<compile_context>
chip_gen: v6e
topology: v6e:2x2x1
jax: 0.10.0
libtpu: 0.0.40
codegen_flags: <defaults>
</compile_context>

<pallas_src>
import functools

import jax
import jax.numpy as jnp
from jax.experimental import pallas as pl
from jax.experimental.pallas import tpu as pltpu

_EPS = 1e-5                       # nn.BatchNorm2d default eps
_VMEM_LIMIT = 32 * 1024 * 1024    # working set ~6.5 MiB incl. double buffering


# --------------------------------------------------------------------------- #
# In-kernel helpers
# --------------------------------------------------------------------------- #
def _per_channel_total(v, W, C):
    """v: (1, W*C) f32.  Returns per-channel totals, already broadcast over x.

    Position x*C + c of the result holds sum_x' v[x'*C + c].  Implemented as a
    coset all-reduce with XLU lane rotations (cheap, off the VPU/store slots).
    """
    if W & (W - 1) == 0:                       # power-of-two W: log2(W) doublings
        t = v
        shift = C
        while shift < W * C:
            t = t + pltpu.roll(t, shift=shift, axis=1)
            shift *= 2
        return t
    t = v                                      # generic fallback: W-1 rotations
    for k in range(1, W):
        t = t + pltpu.roll(v, shift=k * C, axis=1)
    return t


def _bn_scale_shift_tiled(s, q, gamma_t, beta_t, inv_count, W, C):
    """Fold batch-stat BN into a tiled per-(x,c) scale/shift, all (1, W*C) f32."""
    mean = _per_channel_total(s, W, C) * inv_count
    var = jnp.maximum(_per_channel_total(q, W, C) * inv_count - mean * mean, 0.0)
    scale = gamma_t * jax.lax.rsqrt(var + _EPS)
    shift = beta_t - mean * scale
    return scale, shift


def _fused_basic_block_kernel(x_ref, w1_ref, w2_ref, g1_ref, b1_ref,
                              g2_ref, b2_ref, out_ref, pad_ref, y_ref,
                              *, N, H, W, C):
    WC = W * C
    inv_count = 1.0 / float(N * H * W)

    # Zero the two halo rows exactly once; the interior is overwritten per conv.
    zrow = jnp.zeros((1, WC), pad_ref.dtype)
    pad_ref[0:1, :] = zrow
    pad_ref[H + 1:H + 2, :] = zrow

    def conv(slab_bf16, w_ref):
        """3x3 conv of one sample: 3 accumulated (H, WC) @ (WC, WC) MXU matmuls."""
        pad_ref[1:H + 1, :] = slab_bf16                     # one dense 512-lane store
        acc = jnp.dot(pad_ref[0:H, :], w_ref[0],
                      preferred_element_type=jnp.float32)
        acc = acc + jnp.dot(pad_ref[1:H + 1, :], w_ref[1],
                            preferred_element_type=jnp.float32)
        acc = acc + jnp.dot(pad_ref[2:H + 2, :], w_ref[2],
                            preferred_element_type=jnp.float32)
        return acc                                          # (H, WC) f32

    # ---- conv1 over the whole batch (kept in VMEM) + BN1 partial stats --------
    s1 = jnp.zeros((1, WC), jnp.float32)
    q1 = jnp.zeros((1, WC), jnp.float32)
    for n in range(N):
        acc = conv(x_ref[n], w1_ref)
        y_ref[n] = acc
        s1 = s1 + jnp.sum(acc, axis=0, keepdims=True)
        q1 = q1 + jnp.sum(acc * acc, axis=0, keepdims=True)
    scale1, shift1 = _bn_scale_shift_tiled(s1, q1, g1_ref[...], b1_ref[...],
                                           inv_count, W, C)

    # ---- BN1 + ReLU + conv2 (y buffer reused in place) + BN2 partial stats ----
    s2 = jnp.zeros((1, WC), jnp.float32)
    q2 = jnp.zeros((1, WC), jnp.float32)
    for n in range(N):
        h = jnp.maximum(y_ref[n] * scale1 + shift1, 0.0)    # f32 BN + ReLU
        acc = conv(h.astype(jnp.bfloat16), w2_ref)
        y_ref[n] = acc                                      # overwrite conv1 output
        s2 = s2 + jnp.sum(acc, axis=0, keepdims=True)
        q2 = q2 + jnp.sum(acc * acc, axis=0, keepdims=True)
    scale2, shift2 = _bn_scale_shift_tiled(s2, q2, g2_ref[...], b2_ref[...],
                                           inv_count, W, C)

    # ---- BN2 + identity residual + final ReLU (lane-dense 512-lane stores) ----
    for n in range(N):
        res = x_ref[n].astype(jnp.float32)
        out_ref[n] = jnp.maximum(y_ref[n] * scale2 + shift2 + res, 0.0)


# --------------------------------------------------------------------------- #
# Wrapper
# --------------------------------------------------------------------------- #
def _band_weights(w_oihw, W):
    """OIHW 3x3 weights -> (3, W*Cin, W*Cout) bf16 block-banded matrices.

    M_dy[(x+dx-1)*Cin + ci, x*Cout + co] = w[co, ci, dy, dx] for 0 <= x+dx-1 < W
    (out-of-range taps hit the zero padding and are simply dropped from the band).
    """
    w_hwio = jnp.transpose(w_oihw, (2, 3, 1, 0)).astype(jnp.float32)  # (3,3,Ci,Co)
    cin, cout = w_hwio.shape[2], w_hwio.shape[3]
    mats = []
    for dy in range(3):
        m = jnp.zeros((W * cin, W * cout), jnp.float32)
        for dx in range(3):
            shift = jnp.eye(W, W, k=1 - dx, dtype=jnp.float32)   # T[x+dx-1, x] = 1
            m = m + jnp.kron(shift, w_hwio[dy, dx])
        mats.append(m)
    return jnp.stack(mats).astype(jnp.bfloat16)


@jax.jit
def basic_block_forward(x_nchw, w1_oihw, gamma1, beta1, w2_oihw, gamma2, beta2):
    """BasicBlock.forward(x) for stride=1, in_channels == out_channels.

    Returns (out_nchw, loss) with out_nchw shaped like x_nchw and loss == 0.0.
    NOTE: BN running statistics are not updated (training-mode forward only).
    """
    N, C, H, W = x_nchw.shape
    assert w1_oihw.shape[0] == C, "identity shortcut requires in == out channels"
    WC = W * C

    # Layout plumbing (free reshapes / small host-side precompute, all under XLA).
    x_slab = jnp.transpose(x_nchw, (0, 2, 3, 1)).reshape(N, H, WC).astype(jnp.bfloat16)
    w1_band = _band_weights(w1_oihw, W)
    w2_band = _band_weights(w2_oihw, W)

    def tile_c(v):          # (C,) -> (1, W*C) with value[x*C + c] = v[c]
        return jnp.tile(v.astype(jnp.float32).reshape(1, C), (1, W))

    g1t, b1t, g2t, b2t = (tile_c(gamma1), tile_c(beta1),
                          tile_c(gamma2), tile_c(beta2))

    out_slab = pl.pallas_call(
        functools.partial(_fused_basic_block_kernel, N=N, H=H, W=W, C=C),
        out_shape=jax.ShapeDtypeStruct((N, H, WC), jnp.float32),
        grid=(1,),
        in_specs=[
            pl.BlockSpec((N, H, WC), lambda i: (0, 0, 0)),       # x (bf16 slab)
            pl.BlockSpec((3, WC, WC), lambda i: (0, 0, 0)),      # conv1 band weights
            pl.BlockSpec((3, WC, WC), lambda i: (0, 0, 0)),      # conv2 band weights
            pl.BlockSpec((1, WC), lambda i: (0, 0)),             # gamma1 (tiled)
            pl.BlockSpec((1, WC), lambda i: (0, 0)),             # beta1  (tiled)
            pl.BlockSpec((1, WC), lambda i: (0, 0)),             # gamma2 (tiled)
            pl.BlockSpec((1, WC), lambda i: (0, 0)),             # beta2  (tiled)
        ],
        out_specs=pl.BlockSpec((N, H, WC), lambda i: (0, 0, 0)),
        scratch_shapes=[
            pltpu.VMEM((H + 2, WC), jnp.bfloat16),               # padded slab (halo rows)
            pltpu.VMEM((N, H, WC), jnp.float32),                 # conv1/conv2 intermediate
        ],
        compiler_params=pltpu.CompilerParams(
            dimension_semantics=("arbitrary",),
            vmem_limit_bytes=_VMEM_LIMIT),
    )(x_slab, w1_band, w2_band, g1t, b1t, g2t, b2t)

    out_nchw = jnp.transpose(out_slab.reshape(N, H, W, C), (0, 3, 1, 2))
    # Identity shortcut + plain conv/bn/relu layers => zero auxiliary loss.
    return out_nchw, jnp.float32(0.0)


# --------------------------------------------------------------------------- #
# Pure-JAX reference (f32) for correctness validation
# --------------------------------------------------------------------------- #
def _reference_forward(x, w1, g1, b1, w2, g2, b2):
    def conv3x3(h, w):
        return jax.lax.conv_general_dilated(
            h, w, window_strides=(1, 1), padding=((1, 1), (1, 1)),
            dimension_numbers=("NCHW", "OIHW", "NCHW"))

    def bn(h, g, b):
        mean = jnp.mean(h, axis=(0, 2, 3), keepdims=True)
        var = jnp.mean((h - mean) ** 2, axis=(0, 2, 3), keepdims=True)
        return ((h - mean) * jax.lax.rsqrt(var + _EPS)
                * g.reshape(1, -1, 1, 1) + b.reshape(1, -1, 1, 1))

    h = jnp.maximum(bn(conv3x3(x, w1), g1, b1), 0.0)
    h = bn(conv3x3(h, w2), g2, b2)
    return jnp.maximum(h + x, 0.0)


if __name__ == "__main__":
    # Small, BasicBlock-consistent shapes: batch=2, channels=32, spatial 16x16.
    N, C, H, W = 2, 32, 16, 16

    key = jax.random.PRNGKey(0)
    k_x, k_w1, k_w2 = jax.random.split(key, 3)

    x = jax.random.normal(k_x, (N, C, H, W), dtype=jnp.float32)
    fan_in = C * 3 * 3
    w1 = jax.random.normal(k_w1, (C, C, 3, 3), dtype=jnp.float32) / jnp.sqrt(fan_in)
    w2 = jax.random.normal(k_w2, (C, C, 3, 3), dtype=jnp.float32) / jnp.sqrt(fan_in)
    gamma1 = jnp.ones((C,), jnp.float32)
    beta1 = jnp.zeros((C,), jnp.float32)
    gamma2 = jnp.ones((C,), jnp.float32)
    beta2 = jnp.zeros((C,), jnp.float32)

    out, loss = basic_block_forward(x, w1, gamma1, beta1, w2, gamma2, beta2)
    jax.block_until_ready((out, loss))

    ref = _reference_forward(x, w1, gamma1, beta1, w2, gamma2, beta2)
    max_err = float(jnp.max(jnp.abs(out - ref)))

    assert out.shape == (N, C, H, W)
    assert bool(jnp.all(jnp.isfinite(out)))
    assert bool(jnp.all(out >= 0.0))          # final ReLU
    assert float(loss) == 0.0                 # identity shortcut => zero aux loss
    assert max_err < 0.15, f"max abs err vs f32 reference = {max_err}"  # bf16 tolerance

    print("KERNEL_OK")
</pallas_src>

<mosaic_0001>
module attributes {stable_mosaic.version = 11 : i64} {
  func.func @_fused_basic_block_kernel(%arg0: i32, %arg1: memref<2x16x512xbf16, #tpu.memory_space<vmem>>, %arg2: memref<3x512x512xbf16, #tpu.memory_space<vmem>>, %arg3: memref<3x512x512xbf16, #tpu.memory_space<vmem>>, %arg4: memref<1x512xf32, #tpu.memory_space<vmem>>, %arg5: memref<1x512xf32, #tpu.memory_space<vmem>>, %arg6: memref<1x512xf32, #tpu.memory_space<vmem>>, %arg7: memref<1x512xf32, #tpu.memory_space<vmem>>, %arg8: memref<2x16x512xf32, #tpu.memory_space<vmem>>, %arg9: memref<18x512xbf16, #tpu.memory_space<vmem>>, %arg10: memref<2x16x512xf32, #tpu.memory_space<vmem>>) attributes {dimension_semantics = [#tpu.dimension_semantics<arbitrary>], iteration_bounds = array<i64: 1>, scalar_prefetch = 0 : i64, scratch_operands = 2 : i64, tpu.core_type = #tpu.core_type<tc>, window_params = [{pipeline_mode = #tpu.pipeline_mode<synchronous>, transform_indices = @transform_0, window_bounds = array<i64: 2, 16, 512>}, {pipeline_mode = #tpu.pipeline_mode<synchronous>, transform_indices = @transform_1, window_bounds = array<i64: 3, 512, 512>}, {pipeline_mode = #tpu.pipeline_mode<synchronous>, transform_indices = @transform_2, window_bounds = array<i64: 3, 512, 512>}, {pipeline_mode = #tpu.pipeline_mode<synchronous>, transform_indices = @transform_3, window_bounds = array<i64: 1, 512>}, {pipeline_mode = #tpu.pipeline_mode<synchronous>, transform_indices = @transform_4, window_bounds = array<i64: 1, 512>}, {pipeline_mode = #tpu.pipeline_mode<synchronous>, transform_indices = @transform_5, window_bounds = array<i64: 1, 512>}, {pipeline_mode = #tpu.pipeline_mode<synchronous>, transform_indices = @transform_6, window_bounds = array<i64: 1, 512>}, {pipeline_mode = #tpu.pipeline_mode<synchronous>, transform_indices = @transform_7, window_bounds = array<i64: 2, 16, 512>}]} {
    %cst = arith.constant 0.000000e+00 : bf16
    %0 = vector.broadcast %cst : bf16 to vector<1x512xbf16>
    %c0 = arith.constant 0 : index
    %c0_0 = arith.constant 0 : index
    %1 = vector.load %arg9[%c0, %c0_0] : memref<18x512xbf16, #tpu.memory_space<vmem>>, vector<1x512xbf16>
    tpu.vector_store %arg9[%c0, %c0_0], %0 {strides = array<i32>} : memref<18x512xbf16, #tpu.memory_space<vmem>>, vector<1x512xbf16>,
    %c17 = arith.constant 17 : index
    %c0_1 = arith.constant 0 : index
    %2 = vector.load %arg9[%c17, %c0_1] : memref<18x512xbf16, #tpu.memory_space<vmem>>, vector<1x512xbf16>
    tpu.vector_store %arg9[%c17, %c0_1], %0 {strides = array<i32>} : memref<18x512xbf16, #tpu.memory_space<vmem>>, vector<1x512xbf16>,
    %cst_2 = arith.constant 0.000000e+00 : f32
    %3 = vector.broadcast %cst_2 : f32 to vector<1x512xf32>
    %cst_3 = arith.constant 0.000000e+00 : f32
    %4 = vector.broadcast %cst_3 : f32 to vector<1x512xf32>
    %c0_4 = arith.constant 0 : index
    %c0_5 = arith.constant 0 : index
    %c0_6 = arith.constant 0 : index
    %5 = vector.load %arg1[%c0_4, %c0_5, %c0_6] : memref<2x16x512xbf16, #tpu.memory_space<vmem>>, vector<1x16x512xbf16>
    %6 = vector.shape_cast %5 : vector<1x16x512xbf16> to vector<16x512xbf16>
    %c1 = arith.constant 1 : index
    %c0_7 = arith.constant 0 : index
    %7 = vector.load %arg9[%c1, %c0_7] : memref<18x512xbf16, #tpu.memory_space<vmem>>, vector<16x512xbf16>
    tpu.vector_store %arg9[%c1, %c0_7], %6 {strides = array<i32>} : memref<18x512xbf16, #tpu.memory_space<vmem>>, vector<16x512xbf16>,
    %c0_8 = arith.constant 0 : index
    %c0_9 = arith.constant 0 : index
    %8 = vector.load %arg9[%c0_8, %c0_9] : memref<18x512xbf16, #tpu.memory_space<vmem>>, vector<16x512xbf16>
    %c0_10 = arith.constant 0 : index
    %c0_11 = arith.constant 0 : index
    %c0_12 = arith.constant 0 : index
    %9 = vector.load %arg2[%c0_10, %c0_11, %c0_12] : memref<3x512x512xbf16, #tpu.memory_space<vmem>>, vector<1x512x512xbf16>
    %10 = vector.shape_cast %9 : vector<1x512x512xbf16> to vector<512x512xbf16>
    %cst_13 = arith.constant dense<0.000000e+00> : vector<16x512xf32>
    %11 = tpu.matmul %8, %10, %cst_13 {dimension_numbers = #tpu.dot_dimension_numbers<[1], [0], [0], [1], [0, 0, 1, 1], [], []>} : vector<16x512xbf16>, vector<512x512xbf16>, vector<16x512xf32> -> vector<16x512xf32>
    %c1_14 = arith.constant 1 : index
    %c0_15 = arith.constant 0 : index
    %12 = vector.load %arg9[%c1_14, %c0_15] : memref<18x512xbf16, #tpu.memory_space<vmem>>, vector<16x512xbf16>
    %c1_16 = arith.constant 1 : index
    %c0_17 = arith.constant 0 : index
    %c0_18 = arith.constant 0 : index
    %13 = vector.load %arg2[%c1_16, %c0_17, %c0_18] : memref<3x512x512xbf16, #tpu.memory_space<vmem>>, vector<1x512x512xbf16>
    %14 = vector.shape_cast %13 : vector<1x512x512xbf16> to vector<512x512xbf16>
    %cst_19 = arith.constant dense<0.000000e+00> : vector<16x512xf32>
    %15 = tpu.matmul %12, %14, %cst_19 {dimension_numbers = #tpu.dot_dimension_numbers<[1], [0], [0], [1], [0, 0, 1, 1], [], []>} : vector<16x512xbf16>, vector<512x512xbf16>, vector<16x512xf32> -> vector<16x512xf32>
    %16 = arith.addf %11, %15 : vector<16x512xf32>
    %c2 = arith.constant 2 : index
    %c0_20 = arith.constant 0 : index
    %17 = vector.load %arg9[%c2, %c0_20] : memref<18x512xbf16, #tpu.memory_space<vmem>>, vector<16x512xbf16>
    %c2_21 = arith.constant 2 : index
    %c0_22 = arith.constant 0 : index
    %c0_23 = arith.constant 0 : index
    %18 = vector.load %arg2[%c2_21, %c0_22, %c0_23] : memref<3x512x512xbf16, #tpu.memory_space<vmem>>, vector<1x512x512xbf16>
    %19 = vector.shape_cast %18 : vector<1x512x512xbf16> to vector<512x512xbf16>
    %cst_24 = arith.constant dense<0.000000e+00> : vector<16x512xf32>
    %20 = tpu.matmul %17, %19, %cst_24 {dimension_numbers = #tpu.dot_dimension_numbers<[1], [0], [0], [1], [0, 0, 1, 1], [], []>} : vector<16x512xbf16>, vector<512x512xbf16>, vector<16x512xf32> -> vector<16x512xf32>
    %21 = arith.addf %16, %20 : vector<16x512xf32>
    %c0_25 = arith.constant 0 : index
    %c0_26 = arith.constant 0 : index
    %c0_27 = arith.constant 0 : index
    %22 = vector.load %arg10[%c0_25, %c0_26, %c0_27] : memref<2x16x512xf32, #tpu.memory_space<vmem>>, vector<1x16x512xf32>
    %23 = vector.shape_cast %22 : vector<1x16x512xf32> to vector<16x512xf32>
    %24 = vector.shape_cast %21 : vector<16x512xf32> to vector<1x16x512xf32>
    tpu.vector_store %arg10[%c0_25, %c0_26, %c0_27], %24 {strides = array<i32>} : memref<2x16x512xf32, #tpu.memory_space<vmem>>, vector<1x16x512xf32>,
    %cst_28 = arith.constant dense<0.000000e+00> : vector<512xf32>
    %25 = vector.multi_reduction <add>, %21, %cst_28 [0] : vector<16x512xf32> to vector<512xf32>
    %26 = vector.shape_cast %25 : vector<512xf32> to vector<1x512xf32>
    %27 = arith.addf %3, %26 : vector<1x512xf32>
    %28 = arith.mulf %21, %21 : vector<16x512xf32>
    %cst_29 = arith.constant dense<0.000000e+00> : vector<512xf32>
    %29 = vector.multi_reduction <add>, %28, %cst_29 [0] : vector<16x512xf32> to vector<512xf32>
    %30 = vector.shape_cast %29 : vector<512xf32> to vector<1x512xf32>
    %31 = arith.addf %4, %30 : vector<1x512xf32>
    %c1_30 = arith.constant 1 : index
    %c0_31 = arith.constant 0 : index
    %c0_32 = arith.constant 0 : index
    %32 = vector.load %arg1[%c1_30, %c0_31, %c0_32] : memref<2x16x512xbf16, #tpu.memory_space<vmem>>, vector<1x16x512xbf16>
    %33 = vector.shape_cast %32 : vector<1x16x512xbf16> to vector<16x512xbf16>
    %c1_33 = arith.constant 1 : index
    %c0_34 = arith.constant 0 : index
    %34 = vector.load %arg9[%c1_33, %c0_34] : memref<18x512xbf16, #tpu.memory_space<vmem>>, vector<16x512xbf16>
    tpu.vector_store %arg9[%c1_33, %c0_34], %33 {strides = array<i32>} : memref<18x512xbf16, #tpu.memory_space<vmem>>, vector<16x512xbf16>,
    %c0_35 = arith.constant 0 : index
    %c0_36 = arith.constant 0 : index
    %35 = vector.load %arg9[%c0_35, %c0_36] : memref<18x512xbf16, #tpu.memory_space<vmem>>, vector<16x512xbf16>
    %c0_37 = arith.constant 0 : index
    %c0_38 = arith.constant 0 : index
    %c0_39 = arith.constant 0 : index
    %36 = vector.load %arg2[%c0_37, %c0_38, %c0_39] : memref<3x512x512xbf16, #tpu.memory_space<vmem>>, vector<1x512x512xbf16>
    %37 = vector.shape_cast %36 : vector<1x512x512xbf16> to vector<512x512xbf16>
    %cst_40 = arith.constant dense<0.000000e+00> : vector<16x512xf32>
    %38 = tpu.matmul %35, %37, %cst_40 {dimension_numbers = #tpu.dot_dimension_numbers<[1], [0], [0], [1], [0, 0, 1, 1], [], []>} : vector<16x512xbf16>, vector<512x512xbf16>, vector<16x512xf32> -> vector<16x512xf32>
    %c1_41 = arith.constant 1 : index
    %c0_42 = arith.constant 0 : index
    %39 = vector.load %arg9[%c1_41, %c0_42] : memref<18x512xbf16, #tpu.memory_space<vmem>>, vector<16x512xbf16>
    %c1_43 = arith.constant 1 : index
    %c0_44 = arith.constant 0 : index
    %c0_45 = arith.constant 0 : index
    %40 = vector.load %arg2[%c1_43, %c0_44, %c0_45] : memref<3x512x512xbf16, #tpu.memory_space<vmem>>, vector<1x512x512xbf16>
    %41 = vector.shape_cast %40 : vector<1x512x512xbf16> to vector<512x512xbf16>
    %cst_46 = arith.constant dense<0.000000e+00> : vector<16x512xf32>
    %42 = tpu.matmul %39, %41, %cst_46 {dimension_numbers = #tpu.dot_dimension_numbers<[1], [0], [0], [1], [0, 0, 1, 1], [], []>} : vector<16x512xbf16>, vector<512x512xbf16>, vector<16x512xf32> -> vector<16x512xf32>
    %43 = arith.addf %38, %42 : vector<16x512xf32>
    %c2_47 = arith.constant 2 : index
    %c0_48 = arith.constant 0 : index
    %44 = vector.load %arg9[%c2_47, %c0_48] : memref<18x512xbf16, #tpu.memory_space<vmem>>, vector<16x512xbf16>
    %c2_49 = arith.constant 2 : index
    %c0_50 = arith.constant 0 : index
    %c0_51 = arith.constant 0 : index
    %45 = vector.load %arg2[%c2_49, %c0_50, %c0_51] : memref<3x512x512xbf16, #tpu.memory_space<vmem>>, vector<1x512x512xbf16>
    %46 = vector.shape_cast %45 : vector<1x512x512xbf16> to vector<512x512xbf16>
    %cst_52 = arith.constant dense<0.000000e+00> : vector<16x512xf32>
    %47 = tpu.matmul %44, %46, %cst_52 {dimension_numbers = #tpu.dot_dimension_numbers<[1], [0], [0], [1], [0, 0, 1, 1], [], []>} : vector<16x512xbf16>, vector<512x512xbf16>, vector<16x512xf32> -> vector<16x512xf32>
    %48 = arith.addf %43, %47 : vector<16x512xf32>
    %c1_53 = arith.constant 1 : index
    %c0_54 = arith.constant 0 : index
    %c0_55 = arith.constant 0 : index
    %49 = vector.load %arg10[%c1_53, %c0_54, %c0_55] : memref<2x16x512xf32, #tpu.memory_space<vmem>>, vector<1x16x512xf32>
    %50 = vector.shape_cast %49 : vector<1x16x512xf32> to vector<16x512xf32>
    %51 = vector.shape_cast %48 : vector<16x512xf32> to vector<1x16x512xf32>
    tpu.vector_store %arg10[%c1_53, %c0_54, %c0_55], %51 {strides = array<i32>} : memref<2x16x512xf32, #tpu.memory_space<vmem>>, vector<1x16x512xf32>,
    %cst_56 = arith.constant dense<0.000000e+00> : vector<512xf32>
    %52 = vector.multi_reduction <add>, %48, %cst_56 [0] : vector<16x512xf32> to vector<512xf32>
    %53 = vector.shape_cast %52 : vector<512xf32> to vector<1x512xf32>
    %54 = arith.addf %27, %53 : vector<1x512xf32>
    %55 = arith.mulf %48, %48 : vector<16x512xf32>
    %cst_57 = arith.constant dense<0.000000e+00> : vector<512xf32>
    %56 = vector.multi_reduction <add>, %55, %cst_57 [0] : vector<16x512xf32> to vector<512xf32>
    %57 = vector.shape_cast %56 : vector<512xf32> to vector<1x512xf32>
    %58 = arith.addf %31, %57 : vector<1x512xf32>
    %c0_58 = arith.constant 0 : index
    %c0_59 = arith.constant 0 : index
    %59 = vector.load %arg4[%c0_58, %c0_59] : memref<1x512xf32, #tpu.memory_space<vmem>>, vector<1x512xf32>
    %c0_60 = arith.constant 0 : index
    %c0_61 = arith.constant 0 : index
    %60 = vector.load %arg5[%c0_60, %c0_61] : memref<1x512xf32, #tpu.memory_space<vmem>>, vector<1x512xf32>
    %c32_i32 = arith.constant 32 : i32
    %61 = tpu.dynamic_rotate %54 by %c32_i32 dim 1 : vector<1x512xf32>, i32 -> vector<1x512xf32>
    %62 = arith.addf %54, %61 : vector<1x512xf32>
    %c64_i32 = arith.constant 64 : i32
    %63 = tpu.dynamic_rotate %62 by %c64_i32 dim 1 : vector<1x512xf32>, i32 -> vector<1x512xf32>
    %64 = arith.addf %62, %63 : vector<1x512xf32>
    %c128_i32 = arith.constant 128 : i32
    %65 = tpu.dynamic_rotate %64 by %c128_i32 dim 1 : vector<1x512xf32>, i32 -> vector<1x512xf32>
    %66 = arith.addf %64, %65 : vector<1x512xf32>
    %c256_i32 = arith.constant 256 : i32
    %67 = tpu.dynamic_rotate %66 by %c256_i32 dim 1 : vector<1x512xf32>, i32 -> vector<1x512xf32>
    %68 = arith.addf %66, %67 : vector<1x512xf32>
    %cst_62 = arith.constant 0.001953125 : f32
    %69 = vector.broadcast %cst_62 : f32 to vector<1x512xf32>
    %70 = arith.mulf %68, %69 : vector<1x512xf32>
    %c32_i32_63 = arith.constant 32 : i32
    %71 = tpu.dynamic_rotate %58 by %c32_i32_63 dim 1 : vector<1x512xf32>, i32 -> vector<1x512xf32>
    %72 = arith.addf %58, %71 : vector<1x512xf32>
    %c64_i32_64 = arith.constant 64 : i32
    %73 = tpu.dynamic_rotate %72 by %c64_i32_64 dim 1 : vector<1x512xf32>, i32 -> vector<1x512xf32>
    %74 = arith.addf %72, %73 : vector<1x512xf32>
    %c128_i32_65 = arith.constant 128 : i32
    %75 = tpu.dynamic_rotate %74 by %c128_i32_65 dim 1 : vector<1x512xf32>, i32 -> vector<1x512xf32>
    %76 = arith.addf %74, %75 : vector<1x512xf32>
    %c256_i32_66 = arith.constant 256 : i32
    %77 = tpu.dynamic_rotate %76 by %c256_i32_66 dim 1 : vector<1x512xf32>, i32 -> vector<1x512xf32>
    %78 = arith.addf %76, %77 : vector<1x512xf32>
    %cst_67 = arith.constant 0.001953125 : f32
    %79 = vector.broadcast %cst_67 : f32 to vector<1x512xf32>
    %80 = arith.mulf %78, %79 : vector<1x512xf32>
    %81 = arith.mulf %70, %70 : vector<1x512xf32>
    %82 = arith.subf %80, %81 : vector<1x512xf32>
    %cst_68 = arith.constant 0.000000e+00 : f32
    %83 = vector.broadcast %cst_68 : f32 to vector<1x512xf32>
    %84 = arith.maximumf %82, %83 : vector<1x512xf32>
    %cst_69 = arith.constant 9.99999974E-6 : f32
    %85 = vector.broadcast %cst_69 : f32 to vector<1x512xf32>
    %86 = arith.addf %84, %85 : vector<1x512xf32>
    %87 = math.rsqrt %86 : vector<1x512xf32>
    %88 = arith.mulf %59, %87 : vector<1x512xf32>
    %89 = arith.mulf %70, %88 : vector<1x512xf32>
    %90 = arith.subf %60, %89 : vector<1x512xf32>
    %cst_70 = arith.constant 0.000000e+00 : f32
    %91 = vector.broadcast %cst_70 : f32 to vector<1x512xf32>
    %cst_71 = arith.constant 0.000000e+00 : f32
    %92 = vector.broadcast %cst_71 : f32 to vector<1x512xf32>
    %c0_72 = arith.constant 0 : index
    %c0_73 = arith.constant 0 : index
    %c0_74 = arith.constant 0 : index
    %93 = vector.load %arg10[%c0_72, %c0_73, %c0_74] : memref<2x16x512xf32, #tpu.memory_space<vmem>>, vector<1x16x512xf32>
    %94 = vector.shape_cast %93 : vector<1x16x512xf32> to vector<16x512xf32>
    %95 = vector.broadcast %88 : vector<1x512xf32> to vector<16x512xf32>
    %96 = arith.mulf %94, %95 : vector<16x512xf32>
    %97 = vector.broadcast %90 : vector<1x512xf32> to vector<16x512xf32>
    %98 = arith.addf %96, %97 : vector<16x512xf32>
    %cst_75 = arith.constant 0.000000e+00 : f32
    %99 = vector.broadcast %cst_75 : f32 to vector<16x512xf32>
    %100 = arith.maximumf %98, %99 : vector<16x512xf32>
    %101 = arith.truncf %100 : vector<16x512xf32> to vector<16x512xbf16>
    %c1_76 = arith.constant 1 : index
    %c0_77 = arith.constant 0 : index
    %102 = vector.load %arg9[%c1_76, %c0_77] : memref<18x512xbf16, #tpu.memory_space<vmem>>, vector<16x512xbf16>
    tpu.vector_store %arg9[%c1_76, %c0_77], %101 {strides = array<i32>} : memref<18x512xbf16, #tpu.memory_space<vmem>>, vector<16x512xbf16>,
    %c0_78 = arith.constant 0 : index
    %c0_79 = arith.constant 0 : index
    %103 = vector.load %arg9[%c0_78, %c0_79] : memref<18x512xbf16, #tpu.memory_space<vmem>>, vector<16x512xbf16>
    %c0_80 = arith.constant 0 : index
    %c0_81 = arith.constant 0 : index
    %c0_82 = arith.constant 0 : index
    %104 = vector.load %arg3[%c0_80, %c0_81, %c0_82] : memref<3x512x512xbf16, #tpu.memory_space<vmem>>, vector<1x512x512xbf16>
    %105 = vector.shape_cast %104 : vector<1x512x512xbf16> to vector<512x512xbf16>
    %cst_83 = arith.constant dense<0.000000e+00> : vector<16x512xf32>
    %106 = tpu.matmul %103, %105, %cst_83 {dimension_numbers = #tpu.dot_dimension_numbers<[1], [0], [0], [1], [0, 0, 1, 1], [], []>} : vector<16x512xbf16>, vector<512x512xbf16>, vector<16x512xf32> -> vector<16x512xf32>
    %c1_84 = arith.constant 1 : index
    %c0_85 = arith.constant 0 : index
    %107 = vector.load %arg9[%c1_84, %c0_85] : memref<18x512xbf16, #tpu.memory_space<vmem>>, vector<16x512xbf16>
    %c1_86 = arith.constant 1 : index
    %c0_87 = arith.constant 0 : index
    %c0_88 = arith.constant 0 : index
    %108 = vector.load %arg3[%c1_86, %c0_87, %c0_88] : memref<3x512x512xbf16, #tpu.memory_space<vmem>>, vector<1x512x512xbf16>
    %109 = vector.shape_cast %108 : vector<1x512x512xbf16> to vector<512x512xbf16>
    %cst_89 = arith.constant dense<0.000000e+00> : vector<16x512xf32>
    %110 = tpu.matmul %107, %109, %cst_89 {dimension_numbers = #tpu.dot_dimension_numbers<[1], [0], [0], [1], [0, 0, 1, 1], [], []>} : vector<16x512xbf16>, vector<512x512xbf16>, vector<16x512xf32> -> vector<16x512xf32>
    %111 = arith.addf %106, %110 : vector<16x512xf32>
    %c2_90 = arith.constant 2 : index
    %c0_91 = arith.constant 0 : index
    %112 = vector.load %arg9[%c2_90, %c0_91] : memref<18x512xbf16, #tpu.memory_space<vmem>>, vector<16x512xbf16>
    %c2_92 = arith.constant 2 : index
    %c0_93 = arith.constant 0 : index
    %c0_94 = arith.constant 0 : index
    %113 = vector.load %arg3[%c2_92, %c0_93, %c0_94] : memref<3x512x512xbf16, #tpu.memory_space<vmem>>, vector<1x512x512xbf16>
    %114 = vector.shape_cast %113 : vector<1x512x512xbf16> to vector<512x512xbf16>
    %cst_95 = arith.constant dense<0.000000e+00> : vector<16x512xf32>
    %115 = tpu.matmul %112, %114, %cst_95 {dimension_numbers = #tpu.dot_dimension_numbers<[1], [0], [0], [1], [0, 0, 1, 1], [], []>} : vector<16x512xbf16>, vector<512x512xbf16>, vector<16x512xf32> -> vector<16x512xf32>
    %116 = arith.addf %111, %115 : vector<16x512xf32>
    %c0_96 = arith.constant 0 : index
    %c0_97 = arith.constant 0 : index
    %c0_98 = arith.constant 0 : index
    %117 = vector.load %arg10[%c0_96, %c0_97, %c0_98] : memref<2x16x512xf32, #tpu.memory_space<vmem>>, vector<1x16x512xf32>
    %118 = vector.shape_cast %117 : vector<1x16x512xf32> to vector<16x512xf32>
    %119 = vector.shape_cast %116 : vector<16x512xf32> to vector<1x16x512xf32>
    tpu.vector_store %arg10[%c0_96, %c0_97, %c0_98], %119 {strides = array<i32>} : memref<2x16x512xf32, #tpu.memory_space<vmem>>, vector<1x16x512xf32>,
    %cst_99 = arith.constant dense<0.000000e+00> : vector<512xf32>
    %120 = vector.multi_reduction <add>, %116, %cst_99 [0] : vector<16x512xf32> to vector<512xf32>
    %121 = vector.shape_cast %120 : vector<512xf32> to vector<1x512xf32>
    %122 = arith.addf %91, %121 : vector<1x512xf32>
    %123 = arith.mulf %116, %116 : vector<16x512xf32>
    %cst_100 = arith.constant dense<0.000000e+00> : vector<512xf32>
    %124 = vector.multi_reduction <add>, %123, %cst_100 [0] : vector<16x512xf32> to vector<512xf32>
    %125 = vector.shape_cast %124 : vector<512xf32> to vector<1x512xf32>
    %126 = arith.addf %92, %125 : vector<1x512xf32>
    %c1_101 = arith.constant 1 : index
    %c0_102 = arith.constant 0 : index
    %c0_103 = arith.constant 0 : index
    %127 = vector.load %arg10[%c1_101, %c0_102, %c0_103] : memref<2x16x512xf32, #tpu.memory_space<vmem>>, vector<1x16x512xf32>
    %128 = vector.shape_cast %127 : vector<1x16x512xf32> to vector<16x512xf32>
    %129 = vector.broadcast %88 : vector<1x512xf32> to vector<16x512xf32>
    %130 = arith.mulf %128, %129 : vector<16x512xf32>
    %131 = vector.broadcast %90 : vector<1x512xf32> to vector<16x512xf32>
    %132 = arith.addf %130, %131 : vector<16x512xf32>
    %cst_104 = arith.constant 0.000000e+00 : f32
    %133 = vector.broadcast %cst_104 : f32 to vector<16x512xf32>
    %134 = arith.maximumf %132, %133 : vector<16x512xf32>
    %135 = arith.truncf %134 : vector<16x512xf32> to vector<16x512xbf16>
    %c1_105 = arith.constant 1 : index
    %c0_106 = arith.constant 0 : index
    %136 = vector.load %arg9[%c1_105, %c0_106] : memref<18x512xbf16, #tpu.memory_space<vmem>>, vector<16x512xbf16>
    tpu.vector_store %arg9[%c1_105, %c0_106], %135 {strides = array<i32>} : memref<18x512xbf16, #tpu.memory_space<vmem>>, vector<16x512xbf16>,
    %c0_107 = arith.constant 0 : index
    %c0_108 = arith.constant 0 : index
    %137 = vector.load %arg9[%c0_107, %c0_108] : memref<18x512xbf16, #tpu.memory_space<vmem>>, vector<16x512xbf16>
    %c0_109 = arith.constant 0 : index
    %c0_110 = arith.constant 0 : index
    %c0_111 = arith.constant 0 : index
    %138 = vector.load %arg3[%c0_109, %c0_110, %c0_111] : memref<3x512x512xbf16, #tpu.memory_space<vmem>>, vector<1x512x512xbf16>
    %139 = vector.shape_cast %138 : vector<1x512x512xbf16> to vector<512x512xbf16>
    %cst_112 = arith.constant dense<0.000000e+00> : vector<16x512xf32>
    %140 = tpu.matmul %137, %139, %cst_112 {dimension_numbers = #tpu.dot_dimension_numbers<[1], [0], [0], [1], [0, 0, 1, 1], [], []>} : vector<16x512xbf16>, vector<512x512xbf16>, vector<16x512xf32> -> vector<16x512xf32>
    %c1_113 = arith.constant 1 : index
    %c0_114 = arith.constant 0 : index
    %141 = vector.load %arg9[%c1_113, %c0_114] : memref<18x512xbf16, #tpu.memory_space<vmem>>, vector<16x512xbf16>
    %c1_115 = arith.constant 1 : index
    %c0_116 = arith.constant 0 : index
    %c0_117 = arith.constant 0 : index
    %142 = vector.load %arg3[%c1_115, %c0_116, %c0_117] : memref<3x512x512xbf16, #tpu.memory_space<vmem>>, vector<1x512x512xbf16>
    %143 = vector.shape_cast %142 : vector<1x512x512xbf16> to vector<512x512xbf16>
    %cst_118 = arith.constant dense<0.000000e+00> : vector<16x512xf32>
    %144 = tpu.matmul %141, %143, %cst_118 {dimension_numbers = #tpu.dot_dimension_numbers<[1], [0], [0], [1], [0, 0, 1, 1], [], []>} : vector<16x512xbf16>, vector<512x512xbf16>, vector<16x512xf32> -> vector<16x512xf32>
    %145 = arith.addf %140, %144 : vector<16x512xf32>
    %c2_119 = arith.constant 2 : index
    %c0_120 = arith.constant 0 : index
    %146 = vector.load %arg9[%c2_119, %c0_120] : memref<18x512xbf16, #tpu.memory_space<vmem>>, vector<16x512xbf16>
    %c2_121 = arith.constant 2 : index
    %c0_122 = arith.constant 0 : index
    %c0_123 = arith.constant 0 : index
    %147 = vector.load %arg3[%c2_121, %c0_122, %c0_123] : memref<3x512x512xbf16, #tpu.memory_space<vmem>>, vector<1x512x512xbf16>
    %148 = vector.shape_cast %147 : vector<1x512x512xbf16> to vector<512x512xbf16>
    %cst_124 = arith.constant dense<0.000000e+00> : vector<16x512xf32>
    %149 = tpu.matmul %146, %148, %cst_124 {dimension_numbers = #tpu.dot_dimension_numbers<[1], [0], [0], [1], [0, 0, 1, 1], [], []>} : vector<16x512xbf16>, vector<512x512xbf16>, vector<16x512xf32> -> vector<16x512xf32>
    %150 = arith.addf %145, %149 : vector<16x512xf32>
    %c1_125 = arith.constant 1 : index
    %c0_126 = arith.constant 0 : index
    %c0_127 = arith.constant 0 : index
    %151 = vector.load %arg10[%c1_125, %c0_126, %c0_127] : memref<2x16x512xf32, #tpu.memory_space<vmem>>, vector<1x16x512xf32>
    %152 = vector.shape_cast %151 : vector<1x16x512xf32> to vector<16x512xf32>
    %153 = vector.shape_cast %150 : vector<16x512xf32> to vector<1x16x512xf32>
    tpu.vector_store %arg10[%c1_125, %c0_126, %c0_127], %153 {strides = array<i32>} : memref<2x16x512xf32, #tpu.memory_space<vmem>>, vector<1x16x512xf32>,
    %cst_128 = arith.constant dense<0.000000e+00> : vector<512xf32>
    %154 = vector.multi_reduction <add>, %150, %cst_128 [0] : vector<16x512xf32> to vector<512xf32>
    %155 = vector.shape_cast %154 : vector<512xf32> to vector<1x512xf32>
    %156 = arith.addf %122, %155 : vector<1x512xf32>
    %157 = arith.mulf %150, %150 : vector<16x512xf32>
    %cst_129 = arith.constant dense<0.000000e+00> : vector<512xf32>
    %158 = vector.multi_reduction <add>, %157, %cst_129 [0] : vector<16x512xf32> to vector<512xf32>
    %159 = vector.shape_cast %158 : vector<512xf32> to vector<1x512xf32>
    %160 = arith.addf %126, %159 : vector<1x512xf32>
    %c0_130 = arith.constant 0 : index
    %c0_131 = arith.constant 0 : index
    %161 = vector.load %arg6[%c0_130, %c0_131] : memref<1x512xf32, #tpu.memory_space<vmem>>, vector<1x512xf32>
    %c0_132 = arith.constant 0 : index
    %c0_133 = arith.constant 0 : index
    %162 = vector.load %arg7[%c0_132, %c0_133] : memref<1x512xf32, #tpu.memory_space<vmem>>, vector<1x512xf32>
    %c32_i32_134 = arith.constant 32 : i32
    %163 = tpu.dynamic_rotate %156 by %c32_i32_134 dim 1 : vector<1x512xf32>, i32 -> vector<1x512xf32>
    %164 = arith.addf %156, %163 : vector<1x512xf32>
    %c64_i32_135 = arith.constant 64 : i32
    %165 = tpu.dynamic_rotate %164 by %c64_i32_135 dim 1 : vector<1x512xf32>, i32 -> vector<1x512xf32>
    %166 = arith.addf %164, %165 : vector<1x512xf32>
    %c128_i32_136 = arith.constant 128 : i32
    %167 = tpu.dynamic_rotate %166 by %c128_i32_136 dim 1 : vector<1x512xf32>, i32 -> vector<1x512xf32>
    %168 = arith.addf %166, %167 : vector<1x512xf32>
    %c256_i32_137 = arith.constant 256 : i32
    %169 = tpu.dynamic_rotate %168 by %c256_i32_137 dim 1 : vector<1x512xf32>, i32 -> vector<1x512xf32>
    %170 = arith.addf %168, %169 : vector<1x512xf32>
    %cst_138 = arith.constant 0.001953125 : f32
    %171 = vector.broadcast %cst_138 : f32 to vector<1x512xf32>
    %172 = arith.mulf %170, %171 : vector<1x512xf32>
    %c32_i32_139 = arith.constant 32 : i32
    %173 = tpu.dynamic_rotate %160 by %c32_i32_139 dim 1 : vector<1x512xf32>, i32 -> vector<1x512xf32>
    %174 = arith.addf %160, %173 : vector<1x512xf32>
    %c64_i32_140 = arith.constant 64 : i32
    %175 = tpu.dynamic_rotate %174 by %c64_i32_140 dim 1 : vector<1x512xf32>, i32 -> vector<1x512xf32>
    %176 = arith.addf %174, %175 : vector<1x512xf32>
    %c128_i32_141 = arith.constant 128 : i32
    %177 = tpu.dynamic_rotate %176 by %c128_i32_141 dim 1 : vector<1x512xf32>, i32 -> vector<1x512xf32>
    %178 = arith.addf %176, %177 : vector<1x512xf32>
    %c256_i32_142 = arith.constant 256 : i32
    %179 = tpu.dynamic_rotate %178 by %c256_i32_142 dim 1 : vector<1x512xf32>, i32 -> vector<1x512xf32>
    %180 = arith.addf %178, %179 : vector<1x512xf32>
    %cst_143 = arith.constant 0.001953125 : f32
    %181 = vector.broadcast %cst_143 : f32 to vector<1x512xf32>
    %182 = arith.mulf %180, %181 : vector<1x512xf32>
    %183 = arith.mulf %172, %172 : vector<1x512xf32>
    %184 = arith.subf %182, %183 : vector<1x512xf32>
    %cst_144 = arith.constant 0.000000e+00 : f32
    %185 = vector.broadcast %cst_144 : f32 to vector<1x512xf32>
    %186 = arith.maximumf %184, %185 : vector<1x512xf32>
    %cst_145 = arith.constant 9.99999974E-6 : f32
    %187 = vector.broadcast %cst_145 : f32 to vector<1x512xf32>
    %188 = arith.addf %186, %187 : vector<1x512xf32>
    %189 = math.rsqrt %188 : vector<1x512xf32>
    %190 = arith.mulf %161, %189 : vector<1x512xf32>
    %191 = arith.mulf %172, %190 : vector<1x512xf32>
    %192 = arith.subf %162, %191 : vector<1x512xf32>
    %c0_146 = arith.constant 0 : index
    %c0_147 = arith.constant 0 : index
    %c0_148 = arith.constant 0 : index
    %193 = vector.load %arg1[%c0_146, %c0_147, %c0_148] : memref<2x16x512xbf16, #tpu.memory_space<vmem>>, vector<1x16x512xbf16>
    %194 = vector.shape_cast %193 : vector<1x16x512xbf16> to vector<16x512xbf16>
    %195 = arith.extf %194 : vector<16x512xbf16> to vector<16x512xf32>
    %c0_149 = arith.constant 0 : index
    %c0_150 = arith.constant 0 : index
    %c0_151 = arith.constant 0 : index
    %196 = vector.load %arg10[%c0_149, %c0_150, %c0_151] : memref<2x16x512xf32, #tpu.memory_space<vmem>>, vector<1x16x512xf32>
    %197 = vector.shape_cast %196 : vector<1x16x512xf32> to vector<16x512xf32>
    %198 = vector.broadcast %190 : vector<1x512xf32> to vector<16x512xf32>
    %199 = arith.mulf %197, %198 : vector<16x512xf32>
    %200 = vector.broadcast %192 : vector<1x512xf32> to vector<16x512xf32>
    %201 = arith.addf %199, %200 : vector<16x512xf32>
    %202 = arith.addf %201, %195 : vector<16x512xf32>
    %cst_152 = arith.constant 0.000000e+00 : f32
    %203 = vector.broadcast %cst_152 : f32 to vector<16x512xf32>
    %204 = arith.maximumf %202, %203 : vector<16x512xf32>
    %c0_153 = arith.constant 0 : index
    %c0_154 = arith.constant 0 : index
    %c0_155 = arith.constant 0 : index
    %205 = vector.load %arg8[%c0_153, %c0_154, %c0_155] : memref<2x16x512xf32, #tpu.memory_space<vmem>>, vector<1x16x512xf32>
    %206 = vector.shape_cast %205 : vector<1x16x512xf32> to vector<16x512xf32>
    %207 = vector.shape_cast %204 : vector<16x512xf32> to vector<1x16x512xf32>
    tpu.vector_store %arg8[%c0_153, %c0_154, %c0_155], %207 {strides = array<i32>} : memref<2x16x512xf32, #tpu.memory_space<vmem>>, vector<1x16x512xf32>,
    %c1_156 = arith.constant 1 : index
    %c0_157 = arith.constant 0 : index
    %c0_158 = arith.constant 0 : index
    %208 = vector.load %arg1[%c1_156, %c0_157, %c0_158] : memref<2x16x512xbf16, #tpu.memory_space<vmem>>, vector<1x16x512xbf16>
    %209 = vector.shape_cast %208 : vector<1x16x512xbf16> to vector<16x512xbf16>
    %210 = arith.extf %209 : vector<16x512xbf16> to vector<16x512xf32>
    %c1_159 = arith.constant 1 : index
    %c0_160 = arith.constant 0 : index
    %c0_161 = arith.constant 0 : index
    %211 = vector.load %arg10[%c1_159, %c0_160, %c0_161] : memref<2x16x512xf32, #tpu.memory_space<vmem>>, vector<1x16x512xf32>
    %212 = vector.shape_cast %211 : vector<1x16x512xf32> to vector<16x512xf32>
    %213 = vector.broadcast %190 : vector<1x512xf32> to vector<16x512xf32>
    %214 = arith.mulf %212, %213 : vector<16x512xf32>
    %215 = vector.broadcast %192 : vector<1x512xf32> to vector<16x512xf32>
    %216 = arith.addf %214, %215 : vector<16x512xf32>
    %217 = arith.addf %216, %210 : vector<16x512xf32>
    %cst_162 = arith.constant 0.000000e+00 : f32
    %218 = vector.broadcast %cst_162 : f32 to vector<16x512xf32>
    %219 = arith.maximumf %217, %218 : vector<16x512xf32>
    %c1_163 = arith.constant 1 : index
    %c0_164 = arith.constant 0 : index
    %c0_165 = arith.constant 0 : index
    %220 = vector.load %arg8[%c1_163, %c0_164, %c0_165] : memref<2x16x512xf32, #tpu.memory_space<vmem>>, vector<1x16x512xf32>
    %221 = vector.shape_cast %220 : vector<1x16x512xf32> to vector<16x512xf32>
    %222 = vector.shape_cast %219 : vector<16x512xf32> to vector<1x16x512xf32>
    tpu.vector_store %arg8[%c1_163, %c0_164, %c0_165], %222 {strides = array<i32>} : memref<2x16x512xf32, #tpu.memory_space<vmem>>, vector<1x16x512xf32>,
    return
  }
  func.func @transform_0(%arg0: i32) -> (i32, i32, i32) {
    %c0_i32 = arith.constant 0 : i32
    %c0_i32_0 = arith.constant 0 : i32
    %c0_i32_1 = arith.constant 0 : i32
    %c0_i32_2 = arith.constant 0 : i32
    return %c0_i32, %c0_i32_0, %c0_i32_1 : i32, i32, i32
  }
  func.func @transform_1(%arg0: i32) -> (i32, i32, i32) {
    %c0_i32 = arith.constant 0 : i32
    %c0_i32_0 = arith.constant 0 : i32
    %c0_i32_1 = arith.constant 0 : i32
    %c0_i32_2 = arith.constant 0 : i32
    return %c0_i32, %c0_i32_0, %c0_i32_1 : i32, i32, i32
  }
  func.func @transform_2(%arg0: i32) -> (i32, i32, i32) {
    %c0_i32 = arith.constant 0 : i32
    %c0_i32_0 = arith.constant 0 : i32
    %c0_i32_1 = arith.constant 0 : i32
    %c0_i32_2 = arith.constant 0 : i32
    return %c0_i32, %c0_i32_0, %c0_i32_1 : i32, i32, i32
  }
  func.func @transform_3(%arg0: i32) -> (i32, i32) {
    %c0_i32 = arith.constant 0 : i32
    %c0_i32_0 = arith.constant 0 : i32
    %c0_i32_1 = arith.constant 0 : i32
    return %c0_i32, %c0_i32_0 : i32, i32
  }
  func.func @transform_4(%arg0: i32) -> (i32, i32) {
    %c0_i32 = arith.constant 0 : i32
    %c0_i32_0 = arith.constant 0 : i32
    %c0_i32_1 = arith.constant 0 : i32
    return %c0_i32, %c0_i32_0 : i32, i32
  }
  func.func @transform_5(%arg0: i32) -> (i32, i32) {
    %c0_i32 = arith.constant 0 : i32
    %c0_i32_0 = arith.constant 0 : i32
    %c0_i32_1 = arith.constant 0 : i32
    return %c0_i32, %c0_i32_0 : i32, i32
  }
  func.func @transform_6(%arg0: i32) -> (i32, i32) {
    %c0_i32 = arith.constant 0 : i32
    %c0_i32_0 = arith.constant 0 : i32
    %c0_i32_1 = arith.constant 0 : i32
    return %c0_i32, %c0_i32_0 : i32, i32
  }
  func.func @transform_7(%arg0: i32) -> (i32, i32, i32) {
    %c0_i32 = arith.constant 0 : i32
    %c0_i32_0 = arith.constant 0 : i32
    %c0_i32_1 = arith.constant 0 : i32
    %c0_i32_2 = arith.constant 0 : i32
    return %c0_i32, %c0_i32_0, %c0_i32_1 : i32, i32, i32
  }
}

</mosaic_0001>

<llo_original>
// kernel: basic_block_forward.1
$region0: #{basic_block_forward.1}
  #allocation0 [shape = 'u32[]', space=smem, size = 0x4, offset = 0x4, fixed_abs, tag = 'smem constant byte address 0x4 - core index']
  #allocation1 [shape = 'u32[144,128]{1,0:T(1,128)}', space=vmem, size = 0x12000, scoped, tag = 'internal scratch']
  #allocation2 [shape = 'bf16[18,512]{1,0:T(8,128)(2,1)}', space=vmem, size = 0x6000, scoped, tag = 'scratch operand']
  #allocation3 [shape = 'f32[2,16,512]{2,1,0:T(8,128)}', space=vmem, size = 0x10000, scoped, tag = 'scratch operand']
  %s0 = inlined_call_operand.vmem [shape: bf16[2,16,512], index: 0, kind: input, shape index: {}]
  %s1 = inlined_call_operand.vmem [shape: bf16[3,512,512], index: 1, kind: input, shape index: {}]
  %s2 = inlined_call_operand.vmem [shape: bf16[3,512,512], index: 2, kind: input, shape index: {}]
  %s3 = inlined_call_operand.vmem [shape: f32[1,512], index: 3, kind: input, shape index: {}]
  %s4 = inlined_call_operand.vmem [shape: f32[1,512], index: 4, kind: input, shape index: {}]
  %s5 = inlined_call_operand.vmem [shape: f32[1,512], index: 5, kind: input, shape index: {}]
  %s6 = inlined_call_operand.vmem [shape: f32[1,512], index: 6, kind: input, shape index: {}]
  %s7 = inlined_call_operand.vmem [shape: f32[2,16,512], index: 7, kind: output, shape index: {}]
  %s8 = sld [smem:[#allocation0]]
  $region38: #{basic_block_forward.1} parent=0
    _
  %s10 = ssub.s32 1, %s8
  %s11 = scalar_select 0, %s10, %s8
  // Predicated region
  $region2: #{basic_block_forward.1} parent=0 // pred_check
    _
  $region3: #{basic_block_forward.1} parent=0 // pred_check_branch
    %13 = sbr.rel (0) target = $region5
  $region4: #{basic_block_forward.1} parent=0 // pred_region
    _
  $region5: #{basic_block_forward.1} parent=0 // pred_fallthru
    _
  // Predicated region
  $region6: #{basic_block_forward.1} parent=0 // pred_check
    _
  $region7: #{basic_block_forward.1} parent=0 // pred_check_branch
    %15 = sbr.rel (0) target = $region9
  $region8: #{basic_block_forward.1} parent=0 // pred_region
    _
  $region9: #{basic_block_forward.1} parent=0 // pred_fallthru
    _
  // Predicated region
  $region10: #{basic_block_forward.1} parent=0 // pred_check
    _
  $region11: #{basic_block_forward.1} parent=0 // pred_check_branch
    %17 = sbr.rel (0) target = $region13
  $region12: #{basic_block_forward.1} parent=0 // pred_region
    _
  $region13: #{basic_block_forward.1} parent=0 // pred_fallthru
    _
  // Predicated region
  $region14: #{basic_block_forward.1} parent=0 // pred_check
    _
  $region15: #{basic_block_forward.1} parent=0 // pred_check_branch
    %19 = sbr.rel (0) target = $region17
  $region16: #{basic_block_forward.1} parent=0 // pred_region
    _
  $region17: #{basic_block_forward.1} parent=0 // pred_fallthru
    _
  // Predicated region
  $region18: #{basic_block_forward.1} parent=0 // pred_check
    _
  $region19: #{basic_block_forward.1} parent=0 // pred_check_branch
    %21 = sbr.rel (0) target = $region21
  $region20: #{basic_block_forward.1} parent=0 // pred_region
    _
  $region21: #{basic_block_forward.1} parent=0 // pred_fallthru
    _
  // Predicated region
  $region22: #{basic_block_forward.1} parent=0 // pred_check
    _
  $region23: #{basic_block_forward.1} parent=0 // pred_check_branch
    %23 = sbr.rel (0) target = $region25
  $region24: #{basic_block_forward.1} parent=0 // pred_region
    _
  $region25: #{basic_block_forward.1} parent=0 // pred_fallthru
    _
  // Predicated region
  $region26: #{basic_block_forward.1} parent=0 // pred_check
    _
  $region27: #{basic_block_forward.1} parent=0 // pred_check_branch
    %25 = sbr.rel (0) target = $region29
  $region28: #{basic_block_forward.1} parent=0 // pred_region
    _
  $region29: #{basic_block_forward.1} parent=0 // pred_fallthru
    _
  %vm27 = vcmask 1040384
  %vm28 = vsmask.f32 256
  %vm29 = vmand %vm27, %vm28
  %vm30 = vcmask 1044484
  %vm31 = vsmask.f32 4352
  %vm32 = vmand %vm30, %vm31
  %vm33 = vmor %vm32, %vm29
  %v34 = vld [vmem:[#allocation2] sm:$0x11]
  %v35 = vsel %vm33, 0, %v34
  %36 = vst [vmem:[#allocation2] sm:$0x11] %v35
  %v37 = vld [vmem:[#allocation2 + $0x8] sm:$0x11]
  %v38 = vsel %vm33, 0, %v37
  %39 = vst [vmem:[#allocation2 + $0x8] sm:$0x11] %v38
  %vm40 = vsmask.f32 7938
  %vm41 = vmand %vm27, %vm40
  %vm42 = vsmask.f32 7954
  %vm43 = vmand %vm30, %vm42
  %vm44 = vmor %vm43, %vm41
  %v45 = vld [vmem:[#allocation2 + $0x20] sm:$0x11]
  %v46 = vsel %vm44, 0, %v45
  %47 = vst [vmem:[#allocation2 + $0x20] sm:$0x11] %v46
  %v48 = vld [vmem:[#allocation2 + $0x28] sm:$0x11]
  %v49 = vsel %vm44, 0, %v48
  %50 = vst [vmem:[#allocation2 + $0x28] sm:$0x11] %v49
  %v51 = vld [vmem:[%s0] sm:$0xff]
  %v52 = vld [vmem:[%s0 + $0x8] sm:$0xff]
  %v53 = vld [vmem:[%s0 + $0x10] sm:$0xff]
  %v54 = vld [vmem:[%s0 + $0x18] sm:$0xff]
  %vm55 = vsmask.f32 4368
  %vm56 = vmor %vm28, %vm55
  %v58 = vshrl.u32 %v51, 16
  %v60 = vrot.slane %v58, 7
  %v61 = vshll.u32 %v51, 16
  %v63 = vor.u32 %v60, %v61
  %v65 = vshrl.u32 %v52, 16
  %v67 = vrot.slane %v65, 7
  %v68 = vshll.u32 %v52, 16
  %v70 = vor.u32 %v67, %v68
  %v71 = vrot.slane %v60, 4
  %v73 = vshrl.u32 %v53, 16
  %v75 = vrot.slane %v73, 7
  %v76 = vshll.u32 %v53, 16
  %v78 = vor.u32 %v75, %v76
  %v79 = vsel %vm56, %v71, %v78
  %v80 = vrot.slane %v67, 4
  %v82 = vshrl.u32 %v54, 16
  %v84 = vrot.slane %v82, 7
  %v85 = vshll.u32 %v54, 16
  %v87 = vor.u32 %v84, %v85
  %v88 = vsel %vm56, %v80, %v87
  %v89 = vrot.slane %v75, 4
  %v90 = vrot.slane %v84, 4
  %vm97 = vcmask 1043456
  %vm98 = vmand %vm97, %vm40
  %vm99 = vcmask 1047556
  %vm100 = vmand %vm99, %vm42
  %vm101 = vmor %vm100, %vm98
  %v102 = vld [vmem:[#allocation2] sm:$0xff]
  %v103 = vsel %vm101, %v63, %v102
  %104 = vst [vmem:[#allocation2] sm:$0xff] %v103
  %v105 = vld [vmem:[#allocation2 + $0x8] sm:$0xff]
  %v106 = vsel %vm101, %v70, %v105
  %107 = vst [vmem:[#allocation2 + $0x8] sm:$0xff] %v106
  %108 = vst [vmem:[#allocation2 + $0x10] sm:$0xff] %v79
  %109 = vst [vmem:[#allocation2 + $0x18] sm:$0xff] %v88
  %v110 = vld [vmem:[#allocation2 + $0x20] sm:$0x11]
  %v111 = vsel %vm33, %v89, %v110
  %112 = vst [vmem:[#allocation2 + $0x20] sm:$0x11] %v111
  %v113 = vld [vmem:[#allocation2 + $0x28] sm:$0x11]
  %v114 = vsel %vm33, %v90, %v113
  %115 = vst [vmem:[#allocation2 + $0x28] sm:$0x11] %v114
  %v116 = vld [vmem:[#allocation2] sm:$0xff]
  %v117 = vld [vmem:[#allocation2 + $0x8] sm:$0xff]
  %v118 = vld [vmem:[#allocation2 + $0x10] sm:$0xff]
  %v119 = vld [vmem:[#allocation2 + $0x18] sm:$0xff]
  %v120 = vld [vmem:[%s1] sm:$0xff]
  %v121 = vld [vmem:[%s1 + $0x8] sm:$0xff]
  %v122 = vld [vmem:[%s1 + $0x10] sm:$0xff]
  %v123 = vld [vmem:[%s1 + $0x18] sm:$0xff]
  %v124 = vld [vmem:[%s1 + $0x20] sm:$0xff]
  %v125 = vld [vmem:[%s1 + $0x28] sm:$0xff]
  %v126 = vld [vmem:[%s1 + $0x30] sm:$0xff]
  %v127 = vld [vmem:[%s1 + $0x38] sm:$0xff]
  %v128 = vld [vmem:[%s1 + $0x40] sm:$0xff]
  %v129 = vld [vmem:[%s1 + $0x48] sm:$0xff]
  %v130 = vld [vmem:[%s1 + $0x50] sm:$0xff]
  %v131 = vld [vmem:[%s1 + $0x58] sm:$0xff]
  %v132 = vld [vmem:[%s1 + $0x60] sm:$0xff]
  %v133 = vld [vmem:[%s1 + $0x68] sm:$0xff]
  %v134 = vld [vmem:[%s1 + $0x70] sm:$0xff]
  %v135 = vld [vmem:[%s1 + $0x78] sm:$0xff]
  %v136 = vld [vmem:[%s1 + $0x80] sm:$0xff]
  %v137 = vld [vmem:[%s1 + $0x88] sm:$0xff]
  %v138 = vld [vmem:[%s1 + $0x90] sm:$0xff]
  %v139 = vld [vmem:[%s1 + $0x98] sm:$0xff]
  %v140 = vld [vmem:[%s1 + $0xa0] sm:$0xff]
  %v141 = vld [vmem:[%s1 + $0xa8] sm:$0xff]
  %v142 = vld [vmem:[%s1 + $0xb0] sm:$0xff]
  %v143 = vld [vmem:[%s1 + $0xb8] sm:$0xff]
  %v144 = vld [vmem:[%s1 + $0xc0] sm:$0xff]
  %v145 = vld [vmem:[%s1 + $0xc8] sm:$0xff]
  %v146 = vld [vmem:[%s1 + $0xd0] sm:$0xff]
  %v147 = vld [vmem:[%s1 + $0xd8] sm:$0xff]
  %v148 = vld [vmem:[%s1 + $0xe0] sm:$0xff]
  %v149 = vld [vmem:[%s1 + $0xe8] sm:$0xff]
  %v150 = vld [vmem:[%s1 + $0xf0] sm:$0xff]
  %v151 = vld [vmem:[%s1 + $0xf8] sm:$0xff]
  %v152 = vld [vmem:[%s1 + $0x100] sm:$0xff]
  %v153 = vld [vmem:[%s1 + $0x108] sm:$0xff]
  %v154 = vld [vmem:[%s1 + $0x110] sm:$0xff]
  %v155 = vld [vmem:[%s1 + $0x118] sm:$0xff]
  %v156 = vld [vmem:[%s1 + $0x120] sm:$0xff]
  %v157 = vld [vmem:[%s1 + $0x128] sm:$0xff]
  %v158 = vld [vmem:[%s1 + $0x130] sm:$0xff]
  %v159 = vld [vmem:[%s1 + $0x138] sm:$0xff]
  %v160 = vld [vmem:[%s1 + $0x140] sm:$0xff]
  %v161 = vld [vmem:[%s1 + $0x148] sm:$0xff]
  %v162 = vld [vmem:[%s1 + $0x150] sm:$0xff]
  %v163 = vld [vmem:[%s1 + $0x158] sm:$0xff]
  %v164 = vld [vmem:[%s1 + $0x160] sm:$0xff]
  %v165 = vld [vmem:[%s1 + $0x168] sm:$0xff]
  %v166 = vld [vmem:[%s1 + $0x170] sm:$0xff]
  %v167 = vld [vmem:[%s1 + $0x178] sm:$0xff]
  %v168 = vld [vmem:[%s1 + $0x180] sm:$0xff]
  %v169 = vld [vmem:[%s1 + $0x188] sm:$0xff]
  %v170 = vld [vmem:[%s1 + $0x190] sm:$0xff]
  %v171 = vld [vmem:[%s1 + $0x198] sm:$0xff]
  %v172 = vld [vmem:[%s1 + $0x1a0] sm:$0xff]
  %v173 = vld [vmem:[%s1 + $0x1a8] sm:$0xff]
  %v174 = vld [vmem:[%s1 + $0x1b0] sm:$0xff]
  %v175 = vld [vmem:[%s1 + $0x1b8] sm:$0xff]
  %v176 = vld [vmem:[%s1 + $0x1c0] sm:$0xff]
  %v177 = vld [vmem:[%s1 + $0x1c8] sm:$0xff]
  %v178 = vld [vmem:[%s1 + $0x1d0] sm:$0xff]
  %v179 = vld [vmem:[%s1 + $0x1d8] sm:$0xff]
  %v180 = vld [vmem:[%s1 + $0x1e0] sm:$0xff]
  %v181 = vld [vmem:[%s1 + $0x1e8] sm:$0xff]
  %v182 = vld [vmem:[%s1 + $0x1f0] sm:$0xff]
  %v183 = vld [vmem:[%s1 + $0x1f8] sm:$0xff]
  %v184 = vld [vmem:[%s1 + $0x200] sm:$0xff]
  %v185 = vld [vmem:[%s1 + $0x208] sm:$0xff]
  %v186 = vld [vmem:[%s1 + $0x210] sm:$0xff]
  %v187 = vld [vmem:[%s1 + $0x218] sm:$0xff]
  %v188 = vld [vmem:[%s1 + $0x220] sm:$0xff]
  %v189 = vld [vmem:[%s1 + $0x228] sm:$0xff]
  %v190 = vld [vmem:[%s1 + $0x230] sm:$0xff]
  %v191 = vld [vmem:[%s1 + $0x238] sm:$0xff]
  %v192 = vld [vmem:[%s1 + $0x240] sm:$0xff]
  %v193 = vld [vmem:[%s1 + $0x248] sm:$0xff]
  %v194 = vld [vmem:[%s1 + $0x250] sm:$0xff]
  %v195 = vld [vmem:[%s1 + $0x258] sm:$0xff]
  %v196 = vld [vmem:[%s1 + $0x260] sm:$0xff]
  %v197 = vld [vmem:[%s1 + $0x268] sm:$0xff]
  %v198 = vld [vmem:[%s1 + $0x270] sm:$0xff]
  %v199 = vld [vmem:[%s1 + $0x278] sm:$0xff]
  %v200 = vld [vmem:[%s1 + $0x280] sm:$0xff]
  %v201 = vld [vmem:[%s1 + $0x288] sm:$0xff]
  %v202 = vld [vmem:[%s1 + $0x290] sm:$0xff]
  %v203 = vld [vmem:[%s1 + $0x298] sm:$0xff]
  %v204 = vld [vmem:[%s1 + $0x2a0] sm:$0xff]
  %v205 = vld [vmem:[%s1 + $0x2a8] sm:$0xff]
  %v206 = vld [vmem:[%s1 + $0x2b0] sm:$0xff]
  %v207 = vld [vmem:[%s1 + $0x2b8] sm:$0xff]
  %v208 = vld [vmem:[%s1 + $0x2c0] sm:$0xff]
  %v209 = vld [vmem:[%s1 + $0x2c8] sm:$0xff]
  %v210 = vld [vmem:[%s1 + $0x2d0] sm:$0xff]
  %v211 = vld [vmem:[%s1 + $0x2d8] sm:$0xff]
  %v212 = vld [vmem:[%s1 + $0x2e0] sm:$0xff]
  %v213 = vld [vmem:[%s1 + $0x2e8] sm:$0xff]
  %v214 = vld [vmem:[%s1 + $0x2f0] sm:$0xff]
  %v215 = vld [vmem:[%s1 + $0x2f8] sm:$0xff]
  %v216 = vld [vmem:[%s1 + $0x300] sm:$0xff]
  %v217 = vld [vmem:[%s1 + $0x308] sm:$0xff]
  %v218 = vld [vmem:[%s1 + $0x310] sm:$0xff]
  %v219 = vld [vmem:[%s1 + $0x318] sm:$0xff]
  %v220 = vld [vmem:[%s1 + $0x320] sm:$0xff]
  %v221 = vld [vmem:[%s1 + $0x328] sm:$0xff]
  %v222 = vld [vmem:[%s1 + $0x330] sm:$0xff]
  %v223 = vld [vmem:[%s1 + $0x338] sm:$0xff]
  %v224 = vld [vmem:[%s1 + $0x340] sm:$0xff]
  %v225 = vld [vmem:[%s1 + $0x348] sm:$0xff]
  %v226 = vld [vmem:[%s1 + $0x350] sm:$0xff]
  %v227 = vld [vmem:[%s1 + $0x358] sm:$0xff]
  %v228 = vld [vmem:[%s1 + $0x360] sm:$0xff]
  %v229 = vld [vmem:[%s1 + $0x368] sm:$0xff]
  %v230 = vld [vmem:[%s1 + $0x370] sm:$0xff]
  %v231 = vld [vmem:[%s1 + $0x378] sm:$0xff]
  %v232 = vld [vmem:[%s1 + $0x380] sm:$0xff]
  %v233 = vld [vmem:[%s1 + $0x388] sm:$0xff]
  %v234 = vld [vmem:[%s1 + $0x390] sm:$0xff]
  %v235 = vld [vmem:[%s1 + $0x398] sm:$0xff]
  %v236 = vld [vmem:[%s1 + $0x3a0] sm:$0xff]
  %v237 = vld [vmem:[%s1 + $0x3a8] sm:$0xff]
  %v238 = vld [vmem:[%s1 + $0x3b0] sm:$0xff]
  %v239 = vld [vmem:[%s1 + $0x3b8] sm:$0xff]
  %v240 = vld [vmem:[%s1 + $0x3c0] sm:$0xff]
  %v241 = vld [vmem:[%s1 + $0x3c8] sm:$0xff]
  %v242 = vld [vmem:[%s1 + $0x3d0] sm:$0xff]
  %v243 = vld [vmem:[%s1 + $0x3d8] sm:$0xff]
  %v244 = vld [vmem:[%s1 + $0x3e0] sm:$0xff]
  %v245 = vld [vmem:[%s1 + $0x3e8] sm:$0xff]
  %v246 = vld [vmem:[%s1 + $0x3f0] sm:$0xff]
  %v247 = vld [vmem:[%s1 + $0x3f8] sm:$0xff]
  %v248 = vld [vmem:[#allocation2 + $0x20] sm:$0x11]
  %v249 = vld [vmem:[#allocation2 + $0x28] sm:$0x11]
  %s250 = scalar_lea.vmem %s1, 1024
  %v251 = vld [vmem:[%s250] sm:$0xff]
  %v252 = vld [vmem:[%s250 + $0x8] sm:$0xff]
  %v253 = vld [vmem:[%s250 + $0x10] sm:$0xff]
  %v254 = vld [vmem:[%s250 + $0x18] sm:$0xff]
  %v255 = vld [vmem:[%s250 + $0x20] sm:$0xff]
  %v256 = vld [vmem:[%s250 + $0x28] sm:$0xff]
  %v257 = vld [vmem:[%s250 + $0x30] sm:$0xff]
  %v258 = vld [vmem:[%s250 + $0x38] sm:$0xff]
  %v259 = vld [vmem:[%s250 + $0x40] sm:$0xff]
  %v260 = vld [vmem:[%s250 + $0x48] sm:$0xff]
  %v261 = vld [vmem:[%s250 + $0x50] sm:$0xff]
  %v262 = vld [vmem:[%s250 + $0x58] sm:$0xff]
  %v263 = vld [vmem:[%s250 + $0x60] sm:$0xff]
  %v264 = vld [vmem:[%s250 + $0x68] sm:$0xff]
  %v265 = vld [vmem:[%s250 + $0x70] sm:$0xff]
  %v266 = vld [vmem:[%s250 + $0x78] sm:$0xff]
  %v267 = vld [vmem:[%s250 + $0x80] sm:$0xff]
  %v268 = vld [vmem:[%s250 + $0x88] sm:$0xff]
  %v269 = vld [vmem:[%s250 + $0x90] sm:$0xff]
  %v270 = vld [vmem:[%s250 + $0x98] sm:$0xff]
  %v271 = vld [vmem:[%s250 + $0xa0] sm:$0xff]
  %v272 = vld [vmem:[%s250 + $0xa8] sm:$0xff]
  %v273 = vld [vmem:[%s250 + $0xb0] sm:$0xff]
  %v274 = vld [vmem:[%s250 + $0xb8] sm:$0xff]
  %v275 = vld [vmem:[%s250 + $0xc0] sm:$0xff]
  %v276 = vld [vmem:[%s250 + $0xc8] sm:$0xff]
  %v277 = vld [vmem:[%s250 + $0xd0] sm:$0xff]
  %v278 = vld [vmem:[%s250 + $0xd8] sm:$0xff]
  %v279 = vld [vmem:[%s250 + $0xe0] sm:$0xff]
  %v280 = vld [vmem:[%s250 + $0xe8] sm:$0xff]
  %v281 = vld [vmem:[%s250 + $0xf0] sm:$0xff]
  %v282 = vld [vmem:[%s250 + $0xf8] sm:$0xff]
  %v283 = vld [vmem:[%s250 + $0x100] sm:$0xff]
  %v284 = vld [vmem:[%s250 + $0x108] sm:$0xff]
  %v285 = vld [vmem:[%s250 + $0x110] sm:$0xff]
  %v286 = vld [vmem:[%s250 + $0x118] sm:$0xff]
  %v287 = vld [vmem:[%s250 + $0x120] sm:$0xff]
  %v288 = vld [vmem:[%s250 + $0x128] sm:$0xff]
  %v289 = vld [vmem:[%s250 + $0x130] sm:$0xff]
  %v290 = vld [vmem:[%s250 + $0x138] sm:$0xff]
  %v291 = vld [vmem:[%s250 + $0x140] sm:$0xff]
  %v292 = vld [vmem:[%s250 + $0x148] sm:$0xff]
  %v293 = vld [vmem:[%s250 + $0x150] sm:$0xff]
  %v294 = vld [vmem:[%s250 + $0x158] sm:$0xff]
  %v295 = vld [vmem:[%s250 + $0x160] sm:$0xff]
  %v296 = vld [vmem:[%s250 + $0x168] sm:$0xff]
  %v297 = vld [vmem:[%s250 + $0x170] sm:$0xff]
  %v298 = vld [vmem:[%s250 + $0x178] sm:$0xff]
  %v299 = vld [vmem:[%s250 + $0x180] sm:$0xff]
  %v300 = vld [vmem:[%s250 + $0x188] sm:$0xff]
  %v301 = vld [vmem:[%s250 + $0x190] sm:$0xff]
  %v302 = vld [vmem:[%s250 + $0x198] sm:$0xff]
  %v303 = vld [vmem:[%s250 + $0x1a0] sm:$0xff]
  %v304 = vld [vmem:[%s250 + $0x1a8] sm:$0xff]
  %v305 = vld [vmem:[%s250 + $0x1b0] sm:$0xff]
  %v306 = vld [vmem:[%s250 + $0x1b8] sm:$0xff]
  %v307 = vld [vmem:[%s250 + $0x1c0] sm:$0xff]
  %v308 = vld [vmem:[%s250 + $0x1c8] sm:$0xff]
  %v309 = vld [vmem:[%s250 + $0x1d0] sm:$0xff]
  %v310 = vld [vmem:[%s250 + $0x1d8] sm:$0xff]
  %v311 = vld [vmem:[%s250 + $0x1e0] sm:$0xff]
  %v312 = vld [vmem:[%s250 + $0x1e8] sm:$0xff]
  %v313 = vld [vmem:[%s250 + $0x1f0] sm:$0xff]
  %v314 = vld [vmem:[%s250 + $0x1f8] sm:$0xff]
  %v315 = vld [vmem:[%s250 + $0x200] sm:$0xff]
  %v316 = vld [vmem:[%s250 + $0x208] sm:$0xff]
  %v317 = vld [vmem:[%s250 + $0x210] sm:$0xff]
  %v318 = vld [vmem:[%s250 + $0x218] sm:$0xff]
  %v319 = vld [vmem:[%s250 + $0x220] sm:$0xff]
  %v320 = vld [vmem:[%s250 + $0x228] sm:$0xff]
  %v321 = vld [vmem:[%s250 + $0x230] sm:$0xff]
  %v322 = vld [vmem:[%s250 + $0x238] sm:$0xff]
  %v323 = vld [vmem:[%s250 + $0x240] sm:$0xff]
  %v324 = vld [vmem:[%s250 + $0x248] sm:$0xff]
  %v325 = vld [vmem:[%s250 + $0x250] sm:$0xff]
  %v326 = vld [vmem:[%s250 + $0x258] sm:$0xff]
  %v327 = vld [vmem:[%s250 + $0x260] sm:$0xff]
  %v328 = vld [vmem:[%s250 + $0x268] sm:$0xff]
  %v329 = vld [vmem:[%s250 + $0x270] sm:$0xff]
  %v330 = vld [vmem:[%s250 + $0x278] sm:$0xff]
  %v331 = vld [vmem:[%s250 + $0x280] sm:$0xff]
  %v332 = vld [vmem:[%s250 + $0x288] sm:$0xff]
  %v333 = vld [vmem:[%s250 + $0x290] sm:$0xff]
  %v334 = vld [vmem:[%s250 + $0x298] sm:$0xff]
  %v335 = vld [vmem:[%s250 + $0x2a0] sm:$0xff]
  %v336 = vld [vmem:[%s250 + $0x2a8] sm:$0xff]
  %v337 = vld [vmem:[%s250 + $0x2b0] sm:$0xff]
  %v338 = vld [vmem:[%s250 + $0x2b8] sm:$0xff]
  %v339 = vld [vmem:[%s250 + $0x2c0] sm:$0xff]
  %v340 = vld [vmem:[%s250 + $0x2c8] sm:$0xff]
  %v341 = vld [vmem:[%s250 + $0x2d0] sm:$0xff]
  %v342 = vld [vmem:[%s250 + $0x2d8] sm:$0xff]
  %v343 = vld [vmem:[%s250 + $0x2e0] sm:$0xff]
  %v344 = vld [vmem:[%s250 + $0x2e8] sm:$0xff]
  %v345 = vld [vmem:[%s250 + $0x2f0] sm:$0xff]
  %v346 = vld [vmem:[%s250 + $0x2f8] sm:$0xff]
  %v347 = vld [vmem:[%s250 + $0x300] sm:$0xff]
  %v348 = vld [vmem:[%s250 + $0x308] sm:$0xff]
  %v349 = vld [vmem:[%s250 + $0x310] sm:$0xff]
  %v350 = vld [vmem:[%s250 + $0x318] sm:$0xff]
  %v351 = vld [vmem:[%s250 + $0x320] sm:$0xff]
  %v352 = vld [vmem:[%s250 + $0x328] sm:$0xff]
  %v353 = vld [vmem:[%s250 + $0x330] sm:$0xff]
  %v354 = vld [vmem:[%s250 + $0x338] sm:$0xff]
  %v355 = vld [vmem:[%s250 + $0x340] sm:$0xff]
  %v356 = vld [vmem:[%s250 + $0x348] sm:$0xff]
  %v357 = vld [vmem:[%s250 + $0x350] sm:$0xff]
  %v358 = vld [vmem:[%s250 + $0x358] sm:$0xff]
  %v359 = vld [vmem:[%s250 + $0x360] sm:$0xff]
  %v360 = vld [vmem:[%s250 + $0x368] sm:$0xff]
  %v361 = vld [vmem:[%s250 + $0x370] sm:$0xff]
  %v362 = vld [vmem:[%s250 + $0x378] sm:$0xff]
  %v363 = vld [vmem:[%s250 + $0x380] sm:$0xff]
  %v364 = vld [vmem:[%s250 + $0x388] sm:$0xff]
  %v365 = vld [vmem:[%s250 + $0x390] sm:$0xff]
  %v366 = vld [vmem:[%s250 + $0x398] sm:$0xff]
  %v367 = vld [vmem:[%s250 + $0x3a0] sm:$0xff]
  %v368 = vld [vmem:[%s250 + $0x3a8] sm:$0xff]
  %v369 = vld [vmem:[%s250 + $0x3b0] sm:$0xff]
  %v370 = vld [vmem:[%s250 + $0x3b8] sm:$0xff]
  %v371 = vld [vmem:[%s250 + $0x3c0] sm:$0xff]
  %v372 = vld [vmem:[%s250 + $0x3c8] sm:$0xff]
  %v373 = vld [vmem:[%s250 + $0x3d0] sm:$0xff]
  %v374 = vld [vmem:[%s250 + $0x3d8] sm:$0xff]
  %v375 = vld [vmem:[%s250 + $0x3e0] sm:$0xff]
  %v376 = vld [vmem:[%s250 + $0x3e8] sm:$0xff]
  %v377 = vld [vmem:[%s250 + $0x3f0] sm:$0xff]
  %v378 = vld [vmem:[%s250 + $0x3f8] sm:$0xff]
  %v385 = vunpack.c.l.b16 %v116
  %v386 = vunpack.c.h.b16 %v116
  %v387 = vunpack.c.l.b16 %v117
  %v388 = vunpack.c.h.b16 %v117
  %v389 = vunpack.c.l.b16 %v118
  %v390 = vunpack.c.h.b16 %v118
  %v391 = vunpack.c.l.b16 %v119
  %v392 = vunpack.c.h.b16 %v119
  %v393 = vunpack.c.l.b16 %v248
  %v394 = vunpack.c.h.b16 %v248
  %v395 = vunpack.c.l.b16 %v249
  %v396 = vunpack.c.h.b16 %v249
  %v397 = vpack.c.b16 %v389, %v385
  %v398 = vpack.c.b16 %v390, %v386
  %v399 = vpack.c.b16 %v391, %v387
  %v400 = vpack.c.b16 %v392, %v388
  %v401 = vpack.c.b16 %v393, %v393
  %v402 = vpack.c.b16 %v394, %v394
  %v403 = vpack.c.b16 %v395, %v395
  %v404 = vpack.c.b16 %v396, %v396
  %vm405 = vsmask.f32 7424
  %v407 = vshrl.u32 %v397, 16
  %v409 = vshll.u32 %v397, 16
  %v411 = vrot.slane %v409, 1
  %v412 = vor.u32 %v407, %v411
  %v414 = vshll.u32 %v401, 16
  %v416 = vrot.slane %v414, 1
  %v417 = vsel %vm405, %v412, %v416
  %v419 = vshrl.u32 %v398, 16
  %v421 = vshll.u32 %v398, 16
  %v423 = vrot.slane %v421, 1
  %v424 = vor.u32 %v419, %v423
  %v426 = vshll.u32 %v402, 16
  %v428 = vrot.slane %v426, 1
  %v429 = vsel %vm405, %v424, %v428
  %v431 = vshrl.u32 %v399, 16
  %v433 = vshll.u32 %v399, 16
  %v435 = vrot.slane %v433, 1
  %v436 = vor.u32 %v431, %v435
  %v438 = vshll.u32 %v403, 16
  %v440 = vrot.slane %v438, 1
  %v441 = vsel %vm405, %v436, %v440
  %v443 = vshrl.u32 %v400, 16
  %v445 = vshll.u32 %v400, 16
  %v447 = vrot.slane %v445, 1
  %v448 = vor.u32 %v443, %v447
  %v450 = vshll.u32 %v404, 16
  %v452 = vrot.slane %v450, 1
  %v453 = vsel %vm405, %v448, %v452
  %v586 = vunpack.c.l.b16 %v251
  %v587 = vunpack.c.h.b16 %v251
  %v588 = vunpack.c.l.b16 %v252
  %v589 = vunpack.c.h.b16 %v252
  %v590 = vunpack.c.l.b16 %v253
  %v591 = vunpack.c.h.b16 %v253
  %v592 = vunpack.c.l.b16 %v254
  %v593 = vunpack.c.h.b16 %v254
  %v594 = vunpack.c.l.b16 %v255
  %v595 = vunpack.c.h.b16 %v255
  %v596 = vunpack.c.l.b16 %v256
  %v597 = vunpack.c.h.b16 %v256
  %v598 = vunpack.c.l.b16 %v257
  %v599 = vunpack.c.h.b16 %v257
  %v600 = vunpack.c.l.b16 %v258
  %v601 = vunpack.c.h.b16 %v258
  %v602 = vunpack.c.l.b16 %v259
  %v603 = vunpack.c.h.b16 %v259
  %v604 = vunpack.c.l.b16 %v260
  %v605 = vunpack.c.h.b16 %v260
  %v606 = vunpack.c.l.b16 %v261
  %v607 = vunpack.c.h.b16 %v261
  %v608 = vunpack.c.l.b16 %v262
  %v609 = vunpack.c.h.b16 %v262
  %v610 = vunpack.c.l.b16 %v263
  %v611 = vunpack.c.h.b16 %v263
  %v612 = vunpack.c.l.b16 %v264
  %v613 = vunpack.c.h.b16 %v264
  %v614 = vunpack.c.l.b16 %v265
  %v615 = vunpack.c.h.b16 %v265
  %v616 = vunpack.c.l.b16 %v266
  %v617 = vunpack.c.h.b16 %v266
  %v618 = vunpack.c.l.b16 %v267
  %v619 = vunpack.c.h.b16 %v267
  %v620 = vunpack.c.l.b16 %v268
  %v621 = vunpack.c.h.b16 %v268
  %v622 = vunpack.c.l.b16 %v269
  %v623 = vunpack.c.h.b16 %v269
  %v624 = vunpack.c.l.b16 %v270
  %v625 = vunpack.c.h.b16 %v270
  %v626 = vunpack.c.l.b16 %v271
  %v627 = vunpack.c.h.b16 %v271
  %v628 = vunpack.c.l.b16 %v272
  %v629 = vunpack.c.h.b16 %v272
  %v630 = vunpack.c.l.b16 %v273
  %v631 = vunpack.c.h.b16 %v273
  %v632 = vunpack.c.l.b16 %v274
  %v633 = vunpack.c.h.b16 %v274
  %v634 = vunpack.c.l.b16 %v275
  %v635 = vunpack.c.h.b16 %v275
  %v636 = vunpack.c.l.b16 %v276
  %v637 = vunpack.c.h.b16 %v276
  %v638 = vunpack.c.l.b16 %v277
  %v639 = vunpack.c.h.b16 %v277
  %v640 = vunpack.c.l.b16 %v278
  %v641 = vunpack.c.h.b16 %v278
  %v642 = vunpack.c.l.b16 %v279
  %v643 = vunpack.c.h.b16 %v279
  %v644 = vunpack.c.l.b16 %v280
  %v645 = vunpack.c.h.b16 %v280
  %v646 = vunpack.c.l.b16 %v281
  %v647 = vunpack.c.h.b16 %v281
  %v648 = vunpack.c.l.b16 %v282
  %v649 = vunpack.c.h.b16 %v282
  %v650 = vunpack.c.l.b16 %v283
  %v651 = vunpack.c.h.b16 %v283
  %v652 = vunpack.c.l.b16 %v284
  %v653 = vunpack.c.h.b16 %v284
  %v654 = vunpack.c.l.b16 %v285
  %v655 = vunpack.c.h.b16 %v285
  %v656 = vunpack.c.l.b16 %v286
  %v657 = vunpack.c.h.b16 %v286
  %v658 = vunpack.c.l.b16 %v287
  %v659 = vunpack.c.h.b16 %v287
  %v660 = vunpack.c.l.b16 %v288
  %v661 = vunpack.c.h.b16 %v288
  %v662 = vunpack.c.l.b16 %v289
  %v663 = vunpack.c.h.b16 %v289
  %v664 = vunpack.c.l.b16 %v290
  %v665 = vunpack.c.h.b16 %v290
  %v666 = vunpack.c.l.b16 %v291
  %v667 = vunpack.c.h.b16 %v291
  %v668 = vunpack.c.l.b16 %v292
  %v669 = vunpack.c.h.b16 %v292
  %v670 = vunpack.c.l.b16 %v293
  %v671 = vunpack.c.h.b16 %v293
  %v672 = vunpack.c.l.b16 %v294
  %v673 = vunpack.c.h.b16 %v294
  %v674 = vunpack.c.l.b16 %v295
  %v675 = vunpack.c.h.b16 %v295
  %v676 = vunpack.c.l.b16 %v296
  %v677 = vunpack.c.h.b16 %v296
  %v678 = vunpack.c.l.b16 %v297
  %v679 = vunpack.c.h.b16 %v297
  %v680 = vunpack.c.l.b16 %v298
  %v681 = vunpack.c.h.b16 %v298
  %v682 = vunpack.c.l.b16 %v299
  %v683 = vunpack.c.h.b16 %v299
  %v684 = vunpack.c.l.b16 %v300
  %v685 = vunpack.c.h.b16 %v300
  %v686 = vunpack.c.l.b16 %v301
  %v687 = vunpack.c.h.b16 %v301
  %v688 = vunpack.c.l.b16 %v302
  %v689 = vunpack.c.h.b16 %v302
  %v690 = vunpack.c.l.b16 %v303
  %v691 = vunpack.c.h.b16 %v303
  %v692 = vunpack.c.l.b16 %v304
  %v693 = vunpack.c.h.b16 %v304
  %v694 = vunpack.c.l.b16 %v305
  %v695 = vunpack.c.h.b16 %v305
  %v696 = vunpack.c.l.b16 %v306
  %v697 = vunpack.c.h.b16 %v306
  %v698 = vunpack.c.l.b16 %v307
  %v699 = vunpack.c.h.b16 %v307
  %v700 = vunpack.c.l.b16 %v308
  %v701 = vunpack.c.h.b16 %v308
  %v702 = vunpack.c.l.b16 %v309
  %v703 = vunpack.c.h.b16 %v309
  %v704 = vunpack.c.l.b16 %v310
  %v705 = vunpack.c.h.b16 %v310
  %v706 = vunpack.c.l.b16 %v311
  %v707 = vunpack.c.h.b16 %v311
  %v708 = vunpack.c.l.b16 %v312
  %v709 = vunpack.c.h.b16 %v312
  %v710 = vunpack.c.l.b16 %v313
  %v711 = vunpack.c.h.b16 %v313
  %v712 = vunpack.c.l.b16 %v314
  %v713 = vunpack.c.h.b16 %v314
  %v714 = vunpack.c.l.b16 %v315
  %v715 = vunpack.c.h.b16 %v315
  %v716 = vunpack.c.l.b16 %v316
  %v717 = vunpack.c.h.b16 %v316
  %v718 = vunpack.c.l.b16 %v317
  %v719 = vunpack.c.h.b16 %v317
  %v720 = vunpack.c.l.b16 %v318
  %v721 = vunpack.c.h.b16 %v318
  %v722 = vunpack.c.l.b16 %v319
  %v723 = vunpack.c.h.b16 %v319
  %v724 = vunpack.c.l.b16 %v320
  %v725 = vunpack.c.h.b16 %v320
  %v726 = vunpack.c.l.b16 %v321
  %v727 = vunpack.c.h.b16 %v321
  %v728 = vunpack.c.l.b16 %v322
  %v729 = vunpack.c.h.b16 %v322
  %v730 = vunpack.c.l.b16 %v323
  %v731 = vunpack.c.h.b16 %v323
  %v732 = vunpack.c.l.b16 %v324
  %v733 = vunpack.c.h.b16 %v324
  %v734 = vunpack.c.l.b16 %v325
  %v735 = vunpack.c.h.b16 %v325
  %v736 = vunpack.c.l.b16 %v326
  %v737 = vunpack.c.h.b16 %v326
  %v738 = vunpack.c.l.b16 %v327
  %v739 = vunpack.c.h.b16 %v327
  %v740 = vunpack.c.l.b16 %v328
  %v741 = vunpack.c.h.b16 %v328
  %v742 = vunpack.c.l.b16 %v329
  %v743 = vunpack.c.h.b16 %v329
  %v744 = vunpack.c.l.b16 %v330
  %v745 = vunpack.c.h.b16 %v330
  %v746 = vunpack.c.l.b16 %v331
  %v747 = vunpack.c.h.b16 %v331
  %v748 = vunpack.c.l.b16 %v332
  %v749 = vunpack.c.h.b16 %v332
  %v750 = vunpack.c.l.b16 %v333
  %v751 = vunpack.c.h.b16 %v333
  %v752 = vunpack.c.l.b16 %v334
  %v753 = vunpack.c.h.b16 %v334
  %v754 = vunpack.c.l.b16 %v335
  %v755 = vunpack.c.h.b16 %v335
  %v756 = vunpack.c.l.b16 %v336
  %v757 = vunpack.c.h.b16 %v336
  %v758 = vunpack.c.l.b16 %v337
  %v759 = vunpack.c.h.b16 %v337
  %v760 = vunpack.c.l.b16 %v338
  %v761 = vunpack.c.h.b16 %v338
  %v762 = vunpack.c.l.b16 %v339
  %v763 = vunpack.c.h.b16 %v339
  %v764 = vunpack.c.l.b16 %v340
  %v765 = vunpack.c.h.b16 %v340
  %v766 = vunpack.c.l.b16 %v341
  %v767 = vunpack.c.h.b16 %v341
  %v768 = vunpack.c.l.b16 %v342
  %v769 = vunpack.c.h.b16 %v342
  %v770 = vunpack.c.l.b16 %v343
  %v771 = vunpack.c.h.b16 %v343
  %v772 = vunpack.c.l.b16 %v344
  %v773 = vunpack.c.h.b16 %v344
  %v774 = vunpack.c.l.b16 %v345
  %v775 = vunpack.c.h.b16 %v345
  %v776 = vunpack.c.l.b16 %v346
  %v777 = vunpack.c.h.b16 %v346
  %v778 = vunpack.c.l.b16 %v347
  %v779 = vunpack.c.h.b16 %v347
  %v780 = vunpack.c.l.b16 %v348
  %v781 = vunpack.c.h.b16 %v348
  %v782 = vunpack.c.l.b16 %v349
  %v783 = vunpack.c.h.b16 %v349
  %v784 = vunpack.c.l.b16 %v350
  %v785 = vunpack.c.h.b16 %v350
  %v786 = vunpack.c.l.b16 %v351
  %v787 = vunpack.c.h.b16 %v351
  %v788 = vunpack.c.l.b16 %v352
  %v789 = vunpack.c.h.b16 %v352
  %v790 = vunpack.c.l.b16 %v353
  %v791 = vunpack.c.h.b16 %v353
  %v792 = vunpack.c.l.b16 %v354
  %v793 = vunpack.c.h.b16 %v354
  %v794 = vunpack.c.l.b16 %v355
  %v795 = vunpack.c.h.b16 %v355
  %v796 = vunpack.c.l.b16 %v356
  %v797 = vunpack.c.h.b16 %v356
  %v798 = vunpack.c.l.b16 %v357
  %v799 = vunpack.c.h.b16 %v357
  %v800 = vunpack.c.l.b16 %v358
  %v801 = vunpack.c.h.b16 %v358
  %v802 = vunpack.c.l.b16 %v359
  %v803 = vunpack.c.h.b16 %v359
  %v804 = vunpack.c.l.b16 %v360
  %v805 = vunpack.c.h.b16 %v360
  %v806 = vunpack.c.l.b16 %v361
  %v807 = vunpack.c.h.b16 %v361
  %v808 = vunpack.c.l.b16 %v362
  %v809 = vunpack.c.h.b16 %v362
  %v810 = vunpack.c.l.b16 %v363
  %v811 = vunpack.c.h.b16 %v363
  %v812 = vunpack.c.l.b16 %v364
  %v813 = vunpack.c.h.b16 %v364
  %v814 = vunpack.c.l.b16 %v365
  %v815 = vunpack.c.h.b16 %v365
  %v816 = vunpack.c.l.b16 %v366
  %v817 = vunpack.c.h.b16 %v366
  %v818 = vunpack.c.l.b16 %v367
  %v819 = vunpack.c.h.b16 %v367
  %v820 = vunpack.c.l.b16 %v368
  %v821 = vunpack.c.h.b16 %v368
  %v822 = vunpack.c.l.b16 %v369
  %v823 = vunpack.c.h.b16 %v369
  %v824 = vunpack.c.l.b16 %v370
  %v825 = vunpack.c.h.b16 %v370
  %v826 = vunpack.c.l.b16 %v371
  %v827 = vunpack.c.h.b16 %v371
  %v828 = vunpack.c.l.b16 %v372
  %v829 = vunpack.c.h.b16 %v372
  %v830 = vunpack.c.l.b16 %v373
  %v831 = vunpack.c.h.b16 %v373
  %v832 = vunpack.c.l.b16 %v374
  %v833 = vunpack.c.h.b16 %v374
  %v834 = vunpack.c.l.b16 %v375
  %v835 = vunpack.c.h.b16 %v375
  %v836 = vunpack.c.l.b16 %v376
  %v837 = vunpack.c.h.b16 %v376
  %v838 = vunpack.c.l.b16 %v377
  %v839 = vunpack.c.h.b16 %v377
  %v840 = vunpack.c.l.b16 %v378
  %v841 = vunpack.c.h.b16 %v378
  %v842 = vpack.c.b16 %v590, %v586
  %v843 = vpack.c.b16 %v591, %v587
  %v844 = vpack.c.b16 %v592, %v588
  %v845 = vpack.c.b16 %v593, %v589
  %v846 = vpack.c.b16 %v598, %v594
  %v847 = vpack.c.b16 %v599, %v595
  %v848 = vpack.c.b16 %v600, %v596
  %v849 = vpack.c.b16 %v601, %v597
  %v850 = vpack.c.b16 %v606, %v602
  %v851 = vpack.c.b16 %v607, %v603
  %v852 = vpack.c.b16 %v608, %v604
  %v853 = vpack.c.b16 %v609, %v605
  %v854 = vpack.c.b16 %v614, %v610
  %v855 = vpack.c.b16 %v615, %v611
  %v856 = vpack.c.b16 %v616, %v612
  %v857 = vpack.c.b16 %v617, %v613
  %v858 = vpack.c.b16 %v622, %v618
  %v859 = vpack.c.b16 %v623, %v619
  %v860 = vpack.c.b16 %v624, %v620
  %v861 = vpack.c.b16 %v625, %v621
  %v862 = vpack.c.b16 %v630, %v626
  %v863 = vpack.c.b16 %v631, %v627
  %v864 = vpack.c.b16 %v632, %v628
  %v865 = vpack.c.b16 %v633, %v629
  %v866 = vpack.c.b16 %v638, %v634
  %v867 = vpack.c.b16 %v639, %v635
  %v868 = vpack.c.b16 %v640, %v636
  %v869 = vpack.c.b16 %v641, %v637
  %v870 = vpack.c.b16 %v646, %v642
  %v871 = vpack.c.b16 %v647, %v643
  %v872 = vpack.c.b16 %v648, %v644
  %v873 = vpack.c.b16 %v649, %v645
  %v874 = vpack.c.b16 %v654, %v650
  %v875 = vpack.c.b16 %v655, %v651
  %v876 = vpack.c.b16 %v656, %v652
  %v877 = vpack.c.b16 %v657, %v653
  %v878 = vpack.c.b16 %v662, %v658
  %v879 = vpack.c.b16 %v663, %v659
  %v880 = vpack.c.b16 %v664, %v660
  %v881 = vpack.c.b16 %v665, %v661
  %v882 = vpack.c.b16 %v670, %v666
  %v883 = vpack.c.b16 %v671, %v667
  %v884 = vpack.c.b16 %v672, %v668
  %v885 = vpack.c.b16 %v673, %v669
  %v886 = vpack.c.b16 %v678, %v674
  %v887 = vpack.c.b16 %v679, %v675
  %v888 = vpack.c.b16 %v680, %v676
  %v889 = vpack.c.b16 %v681, %v677
  %v890 = vpack.c.b16 %v686, %v682
  %v891 = vpack.c.b16 %v687, %v683
  %v892 = vpack.c.b16 %v688, %v684
  %v893 = vpack.c.b16 %v689, %v685
  %v894 = vpack.c.b16 %v694, %v690
  %v895 = vpack.c.b16 %v695, %v691
  %v896 = vpack.c.b16 %v696, %v692
  %v897 = vpack.c.b16 %v697, %v693
  %v898 = vpack.c.b16 %v702, %v698
  %v899 = vpack.c.b16 %v703, %v699
  %v900 = vpack.c.b16 %v704, %v700
  %v901 = vpack.c.b16 %v705, %v701
  %v902 = vpack.c.b16 %v710, %v706
  %v903 = vpack.c.b16 %v711, %v707
  %v904 = vpack.c.b16 %v712, %v708
  %v905 = vpack.c.b16 %v713, %v709
  %v906 = vpack.c.b16 %v718, %v714
  %v907 = vpack.c.b16 %v719, %v715
  %v908 = vpack.c.b16 %v720, %v716
  %v909 = vpack.c.b16 %v721, %v717
  %v910 = vpack.c.b16 %v726, %v722
  %v911 = vpack.c.b16 %v727, %v723
  %v912 = vpack.c.b16 %v728, %v724
  %v913 = vpack.c.b16 %v729, %v725
  %v914 = vpack.c.b16 %v734, %v730
  %v915 = vpack.c.b16 %v735, %v731
  %v916 = vpack.c.b16 %v736, %v732
  %v917 = vpack.c.b16 %v737, %v733
  %v918 = vpack.c.b16 %v742, %v738
  %v919 = vpack.c.b16 %v743, %v739
  %v920 = vpack.c.b16 %v744, %v740
  %v921 = vpack.c.b16 %v745, %v741
  %v922 = vpack.c.b16 %v750, %v746
  %v923 = vpack.c.b16 %v751, %v747
  %v924 = vpack.c.b16 %v752, %v748
  %v925 = vpack.c.b16 %v753, %v749
  %v926 = vpack.c.b16 %v758, %v754
  %v927 = vpack.c.b16 %v759, %v755
  %v928 = vpack.c.b16 %v760, %v756
  %v929 = vpack.c.b16 %v761, %v757
  %v930 = vpack.c.b16 %v766, %v762
  %v931 = vpack.c.b16 %v767, %v763
  %v932 = vpack.c.b16 %v768, %v764
  %v933 = vpack.c.b16 %v769, %v765
  %v934 = vpack.c.b16 %v774, %v770
  %v935 = vpack.c.b16 %v775, %v771
  %v936 = vpack.c.b16 %v776, %v772
  %v937 = vpack.c.b16 %v777, %v773
  %v938 = vpack.c.b16 %v782, %v778
  %v939 = vpack.c.b16 %v783, %v779
  %v940 = vpack.c.b16 %v784, %v780
  %v941 = vpack.c.b16 %v785, %v781
  %v942 = vpack.c.b16 %v790, %v786
  %v943 = vpack.c.b16 %v791, %v787
  %v944 = vpack.c.b16 %v792, %v788
  %v945 = vpack.c.b16 %v793, %v789
  %v946 = vpack.c.b16 %v798, %v794
  %v947 = vpack.c.b16 %v799, %v795
  %v948 = vpack.c.b16 %v800, %v796
  %v949 = vpack.c.b16 %v801, %v797
  %v950 = vpack.c.b16 %v806, %v802
  %v951 = vpack.c.b16 %v807, %v803
  %v952 = vpack.c.b16 %v808, %v804
  %v953 = vpack.c.b16 %v809, %v805
  %v954 = vpack.c.b16 %v814, %v810
  %v955 = vpack.c.b16 %v815, %v811
  %v956 = vpack.c.b16 %v816, %v812
  %v957 = vpack.c.b16 %v817, %v813
  %v958 = vpack.c.b16 %v822, %v818
  %v959 = vpack.c.b16 %v823, %v819
  %v960 = vpack.c.b16 %v824, %v820
  %v961 = vpack.c.b16 %v825, %v821
  %v962 = vpack.c.b16 %v830, %v826
  %v963 = vpack.c.b16 %v831, %v827
  %v964 = vpack.c.b16 %v832, %v828
  %v965 = vpack.c.b16 %v833, %v829
  %v966 = vpack.c.b16 %v838, %v834
  %v967 = vpack.c.b16 %v839, %v835
  %v968 = vpack.c.b16 %v840, %v836
  %v969 = vpack.c.b16 %v841, %v837
  %1098 = vmatprep.subr.bf16.mxu0 %v871
  %1099 = vmatpush1.bf16.msra.mxu0 %v870
  %1100 = vmatprep.subr.bf16.mxu0 %v867
  %1101 = vmatpush1.bf16.msra.mxu0 %v866
  %1102 = vmatprep.subr.bf16.mxu0 %v863
  %1103 = vmatpush1.bf16.msra.mxu0 %v862
  %1104 = vmatprep.subr.bf16.mxu0 %v859
  %1105 = vmatpush1.bf16.msra.mxu0 %v858
  %1106 = vmatprep.subr.bf16.mxu0 %v855
  %1107 = vmatpush1.bf16.msra.mxu0 %v854
  %1108 = vmatprep.subr.bf16.mxu0 %v851
  %1109 = vmatpush1.bf16.msra.mxu0 %v850
  %1110 = vmatprep.subr.bf16.mxu0 %v847
  %1111 = vmatpush1.bf16.msra.mxu0 %v846
  %1112 = vmatprep.subr.bf16.mxu0 %v843
  %1113 = vmatpush1.bf16.msra.mxu0 %v842
  %1114 = vmatprep.subr.bf16.mxu0 %v903
  %1115 = vmatpush2.bf16.msra.mxu0 %v902
  %1116 = vmatprep.subr.bf16.mxu0 %v899
  %1117 = vmatpush2.bf16.msra.mxu0 %v898
  %1118 = vmatprep.subr.bf16.mxu0 %v895
  %1119 = vmatpush2.bf16.msra.mxu0 %v894
  %1120 = vmatprep.subr.bf16.mxu0 %v891
  %1121 = vmatpush2.bf16.msra.mxu0 %v890
  %1122 = vmatprep.subr.bf16.mxu0 %v887
  %1123 = vmatpush2.bf16.msra.mxu0 %v886
  %1124 = vmatprep.subr.bf16.mxu0 %v883
  %1125 = vmatpush2.bf16.msra.mxu0 %v882
  %1126 = vmatprep.subr.bf16.mxu0 %v879
  %1127 = vmatpush2.bf16.msra.mxu0 %v878
  %1128 = vmatprep.subr.bf16.mxu0 %v875
  %1129 = vmatpush2.bf16.msra.mxu0 %v874
  %1130 = vmatprep.mubr.bf16.mxu0 %v429
  %1131 = vmatmul.mubr.bf16.gmra.mxu0 %v417
  %v1132 = vpop.f32.mrf.mxu0
  %v1133 = vadd.f32 0.0, %v1132
  %v1134 = vpop.f32.mrf.mxu0
  %v1135 = vadd.f32 0.0, %v1134
  %v1136 = vpop.f32.mrf.mxu0
  %v1137 = vadd.f32 0.0, %v1136
  %v1138 = vpop.f32.mrf.mxu0
  %v1139 = vadd.f32 0.0, %v1138
  %1140 = vdwg.mxu0
  %1141 = vmatprep.subr.bf16.mxu0 %v935
  %1142 = vmatpush1.bf16.msra.mxu0 %v934
  %1143 = vmatprep.subr.bf16.mxu0 %v931
  %1144 = vmatpush1.bf16.msra.mxu0 %v930
  %1145 = vmatprep.subr.bf16.mxu0 %v927
  %1146 = vmatpush1.bf16.msra.mxu0 %v926
  %1147 = vmatprep.subr.bf16.mxu0 %v923
  %1148 = vmatpush1.bf16.msra.mxu0 %v922
  %1149 = vmatprep.subr.bf16.mxu0 %v919
  %1150 = vmatpush1.bf16.msra.mxu0 %v918
  %1151 = vmatprep.subr.bf16.mxu0 %v915
  %1152 = vmatpush1.bf16.msra.mxu0 %v914
  %1153 = vmatprep.subr.bf16.mxu0 %v911
  %1154 = vmatpush1.bf16.msra.mxu0 %v910
  %1155 = vmatprep.subr.bf16.mxu0 %v907
  %1156 = vmatpush1.bf16.msra.mxu0 %v906
  %1157 = vmatprep.subr.bf16.mxu0 %v967
  %1158 = vmatpush2.bf16.msra.mxu0 %v966
  %1159 = vmatprep.subr.bf16.mxu0 %v963
  %1160 = vmatpush2.bf16.msra.mxu0 %v962
  %1161 = vmatprep.subr.bf16.mxu0 %v959
  %1162 = vmatpush2.bf16.msra.mxu0 %v958
  %1163 = vmatprep.subr.bf16.mxu0 %v955
  %1164 = vmatpush2.bf16.msra.mxu0 %v954
  %1165 = vmatprep.subr.bf16.mxu0 %v951
  %1166 = vmatpush2.bf16.msra.mxu0 %v950
  %1167 = vmatprep.subr.bf16.mxu0 %v947
  %1168 = vmatpush2.bf16.msra.mxu0 %v946
  %1169 = vmatprep.subr.bf16.mxu0 %v943
  %1170 = vmatpush2.bf16.msra.mxu0 %v942
  %1171 = vmatprep.subr.bf16.mxu0 %v939
  %1172 = vmatpush2.bf16.msra.mxu0 %v938
  %1173 = vmatprep.mubr.bf16.mxu0 %v453
  %1174 = vmatmul.mubr.bf16.gmra.mxu0 %v441
  %v1175 = vpop.f32.mrf.mxu0
  %v1176 = vadd.f32 %v1133, %v1175
  %v1177 = vpop.f32.mrf.mxu0
  %v1178 = vadd.f32 %v1135, %v1177
  %v1179 = vpop.f32.mrf.mxu0
  %v1180 = vadd.f32 %v1137, %v1179
  %v1181 = vpop.f32.mrf.mxu0
  %v1182 = vadd.f32 %v1139, %v1181
  %1183 = vdwg.mxu0
  %1184 = vmatprep.subr.bf16.mxu0 %v873
  %1185 = vmatpush1.bf16.msra.mxu0 %v872
  %1186 = vmatprep.subr.bf16.mxu0 %v869
  %1187 = vmatpush1.bf16.msra.mxu0 %v868
  %1188 = vmatprep.subr.bf16.mxu0 %v865
  %1189 = vmatpush1.bf16.msra.mxu0 %v864
  %1190 = vmatprep.subr.bf16.mxu0 %v861
  %1191 = vmatpush1.bf16.msra.mxu0 %v860
  %1192 = vmatprep.subr.bf16.mxu0 %v857
  %1193 = vmatpush1.bf16.msra.mxu0 %v856
  %1194 = vmatprep.subr.bf16.mxu0 %v853
  %1195 = vmatpush1.bf16.msra.mxu0 %v852
  %1196 = vmatprep.subr.bf16.mxu0 %v849
  %1197 = vmatpush1.bf16.msra.mxu0 %v848
  %1198 = vmatprep.subr.bf16.mxu0 %v845
  %1199 = vmatpush1.bf16.msra.mxu0 %v844
  %1200 = vmatprep.subr.bf16.mxu0 %v905
  %1201 = vmatpush2.bf16.msra.mxu0 %v904
  %1202 = vmatprep.subr.bf16.mxu0 %v901
  %1203 = vmatpush2.bf16.msra.mxu0 %v900
  %1204 = vmatprep.subr.bf16.mxu0 %v897
  %1205 = vmatpush2.bf16.msra.mxu0 %v896
  %1206 = vmatprep.subr.bf16.mxu0 %v893
  %1207 = vmatpush2.bf16.msra.mxu0 %v892
  %1208 = vmatprep.subr.bf16.mxu0 %v889
  %1209 = vmatpush2.bf16.msra.mxu0 %v888
  %1210 = vmatprep.subr.bf16.mxu0 %v885
  %1211 = vmatpush2.bf16.msra.mxu0 %v884
  %1212 = vmatprep.subr.bf16.mxu0 %v881
  %1213 = vmatpush2.bf16.msra.mxu0 %v880
  %1214 = vmatprep.subr.bf16.mxu0 %v877
  %1215 = vmatpush2.bf16.msra.mxu0 %v876
  %1216 = vmatprep.mubr.bf16.mxu0 %v429
  %1217 = vmatmul.mubr.bf16.gmra.mxu0 %v417
  %v1218 = vpop.f32.mrf.mxu0
  %v1219 = vadd.f32 0.0, %v1218
  %v1220 = vpop.f32.mrf.mxu0
  %v1221 = vadd.f32 0.0, %v1220
  %v1222 = vpop.f32.mrf.mxu0
  %v1223 = vadd.f32 0.0, %v1222
  %v1224 = vpop.f32.mrf.mxu0
  %v1225 = vadd.f32 0.0, %v1224
  %1226 = vdwg.mxu0
  %1227 = vmatprep.subr.bf16.mxu0 %v937
  %1228 = vmatpush1.bf16.msra.mxu0 %v936
  %1229 = vmatprep.subr.bf16.mxu0 %v933
  %1230 = vmatpush1.bf16.msra.mxu0 %v932
  %1231 = vmatprep.subr.bf16.mxu0 %v929
  %1232 = vmatpush1.bf16.msra.mxu0 %v928
  %1233 = vmatprep.subr.bf16.mxu0 %v925
  %1234 = vmatpush1.bf16.msra.mxu0 %v924
  %1235 = vmatprep.subr.bf16.mxu0 %v921
  %1236 = vmatpush1.bf16.msra.mxu0 %v920
  %1237 = vmatprep.subr.bf16.mxu0 %v917
  %1238 = vmatpush1.bf16.msra.mxu0 %v916
  %1239 = vmatprep.subr.bf16.mxu0 %v913
  %1240 = vmatpush1.bf16.msra.mxu0 %v912
  %1241 = vmatprep.subr.bf16.mxu0 %v909
  %1242 = vmatpush1.bf16.msra.mxu0 %v908
  %1243 = vmatprep.subr.bf16.mxu0 %v969
  %1244 = vmatpush2.bf16.msra.mxu0 %v968
  %1245 = vmatprep.subr.bf16.mxu0 %v965
  %1246 = vmatpush2.bf16.msra.mxu0 %v964
  %1247 = vmatprep.subr.bf16.mxu0 %v961
  %1248 = vmatpush2.bf16.msra.mxu0 %v960
  %1249 = vmatprep.subr.bf16.mxu0 %v957
  %1250 = vmatpush2.bf16.msra.mxu0 %v956
  %1251 = vmatprep.subr.bf16.mxu0 %v953
  %1252 = vmatpush2.bf16.msra.mxu0 %v952
  %1253 = vmatprep.subr.bf16.mxu0 %v949
  %1254 = vmatpush2.bf16.msra.mxu0 %v948
  %1255 = vmatprep.subr.bf16.mxu0 %v945
  %1256 = vmatpush2.bf16.msra.mxu0 %v944
  %1257 = vmatprep.subr.bf16.mxu0 %v941
  %1258 = vmatpush2.bf16.msra.mxu0 %v940
  %1259 = vmatprep.mubr.bf16.mxu0 %v453
  %1260 = vmatmul.mubr.bf16.gmra.mxu0 %v441
  %v1261 = vpop.f32.mrf.mxu0
  %v1262 = vadd.f32 %v1219, %v1261
  %v1263 = vpop.f32.mrf.mxu0
  %v1264 = vadd.f32 %v1221, %v1263
  %v1265 = vpop.f32.mrf.mxu0
  %v1266 = vadd.f32 %v1223, %v1265
  %v1267 = vpop.f32.mrf.mxu0
  %v1268 = vadd.f32 %v1225, %v1267
  %1269 = vdwg.mxu0
  %v1402 = vunpack.c.l.b16 %v120
  %v1403 = vunpack.c.h.b16 %v120
  %v1404 = vunpack.c.l.b16 %v121
  %v1405 = vunpack.c.h.b16 %v121
  %v1406 = vunpack.c.l.b16 %v122
  %v1407 = vunpack.c.h.b16 %v122
  %v1408 = vunpack.c.l.b16 %v123
  %v1409 = vunpack.c.h.b16 %v123
  %v1410 = vunpack.c.l.b16 %v124
  %v1411 = vunpack.c.h.b16 %v124
  %v1412 = vunpack.c.l.b16 %v125
  %v1413 = vunpack.c.h.b16 %v125
  %v1414 = vunpack.c.l.b16 %v126
  %v1415 = vunpack.c.h.b16 %v126
  %v1416 = vunpack.c.l.b16 %v127
  %v1417 = vunpack.c.h.b16 %v127
  %v1418 = vunpack.c.l.b16 %v128
  %v1419 = vunpack.c.h.b16 %v128
  %v1420 = vunpack.c.l.b16 %v129
  %v1421 = vunpack.c.h.b16 %v129
  %v1422 = vunpack.c.l.b16 %v130
  %v1423 = vunpack.c.h.b16 %v130
  %v1424 = vunpack.c.l.b16 %v131
  %v1425 = vunpack.c.h.b16 %v131
  %v1426 = vunpack.c.l.b16 %v132
  %v1427 = vunpack.c.h.b16 %v132
  %v1428 = vunpack.c.l.b16 %v133
  %v1429 = vunpack.c.h.b16 %v133
  %v1430 = vunpack.c.l.b16 %v134
  %v1431 = vunpack.c.h.b16 %v134
  %v1432 = vunpack.c.l.b16 %v135
  %v1433 = vunpack.c.h.b16 %v135
  %v1434 = vunpack.c.l.b16 %v136
  %v1435 = vunpack.c.h.b16 %v136
  %v1436 = vunpack.c.l.b16 %v137
  %v1437 = vunpack.c.h.b16 %v137
  %v1438 = vunpack.c.l.b16 %v138
  %v1439 = vunpack.c.h.b16 %v138
  %v1440 = vunpack.c.l.b16 %v139
  %v1441 = vunpack.c.h.b16 %v139
  %v1442 = vunpack.c.l.b16 %v140
  %v1443 = vunpack.c.h.b16 %v140
  %v1444 = vunpack.c.l.b16 %v141
  %v1445 = vunpack.c.h.b16 %v141
  %v1446 = vunpack.c.l.b16 %v142
  %v1447 = vunpack.c.h.b16 %v142
  %v1448 = vunpack.c.l.b16 %v143
  %v1449 = vunpack.c.h.b16 %v143
  %v1450 = vunpack.c.l.b16 %v144
  %v1451 = vunpack.c.h.b16 %v144
  %v1452 = vunpack.c.l.b16 %v145
  %v1453 = vunpack.c.h.b16 %v145
  %v1454 = vunpack.c.l.b16 %v146
  %v1455 = vunpack.c.h.b16 %v146
  %v1456 = vunpack.c.l.b16 %v147
  %v1457 = vunpack.c.h.b16 %v147
  %v1458 = vunpack.c.l.b16 %v148
  %v1459 = vunpack.c.h.b16 %v148
  %v1460 = vunpack.c.l.b16 %v149
  %v1461 = vunpack.c.h.b16 %v149
  %v1462 = vunpack.c.l.b16 %v150
  %v1463 = vunpack.c.h.b16 %v150
  %v1464 = vunpack.c.l.b16 %v151
  %v1465 = vunpack.c.h.b16 %v151
  %v1466 = vunpack.c.l.b16 %v152
  %v1467 = vunpack.c.h.b16 %v152
  %v1468 = vunpack.c.l.b16 %v153
  %v1469 = vunpack.c.h.b16 %v153
  %v1470 = vunpack.c.l.b16 %v154
  %v1471 = vunpack.c.h.b16 %v154
  %v1472 = vunpack.c.l.b16 %v155
  %v1473 = vunpack.c.h.b16 %v155
  %v1474 = vunpack.c.l.b16 %v156
  %v1475 = vunpack.c.h.b16 %v156
  %v1476 = vunpack.c.l.b16 %v157
  %v1477 = vunpack.c.h.b16 %v157
  %v1478 = vunpack.c.l.b16 %v158
  %v1479 = vunpack.c.h.b16 %v158
  %v1480 = vunpack.c.l.b16 %v159
  %v1481 = vunpack.c.h.b16 %v159
  %v1482 = vunpack.c.l.b16 %v160
  %v1483 = vunpack.c.h.b16 %v160
  %v1484 = vunpack.c.l.b16 %v161
  %v1485 = vunpack.c.h.b16 %v161
  %v1486 = vunpack.c.l.b16 %v162
  %v1487 = vunpack.c.h.b16 %v162
  %v1488 = vunpack.c.l.b16 %v163
  %v1489 = vunpack.c.h.b16 %v163
  %v1490 = vunpack.c.l.b16 %v164
  %v1491 = vunpack.c.h.b16 %v164
  %v1492 = vunpack.c.l.b16 %v165
  %v1493 = vunpack.c.h.b16 %v165
  %v1494 = vunpack.c.l.b16 %v166
  %v1495 = vunpack.c.h.b16 %v166
  %v1496 = vunpack.c.l.b16 %v167
  %v1497 = vunpack.c.h.b16 %v167
  %v1498 = vunpack.c.l.b16 %v168
  %v1499 = vunpack.c.h.b16 %v168
  %v1500 = vunpack.c.l.b16 %v169
  %v1501 = vunpack.c.h.b16 %v169
  %v1502 = vunpack.c.l.b16 %v170
  %v1503 = vunpack.c.h.b16 %v170
  %v1504 = vunpack.c.l.b16 %v171
  %v1505 = vunpack.c.h.b16 %v171
  %v1506 = vunpack.c.l.b16 %v172
  %v1507 = vunpack.c.h.b16 %v172
  %v1508 = vunpack.c.l.b16 %v173
  %v1509 = vunpack.c.h.b16 %v173
  %v1510 = vunpack.c.l.b16 %v174
  %v1511 = vunpack.c.h.b16 %v174
  %v1512 = vunpack.c.l.b16 %v175
  %v1513 = vunpack.c.h.b16 %v175
  %v1514 = vunpack.c.l.b16 %v176
  %v1515 = vunpack.c.h.b16 %v176
  %v1516 = vunpack.c.l.b16 %v177
  %v1517 = vunpack.c.h.b16 %v177
  %v1518 = vunpack.c.l.b16 %v178
  %v1519 = vunpack.c.h.b16 %v178
  %v1520 = vunpack.c.l.b16 %v179
  %v1521 = vunpack.c.h.b16 %v179
  %v1522 = vunpack.c.l.b16 %v180
  %v1523 = vunpack.c.h.b16 %v180
  %v1524 = vunpack.c.l.b16 %v181
  %v1525 = vunpack.c.h.b16 %v181
  %v1526 = vunpack.c.l.b16 %v182
  %v1527 = vunpack.c.h.b16 %v182
  %v1528 = vunpack.c.l.b16 %v183
  %v1529 = vunpack.c.h.b16 %v183
  %v1530 = vunpack.c.l.b16 %v184
  %v1531 = vunpack.c.h.b16 %v184
  %v1532 = vunpack.c.l.b16 %v185
  %v1533 = vunpack.c.h.b16 %v185
  %v1534 = vunpack.c.l.b16 %v186
  %v1535 = vunpack.c.h.b16 %v186
  %v1536 = vunpack.c.l.b16 %v187
  %v1537 = vunpack.c.h.b16 %v187
  %v1538 = vunpack.c.l.b16 %v188
  %v1539 = vunpack.c.h.b16 %v188
  %v1540 = vunpack.c.l.b16 %v189
  %v1541 = vunpack.c.h.b16 %v189
  %v1542 = vunpack.c.l.b16 %v190
  %v1543 = vunpack.c.h.b16 %v190
  %v1544 = vunpack.c.l.b16 %v191
  %v1545 = vunpack.c.h.b16 %v191
  %v1546 = vunpack.c.l.b16 %v192
  %v1547 = vunpack.c.h.b16 %v192
  %v1548 = vunpack.c.l.b16 %v193
  %v1549 = vunpack.c.h.b16 %v193
  %v1550 = vunpack.c.l.b16 %v194
  %v1551 = vunpack.c.h.b16 %v194
  %v1552 = vunpack.c.l.b16 %v195
  %v1553 = vunpack.c.h.b16 %v195
  %v1554 = vunpack.c.l.b16 %v196
  %v1555 = vunpack.c.h.b16 %v196
  %v1556 = vunpack.c.l.b16 %v197
  %v1557 = vunpack.c.h.b16 %v197
  %v1558 = vunpack.c.l.b16 %v198
  %v1559 = vunpack.c.h.b16 %v198
  %v1560 = vunpack.c.l.b16 %v199
  %v1561 = vunpack.c.h.b16 %v199
  %v1562 = vunpack.c.l.b16 %v200
  %v1563 = vunpack.c.h.b16 %v200
  %v1564 = vunpack.c.l.b16 %v201
  %v1565 = vunpack.c.h.b16 %v201
  %v1566 = vunpack.c.l.b16 %v202
  %v1567 = vunpack.c.h.b16 %v202
  %v1568 = vunpack.c.l.b16 %v203
  %v1569 = vunpack.c.h.b16 %v203
  %v1570 = vunpack.c.l.b16 %v204
  %v1571 = vunpack.c.h.b16 %v204
  %v1572 = vunpack.c.l.b16 %v205
  %v1573 = vunpack.c.h.b16 %v205
  %v1574 = vunpack.c.l.b16 %v206
  %v1575 = vunpack.c.h.b16 %v206
  %v1576 = vunpack.c.l.b16 %v207
  %v1577 = vunpack.c.h.b16 %v207
  %v1578 = vunpack.c.l.b16 %v208
  %v1579 = vunpack.c.h.b16 %v208
  %v1580 = vunpack.c.l.b16 %v209
  %v1581 = vunpack.c.h.b16 %v209
  %v1582 = vunpack.c.l.b16 %v210
  %v1583 = vunpack.c.h.b16 %v210
  %v1584 = vunpack.c.l.b16 %v211
  %v1585 = vunpack.c.h.b16 %v211
  %v1586 = vunpack.c.l.b16 %v212
  %v1587 = vunpack.c.h.b16 %v212
  %v1588 = vunpack.c.l.b16 %v213
  %v1589 = vunpack.c.h.b16 %v213
  %v1590 = vunpack.c.l.b16 %v214
  %v1591 = vunpack.c.h.b16 %v214
  %v1592 = vunpack.c.l.b16 %v215
  %v1593 = vunpack.c.h.b16 %v215
  %v1594 = vunpack.c.l.b16 %v216
  %v1595 = vunpack.c.h.b16 %v216
  %v1596 = vunpack.c.l.b16 %v217
  %v1597 = vunpack.c.h.b16 %v217
  %v1598 = vunpack.c.l.b16 %v218
  %v1599 = vunpack.c.h.b16 %v218
  %v1600 = vunpack.c.l.b16 %v219
  %v1601 = vunpack.c.h.b16 %v219
  %v1602 = vunpack.c.l.b16 %v220
  %v1603 = vunpack.c.h.b16 %v220
  %v1604 = vunpack.c.l.b16 %v221
  %v1605 = vunpack.c.h.b16 %v221
  %v1606 = vunpack.c.l.b16 %v222
  %v1607 = vunpack.c.h.b16 %v222
  %v1608 = vunpack.c.l.b16 %v223
  %v1609 = vunpack.c.h.b16 %v223
  %v1610 = vunpack.c.l.b16 %v224
  %v1611 = vunpack.c.h.b16 %v224
  %v1612 = vunpack.c.l.b16 %v225
  %v1613 = vunpack.c.h.b16 %v225
  %v1614 = vunpack.c.l.b16 %v226
  %v1615 = vunpack.c.h.b16 %v226
  %v1616 = vunpack.c.l.b16 %v227
  %v1617 = vunpack.c.h.b16 %v227
  %v1618 = vunpack.c.l.b16 %v228
  %v1619 = vunpack.c.h.b16 %v228
  %v1620 = vunpack.c.l.b16 %v229
  %v1621 = vunpack.c.h.b16 %v229
  %v1622 = vunpack.c.l.b16 %v230
  %v1623 = vunpack.c.h.b16 %v230
  %v1624 = vunpack.c.l.b16 %v231
  %v1625 = vunpack.c.h.b16 %v231
  %v1626 = vunpack.c.l.b16 %v232
  %v1627 = vunpack.c.h.b16 %v232
  %v1628 = vunpack.c.l.b16 %v233
  %v1629 = vunpack.c.h.b16 %v233
  %v1630 = vunpack.c.l.b16 %v234
  %v1631 = vunpack.c.h.b16 %v234
  %v1632 = vunpack.c.l.b16 %v235
  %v1633 = vunpack.c.h.b16 %v235
  %v1634 = vunpack.c.l.b16 %v236
  %v1635 = vunpack.c.h.b16 %v236
  %v1636 = vunpack.c.l.b16 %v237
  %v1637 = vunpack.c.h.b16 %v237
  %v1638 = vunpack.c.l.b16 %v238
  %v1639 = vunpack.c.h.b16 %v238
  %v1640 = vunpack.c.l.b16 %v239
  %v1641 = vunpack.c.h.b16 %v239
  %v1642 = vunpack.c.l.b16 %v240
  %v1643 = vunpack.c.h.b16 %v240
  %v1644 = vunpack.c.l.b16 %v241
  %v1645 = vunpack.c.h.b16 %v241
  %v1646 = vunpack.c.l.b16 %v242
  %v1647 = vunpack.c.h.b16 %v242
  %v1648 = vunpack.c.l.b16 %v243
  %v1649 = vunpack.c.h.b16 %v243
  %v1650 = vunpack.c.l.b16 %v244
  %v1651 = vunpack.c.h.b16 %v244
  %v1652 = vunpack.c.l.b16 %v245
  %v1653 = vunpack.c.h.b16 %v245
  %v1654 = vunpack.c.l.b16 %v246
  %v1655 = vunpack.c.h.b16 %v246
  %v1656 = vunpack.c.l.b16 %v247
  %v1657 = vunpack.c.h.b16 %v247
  %v1658 = vpack.c.b16 %v1406, %v1402
  %v1659 = vpack.c.b16 %v1407, %v1403
  %v1660 = vpack.c.b16 %v1408, %v1404
  %v1661 = vpack.c.b16 %v1409, %v1405
  %v1662 = vpack.c.b16 %v1414, %v1410
  %v1663 = vpack.c.b16 %v1415, %v1411
  %v1664 = vpack.c.b16 %v1416, %v1412
  %v1665 = vpack.c.b16 %v1417, %v1413
  %v1666 = vpack.c.b16 %v1422, %v1418
  %v1667 = vpack.c.b16 %v1423, %v1419
  %v1668 = vpack.c.b16 %v1424, %v1420
  %v1669 = vpack.c.b16 %v1425, %v1421
  %v1670 = vpack.c.b16 %v1430, %v1426
  %v1671 = vpack.c.b16 %v1431, %v1427
  %v1672 = vpack.c.b16 %v1432, %v1428
  %v1673 = vpack.c.b16 %v1433, %v1429
  %v1674 = vpack.c.b16 %v1438, %v1434
  %v1675 = vpack.c.b16 %v1439, %v1435
  %v1676 = vpack.c.b16 %v1440, %v1436
  %v1677 = vpack.c.b16 %v1441, %v1437
  %v1678 = vpack.c.b16 %v1446, %v1442
  %v1679 = vpack.c.b16 %v1447, %v1443
  %v1680 = vpack.c.b16 %v1448, %v1444
  %v1681 = vpack.c.b16 %v1449, %v1445
  %v1682 = vpack.c.b16 %v1454, %v1450
  %v1683 = vpack.c.b16 %v1455, %v1451
  %v1684 = vpack.c.b16 %v1456, %v1452
  %v1685 = vpack.c.b16 %v1457, %v1453
  %v1686 = vpack.c.b16 %v1462, %v1458
  %v1687 = vpack.c.b16 %v1463, %v1459
  %v1688 = vpack.c.b16 %v1464, %v1460
  %v1689 = vpack.c.b16 %v1465, %v1461
  %v1690 = vpack.c.b16 %v1470, %v1466
  %v1691 = vpack.c.b16 %v1471, %v1467
  %v1692 = vpack.c.b16 %v1472, %v1468
  %v1693 = vpack.c.b16 %v1473, %v1469
  %v1694 = vpack.c.b16 %v1478, %v1474
  %v1695 = vpack.c.b16 %v1479, %v1475
  %v1696 = vpack.c.b16 %v1480, %v1476
  %v1697 = vpack.c.b16 %v1481, %v1477
  %v1698 = vpack.c.b16 %v1486, %v1482
  %v1699 = vpack.c.b16 %v1487, %v1483
  %v1700 = vpack.c.b16 %v1488, %v1484
  %v1701 = vpack.c.b16 %v1489, %v1485
  %v1702 = vpack.c.b16 %v1494, %v1490
  %v1703 = vpack.c.b16 %v1495, %v1491
  %v1704 = vpack.c.b16 %v1496, %v1492
  %v1705 = vpack.c.b16 %v1497, %v1493
  %v1706 = vpack.c.b16 %v1502, %v1498
  %v1707 = vpack.c.b16 %v1503, %v1499
  %v1708 = vpack.c.b16 %v1504, %v1500
  %v1709 = vpack.c.b16 %v1505, %v1501
  %v1710 = vpack.c.b16 %v1510, %v1506
  %v1711 = vpack.c.b16 %v1511, %v1507
  %v1712 = vpack.c.b16 %v1512, %v1508
  %v1713 = vpack.c.b16 %v1513, %v1509
  %v1714 = vpack.c.b16 %v1518, %v1514
  %v1715 = vpack.c.b16 %v1519, %v1515
  %v1716 = vpack.c.b16 %v1520, %v1516
  %v1717 = vpack.c.b16 %v1521, %v1517
  %v1718 = vpack.c.b16 %v1526, %v1522
  %v1719 = vpack.c.b16 %v1527, %v1523
  %v1720 = vpack.c.b16 %v1528, %v1524
  %v1721 = vpack.c.b16 %v1529, %v1525
  %v1722 = vpack.c.b16 %v1534, %v1530
  %v1723 = vpack.c.b16 %v1535, %v1531
  %v1724 = vpack.c.b16 %v1536, %v1532
  %v1725 = vpack.c.b16 %v1537, %v1533
  %v1726 = vpack.c.b16 %v1542, %v1538
  %v1727 = vpack.c.b16 %v1543, %v1539
  %v1728 = vpack.c.b16 %v1544, %v1540
  %v1729 = vpack.c.b16 %v1545, %v1541
  %v1730 = vpack.c.b16 %v1550, %v1546
  %v1731 = vpack.c.b16 %v1551, %v1547
  %v1732 = vpack.c.b16 %v1552, %v1548
  %v1733 = vpack.c.b16 %v1553, %v1549
  %v1734 = vpack.c.b16 %v1558, %v1554
  %v1735 = vpack.c.b16 %v1559, %v1555
  %v1736 = vpack.c.b16 %v1560, %v1556
  %v1737 = vpack.c.b16 %v1561, %v1557
  %v1738 = vpack.c.b16 %v1566, %v1562
  %v1739 = vpack.c.b16 %v1567, %v1563
  %v1740 = vpack.c.b16 %v1568, %v1564
  %v1741 = vpack.c.b16 %v1569, %v1565
  %v1742 = vpack.c.b16 %v1574, %v1570
  %v1743 = vpack.c.b16 %v1575, %v1571
  %v1744 = vpack.c.b16 %v1576, %v1572
  %v1745 = vpack.c.b16 %v1577, %v1573
  %v1746 = vpack.c.b16 %v1582, %v1578
  %v1747 = vpack.c.b16 %v1583, %v1579
  %v1748 = vpack.c.b16 %v1584, %v1580
  %v1749 = vpack.c.b16 %v1585, %v1581
  %v1750 = vpack.c.b16 %v1590, %v1586
  %v1751 = vpack.c.b16 %v1591, %v1587
  %v1752 = vpack.c.b16 %v1592, %v1588
  %v1753 = vpack.c.b16 %v1593, %v1589
  %v1754 = vpack.c.b16 %v1598, %v1594
  %v1755 = vpack.c.b16 %v1599, %v1595
  %v1756 = vpack.c.b16 %v1600, %v1596
  %v1757 = vpack.c.b16 %v1601, %v1597
  %v1758 = vpack.c.b16 %v1606, %v1602
  %v1759 = vpack.c.b16 %v1607, %v1603
  %v1760 = vpack.c.b16 %v1608, %v1604
  %v1761 = vpack.c.b16 %v1609, %v1605
  %v1762 = vpack.c.b16 %v1614, %v1610
  %v1763 = vpack.c.b16 %v1615, %v1611
  %v1764 = vpack.c.b16 %v1616, %v1612
  %v1765 = vpack.c.b16 %v1617, %v1613
  %v1766 = vpack.c.b16 %v1622, %v1618
  %v1767 = vpack.c.b16 %v1623, %v1619
  %v1768 = vpack.c.b16 %v1624, %v1620
  %v1769 = vpack.c.b16 %v1625, %v1621
  %v1770 = vpack.c.b16 %v1630, %v1626
  %v1771 = vpack.c.b16 %v1631, %v1627
  %v1772 = vpack.c.b16 %v1632, %v1628
  %v1773 = vpack.c.b16 %v1633, %v1629
  %v1774 = vpack.c.b16 %v1638, %v1634
  %v1775 = vpack.c.b16 %v1639, %v1635
  %v1776 = vpack.c.b16 %v1640, %v1636
  %v1777 = vpack.c.b16 %v1641, %v1637
  %v1778 = vpack.c.b16 %v1646, %v1642
  %v1779 = vpack.c.b16 %v1647, %v1643
  %v1780 = vpack.c.b16 %v1648, %v1644
  %v1781 = vpack.c.b16 %v1649, %v1645
  %v1782 = vpack.c.b16 %v1654, %v1650
  %v1783 = vpack.c.b16 %v1655, %v1651
  %v1784 = vpack.c.b16 %v1656, %v1652
  %v1785 = vpack.c.b16 %v1657, %v1653
  %1914 = vmatprep.subr.bf16.mxu0 %v1687
  %1915 = vmatpush1.bf16.msra.mxu0 %v1686
  %1916 = vmatprep.subr.bf16.mxu0 %v1683
  %1917 = vmatpush1.bf16.msra.mxu0 %v1682
  %1918 = vmatprep.subr.bf16.mxu0 %v1679
  %1919 = vmatpush1.bf16.msra.mxu0 %v1678
  %1920 = vmatprep.subr.bf16.mxu0 %v1675
  %1921 = vmatpush1.bf16.msra.mxu0 %v1674
  %1922 = vmatprep.subr.bf16.mxu0 %v1671
  %1923 = vmatpush1.bf16.msra.mxu0 %v1670
  %1924 = vmatprep.subr.bf16.mxu0 %v1667
  %1925 = vmatpush1.bf16.msra.mxu0 %v1666
  %1926 = vmatprep.subr.bf16.mxu0 %v1663
  %1927 = vmatpush1.bf16.msra.mxu0 %v1662
  %1928 = vmatprep.subr.bf16.mxu0 %v1659
  %1929 = vmatpush1.bf16.msra.mxu0 %v1658
  %1930 = vmatprep.subr.bf16.mxu0 %v1719
  %1931 = vmatpush2.bf16.msra.mxu0 %v1718
  %1932 = vmatprep.subr.bf16.mxu0 %v1715
  %1933 = vmatpush2.bf16.msra.mxu0 %v1714
  %1934 = vmatprep.subr.bf16.mxu0 %v1711
  %1935 = vmatpush2.bf16.msra.mxu0 %v1710
  %1936 = vmatprep.subr.bf16.mxu0 %v1707
  %1937 = vmatpush2.bf16.msra.mxu0 %v1706
  %1938 = vmatprep.subr.bf16.mxu0 %v1703
  %1939 = vmatpush2.bf16.msra.mxu0 %v1702
  %1940 = vmatprep.subr.bf16.mxu0 %v1699
  %1941 = vmatpush2.bf16.msra.mxu0 %v1698
  %1942 = vmatprep.subr.bf16.mxu0 %v1695
  %1943 = vmatpush2.bf16.msra.mxu0 %v1694
  %1944 = vmatprep.subr.bf16.mxu0 %v1691
  %1945 = vmatpush2.bf16.msra.mxu0 %v1690
  %1946 = vmatprep.mubr.bf16.mxu0 %v398
  %1947 = vmatmul.mubr.bf16.gmra.mxu0 %v397
  %v1948 = vpop.f32.mrf.mxu0
  %v1949 = vadd.f32 %v1176, %v1948
  %v1950 = vpop.f32.mrf.mxu0
  %v1951 = vadd.f32 %v1178, %v1950
  %v1952 = vpop.f32.mrf.mxu0
  %v1953 = vadd.f32 %v1180, %v1952
  %v1954 = vpop.f32.mrf.mxu0
  %v1955 = vadd.f32 %v1182, %v1954
  %1956 = vdwg.mxu0
  %1957 = vmatprep.subr.bf16.mxu0 %v1751
  %1958 = vmatpush1.bf16.msra.mxu0 %v1750
  %1959 = vmatprep.subr.bf16.mxu0 %v1747
  %1960 = vmatpush1.bf16.msra.mxu0 %v1746
  %1961 = vmatprep.subr.bf16.mxu0 %v1743
  %1962 = vmatpush1.bf16.msra.mxu0 %v1742
  %1963 = vmatprep.subr.bf16.mxu0 %v1739
  %1964 = vmatpush1.bf16.msra.mxu0 %v1738
  %1965 = vmatprep.subr.bf16.mxu0 %v1735
  %1966 = vmatpush1.bf16.msra.mxu0 %v1734
  %1967 = vmatprep.subr.bf16.mxu0 %v1731
  %1968 = vmatpush1.bf16.msra.mxu0 %v1730
  %1969 = vmatprep.subr.bf16.mxu0 %v1727
  %1970 = vmatpush1.bf16.msra.mxu0 %v1726
  %1971 = vmatprep.subr.bf16.mxu0 %v1723
  %1972 = vmatpush1.bf16.msra.mxu0 %v1722
  %1973 = vmatprep.subr.bf16.mxu0 %v1783
  %1974 = vmatpush2.bf16.msra.mxu0 %v1782
  %1975 = vmatprep.subr.bf16.mxu0 %v1779
  %1976 = vmatpush2.bf16.msra.mxu0 %v1778
  %1977 = vmatprep.subr.bf16.mxu0 %v1775
  %1978 = vmatpush2.bf16.msra.mxu0 %v1774
  %1979 = vmatprep.subr.bf16.mxu0 %v1771
  %1980 = vmatpush2.bf16.msra.mxu0 %v1770
  %1981 = vmatprep.subr.bf16.mxu0 %v1767
  %1982 = vmatpush2.bf16.msra.mxu0 %v1766
  %1983 = vmatprep.subr.bf16.mxu0 %v1763
  %1984 = vmatpush2.bf16.msra.mxu0 %v1762
  %1985 = vmatprep.subr.bf16.mxu0 %v1759
  %1986 = vmatpush2.bf16.msra.mxu0 %v1758
  %1987 = vmatprep.subr.bf16.mxu0 %v1755
  %1988 = vmatpush2.bf16.msra.mxu0 %v1754
  %1989 = vmatprep.mubr.bf16.mxu0 %v400
  %1990 = vmatmul.mubr.bf16.gmra.mxu0 %v399
  %v1991 = vpop.f32.mrf.mxu0
  %v1992 = vadd.f32 %v1949, %v1991
  %v1993 = vpop.f32.mrf.mxu0
  %v1994 = vadd.f32 %v1951, %v1993
  %v1995 = vpop.f32.mrf.mxu0
  %v1996 = vadd.f32 %v1953, %v1995
  %v1997 = vpop.f32.mrf.mxu0
  %v1998 = vadd.f32 %v1955, %v1997
  %1999 = vdwg.mxu0
  %2000 = vmatprep.subr.bf16.mxu0 %v1689
  %2001 = vmatpush1.bf16.msra.mxu0 %v1688
  %2002 = vmatprep.subr.bf16.mxu0 %v1685
  %2003 = vmatpush1.bf16.msra.mxu0 %v1684
  %2004 = vmatprep.subr.bf16.mxu0 %v1681
  %2005 = vmatpush1.bf16.msra.mxu0 %v1680
  %2006 = vmatprep.subr.bf16.mxu0 %v1677
  %2007 = vmatpush1.bf16.msra.mxu0 %v1676
  %2008 = vmatprep.subr.bf16.mxu0 %v1673
  %2009 = vmatpush1.bf16.msra.mxu0 %v1672
  %2010 = vmatprep.subr.bf16.mxu0 %v1669
  %2011 = vmatpush1.bf16.msra.mxu0 %v1668
  %2012 = vmatprep.subr.bf16.mxu0 %v1665
  %2013 = vmatpush1.bf16.msra.mxu0 %v1664
  %2014 = vmatprep.subr.bf16.mxu0 %v1661
  %2015 = vmatpush1.bf16.msra.mxu0 %v1660
  %2016 = vmatprep.subr.bf16.mxu0 %v1721
  %2017 = vmatpush2.bf16.msra.mxu0 %v1720
  %2018 = vmatprep.subr.bf16.mxu0 %v1717
  %2019 = vmatpush2.bf16.msra.mxu0 %v1716
  %2020 = vmatprep.subr.bf16.mxu0 %v1713
  %2021 = vmatpush2.bf16.msra.mxu0 %v1712
  %2022 = vmatprep.subr.bf16.mxu0 %v1709
  %2023 = vmatpush2.bf16.msra.mxu0 %v1708
  %2024 = vmatprep.subr.bf16.mxu0 %v1705
  %2025 = vmatpush2.bf16.msra.mxu0 %v1704
  %2026 = vmatprep.subr.bf16.mxu0 %v1701
  %2027 = vmatpush2.bf16.msra.mxu0 %v1700
  %2028 = vmatprep.subr.bf16.mxu0 %v1697
  %2029 = vmatpush2.bf16.msra.mxu0 %v1696
  %2030 = vmatprep.subr.bf16.mxu0 %v1693
  %2031 = vmatpush2.bf16.msra.mxu0 %v1692
  %2032 = vmatprep.mubr.bf16.mxu0 %v398
  %2033 = vmatmul.mubr.bf16.gmra.mxu0 %v397
  %v2034 = vpop.f32.mrf.mxu0
  %v2035 = vadd.f32 %v1262, %v2034
  %v2036 = vpop.f32.mrf.mxu0
  %v2037 = vadd.f32 %v1264, %v2036
  %v2038 = vpop.f32.mrf.mxu0
  %v2039 = vadd.f32 %v1266, %v2038
  %v2040 = vpop.f32.mrf.mxu0
  %v2041 = vadd.f32 %v1268, %v2040
  %2042 = vdwg.mxu0
  %2043 = vmatprep.subr.bf16.mxu0 %v1753
  %2044 = vmatpush1.bf16.msra.mxu0 %v1752
  %2045 = vmatprep.subr.bf16.mxu0 %v1749
  %2046 = vmatpush1.bf16.msra.mxu0 %v1748
  %2047 = vmatprep.subr.bf16.mxu0 %v1745
  %2048 = vmatpush1.bf16.msra.mxu0 %v1744
  %2049 = vmatprep.subr.bf16.mxu0 %v1741
  %2050 = vmatpush1.bf16.msra.mxu0 %v1740
  %2051 = vmatprep.subr.bf16.mxu0 %v1737
  %2052 = vmatpush1.bf16.msra.mxu0 %v1736
  %2053 = vmatprep.subr.bf16.mxu0 %v1733
  %2054 = vmatpush1.bf16.msra.mxu0 %v1732
  %2055 = vmatprep.subr.bf16.mxu0 %v1729
  %2056 = vmatpush1.bf16.msra.mxu0 %v1728
  %2057 = vmatprep.subr.bf16.mxu0 %v1725
  %2058 = vmatpush1.bf16.msra.mxu0 %v1724
  %2059 = vmatprep.subr.bf16.mxu0 %v1785
  %2060 = vmatpush2.bf16.msra.mxu0 %v1784
  %2061 = vmatprep.subr.bf16.mxu0 %v1781
  %2062 = vmatpush2.bf16.msra.mxu0 %v1780
  %2063 = vmatprep.subr.bf16.mxu0 %v1777
  %2064 = vmatpush2.bf16.msra.mxu0 %v1776
  %2065 = vmatprep.subr.bf16.mxu0 %v1773
  %2066 = vmatpush2.bf16.msra.mxu0 %v1772
  %2067 = vmatprep.subr.bf16.mxu0 %v1769
  %2068 = vmatpush2.bf16.msra.mxu0 %v1768
  %2069 = vmatprep.subr.bf16.mxu0 %v1765
  %2070 = vmatpush2.bf16.msra.mxu0 %v1764
  %2071 = vmatprep.subr.bf16.mxu0 %v1761
  %2072 = vmatpush2.bf16.msra.mxu0 %v1760
  %2073 = vmatprep.subr.bf16.mxu0 %v1757
  %2074 = vmatpush2.bf16.msra.mxu0 %v1756
  %2075 = vmatprep.mubr.bf16.mxu0 %v400
  %2076 = vmatmul.mubr.bf16.gmra.mxu0 %v399
  %v2077 = vpop.f32.mrf.mxu0
  %v2078 = vadd.f32 %v2035, %v2077
  %v2079 = vpop.f32.mrf.mxu0
  %v2080 = vadd.f32 %v2037, %v2079
  %v2081 = vpop.f32.mrf.mxu0
  %v2082 = vadd.f32 %v2039, %v2081
  %v2083 = vpop.f32.mrf.mxu0
  %v2084 = vadd.f32 %v2041, %v2083
  %2085 = vdwg.mxu0
  %v2086 = vld [vmem:[#allocation2] sm:$0xee]
  %v2087 = vld [vmem:[#allocation2 + $0x8] sm:$0xee]
  %s2088 = scalar_lea.vmem %s1, 2048
  %v2089 = vld [vmem:[%s2088] sm:$0xff]
  %v2090 = vld [vmem:[%s2088 + $0x8] sm:$0xff]
  %v2091 = vld [vmem:[%s2088 + $0x10] sm:$0xff]
  %v2092 = vld [vmem:[%s2088 + $0x18] sm:$0xff]
  %v2093 = vld [vmem:[%s2088 + $0x20] sm:$0xff]
  %v2094 = vld [vmem:[%s2088 + $0x28] sm:$0xff]
  %v2095 = vld [vmem:[%s2088 + $0x30] sm:$0xff]
  %v2096 = vld [vmem:[%s2088 + $0x38] sm:$0xff]
  %v2097 = vld [vmem:[%s2088 + $0x40] sm:$0xff]
  %v2098 = vld [vmem:[%s2088 + $0x48] sm:$0xff]
  %v2099 = vld [vmem:[%s2088 + $0x50] sm:$0xff]
  %v2100 = vld [vmem:[%s2088 + $0x58] sm:$0xff]
  %v2101 = vld [vmem:[%s2088 + $0x60] sm:$0xff]
  %v2102 = vld [vmem:[%s2088 + $0x68] sm:$0xff]
  %v2103 = vld [vmem:[%s2088 + $0x70] sm:$0xff]
  %v2104 = vld [vmem:[%s2088 + $0x78] sm:$0xff]
  %v2105 = vld [vmem:[%s2088 + $0x80] sm:$0xff]
  %v2106 = vld [vmem:[%s2088 + $0x88] sm:$0xff]
  %v2107 = vld [vmem:[%s2088 + $0x90] sm:$0xff]
  %v2108 = vld [vmem:[%s2088 + $0x98] sm:$0xff]
  %v2109 = vld [vmem:[%s2088 + $0xa0] sm:$0xff]
  %v2110 = vld [vmem:[%s2088 + $0xa8] sm:$0xff]
  %v2111 = vld [vmem:[%s2088 + $0xb0] sm:$0xff]
  %v2112 = vld [vmem:[%s2088 + $0xb8] sm:$0xff]
  %v2113 = vld [vmem:[%s2088 + $0xc0] sm:$0xff]
  %v2114 = vld [vmem:[%s2088 + $0xc8] sm:$0xff]
  %v2115 = vld [vmem:[%s2088 + $0xd0] sm:$0xff]
  %v2116 = vld [vmem:[%s2088 + $0xd8] sm:$0xff]
  %v2117 = vld [vmem:[%s2088 + $0xe0] sm:$0xff]
  %v2118 = vld [vmem:[%s2088 + $0xe8] sm:$0xff]
  %v2119 = vld [vmem:[%s2088 + $0xf0] sm:$0xff]
  %v2120 = vld [vmem:[%s2088 + $0xf8] sm:$0xff]
  %v2121 = vld [vmem:[%s2088 + $0x100] sm:$0xff]
  %v2122 = vld [vmem:[%s2088 + $0x108] sm:$0xff]
  %v2123 = vld [vmem:[%s2088 + $0x110] sm:$0xff]
  %v2124 = vld [vmem:[%s2088 + $0x118] sm:$0xff]
  %v2125 = vld [vmem:[%s2088 + $0x120] sm:$0xff]
  %v2126 = vld [vmem:[%s2088 + $0x128] sm:$0xff]
  %v2127 = vld [vmem:[%s2088 + $0x130] sm:$0xff]
  %v2128 = vld [vmem:[%s2088 + $0x138] sm:$0xff]
  %v2129 = vld [vmem:[%s2088 + $0x140] sm:$0xff]
  %v2130 = vld [vmem:[%s2088 + $0x148] sm:$0xff]
  %v2131 = vld [vmem:[%s2088 + $0x150] sm:$0xff]
  %v2132 = vld [vmem:[%s2088 + $0x158] sm:$0xff]
  %v2133 = vld [vmem:[%s2088 + $0x160] sm:$0xff]
  %v2134 = vld [vmem:[%s2088 + $0x168] sm:$0xff]
  %v2135 = vld [vmem:[%s2088 + $0x170] sm:$0xff]
  %v2136 = vld [vmem:[%s2088 + $0x178] sm:$0xff]
  %v2137 = vld [vmem:[%s2088 + $0x180] sm:$0xff]
  %v2138 = vld [vmem:[%s2088 + $0x188] sm:$0xff]
  %v2139 = vld [vmem:[%s2088 + $0x190] sm:$0xff]
  %v2140 = vld [vmem:[%s2088 + $0x198] sm:$0xff]
  %v2141 = vld [vmem:[%s2088 + $0x1a0] sm:$0xff]
  %v2142 = vld [vmem:[%s2088 + $0x1a8] sm:$0xff]
  %v2143 = vld [vmem:[%s2088 + $0x1b0] sm:$0xff]
  %v2144 = vld [vmem:[%s2088 + $0x1b8] sm:$0xff]
  %v2145 = vld [vmem:[%s2088 + $0x1c0] sm:$0xff]
  %v2146 = vld [vmem:[%s2088 + $0x1c8] sm:$0xff]
  %v2147 = vld [vmem:[%s2088 + $0x1d0] sm:$0xff]
  %v2148 = vld [vmem:[%s2088 + $0x1d8] sm:$0xff]
  %v2149 = vld [vmem:[%s2088 + $0x1e0] sm:$0xff]
  %v2150 = vld [vmem:[%s2088 + $0x1e8] sm:$0xff]
  %v2151 = vld [vmem:[%s2088 + $0x1f0] sm:$0xff]
  %v2152 = vld [vmem:[%s2088 + $0x1f8] sm:$0xff]
  %v2153 = vld [vmem:[%s2088 + $0x200] sm:$0xff]
  %v2154 = vld [vmem:[%s2088 + $0x208] sm:$0xff]
  %v2155 = vld [vmem:[%s2088 + $0x210] sm:$0xff]
  %v2156 = vld [vmem:[%s2088 + $0x218] sm:$0xff]
  %v2157 = vld [vmem:[%s2088 + $0x220] sm:$0xff]
  %v2158 = vld [vmem:[%s2088 + $0x228] sm:$0xff]
  %v2159 = vld [vmem:[%s2088 + $0x230] sm:$0xff]
  %v2160 = vld [vmem:[%s2088 + $0x238] sm:$0xff]
  %v2161 = vld [vmem:[%s2088 + $0x240] sm:$0xff]
  %v2162 = vld [vmem:[%s2088 + $0x248] sm:$0xff]
  %v2163 = vld [vmem:[%s2088 + $0x250] sm:$0xff]
  %v2164 = vld [vmem:[%s2088 + $0x258] sm:$0xff]
  %v2165 = vld [vmem:[%s2088 + $0x260] sm:$0xff]
  %v2166 = vld [vmem:[%s2088 + $0x268] sm:$0xff]
  %v2167 = vld [vmem:[%s2088 + $0x270] sm:$0xff]
  %v2168 = vld [vmem:[%s2088 + $0x278] sm:$0xff]
  %v2169 = vld [vmem:[%s2088 + $0x280] sm:$0xff]
  %v2170 = vld [vmem:[%s2088 + $0x288] sm:$0xff]
  %v2171 = vld [vmem:[%s2088 + $0x290] sm:$0xff]
  %v2172 = vld [vmem:[%s2088 + $0x298] sm:$0xff]
  %v2173 = vld [vmem:[%s2088 + $0x2a0] sm:$0xff]
  %v2174 = vld [vmem:[%s2088 + $0x2a8] sm:$0xff]
  %v2175 = vld [vmem:[%s2088 + $0x2b0] sm:$0xff]
  %v2176 = vld [vmem:[%s2088 + $0x2b8] sm:$0xff]
  %v2177 = vld [vmem:[%s2088 + $0x2c0] sm:$0xff]
  %v2178 = vld [vmem:[%s2088 + $0x2c8] sm:$0xff]
  %v2179 = vld [vmem:[%s2088 + $0x2d0] sm:$0xff]
  %v2180 = vld [vmem:[%s2088 + $0x2d8] sm:$0xff]
  %v2181 = vld [vmem:[%s2088 + $0x2e0] sm:$0xff]
  %v2182 = vld [vmem:[%s2088 + $0x2e8] sm:$0xff]
  %v2183 = vld [vmem:[%s2088 + $0x2f0] sm:$0xff]
  %v2184 = vld [vmem:[%s2088 + $0x2f8] sm:$0xff]
  %v2185 = vld [vmem:[%s2088 + $0x300] sm:$0xff]
  %v2186 = vld [vmem:[%s2088 + $0x308] sm:$0xff]
  %v2187 = vld [vmem:[%s2088 + $0x310] sm:$0xff]
  %v2188 = vld [vmem:[%s2088 + $0x318] sm:$0xff]
  %v2189 = vld [vmem:[%s2088 + $0x320] sm:$0xff]
  %v2190 = vld [vmem:[%s2088 + $0x328] sm:$0xff]
  %v2191 = vld [vmem:[%s2088 + $0x330] sm:$0xff]
  %v2192 = vld [vmem:[%s2088 + $0x338] sm:$0xff]
  %v2193 = vld [vmem:[%s2088 + $0x340] sm:$0xff]
  %v2194 = vld [vmem:[%s2088 + $0x348] sm:$0xff]
  %v2195 = vld [vmem:[%s2088 + $0x350] sm:$0xff]
  %v2196 = vld [vmem:[%s2088 + $0x358] sm:$0xff]
  %v2197 = vld [vmem:[%s2088 + $0x360] sm:$0xff]
  %v2198 = vld [vmem:[%s2088 + $0x368] sm:$0xff]
  %v2199 = vld [vmem:[%s2088 + $0x370] sm:$0xff]
  %v2200 = vld [vmem:[%s2088 + $0x378] sm:$0xff]
  %v2201 = vld [vmem:[%s2088 + $0x380] sm:$0xff]
  %v2202 = vld [vmem:[%s2088 + $0x388] sm:$0xff]
  %v2203 = vld [vmem:[%s2088 + $0x390] sm:$0xff]
  %v2204 = vld [vmem:[%s2088 + $0x398] sm:$0xff]
  %v2205 = vld [vmem:[%s2088 + $0x3a0] sm:$0xff]
  %v2206 = vld [vmem:[%s2088 + $0x3a8] sm:$0xff]
  %v2207 = vld [vmem:[%s2088 + $0x3b0] sm:$0xff]
  %v2208 = vld [vmem:[%s2088 + $0x3b8] sm:$0xff]
  %v2209 = vld [vmem:[%s2088 + $0x3c0] sm:$0xff]
  %v2210 = vld [vmem:[%s2088 + $0x3c8] sm:$0xff]
  %v2211 = vld [vmem:[%s2088 + $0x3d0] sm:$0xff]
  %v2212 = vld [vmem:[%s2088 + $0x3d8] sm:$0xff]
  %v2213 = vld [vmem:[%s2088 + $0x3e0] sm:$0xff]
  %v2214 = vld [vmem:[%s2088 + $0x3e8] sm:$0xff]
  %v2215 = vld [vmem:[%s2088 + $0x3f0] sm:$0xff]
  %v2216 = vld [vmem:[%s2088 + $0x3f8] sm:$0xff]
  %v2219 = vunpack.c.l.b16 %v2086
  %v2220 = vunpack.c.h.b16 %v2086
  %v2221 = vunpack.c.l.b16 %v2087
  %v2222 = vunpack.c.h.b16 %v2087
  %v2223 = vpack.c.b16 %v389, %v2219
  %v2224 = vpack.c.b16 %v390, %v2220
  %v2225 = vpack.c.b16 %v391, %v2221
  %v2226 = vpack.c.b16 %v392, %v2222
  %vm2227 = vcmask 1046528
  %v2228 = vrot.slane %v2223, 1
  %v2229 = vrot.slane %v401, 1
  %v2230 = vsel %vm2227, %v2228, %v2229
  %v2231 = vrot.slane %v2224, 1
  %v2232 = vrot.slane %v402, 1
  %v2233 = vsel %vm2227, %v2231, %v2232
  %v2234 = vrot.slane %v2225, 1
  %v2235 = vrot.slane %v403, 1
  %v2236 = vsel %vm2227, %v2234, %v2235
  %v2237 = vrot.slane %v2226, 1
  %v2238 = vrot.slane %v404, 1
  %v2239 = vsel %vm2227, %v2237, %v2238
  %v2372 = vunpack.c.l.b16 %v2089
  %v2373 = vunpack.c.h.b16 %v2089
  %v2374 = vunpack.c.l.b16 %v2090
  %v2375 = vunpack.c.h.b16 %v2090
  %v2376 = vunpack.c.l.b16 %v2091
  %v2377 = vunpack.c.h.b16 %v2091
  %v2378 = vunpack.c.l.b16 %v2092
  %v2379 = vunpack.c.h.b16 %v2092
  %v2380 = vunpack.c.l.b16 %v2093
  %v2381 = vunpack.c.h.b16 %v2093
  %v2382 = vunpack.c.l.b16 %v2094
  %v2383 = vunpack.c.h.b16 %v2094
  %v2384 = vunpack.c.l.b16 %v2095
  %v2385 = vunpack.c.h.b16 %v2095
  %v2386 = vunpack.c.l.b16 %v2096
  %v2387 = vunpack.c.h.b16 %v2096
  %v2388 = vunpack.c.l.b16 %v2097
  %v2389 = vunpack.c.h.b16 %v2097
  %v2390 = vunpack.c.l.b16 %v2098
  %v2391 = vunpack.c.h.b16 %v2098
  %v2392 = vunpack.c.l.b16 %v2099
  %v2393 = vunpack.c.h.b16 %v2099
  %v2394 = vunpack.c.l.b16 %v2100
  %v2395 = vunpack.c.h.b16 %v2100
  %v2396 = vunpack.c.l.b16 %v2101
  %v2397 = vunpack.c.h.b16 %v2101
  %v2398 = vunpack.c.l.b16 %v2102
  %v2399 = vunpack.c.h.b16 %v2102
  %v2400 = vunpack.c.l.b16 %v2103
  %v2401 = vunpack.c.h.b16 %v2103
  %v2402 = vunpack.c.l.b16 %v2104
  %v2403 = vunpack.c.h.b16 %v2104
  %v2404 = vunpack.c.l.b16 %v2105
  %v2405 = vunpack.c.h.b16 %v2105
  %v2406 = vunpack.c.l.b16 %v2106
  %v2407 = vunpack.c.h.b16 %v2106
  %v2408 = vunpack.c.l.b16 %v2107
  %v2409 = vunpack.c.h.b16 %v2107
  %v2410 = vunpack.c.l.b16 %v2108
  %v2411 = vunpack.c.h.b16 %v2108
  %v2412 = vunpack.c.l.b16 %v2109
  %v2413 = vunpack.c.h.b16 %v2109
  %v2414 = vunpack.c.l.b16 %v2110
  %v2415 = vunpack.c.h.b16 %v2110
  %v2416 = vunpack.c.l.b16 %v2111
  %v2417 = vunpack.c.h.b16 %v2111
  %v2418 = vunpack.c.l.b16 %v2112
  %v2419 = vunpack.c.h.b16 %v2112
  %v2420 = vunpack.c.l.b16 %v2113
  %v2421 = vunpack.c.h.b16 %v2113
  %v2422 = vunpack.c.l.b16 %v2114
  %v2423 = vunpack.c.h.b16 %v2114
  %v2424 = vunpack.c.l.b16 %v2115
  %v2425 = vunpack.c.h.b16 %v2115
  %v2426 = vunpack.c.l.b16 %v2116
  %v2427 = vunpack.c.h.b16 %v2116
  %v2428 = vunpack.c.l.b16 %v2117
  %v2429 = vunpack.c.h.b16 %v2117
  %v2430 = vunpack.c.l.b16 %v2118
  %v2431 = vunpack.c.h.b16 %v2118
  %v2432 = vunpack.c.l.b16 %v2119
  %v2433 = vunpack.c.h.b16 %v2119
  %v2434 = vunpack.c.l.b16 %v2120
  %v2435 = vunpack.c.h.b16 %v2120
  %v2436 = vunpack.c.l.b16 %v2121
  %v2437 = vunpack.c.h.b16 %v2121
  %v2438 = vunpack.c.l.b16 %v2122
  %v2439 = vunpack.c.h.b16 %v2122
  %v2440 = vunpack.c.l.b16 %v2123
  %v2441 = vunpack.c.h.b16 %v2123
  %v2442 = vunpack.c.l.b16 %v2124
  %v2443 = vunpack.c.h.b16 %v2124
  %v2444 = vunpack.c.l.b16 %v2125
  %v2445 = vunpack.c.h.b16 %v2125
  %v2446 = vunpack.c.l.b16 %v2126
  %v2447 = vunpack.c.h.b16 %v2126
  %v2448 = vunpack.c.l.b16 %v2127
  %v2449 = vunpack.c.h.b16 %v2127
  %v2450 = vunpack.c.l.b16 %v2128
  %v2451 = vunpack.c.h.b16 %v2128
  %v2452 = vunpack.c.l.b16 %v2129
  %v2453 = vunpack.c.h.b16 %v2129
  %v2454 = vunpack.c.l.b16 %v2130
  %v2455 = vunpack.c.h.b16 %v2130
  %v2456 = vunpack.c.l.b16 %v2131
  %v2457 = vunpack.c.h.b16 %v2131
  %v2458 = vunpack.c.l.b16 %v2132
  %v2459 = vunpack.c.h.b16 %v2132
  %v2460 = vunpack.c.l.b16 %v2133
  %v2461 = vunpack.c.h.b16 %v2133
  %v2462 = vunpack.c.l.b16 %v2134
  %v2463 = vunpack.c.h.b16 %v2134
  %v2464 = vunpack.c.l.b16 %v2135
  %v2465 = vunpack.c.h.b16 %v2135
  %v2466 = vunpack.c.l.b16 %v2136
  %v2467 = vunpack.c.h.b16 %v2136
  %v2468 = vunpack.c.l.b16 %v2137
  %v2469 = vunpack.c.h.b16 %v2137
  %v2470 = vunpack.c.l.b16 %v2138
  %v2471 = vunpack.c.h.b16 %v2138
  %v2472 = vunpack.c.l.b16 %v2139
  %v2473 = vunpack.c.h.b16 %v2139
  %v2474 = vunpack.c.l.b16 %v2140
  %v2475 = vunpack.c.h.b16 %v2140
  %v2476 = vunpack.c.l.b16 %v2141
  %v2477 = vunpack.c.h.b16 %v2141
  %v2478 = vunpack.c.l.b16 %v2142
  %v2479 = vunpack.c.h.b16 %v2142
  %v2480 = vunpack.c.l.b16 %v2143
  %v2481 = vunpack.c.h.b16 %v2143
  %v2482 = vunpack.c.l.b16 %v2144
  %v2483 = vunpack.c.h.b16 %v2144
  %v2484 = vunpack.c.l.b16 %v2145
  %v2485 = vunpack.c.h.b16 %v2145
  %v2486 = vunpack.c.l.b16 %v2146
  %v2487 = vunpack.c.h.b16 %v2146
  %v2488 = vunpack.c.l.b16 %v2147
  %v2489 = vunpack.c.h.b16 %v2147
  %v2490 = vunpack.c.l.b16 %v2148
  %v2491 = vunpack.c.h.b16 %v2148
  %v2492 = vunpack.c.l.b16 %v2149
  %v2493 = vunpack.c.h.b16 %v2149
  %v2494 = vunpack.c.l.b16 %v2150
  %v2495 = vunpack.c.h.b16 %v2150
  %v2496 = vunpack.c.l.b16 %v2151
  %v2497 = vunpack.c.h.b16 %v2151
  %v2498 = vunpack.c.l.b16 %v2152
  %v2499 = vunpack.c.h.b16 %v2152
  %v2500 = vunpack.c.l.b16 %v2153
  %v2501 = vunpack.c.h.b16 %v2153
  %v2502 = vunpack.c.l.b16 %v2154
  %v2503 = vunpack.c.h.b16 %v2154
  %v2504 = vunpack.c.l.b16 %v2155
  %v2505 = vunpack.c.h.b16 %v2155
  %v2506 = vunpack.c.l.b16 %v2156
  %v2507 = vunpack.c.h.b16 %v2156
  %v2508 = vunpack.c.l.b16 %v2157
  %v2509 = vunpack.c.h.b16 %v2157
  %v2510 = vunpack.c.l.b16 %v2158
  %v2511 = vunpack.c.h.b16 %v2158
  %v2512 = vunpack.c.l.b16 %v2159
  %v2513 = vunpack.c.h.b16 %v2159
  %v2514 = vunpack.c.l.b16 %v2160
  %v2515 = vunpack.c.h.b16 %v2160
  %v2516 = vunpack.c.l.b16 %v2161
  %v2517 = vunpack.c.h.b16 %v2161
  %v2518 = vunpack.c.l.b16 %v2162
  %v2519 = vunpack.c.h.b16 %v2162
  %v2520 = vunpack.c.l.b16 %v2163
  %v2521 = vunpack.c.h.b16 %v2163
  %v2522 = vunpack.c.l.b16 %v2164
  %v2523 = vunpack.c.h.b16 %v2164
  %v2524 = vunpack.c.l.b16 %v2165
  %v2525 = vunpack.c.h.b16 %v2165
  %v2526 = vunpack.c.l.b16 %v2166
  %v2527 = vunpack.c.h.b16 %v2166
  %v2528 = vunpack.c.l.b16 %v2167
  %v2529 = vunpack.c.h.b16 %v2167
  %v2530 = vunpack.c.l.b16 %v2168
  %v2531 = vunpack.c.h.b16 %v2168
  %v2532 = vunpack.c.l.b16 %v2169
  %v2533 = vunpack.c.h.b16 %v2169
  %v2534 = vunpack.c.l.b16 %v2170
  %v2535 = vunpack.c.h.b16 %v2170
  %v2536 = vunpack.c.l.b16 %v2171
  %v2537 = vunpack.c.h.b16 %v2171
  %v2538 = vunpack.c.l.b16 %v2172
  %v2539 = vunpack.c.h.b16 %v2172
  %v2540 = vunpack.c.l.b16 %v2173
  %v2541 = vunpack.c.h.b16 %v2173
  %v2542 = vunpack.c.l.b16 %v2174
  %v2543 = vunpack.c.h.b16 %v2174
  %v2544 = vunpack.c.l.b16 %v2175
  %v2545 = vunpack.c.h.b16 %v2175
  %v2546 = vunpack.c.l.b16 %v2176
  %v2547 = vunpack.c.h.b16 %v2176
  %v2548 = vunpack.c.l.b16 %v2177
  %v2549 = vunpack.c.h.b16 %v2177
  %v2550 = vunpack.c.l.b16 %v2178
  %v2551 = vunpack.c.h.b16 %v2178
  %v2552 = vunpack.c.l.b16 %v2179
  %v2553 = vunpack.c.h.b16 %v2179
  %v2554 = vunpack.c.l.b16 %v2180
  %v2555 = vunpack.c.h.b16 %v2180
  %v2556 = vunpack.c.l.b16 %v2181
  %v2557 = vunpack.c.h.b16 %v2181
  %v2558 = vunpack.c.l.b16 %v2182
  %v2559 = vunpack.c.h.b16 %v2182
  %v2560 = vunpack.c.l.b16 %v2183
  %v2561 = vunpack.c.h.b16 %v2183
  %v2562 = vunpack.c.l.b16 %v2184
  %v2563 = vunpack.c.h.b16 %v2184
  %v2564 = vunpack.c.l.b16 %v2185
  %v2565 = vunpack.c.h.b16 %v2185
  %v2566 = vunpack.c.l.b16 %v2186
  %v2567 = vunpack.c.h.b16 %v2186
  %v2568 = vunpack.c.l.b16 %v2187
  %v2569 = vunpack.c.h.b16 %v2187
  %v2570 = vunpack.c.l.b16 %v2188
  %v2571 = vunpack.c.h.b16 %v2188
  %v2572 = vunpack.c.l.b16 %v2189
  %v2573 = vunpack.c.h.b16 %v2189
  %v2574 = vunpack.c.l.b16 %v2190
  %v2575 = vunpack.c.h.b16 %v2190
  %v2576 = vunpack.c.l.b16 %v2191
  %v2577 = vunpack.c.h.b16 %v2191
  %v2578 = vunpack.c.l.b16 %v2192
  %v2579 = vunpack.c.h.b16 %v2192
  %v2580 = vunpack.c.l.b16 %v2193
  %v2581 = vunpack.c.h.b16 %v2193
  %v2582 = vunpack.c.l.b16 %v2194
  %v2583 = vunpack.c.h.b16 %v2194
  %v2584 = vunpack.c.l.b16 %v2195
  %v2585 = vunpack.c.h.b16 %v2195
  %v2586 = vunpack.c.l.b16 %v2196
  %v2587 = vunpack.c.h.b16 %v2196
  %v2588 = vunpack.c.l.b16 %v2197
  %v2589 = vunpack.c.h.b16 %v2197
  %v2590 = vunpack.c.l.b16 %v2198
  %v2591 = vunpack.c.h.b16 %v2198
  %v2592 = vunpack.c.l.b16 %v2199
  %v2593 = vunpack.c.h.b16 %v2199
  %v2594 = vunpack.c.l.b16 %v2200
  %v2595 = vunpack.c.h.b16 %v2200
  %v2596 = vunpack.c.l.b16 %v2201
  %v2597 = vunpack.c.h.b16 %v2201
  %v2598 = vunpack.c.l.b16 %v2202
  %v2599 = vunpack.c.h.b16 %v2202
  %v2600 = vunpack.c.l.b16 %v2203
  %v2601 = vunpack.c.h.b16 %v2203
  %v2602 = vunpack.c.l.b16 %v2204
  %v2603 = vunpack.c.h.b16 %v2204
  %v2604 = vunpack.c.l.b16 %v2205
  %v2605 = vunpack.c.h.b16 %v2205
  %v2606 = vunpack.c.l.b16 %v2206
  %v2607 = vunpack.c.h.b16 %v2206
  %v2608 = vunpack.c.l.b16 %v2207
  %v2609 = vunpack.c.h.b16 %v2207
  %v2610 = vunpack.c.l.b16 %v2208
  %v2611 = vunpack.c.h.b16 %v2208
  %v2612 = vunpack.c.l.b16 %v2209
  %v2613 = vunpack.c.h.b16 %v2209
  %v2614 = vunpack.c.l.b16 %v2210
  %v2615 = vunpack.c.h.b16 %v2210
  %v2616 = vunpack.c.l.b16 %v2211
  %v2617 = vunpack.c.h.b16 %v2211
  %v2618 = vunpack.c.l.b16 %v2212
  %v2619 = vunpack.c.h.b16 %v2212
  %v2620 = vunpack.c.l.b16 %v2213
  %v2621 = vunpack.c.h.b16 %v2213
  %v2622 = vunpack.c.l.b16 %v2214
  %v2623 = vunpack.c.h.b16 %v2214
  %v2624 = vunpack.c.l.b16 %v2215
  %v2625 = vunpack.c.h.b16 %v2215
  %v2626 = vunpack.c.l.b16 %v2216
  %v2627 = vunpack.c.h.b16 %v2216
  %v2628 = vpack.c.b16 %v2376, %v2372
  %v2629 = vpack.c.b16 %v2377, %v2373
  %v2630 = vpack.c.b16 %v2378, %v2374
  %v2631 = vpack.c.b16 %v2379, %v2375
  %v2632 = vpack.c.b16 %v2384, %v2380
  %v2633 = vpack.c.b16 %v2385, %v2381
  %v2634 = vpack.c.b16 %v2386, %v2382
  %v2635 = vpack.c.b16 %v2387, %v2383
  %v2636 = vpack.c.b16 %v2392, %v2388
  %v2637 = vpack.c.b16 %v2393, %v2389
  %v2638 = vpack.c.b16 %v2394, %v2390
  %v2639 = vpack.c.b16 %v2395, %v2391
  %v2640 = vpack.c.b16 %v2400, %v2396
  %v2641 = vpack.c.b16 %v2401, %v2397
  %v2642 = vpack.c.b16 %v2402, %v2398
  %v2643 = vpack.c.b16 %v2403, %v2399
  %v2644 = vpack.c.b16 %v2408, %v2404
  %v2645 = vpack.c.b16 %v2409, %v2405
  %v2646 = vpack.c.b16 %v2410, %v2406
  %v2647 = vpack.c.b16 %v2411, %v2407
  %v2648 = vpack.c.b16 %v2416, %v2412
  %v2649 = vpack.c.b16 %v2417, %v2413
  %v2650 = vpack.c.b16 %v2418, %v2414
  %v2651 = vpack.c.b16 %v2419, %v2415
  %v2652 = vpack.c.b16 %v2424, %v2420
  %v2653 = vpack.c.b16 %v2425, %v2421
  %v2654 = vpack.c.b16 %v2426, %v2422
  %v2655 = vpack.c.b16 %v2427, %v2423
  %v2656 = vpack.c.b16 %v2432, %v2428
  %v2657 = vpack.c.b16 %v2433, %v2429
  %v2658 = vpack.c.b16 %v2434, %v2430
  %v2659 = vpack.c.b16 %v2435, %v2431
  %v2660 = vpack.c.b16 %v2440, %v2436
  %v2661 = vpack.c.b16 %v2441, %v2437
  %v2662 = vpack.c.b16 %v2442, %v2438
  %v2663 = vpack.c.b16 %v2443, %v2439
  %v2664 = vpack.c.b16 %v2448, %v2444
  %v2665 = vpack.c.b16 %v2449, %v2445
  %v2666 = vpack.c.b16 %v2450, %v2446
  %v2667 = vpack.c.b16 %v2451, %v2447
  %v2668 = vpack.c.b16 %v2456, %v2452
  %v2669 = vpack.c.b16 %v2457, %v2453
  %v2670 = vpack.c.b16 %v2458, %v2454
  %v2671 = vpack.c.b16 %v2459, %v2455
  %v2672 = vpack.c.b16 %v2464, %v2460
  %v2673 = vpack.c.b16 %v2465, %v2461
  %v2674 = vpack.c.b16 %v2466, %v2462
  %v2675 = vpack.c.b16 %v2467, %v2463
  %v2676 = vpack.c.b16 %v2472, %v2468
  %v2677 = vpack.c.b16 %v2473, %v2469
  %v2678 = vpack.c.b16 %v2474, %v2470
  %v2679 = vpack.c.b16 %v2475, %v2471
  %v2680 = vpack.c.b16 %v2480, %v2476
  %v2681 = vpack.c.b16 %v2481, %v2477
  %v2682 = vpack.c.b16 %v2482, %v2478
  %v2683 = vpack.c.b16 %v2483, %v2479
  %v2684 = vpack.c.b16 %v2488, %v2484
  %v2685 = vpack.c.b16 %v2489, %v2485
  %v2686 = vpack.c.b16 %v2490, %v2486
  %v2687 = vpack.c.b16 %v2491, %v2487
  %v2688 = vpack.c.b16 %v2496, %v2492
  %v2689 = vpack.c.b16 %v2497, %v2493
  %v2690 = vpack.c.b16 %v2498, %v2494
  %v2691 = vpack.c.b16 %v2499, %v2495
  %v2692 = vpack.c.b16 %v2504, %v2500
  %v2693 = vpack.c.b16 %v2505, %v2501
  %v2694 = vpack.c.b16 %v2506, %v2502
  %v2695 = vpack.c.b16 %v2507, %v2503
  %v2696 = vpack.c.b16 %v2512, %v2508
  %v2697 = vpack.c.b16 %v2513, %v2509
  %v2698 = vpack.c.b16 %v2514, %v2510
  %v2699 = vpack.c.b16 %v2515, %v2511
  %v2700 = vpack.c.b16 %v2520, %v2516
  %v2701 = vpack.c.b16 %v2521, %v2517
  %v2702 = vpack.c.b16 %v2522, %v2518
  %v2703 = vpack.c.b16 %v2523, %v2519
  %v2704 = vpack.c.b16 %v2528, %v2524
  %v2705 = vpack.c.b16 %v2529, %v2525
  %v2706 = vpack.c.b16 %v2530, %v2526
  %v2707 = vpack.c.b16 %v2531, %v2527
  %v2708 = vpack.c.b16 %v2536, %v2532
  %v2709 = vpack.c.b16 %v2537, %v2533
  %v2710 = vpack.c.b16 %v2538, %v2534
  %v2711 = vpack.c.b16 %v2539, %v2535
  %v2712 = vpack.c.b16 %v2544, %v2540
  %v2713 = vpack.c.b16 %v2545, %v2541
  %v2714 = vpack.c.b16 %v2546, %v2542
  %v2715 = vpack.c.b16 %v2547, %v2543
  %v2716 = vpack.c.b16 %v2552, %v2548
  %v2717 = vpack.c.b16 %v2553, %v2549
  %v2718 = vpack.c.b16 %v2554, %v2550
  %v2719 = vpack.c.b16 %v2555, %v2551
  %v2720 = vpack.c.b16 %v2560, %v2556
  %v2721 = vpack.c.b16 %v2561, %v2557
  %v2722 = vpack.c.b16 %v2562, %v2558
  %v2723 = vpack.c.b16 %v2563, %v2559
  %v2724 = vpack.c.b16 %v2568, %v2564
  %v2725 = vpack.c.b16 %v2569, %v2565
  %v2726 = vpack.c.b16 %v2570, %v2566
  %v2727 = vpack.c.b16 %v2571, %v2567
  %v2728 = vpack.c.b16 %v2576, %v2572
  %v2729 = vpack.c.b16 %v2577, %v2573
  %v2730 = vpack.c.b16 %v2578, %v2574
  %v2731 = vpack.c.b16 %v2579, %v2575
  %v2732 = vpack.c.b16 %v2584, %v2580
  %v2733 = vpack.c.b16 %v2585, %v2581
  %v2734 = vpack.c.b16 %v2586, %v2582
  %v2735 = vpack.c.b16 %v2587, %v2583
  %v2736 = vpack.c.b16 %v2592, %v2588
  %v2737 = vpack.c.b16 %v2593, %v2589
  %v2738 = vpack.c.b16 %v2594, %v2590
  %v2739 = vpack.c.b16 %v2595, %v2591
  %v2740 = vpack.c.b16 %v2600, %v2596
  %v2741 = vpack.c.b16 %v2601, %v2597
  %v2742 = vpack.c.b16 %v2602, %v2598
  %v2743 = vpack.c.b16 %v2603, %v2599
  %v2744 = vpack.c.b16 %v2608, %v2604
  %v2745 = vpack.c.b16 %v2609, %v2605
  %v2746 = vpack.c.b16 %v2610, %v2606
  %v2747 = vpack.c.b16 %v2611, %v2607
  %v2748 = vpack.c.b16 %v2616, %v2612
  %v2749 = vpack.c.b16 %v2617, %v2613
  %v2750 = vpack.c.b16 %v2618, %v2614
  %v2751 = vpack.c.b16 %v2619, %v2615
  %v2752 = vpack.c.b16 %v2624, %v2620
  %v2753 = vpack.c.b16 %v2625, %v2621
  %v2754 = vpack.c.b16 %v2626, %v2622
  %v2755 = vpack.c.b16 %v2627, %v2623
  %2884 = vmatprep.subr.bf16.mxu0 %v2657
  %2885 = vmatpush1.bf16.msra.mxu0 %v2656
  %2886 = vmatprep.subr.bf16.mxu0 %v2653
  %2887 = vmatpush1.bf16.msra.mxu0 %v2652
  %2888 = vmatprep.subr.bf16.mxu0 %v2649
  %2889 = vmatpush1.bf16.msra.mxu0 %v2648
  %2890 = vmatprep.subr.bf16.mxu0 %v2645
  %2891 = vmatpush1.bf16.msra.mxu0 %v2644
  %2892 = vmatprep.subr.bf16.mxu0 %v2641
  %2893 = vmatpush1.bf16.msra.mxu0 %v2640
  %2894 = vmatprep.subr.bf16.mxu0 %v2637
  %2895 = vmatpush1.bf16.msra.mxu0 %v2636
  %2896 = vmatprep.subr.bf16.mxu0 %v2633
  %2897 = vmatpush1.bf16.msra.mxu0 %v2632
  %2898 = vmatprep.subr.bf16.mxu0 %v2629
  %2899 = vmatpush1.bf16.msra.mxu0 %v2628
  %2900 = vmatprep.subr.bf16.mxu0 %v2689
  %2901 = vmatpush2.bf16.msra.mxu0 %v2688
  %2902 = vmatprep.subr.bf16.mxu0 %v2685
  %2903 = vmatpush2.bf16.msra.mxu0 %v2684
  %2904 = vmatprep.subr.bf16.mxu0 %v2681
  %2905 = vmatpush2.bf16.msra.mxu0 %v2680
  %2906 = vmatprep.subr.bf16.mxu0 %v2677
  %2907 = vmatpush2.bf16.msra.mxu0 %v2676
  %2908 = vmatprep.subr.bf16.mxu0 %v2673
  %2909 = vmatpush2.bf16.msra.mxu0 %v2672
  %2910 = vmatprep.subr.bf16.mxu0 %v2669
  %2911 = vmatpush2.bf16.msra.mxu0 %v2668
  %2912 = vmatprep.subr.bf16.mxu0 %v2665
  %2913 = vmatpush2.bf16.msra.mxu0 %v2664
  %2914 = vmatprep.subr.bf16.mxu0 %v2661
  %2915 = vmatpush2.bf16.msra.mxu0 %v2660
  %2916 = vmatprep.mubr.bf16.mxu0 %v2233
  %2917 = vmatmul.mubr.bf16.gmra.mxu0 %v2230
  %v2918 = vpop.f32.mrf.mxu0
  %v2919 = vadd.f32 0.0, %v2918
  %v2920 = vpop.f32.mrf.mxu0
  %v2921 = vadd.f32 0.0, %v2920
  %v2922 = vpop.f32.mrf.mxu0
  %v2923 = vadd.f32 0.0, %v2922
  %v2924 = vpop.f32.mrf.mxu0
  %v2925 = vadd.f32 0.0, %v2924
  %2926 = vdwg.mxu0
  %2927 = vmatprep.subr.bf16.mxu0 %v2721
  %2928 = vmatpush1.bf16.msra.mxu0 %v2720
  %2929 = vmatprep.subr.bf16.mxu0 %v2717
  %2930 = vmatpush1.bf16.msra.mxu0 %v2716
  %2931 = vmatprep.subr.bf16.mxu0 %v2713
  %2932 = vmatpush1.bf16.msra.mxu0 %v2712
  %2933 = vmatprep.subr.bf16.mxu0 %v2709
  %2934 = vmatpush1.bf16.msra.mxu0 %v2708
  %2935 = vmatprep.subr.bf16.mxu0 %v2705
  %2936 = vmatpush1.bf16.msra.mxu0 %v2704
  %2937 = vmatprep.subr.bf16.mxu0 %v2701
  %2938 = vmatpush1.bf16.msra.mxu0 %v2700
  %2939 = vmatprep.subr.bf16.mxu0 %v2697
  %2940 = vmatpush1.bf16.msra.mxu0 %v2696
  %2941 = vmatprep.subr.bf16.mxu0 %v2693
  %2942 = vmatpush1.bf16.msra.mxu0 %v2692
  %2943 = vmatprep.subr.bf16.mxu0 %v2753
  %2944 = vmatpush2.bf16.msra.mxu0 %v2752
  %2945 = vmatprep.subr.bf16.mxu0 %v2749
  %2946 = vmatpush2.bf16.msra.mxu0 %v2748
  %2947 = vmatprep.subr.bf16.mxu0 %v2745
  %2948 = vmatpush2.bf16.msra.mxu0 %v2744
  %2949 = vmatprep.subr.bf16.mxu0 %v2741
  %2950 = vmatpush2.bf16.msra.mxu0 %v2740
  %2951 = vmatprep.subr.bf16.mxu0 %v2737
  %2952 = vmatpush2.bf16.msra.mxu0 %v2736
  %2953 = vmatprep.subr.bf16.mxu0 %v2733
  %2954 = vmatpush2.bf16.msra.mxu0 %v2732
  %2955 = vmatprep.subr.bf16.mxu0 %v2729
  %2956 = vmatpush2.bf16.msra.mxu0 %v2728
  %2957 = vmatprep.subr.bf16.mxu0 %v2725
  %2958 = vmatpush2.bf16.msra.mxu0 %v2724
  %2959 = vmatprep.mubr.bf16.mxu0 %v2239
  %2960 = vmatmul.mubr.bf16.gmra.mxu0 %v2236
  %v2961 = vpop.f32.mrf.mxu0
  %v2962 = vadd.f32 %v2919, %v2961
  %v2963 = vpop.f32.mrf.mxu0
  %v2964 = vadd.f32 %v2921, %v2963
  %v2965 = vpop.f32.mrf.mxu0
  %v2966 = vadd.f32 %v2923, %v2965
  %v2967 = vpop.f32.mrf.mxu0
  %v2968 = vadd.f32 %v2925, %v2967
  %2969 = vdwg.mxu0
  %2970 = vmatprep.subr.bf16.mxu0 %v2659
  %2971 = vmatpush1.bf16.msra.mxu0 %v2658
  %2972 = vmatprep.subr.bf16.mxu0 %v2655
  %2973 = vmatpush1.bf16.msra.mxu0 %v2654
  %2974 = vmatprep.subr.bf16.mxu0 %v2651
  %2975 = vmatpush1.bf16.msra.mxu0 %v2650
  %2976 = vmatprep.subr.bf16.mxu0 %v2647
  %2977 = vmatpush1.bf16.msra.mxu0 %v2646
  %2978 = vmatprep.subr.bf16.mxu0 %v2643
  %2979 = vmatpush1.bf16.msra.mxu0 %v2642
  %2980 = vmatprep.subr.bf16.mxu0 %v2639
  %2981 = vmatpush1.bf16.msra.mxu0 %v2638
  %2982 = vmatprep.subr.bf16.mxu0 %v2635
  %2983 = vmatpush1.bf16.msra.mxu0 %v2634
  %2984 = vmatprep.subr.bf16.mxu0 %v2631
  %2985 = vmatpush1.bf16.msra.mxu0 %v2630
  %2986 = vmatprep.subr.bf16.mxu0 %v2691
  %2987 = vmatpush2.bf16.msra.mxu0 %v2690
  %2988 = vmatprep.subr.bf16.mxu0 %v2687
  %2989 = vmatpush2.bf16.msra.mxu0 %v2686
  %2990 = vmatprep.subr.bf16.mxu0 %v2683
  %2991 = vmatpush2.bf16.msra.mxu0 %v2682
  %2992 = vmatprep.subr.bf16.mxu0 %v2679
  %2993 = vmatpush2.bf16.msra.mxu0 %v2678
  %2994 = vmatprep.subr.bf16.mxu0 %v2675
  %2995 = vmatpush2.bf16.msra.mxu0 %v2674
  %2996 = vmatprep.subr.bf16.mxu0 %v2671
  %2997 = vmatpush2.bf16.msra.mxu0 %v2670
  %2998 = vmatprep.subr.bf16.mxu0 %v2667
  %2999 = vmatpush2.bf16.msra.mxu0 %v2666
  %3000 = vmatprep.subr.bf16.mxu0 %v2663
  %3001 = vmatpush2.bf16.msra.mxu0 %v2662
  %3002 = vmatprep.mubr.bf16.mxu0 %v2233
  %3003 = vmatmul.mubr.bf16.gmra.mxu0 %v2230
  %v3004 = vpop.f32.mrf.mxu0
  %v3005 = vadd.f32 0.0, %v3004
  %v3006 = vpop.f32.mrf.mxu0
  %v3007 = vadd.f32 0.0, %v3006
  %v3008 = vpop.f32.mrf.mxu0
  %v3009 = vadd.f32 0.0, %v3008
  %v3010 = vpop.f32.mrf.mxu0
  %v3011 = vadd.f32 0.0, %v3010
  %3012 = vdwg.mxu0
  %3013 = vmatprep.subr.bf16.mxu0 %v2723
  %3014 = vmatpush1.bf16.msra.mxu0 %v2722
  %3015 = vmatprep.subr.bf16.mxu0 %v2719
  %3016 = vmatpush1.bf16.msra.mxu0 %v2718
  %3017 = vmatprep.subr.bf16.mxu0 %v2715
  %3018 = vmatpush1.bf16.msra.mxu0 %v2714
  %3019 = vmatprep.subr.bf16.mxu0 %v2711
  %3020 = vmatpush1.bf16.msra.mxu0 %v2710
  %3021 = vmatprep.subr.bf16.mxu0 %v2707
  %3022 = vmatpush1.bf16.msra.mxu0 %v2706
  %3023 = vmatprep.subr.bf16.mxu0 %v2703
  %3024 = vmatpush1.bf16.msra.mxu0 %v2702
  %3025 = vmatprep.subr.bf16.mxu0 %v2699
  %3026 = vmatpush1.bf16.msra.mxu0 %v2698
  %3027 = vmatprep.subr.bf16.mxu0 %v2695
  %3028 = vmatpush1.bf16.msra.mxu0 %v2694
  %3029 = vmatprep.subr.bf16.mxu0 %v2755
  %3030 = vmatpush2.bf16.msra.mxu0 %v2754
  %3031 = vmatprep.subr.bf16.mxu0 %v2751
  %3032 = vmatpush2.bf16.msra.mxu0 %v2750
  %3033 = vmatprep.subr.bf16.mxu0 %v2747
  %3034 = vmatpush2.bf16.msra.mxu0 %v2746
  %3035 = vmatprep.subr.bf16.mxu0 %v2743
  %3036 = vmatpush2.bf16.msra.mxu0 %v2742
  %3037 = vmatprep.subr.bf16.mxu0 %v2739
  %3038 = vmatpush2.bf16.msra.mxu0 %v2738
  %3039 = vmatprep.subr.bf16.mxu0 %v2735
  %3040 = vmatpush2.bf16.msra.mxu0 %v2734
  %3041 = vmatprep.subr.bf16.mxu0 %v2731
  %3042 = vmatpush2.bf16.msra.mxu0 %v2730
  %3043 = vmatprep.subr.bf16.mxu0 %v2727
  %3044 = vmatpush2.bf16.msra.mxu0 %v2726
  %3045 = vmatprep.mubr.bf16.mxu0 %v2239
  %3046 = vmatmul.mubr.bf16.gmra.mxu0 %v2236
  %v3047 = vpop.f32.mrf.mxu0
  %v3048 = vadd.f32 %v3005, %v3047
  %v3049 = vpop.f32.mrf.mxu0
  %v3050 = vadd.f32 %v3007, %v3049
  %v3051 = vpop.f32.mrf.mxu0
  %v3052 = vadd.f32 %v3009, %v3051
  %v3053 = vpop.f32.mrf.mxu0
  %v3054 = vadd.f32 %v3011, %v3053
  %3055 = vdwg.mxu0
  %v3056 = vadd.f32 %v1992, %v2962
  %v3057 = vadd.f32 %v1994, %v2964
  %v3058 = vadd.f32 %v2078, %v3048
  %v3059 = vadd.f32 %v2080, %v3050
  %v3060 = vadd.f32 %v1996, %v2966
  %v3061 = vadd.f32 %v1998, %v2968
  %v3062 = vadd.f32 %v2082, %v3052
  %v3063 = vadd.f32 %v2084, %v3054
  %3064 = vst [vmem:[#allocation3] sm:$0xff] %v3056
  %3065 = vst [vmem:[#allocation3 + $0x8] sm:$0xff] %v3057
  %3066 = vst [vmem:[#allocation3 + $0x10] sm:$0xff] %v3058
  %3067 = vst [vmem:[#allocation3 + $0x18] sm:$0xff] %v3059
  %3068 = vst [vmem:[#allocation3 + $0x20] sm:$0xff] %v3060
  %3069 = vst [vmem:[#allocation3 + $0x28] sm:$0xff] %v3061
  %3070 = vst [vmem:[#allocation3 + $0x30] sm:$0xff] %v3062
  %3071 = vst [vmem:[#allocation3 + $0x38] sm:$0xff] %v3063
  %v3072 = vadd.f32 %v3056, %v3060
  %v3073 = vrot.slane %v3072, 4
  %v3074 = vadd.f32 %v3072, %v3073
  %v3075 = vrot.slane %v3074, 2
  %v3076 = vadd.f32 %v3074, %v3075
  %v3077 = vrot.slane %v3076, 1
  %v3078 = vadd.f32 %v3076, %v3077
  %v3079 = vadd.f32 %v3057, %v3061
  %v3080 = vrot.slane %v3079, 4
  %v3081 = vadd.f32 %v3079, %v3080
  %v3082 = vrot.slane %v3081, 2
  %v3083 = vadd.f32 %v3081, %v3082
  %v3084 = vrot.slane %v3083, 1
  %v3085 = vadd.f32 %v3083, %v3084
  %v3086 = vadd.f32 %v3058, %v3062
  %v3087 = vrot.slane %v3086, 4
  %v3088 = vadd.f32 %v3086, %v3087
  %v3089 = vrot.slane %v3088, 2
  %v3090 = vadd.f32 %v3088, %v3089
  %v3091 = vrot.slane %v3090, 1
  %v3092 = vadd.f32 %v3090, %v3091
  %v3093 = vadd.f32 %v3059, %v3063
  %v3094 = vrot.slane %v3093, 4
  %v3095 = vadd.f32 %v3093, %v3094
  %v3096 = vrot.slane %v3095, 2
  %v3097 = vadd.f32 %v3095, %v3096
  %v3098 = vrot.slane %v3097, 1
  %v3099 = vadd.f32 %v3097, %v3098
  %v3100 = vadd.f32 %v3078, 0.0
  %v3101 = vadd.f32 %v3085, 0.0
  %v3102 = vadd.f32 %v3092, 0.0
  %v3103 = vadd.f32 %v3099, 0.0
  %v3104 = vmul.f32 %v3056, %v3056
  %v3105 = vmul.f32 %v3057, %v3057
  %v3106 = vmul.f32 %v3058, %v3058
  %v3107 = vmul.f32 %v3059, %v3059
  %v3108 = vmul.f32 %v3060, %v3060
  %v3109 = vmul.f32 %v3061, %v3061
  %v3110 = vmul.f32 %v3062, %v3062
  %v3111 = vmul.f32 %v3063, %v3063
  %v3112 = vadd.f32 %v3104, %v3108
  %v3113 = vrot.slane %v3112, 4
  %v3114 = vadd.f32 %v3112, %v3113
  %v3115 = vrot.slane %v3114, 2
  %v3116 = vadd.f32 %v3114, %v3115
  %v3117 = vrot.slane %v3116, 1
  %v3118 = vadd.f32 %v3116, %v3117
  %v3119 = vadd.f32 %v3105, %v3109
  %v3120 = vrot.slane %v3119, 4
  %v3121 = vadd.f32 %v3119, %v3120
  %v3122 = vrot.slane %v3121, 2
  %v3123 = vadd.f32 %v3121, %v3122
  %v3124 = vrot.slane %v3123, 1
  %v3125 = vadd.f32 %v3123, %v3124
  %v3126 = vadd.f32 %v3106, %v3110
  %v3127 = vrot.slane %v3126, 4
  %v3128 = vadd.f32 %v3126, %v3127
  %v3129 = vrot.slane %v3128, 2
  %v3130 = vadd.f32 %v3128, %v3129
  %v3131 = vrot.slane %v3130, 1
  %v3132 = vadd.f32 %v3130, %v3131
  %v3133 = vadd.f32 %v3107, %v3111
  %v3134 = vrot.slane %v3133, 4
  %v3135 = vadd.f32 %v3133, %v3134
  %v3136 = vrot.slane %v3135, 2
  %v3137 = vadd.f32 %v3135, %v3136
  %v3138 = vrot.slane %v3137, 1
  %v3139 = vadd.f32 %v3137, %v3138
  %v3140 = vadd.f32 %v3118, 0.0
  %v3141 = vadd.f32 %v3125, 0.0
  %v3142 = vadd.f32 %v3132, 0.0
  %v3143 = vadd.f32 %v3139, 0.0
  %s3144 = scalar_lea.vmem %s0, 32
  %v3145 = vld [vmem:[%s3144] sm:$0xff]
  %v3146 = vld [vmem:[%s3144 + $0x8] sm:$0xff]
  %v3147 = vld [vmem:[%s3144 + $0x10] sm:$0xff]
  %v3148 = vld [vmem:[%s3144 + $0x18] sm:$0xff]
  %v3150 = vshrl.u32 %v3145, 16
  %v3152 = vrot.slane %v3150, 7
  %v3153 = vshll.u32 %v3145, 16
  %v3155 = vor.u32 %v3152, %v3153
  %v3157 = vshrl.u32 %v3146, 16
  %v3159 = vrot.slane %v3157, 7
  %v3160 = vshll.u32 %v3146, 16
  %v3162 = vor.u32 %v3159, %v3160
  %v3163 = vrot.slane %v3152, 4
  %v3165 = vshrl.u32 %v3147, 16
  %v3167 = vrot.slane %v3165, 7
  %v3168 = vshll.u32 %v3147, 16
  %v3170 = vor.u32 %v3167, %v3168
  %v3171 = vsel %vm56, %v3163, %v3170
  %v3172 = vrot.slane %v3159, 4
  %v3174 = vshrl.u32 %v3148, 16
  %v3176 = vrot.slane %v3174, 7
  %v3177 = vshll.u32 %v3148, 16
  %v3179 = vor.u32 %v3176, %v3177
  %v3180 = vsel %vm56, %v3172, %v3179
  %v3181 = vrot.slane %v3167, 4
  %v3182 = vrot.slane %v3176, 4
  %v3189 = vld [vmem:[#allocation2] sm:$0xff]
  %v3190 = vsel %vm101, %v3155, %v3189
  %3191 = vst [vmem:[#allocation2] sm:$0xff] %v3190
  %v3192 = vld [vmem:[#allocation2 + $0x8] sm:$0xff]
  %v3193 = vsel %vm101, %v3162, %v3192
  %3194 = vst [vmem:[#allocation2 + $0x8] sm:$0xff] %v3193
  %3195 = vst [vmem:[#allocation2 + $0x10] sm:$0xff] %v3171
  %3196 = vst [vmem:[#allocation2 + $0x18] sm:$0xff] %v3180
  %v3197 = vld [vmem:[#allocation2 + $0x20] sm:$0x11]
  %v3198 = vsel %vm33, %v3181, %v3197
  %3199 = vst [vmem:[#allocation2 + $0x20] sm:$0x11] %v3198
  %v3200 = vld [vmem:[#allocation2 + $0x28] sm:$0x11]
  %v3201 = vsel %vm33, %v3182, %v3200
  %3202 = vst [vmem:[#allocation2 + $0x28] sm:$0x11] %v3201
  %v3203 = vld [vmem:[#allocation2] sm:$0xff]
  %v3204 = vld [vmem:[#allocation2 + $0x8] sm:$0xff]
  %v3205 = vld [vmem:[#allocation2 + $0x10] sm:$0xff]
  %v3206 = vld [vmem:[#allocation2 + $0x18] sm:$0xff]
  %v3207 = vld [vmem:[%s1] sm:$0xff]
  %v3208 = vld [vmem:[%s1 + $0x8] sm:$0xff]
  %v3209 = vld [vmem:[%s1 + $0x10] sm:$0xff]
  %v3210 = vld [vmem:[%s1 + $0x18] sm:$0xff]
  %v3211 = vld [vmem:[%s1 + $0x20] sm:$0xff]
  %v3212 = vld [vmem:[%s1 + $0x28] sm:$0xff]
  %v3213 = vld [vmem:[%s1 + $0x30] sm:$0xff]
  %v3214 = vld [vmem:[%s1 + $0x38] sm:$0xff]
  %v3215 = vld [vmem:[%s1 + $0x40] sm:$0xff]
  %v3216 = vld [vmem:[%s1 + $0x48] sm:$0xff]
  %v3217 = vld [vmem:[%s1 + $0x50] sm:$0xff]
  %v3218 = vld [vmem:[%s1 + $0x58] sm:$0xff]
  %v3219 = vld [vmem:[%s1 + $0x60] sm:$0xff]
  %v3220 = vld [vmem:[%s1 + $0x68] sm:$0xff]
  %v3221 = vld [vmem:[%s1 + $0x70] sm:$0xff]
  %v3222 = vld [vmem:[%s1 + $0x78] sm:$0xff]
  %v3223 = vld [vmem:[%s1 + $0x80] sm:$0xff]
  %v3224 = vld [vmem:[%s1 + $0x88] sm:$0xff]
  %v3225 = vld [vmem:[%s1 + $0x90] sm:$0xff]
  %v3226 = vld [vmem:[%s1 + $0x98] sm:$0xff]
  %v3227 = vld [vmem:[%s1 + $0xa0] sm:$0xff]
  %v3228 = vld [vmem:[%s1 + $0xa8] sm:$0xff]
  %v3229 = vld [vmem:[%s1 + $0xb0] sm:$0xff]
  %v3230 = vld [vmem:[%s1 + $0xb8] sm:$0xff]
  %v3231 = vld [vmem:[%s1 + $0xc0] sm:$0xff]
  %v3232 = vld [vmem:[%s1 + $0xc8] sm:$0xff]
  %v3233 = vld [vmem:[%s1 + $0xd0] sm:$0xff]
  %v3234 = vld [vmem:[%s1 + $0xd8] sm:$0xff]
  %v3235 = vld [vmem:[%s1 + $0xe0] sm:$0xff]
  %v3236 = vld [vmem:[%s1 + $0xe8] sm:$0xff]
  %v3237 = vld [vmem:[%s1 + $0xf0] sm:$0xff]
  %v3238 = vld [vmem:[%s1 + $0xf8] sm:$0xff]
  %v3239 = vld [vmem:[%s1 + $0x100] sm:$0xff]
  %v3240 = vld [vmem:[%s1 + $0x108] sm:$0xff]
  %v3241 = vld [vmem:[%s1 + $0x110] sm:$0xff]
  %v3242 = vld [vmem:[%s1 + $0x118] sm:$0xff]
  %v3243 = vld [vmem:[%s1 + $0x120] sm:$0xff]
  %v3244 = vld [vmem:[%s1 + $0x128] sm:$0xff]
  %v3245 = vld [vmem:[%s1 + $0x130] sm:$0xff]
  %v3246 = vld [vmem:[%s1 + $0x138] sm:$0xff]
  %v3247 = vld [vmem:[%s1 + $0x140] sm:$0xff]
  %v3248 = vld [vmem:[%s1 + $0x148] sm:$0xff]
  %v3249 = vld [vmem:[%s1 + $0x150] sm:$0xff]
  %v3250 = vld [vmem:[%s1 + $0x158] sm:$0xff]
  %v3251 = vld [vmem:[%s1 + $0x160] sm:$0xff]
  %v3252 = vld [vmem:[%s1 + $0x168] sm:$0xff]
  %v3253 = vld [vmem:[%s1 + $0x170] sm:$0xff]
  %v3254 = vld [vmem:[%s1 + $0x178] sm:$0xff]
  %v3255 = vld [vmem:[%s1 + $0x180] sm:$0xff]
  %v3256 = vld [vmem:[%s1 + $0x188] sm:$0xff]
  %v3257 = vld [vmem:[%s1 + $0x190] sm:$0xff]
  %v3258 = vld [vmem:[%s1 + $0x198] sm:$0xff]
  %v3259 = vld [vmem:[%s1 + $0x1a0] sm:$0xff]
  %v3260 = vld [vmem:[%s1 + $0x1a8] sm:$0xff]
  %v3261 = vld [vmem:[%s1 + $0x1b0] sm:$0xff]
  %v3262 = vld [vmem:[%s1 + $0x1b8] sm:$0xff]
  %v3263 = vld [vmem:[%s1 + $0x1c0] sm:$0xff]
  %v3264 = vld [vmem:[%s1 + $0x1c8] sm:$0xff]
  %v3265 = vld [vmem:[%s1 + $0x1d0] sm:$0xff]
  %v3266 = vld [vmem:[%s1 + $0x1d8] sm:$0xff]
  %v3267 = vld [vmem:[%s1 + $0x1e0] sm:$0xff]
  %v3268 = vld [vmem:[%s1 + $0x1e8] sm:$0xff]
  %v3269 = vld [vmem:[%s1 + $0x1f0] sm:$0xff]
  %v3270 = vld [vmem:[%s1 + $0x1f8] sm:$0xff]
  %v3271 = vld [vmem:[%s1 + $0x200] sm:$0xff]
  %v3272 = vld [vmem:[%s1 + $0x208] sm:$0xff]
  %v3273 = vld [vmem:[%s1 + $0x210] sm:$0xff]
  %v3274 = vld [vmem:[%s1 + $0x218] sm:$0xff]
  %v3275 = vld [vmem:[%s1 + $0x220] sm:$0xff]
  %v3276 = vld [vmem:[%s1 + $0x228] sm:$0xff]
  %v3277 = vld [vmem:[%s1 + $0x230] sm:$0xff]
  %v3278 = vld [vmem:[%s1 + $0x238] sm:$0xff]
  %v3279 = vld [vmem:[%s1 + $0x240] sm:$0xff]
  %v3280 = vld [vmem:[%s1 + $0x248] sm:$0xff]
  %v3281 = vld [vmem:[%s1 + $0x250] sm:$0xff]
  %v3282 = vld [vmem:[%s1 + $0x258] sm:$0xff]
  %v3283 = vld [vmem:[%s1 + $0x260] sm:$0xff]
  %v3284 = vld [vmem:[%s1 + $0x268] sm:$0xff]
  %v3285 = vld [vmem:[%s1 + $0x270] sm:$0xff]
  %v3286 = vld [vmem:[%s1 + $0x278] sm:$0xff]
  %v3287 = vld [vmem:[%s1 + $0x280] sm:$0xff]
  %v3288 = vld [vmem:[%s1 + $0x288] sm:$0xff]
  %v3289 = vld [vmem:[%s1 + $0x290] sm:$0xff]
  %v3290 = vld [vmem:[%s1 + $0x298] sm:$0xff]
  %v3291 = vld [vmem:[%s1 + $0x2a0] sm:$0xff]
  %v3292 = vld [vmem:[%s1 + $0x2a8] sm:$0xff]
  %v3293 = vld [vmem:[%s1 + $0x2b0] sm:$0xff]
  %v3294 = vld [vmem:[%s1 + $0x2b8] sm:$0xff]
  %v3295 = vld [vmem:[%s1 + $0x2c0] sm:$0xff]
  %v3296 = vld [vmem:[%s1 + $0x2c8] sm:$0xff]
  %v3297 = vld [vmem:[%s1 + $0x2d0] sm:$0xff]
  %v3298 = vld [vmem:[%s1 + $0x2d8] sm:$0xff]
  %v3299 = vld [vmem:[%s1 + $0x2e0] sm:$0xff]
  %v3300 = vld [vmem:[%s1 + $0x2e8] sm:$0xff]
  %v3301 = vld [vmem:[%s1 + $0x2f0] sm:$0xff]
  %v3302 = vld [vmem:[%s1 + $0x2f8] sm:$0xff]
  %v3303 = vld [vmem:[%s1 + $0x300] sm:$0xff]
  %v3304 = vld [vmem:[%s1 + $0x308] sm:$0xff]
  %v3305 = vld [vmem:[%s1 + $0x310] sm:$0xff]
  %v3306 = vld [vmem:[%s1 + $0x318] sm:$0xff]
  %v3307 = vld [vmem:[%s1 + $0x320] sm:$0xff]
  %v3308 = vld [vmem:[%s1 + $0x328] sm:$0xff]
  %v3309 = vld [vmem:[%s1 + $0x330] sm:$0xff]
  %v3310 = vld [vmem:[%s1 + $0x338] sm:$0xff]
  %v3311 = vld [vmem:[%s1 + $0x340] sm:$0xff]
  %v3312 = vld [vmem:[%s1 + $0x348] sm:$0xff]
  %v3313 = vld [vmem:[%s1 + $0x350] sm:$0xff]
  %v3314 = vld [vmem:[%s1 + $0x358] sm:$0xff]
  %v3315 = vld [vmem:[%s1 + $0x360] sm:$0xff]
  %v3316 = vld [vmem:[%s1 + $0x368] sm:$0xff]
  %v3317 = vld [vmem:[%s1 + $0x370] sm:$0xff]
  %v3318 = vld [vmem:[%s1 + $0x378] sm:$0xff]
  %v3319 = vld [vmem:[%s1 + $0x380] sm:$0xff]
  %v3320 = vld [vmem:[%s1 + $0x388] sm:$0xff]
  %v3321 = vld [vmem:[%s1 + $0x390] sm:$0xff]
  %v3322 = vld [vmem:[%s1 + $0x398] sm:$0xff]
  %v3323 = vld [vmem:[%s1 + $0x3a0] sm:$0xff]
  %v3324 = vld [vmem:[%s1 + $0x3a8] sm:$0xff]
  %v3325 = vld [vmem:[%s1 + $0x3b0] sm:$0xff]
  %v3326 = vld [vmem:[%s1 + $0x3b8] sm:$0xff]
  %v3327 = vld [vmem:[%s1 + $0x3c0] sm:$0xff]
  %v3328 = vld [vmem:[%s1 + $0x3c8] sm:$0xff]
  %v3329 = vld [vmem:[%s1 + $0x3d0] sm:$0xff]
  %v3330 = vld [vmem:[%s1 + $0x3d8] sm:$0xff]
  %v3331 = vld [vmem:[%s1 + $0x3e0] sm:$0xff]
  %v3332 = vld [vmem:[%s1 + $0x3e8] sm:$0xff]
  %v3333 = vld [vmem:[%s1 + $0x3f0] sm:$0xff]
  %v3334 = vld [vmem:[%s1 + $0x3f8] sm:$0xff]
  %v3335 = vld [vmem:[#allocation2 + $0x20] sm:$0x11]
  %v3336 = vld [vmem:[#allocation2 + $0x28] sm:$0x11]
  %v3337 = vld [vmem:[%s250] sm:$0xff]
  %v3338 = vld [vmem:[%s250 + $0x8] sm:$0xff]
  %v3339 = vld [vmem:[%s250 + $0x10] sm:$0xff]
  %v3340 = vld [vmem:[%s250 + $0x18] sm:$0xff]
  %v3341 = vld [vmem:[%s250 + $0x20] sm:$0xff]
  %v3342 = vld [vmem:[%s250 + $0x28] sm:$0xff]
  %v3343 = vld [vmem:[%s250 + $0x30] sm:$0xff]
  %v3344 = vld [vmem:[%s250 + $0x38] sm:$0xff]
  %v3345 = vld [vmem:[%s250 + $0x40] sm:$0xff]
  %v3346 = vld [vmem:[%s250 + $0x48] sm:$0xff]
  %v3347 = vld [vmem:[%s250 + $0x50] sm:$0xff]
  %v3348 = vld [vmem:[%s250 + $0x58] sm:$0xff]
  %v3349 = vld [vmem:[%s250 + $0x60] sm:$0xff]
  %v3350 = vld [vmem:[%s250 + $0x68] sm:$0xff]
  %v3351 = vld [vmem:[%s250 + $0x70] sm:$0xff]
  %v3352 = vld [vmem:[%s250 + $0x78] sm:$0xff]
  %v3353 = vld [vmem:[%s250 + $0x80] sm:$0xff]
  %v3354 = vld [vmem:[%s250 + $0x88] sm:$0xff]
  %v3355 = vld [vmem:[%s250 + $0x90] sm:$0xff]
  %v3356 = vld [vmem:[%s250 + $0x98] sm:$0xff]
  %v3357 = vld [vmem:[%s250 + $0xa0] sm:$0xff]
  %v3358 = vld [vmem:[%s250 + $0xa8] sm:$0xff]
  %v3359 = vld [vmem:[%s250 + $0xb0] sm:$0xff]
  %v3360 = vld [vmem:[%s250 + $0xb8] sm:$0xff]
  %v3361 = vld [vmem:[%s250 + $0xc0] sm:$0xff]
  %v3362 = vld [vmem:[%s250 + $0xc8] sm:$0xff]
  %v3363 = vld [vmem:[%s250 + $0xd0] sm:$0xff]
  %v3364 = vld [vmem:[%s250 + $0xd8] sm:$0xff]
  %v3365 = vld [vmem:[%s250 + $0xe0] sm:$0xff]
  %v3366 = vld [vmem:[%s250 + $0xe8] sm:$0xff]
  %v3367 = vld [vmem:[%s250 + $0xf0] sm:$0xff]
  %v3368 = vld [vmem:[%s250 + $0xf8] sm:$0xff]
  %v3369 = vld [vmem:[%s250 + $0x100] sm:$0xff]
  %v3370 = vld [vmem:[%s250 + $0x108] sm:$0xff]
  %v3371 = vld [vmem:[%s250 + $0x110] sm:$0xff]
  %v3372 = vld [vmem:[%s250 + $0x118] sm:$0xff]
  %v3373 = vld [vmem:[%s250 + $0x120] sm:$0xff]
  %v3374 = vld [vmem:[%s250 + $0x128] sm:$0xff]
  %v3375 = vld [vmem:[%s250 + $0x130] sm:$0xff]
  %v3376 = vld [vmem:[%s250 + $0x138] sm:$0xff]
  %v3377 = vld [vmem:[%s250 + $0x140] sm:$0xff]
  %v3378 = vld [vmem:[%s250 + $0x148] sm:$0xff]
  %v3379 = vld [vmem:[%s250 + $0x150] sm:$0xff]
  %v3380 = vld [vmem:[%s250 + $0x158] sm:$0xff]
  %v3381 = vld [vmem:[%s250 + $0x160] sm:$0xff]
  %v3382 = vld [vmem:[%s250 + $0x168] sm:$0xff]
  %v3383 = vld [vmem:[%s250 + $0x170] sm:$0xff]
  %v3384 = vld [vmem:[%s250 + $0x178] sm:$0xff]
  %v3385 = vld [vmem:[%s250 + $0x180] sm:$0xff]
  %v3386 = vld [vmem:[%s250 + $0x188] sm:$0xff]
  %v3387 = vld [vmem:[%s250 + $0x190] sm:$0xff]
  %v3388 = vld [vmem:[%s250 + $0x198] sm:$0xff]
  %v3389 = vld [vmem:[%s250 + $0x1a0] sm:$0xff]
  %v3390 = vld [vmem:[%s250 + $0x1a8] sm:$0xff]
  %v3391 = vld [vmem:[%s250 + $0x1b0] sm:$0xff]
  %v3392 = vld [vmem:[%s250 + $0x1b8] sm:$0xff]
  %v3393 = vld [vmem:[%s250 + $0x1c0] sm:$0xff]
  %v3394 = vld [vmem:[%s250 + $0x1c8] sm:$0xff]
  %v3395 = vld [vmem:[%s250 + $0x1d0] sm:$0xff]
  %v3396 = vld [vmem:[%s250 + $0x1d8] sm:$0xff]
  %v3397 = vld [vmem:[%s250 + $0x1e0] sm:$0xff]
  %v3398 = vld [vmem:[%s250 + $0x1e8] sm:$0xff]
  %v3399 = vld [vmem:[%s250 + $0x1f0] sm:$0xff]
  %v3400 = vld [vmem:[%s250 + $0x1f8] sm:$0xff]
  %v3401 = vld [vmem:[%s250 + $0x200] sm:$0xff]
  %v3402 = vld [vmem:[%s250 + $0x208] sm:$0xff]
  %v3403 = vld [vmem:[%s250 + $0x210] sm:$0xff]
  %v3404 = vld [vmem:[%s250 + $0x218] sm:$0xff]
  %v3405 = vld [vmem:[%s250 + $0x220] sm:$0xff]
  %v3406 = vld [vmem:[%s250 + $0x228] sm:$0xff]
  %v3407 = vld [vmem:[%s250 + $0x230] sm:$0xff]
  %v3408 = vld [vmem:[%s250 + $0x238] sm:$0xff]
  %v3409 = vld [vmem:[%s250 + $0x240] sm:$0xff]
  %v3410 = vld [vmem:[%s250 + $0x248] sm:$0xff]
  %v3411 = vld [vmem:[%s250 + $0x250] sm:$0xff]
  %v3412 = vld [vmem:[%s250 + $0x258] sm:$0xff]
  %v3413 = vld [vmem:[%s250 + $0x260] sm:$0xff]
  %v3414 = vld [vmem:[%s250 + $0x268] sm:$0xff]
  %v3415 = vld [vmem:[%s250 + $0x270] sm:$0xff]
  %v3416 = vld [vmem:[%s250 + $0x278] sm:$0xff]
  %v3417 = vld [vmem:[%s250 + $0x280] sm:$0xff]
  %v3418 = vld [vmem:[%s250 + $0x288] sm:$0xff]
  %v3419 = vld [vmem:[%s250 + $0x290] sm:$0xff]
  %v3420 = vld [vmem:[%s250 + $0x298] sm:$0xff]
  %v3421 = vld [vmem:[%s250 + $0x2a0] sm:$0xff]
  %v3422 = vld [vmem:[%s250 + $0x2a8] sm:$0xff]
  %v3423 = vld [vmem:[%s250 + $0x2b0] sm:$0xff]
  %v3424 = vld [vmem:[%s250 + $0x2b8] sm:$0xff]
  %v3425 = vld [vmem:[%s250 + $0x2c0] sm:$0xff]
  %v3426 = vld [vmem:[%s250 + $0x2c8] sm:$0xff]
  %v3427 = vld [vmem:[%s250 + $0x2d0] sm:$0xff]
  %v3428 = vld [vmem:[%s250 + $0x2d8] sm:$0xff]
  %v3429 = vld [vmem:[%s250 + $0x2e0] sm:$0xff]
  %v3430 = vld [vmem:[%s250 + $0x2e8] sm:$0xff]
  %v3431 = vld [vmem:[%s250 + $0x2f0] sm:$0xff]
  %v3432 = vld [vmem:[%s250 + $0x2f8] sm:$0xff]
  %v3433 = vld [vmem:[%s250 + $0x300] sm:$0xff]
  %v3434 = vld [vmem:[%s250 + $0x308] sm:$0xff]
  %v3435 = vld [vmem:[%s250 + $0x310] sm:$0xff]
  %v3436 = vld [vmem:[%s250 + $0x318] sm:$0xff]
  %v3437 = vld [vmem:[%s250 + $0x320] sm:$0xff]
  %v3438 = vld [vmem:[%s250 + $0x328] sm:$0xff]
  %v3439 = vld [vmem:[%s250 + $0x330] sm:$0xff]
  %v3440 = vld [vmem:[%s250 + $0x338] sm:$0xff]
  %v3441 = vld [vmem:[%s250 + $0x340] sm:$0xff]
  %v3442 = vld [vmem:[%s250 + $0x348] sm:$0xff]
  %v3443 = vld [vmem:[%s250 + $0x350] sm:$0xff]
  %v3444 = vld [vmem:[%s250 + $0x358] sm:$0xff]
  %v3445 = vld [vmem:[%s250 + $0x360] sm:$0xff]
  %v3446 = vld [vmem:[%s250 + $0x368] sm:$0xff]
  %v3447 = vld [vmem:[%s250 + $0x370] sm:$0xff]
  %v3448 = vld [vmem:[%s250 + $0x378] sm:$0xff]
  %v3449 = vld [vmem:[%s250 + $0x380] sm:$0xff]
  %v3450 = vld [vmem:[%s250 + $0x388] sm:$0xff]
  %v3451 = vld [vmem:[%s250 + $0x390] sm:$0xff]
  %v3452 = vld [vmem:[%s250 + $0x398] sm:$0xff]
  %v3453 = vld [vmem:[%s250 + $0x3a0] sm:$0xff]
  %v3454 = vld [vmem:[%s250 + $0x3a8] sm:$0xff]
  %v3455 = vld [vmem:[%s250 + $0x3b0] sm:$0xff]
  %v3456 = vld [vmem:[%s250 + $0x3b8] sm:$0xff]
  %v3457 = vld [vmem:[%s250 + $0x3c0] sm:$0xff]
  %v3458 = vld [vmem:[%s250 + $0x3c8] sm:$0xff]
  %v3459 = vld [vmem:[%s250 + $0x3d0] sm:$0xff]
  %v3460 = vld [vmem:[%s250 + $0x3d8] sm:$0xff]
  %v3461 = vld [vmem:[%s250 + $0x3e0] sm:$0xff]
  %v3462 = vld [vmem:[%s250 + $0x3e8] sm:$0xff]
  %v3463 = vld [vmem:[%s250 + $0x3f0] sm:$0xff]
  %v3464 = vld [vmem:[%s250 + $0x3f8] sm:$0xff]
  %v3471 = vunpack.c.l.b16 %v3203
  %v3472 = vunpack.c.h.b16 %v3203
  %v3473 = vunpack.c.l.b16 %v3204
  %v3474 = vunpack.c.h.b16 %v3204
  %v3475 = vunpack.c.l.b16 %v3205
  %v3476 = vunpack.c.h.b16 %v3205
  %v3477 = vunpack.c.l.b16 %v3206
  %v3478 = vunpack.c.h.b16 %v3206
  %v3479 = vunpack.c.l.b16 %v3335
  %v3480 = vunpack.c.h.b16 %v3335
  %v3481 = vunpack.c.l.b16 %v3336
  %v3482 = vunpack.c.h.b16 %v3336
  %v3483 = vpack.c.b16 %v3475, %v3471
  %v3484 = vpack.c.b16 %v3476, %v3472
  %v3485 = vpack.c.b16 %v3477, %v3473
  %v3486 = vpack.c.b16 %v3478, %v3474
  %v3487 = vpack.c.b16 %v3479, %v3479
  %v3488 = vpack.c.b16 %v3480, %v3480
  %v3489 = vpack.c.b16 %v3481, %v3481
  %v3490 = vpack.c.b16 %v3482, %v3482
  %v3492 = vshrl.u32 %v3483, 16
  %v3494 = vshll.u32 %v3483, 16
  %v3496 = vrot.slane %v3494, 1
  %v3497 = vor.u32 %v3492, %v3496
  %v3499 = vshll.u32 %v3487, 16
  %v3501 = vrot.slane %v3499, 1
  %v3502 = vsel %vm405, %v3497, %v3501
  %v3504 = vshrl.u32 %v3484, 16
  %v3506 = vshll.u32 %v3484, 16
  %v3508 = vrot.slane %v3506, 1
  %v3509 = vor.u32 %v3504, %v3508
  %v3511 = vshll.u32 %v3488, 16
  %v3513 = vrot.slane %v3511, 1
  %v3514 = vsel %vm405, %v3509, %v3513
  %v3516 = vshrl.u32 %v3485, 16
  %v3518 = vshll.u32 %v3485, 16
  %v3520 = vrot.slane %v3518, 1
  %v3521 = vor.u32 %v3516, %v3520
  %v3523 = vshll.u32 %v3489, 16
  %v3525 = vrot.slane %v3523, 1
  %v3526 = vsel %vm405, %v3521, %v3525
  %v3528 = vshrl.u32 %v3486, 16
  %v3530 = vshll.u32 %v3486, 16
  %v3532 = vrot.slane %v3530, 1
  %v3533 = vor.u32 %v3528, %v3532
  %v3535 = vshll.u32 %v3490, 16
  %v3537 = vrot.slane %v3535, 1
  %v3538 = vsel %vm405, %v3533, %v3537
  %v3671 = vunpack.c.l.b16 %v3337
  %v3672 = vunpack.c.h.b16 %v3337
  %v3673 = vunpack.c.l.b16 %v3338
  %v3674 = vunpack.c.h.b16 %v3338
  %v3675 = vunpack.c.l.b16 %v3339
  %v3676 = vunpack.c.h.b16 %v3339
  %v3677 = vunpack.c.l.b16 %v3340
  %v3678 = vunpack.c.h.b16 %v3340
  %v3679 = vunpack.c.l.b16 %v3341
  %v3680 = vunpack.c.h.b16 %v3341
  %v3681 = vunpack.c.l.b16 %v3342
  %v3682 = vunpack.c.h.b16 %v3342
  %v3683 = vunpack.c.l.b16 %v3343
  %v3684 = vunpack.c.h.b16 %v3343
  %v3685 = vunpack.c.l.b16 %v3344
  %v3686 = vunpack.c.h.b16 %v3344
  %v3687 = vunpack.c.l.b16 %v3345
  %v3688 = vunpack.c.h.b16 %v3345
  %v3689 = vunpack.c.l.b16 %v3346
  %v3690 = vunpack.c.h.b16 %v3346
  %v3691 = vunpack.c.l.b16 %v3347
  %v3692 = vunpack.c.h.b16 %v3347
  %v3693 = vunpack.c.l.b16 %v3348
  %v3694 = vunpack.c.h.b16 %v3348
  %v3695 = vunpack.c.l.b16 %v3349
  %v3696 = vunpack.c.h.b16 %v3349
  %v3697 = vunpack.c.l.b16 %v3350
  %v3698 = vunpack.c.h.b16 %v3350
  %v3699 = vunpack.c.l.b16 %v3351
  %v3700 = vunpack.c.h.b16 %v3351
  %v3701 = vunpack.c.l.b16 %v3352
  %v3702 = vunpack.c.h.b16 %v3352
  %v3703 = vunpack.c.l.b16 %v3353
  %v3704 = vunpack.c.h.b16 %v3353
  %v3705 = vunpack.c.l.b16 %v3354
  %v3706 = vunpack.c.h.b16 %v3354
  %v3707 = vunpack.c.l.b16 %v3355
  %v3708 = vunpack.c.h.b16 %v3355
  %v3709 = vunpack.c.l.b16 %v3356
  %v3710 = vunpack.c.h.b16 %v3356
  %v3711 = vunpack.c.l.b16 %v3357
  %v3712 = vunpack.c.h.b16 %v3357
  %v3713 = vunpack.c.l.b16 %v3358
  %v3714 = vunpack.c.h.b16 %v3358
  %v3715 = vunpack.c.l.b16 %v3359
  %v3716 = vunpack.c.h.b16 %v3359
  %v3717 = vunpack.c.l.b16 %v3360
  %v3718 = vunpack.c.h.b16 %v3360
  %v3719 = vunpack.c.l.b16 %v3361
  %v3720 = vunpack.c.h.b16 %v3361
  %v3721 = vunpack.c.l.b16 %v3362
  %v3722 = vunpack.c.h.b16 %v3362
  %v3723 = vunpack.c.l.b16 %v3363
  %v3724 = vunpack.c.h.b16 %v3363
  %v3725 = vunpack.c.l.b16 %v3364
  %v3726 = vunpack.c.h.b16 %v3364
  %v3727 = vunpack.c.l.b16 %v3365
  %v3728 = vunpack.c.h.b16 %v3365
  %v3729 = vunpack.c.l.b16 %v3366
  %v3730 = vunpack.c.h.b16 %v3366
  %v3731 = vunpack.c.l.b16 %v3367
  %v3732 = vunpack.c.h.b16 %v3367
  %v3733 = vunpack.c.l.b16 %v3368
  %v3734 = vunpack.c.h.b16 %v3368
  %v3735 = vunpack.c.l.b16 %v3369
  %v3736 = vunpack.c.h.b16 %v3369
  %v3737 = vunpack.c.l.b16 %v3370
  %v3738 = vunpack.c.h.b16 %v3370
  %v3739 = vunpack.c.l.b16 %v3371
  %v3740 = vunpack.c.h.b16 %v3371
  %v3741 = vunpack.c.l.b16 %v3372
  %v3742 = vunpack.c.h.b16 %v3372
  %v3743 = vunpack.c.l.b16 %v3373
  %v3744 = vunpack.c.h.b16 %v3373
  %v3745 = vunpack.c.l.b16 %v3374
  %v3746 = vunpack.c.h.b16 %v3374
  %v3747 = vunpack.c.l.b16 %v3375
  %v3748 = vunpack.c.h.b16 %v3375
  %v3749 = vunpack.c.l.b16 %v3376
  %v3750 = vunpack.c.h.b16 %v3376
  %v3751 = vunpack.c.l.b16 %v3377
  %v3752 = vunpack.c.h.b16 %v3377
  %v3753 = vunpack.c.l.b16 %v3378
  %v3754 = vunpack.c.h.b16 %v3378
  %v3755 = vunpack.c.l.b16 %v3379
  %v3756 = vunpack.c.h.b16 %v3379
  %v3757 = vunpack.c.l.b16 %v3380
  %v3758 = vunpack.c.h.b16 %v3380
  %v3759 = vunpack.c.l.b16 %v3381
  %v3760 = vunpack.c.h.b16 %v3381
  %v3761 = vunpack.c.l.b16 %v3382
  %v3762 = vunpack.c.h.b16 %v3382
  %v3763 = vunpack.c.l.b16 %v3383
  %v3764 = vunpack.c.h.b16 %v3383
  %v3765 = vunpack.c.l.b16 %v3384
  %v3766 = vunpack.c.h.b16 %v3384
  %v3767 = vunpack.c.l.b16 %v3385
  %v3768 = vunpack.c.h.b16 %v3385
  %v3769 = vunpack.c.l.b16 %v3386
  %v3770 = vunpack.c.h.b16 %v3386
  %v3771 = vunpack.c.l.b16 %v3387
  %v3772 = vunpack.c.h.b16 %v3387
  %v3773 = vunpack.c.l.b16 %v3388
  %v3774 = vunpack.c.h.b16 %v3388
  %v3775 = vunpack.c.l.b16 %v3389
  %v3776 = vunpack.c.h.b16 %v3389
  %v3777 = vunpack.c.l.b16 %v3390
  %v3778 = vunpack.c.h.b16 %v3390
  %v3779 = vunpack.c.l.b16 %v3391
  %v3780 = vunpack.c.h.b16 %v3391
  %v3781 = vunpack.c.l.b16 %v3392
  %v3782 = vunpack.c.h.b16 %v3392
  %v3783 = vunpack.c.l.b16 %v3393
  %v3784 = vunpack.c.h.b16 %v3393
  %v3785 = vunpack.c.l.b16 %v3394
  %v3786 = vunpack.c.h.b16 %v3394
  %v3787 = vunpack.c.l.b16 %v3395
  %v3788 = vunpack.c.h.b16 %v3395
  %v3789 = vunpack.c.l.b16 %v3396
  %v3790 = vunpack.c.h.b16 %v3396
  %v3791 = vunpack.c.l.b16 %v3397
  %v3792 = vunpack.c.h.b16 %v3397
  %v3793 = vunpack.c.l.b16 %v3398
  %v3794 = vunpack.c.h.b16 %v3398
  %v3795 = vunpack.c.l.b16 %v3399
  %v3796 = vunpack.c.h.b16 %v3399
  %v3797 = vunpack.c.l.b16 %v3400
  %v3798 = vunpack.c.h.b16 %v3400
  %v3799 = vunpack.c.l.b16 %v3401
  %v3800 = vunpack.c.h.b16 %v3401
  %v3801 = vunpack.c.l.b16 %v3402
  %v3802 = vunpack.c.h.b16 %v3402
  %v3803 = vunpack.c.l.b16 %v3403
  %v3804 = vunpack.c.h.b16 %v3403
  %v3805 = vunpack.c.l.b16 %v3404
  %v3806 = vunpack.c.h.b16 %v3404
  %v3807 = vunpack.c.l.b16 %v3405
  %v3808 = vunpack.c.h.b16 %v3405
  %v3809 = vunpack.c.l.b16 %v3406
  %v3810 = vunpack.c.h.b16 %v3406
  %v3811 = vunpack.c.l.b16 %v3407
  %v3812 = vunpack.c.h.b16 %v3407
  %v3813 = vunpack.c.l.b16 %v3408
  %v3814 = vunpack.c.h.b16 %v3408
  %v3815 = vunpack.c.l.b16 %v3409
  %v3816 = vunpack.c.h.b16 %v3409
  %v3817 = vunpack.c.l.b16 %v3410
  %v3818 = vunpack.c.h.b16 %v3410
  %v3819 = vunpack.c.l.b16 %v3411
  %v3820 = vunpack.c.h.b16 %v3411
  %v3821 = vunpack.c.l.b16 %v3412
  %v3822 = vunpack.c.h.b16 %v3412
  %v3823 = vunpack.c.l.b16 %v3413
  %v3824 = vunpack.c.h.b16 %v3413
  %v3825 = vunpack.c.l.b16 %v3414
  %v3826 = vunpack.c.h.b16 %v3414
  %v3827 = vunpack.c.l.b16 %v3415
  %v3828 = vunpack.c.h.b16 %v3415
  %v3829 = vunpack.c.l.b16 %v3416
  %v3830 = vunpack.c.h.b16 %v3416
  %v3831 = vunpack.c.l.b16 %v3417
  %v3832 = vunpack.c.h.b16 %v3417
  %v3833 = vunpack.c.l.b16 %v3418
  %v3834 = vunpack.c.h.b16 %v3418
  %v3835 = vunpack.c.l.b16 %v3419
  %v3836 = vunpack.c.h.b16 %v3419
  %v3837 = vunpack.c.l.b16 %v3420
  %v3838 = vunpack.c.h.b16 %v3420
  %v3839 = vunpack.c.l.b16 %v3421
  %v3840 = vunpack.c.h.b16 %v3421
  %v3841 = vunpack.c.l.b16 %v3422
  %v3842 = vunpack.c.h.b16 %v3422
  %v3843 = vunpack.c.l.b16 %v3423
  %v3844 = vunpack.c.h.b16 %v3423
  %v3845 = vunpack.c.l.b16 %v3424
  %v3846 = vunpack.c.h.b16 %v3424
  %v3847 = vunpack.c.l.b16 %v3425
  %v3848 = vunpack.c.h.b16 %v3425
  %v3849 = vunpack.c.l.b16 %v3426
  %v3850 = vunpack.c.h.b16 %v3426
  %v3851 = vunpack.c.l.b16 %v3427
  %v3852 = vunpack.c.h.b16 %v3427
  %v3853 = vunpack.c.l.b16 %v3428
  %v3854 = vunpack.c.h.b16 %v3428
  %v3855 = vunpack.c.l.b16 %v3429
  %v3856 = vunpack.c.h.b16 %v3429
  %v3857 = vunpack.c.l.b16 %v3430
  %v3858 = vunpack.c.h.b16 %v3430
  %v3859 = vunpack.c.l.b16 %v3431
  %v3860 = vunpack.c.h.b16 %v3431
  %v3861 = vunpack.c.l.b16 %v3432
  %v3862 = vunpack.c.h.b16 %v3432
  %v3863 = vunpack.c.l.b16 %v3433
  %v3864 = vunpack.c.h.b16 %v3433
  %v3865 = vunpack.c.l.b16 %v3434
  %v3866 = vunpack.c.h.b16 %v3434
  %v3867 = vunpack.c.l.b16 %v3435
  %v3868 = vunpack.c.h.b16 %v3435
  %v3869 = vunpack.c.l.b16 %v3436
  %v3870 = vunpack.c.h.b16 %v3436
  %v3871 = vunpack.c.l.b16 %v3437
  %v3872 = vunpack.c.h.b16 %v3437
  %v3873 = vunpack.c.l.b16 %v3438
  %v3874 = vunpack.c.h.b16 %v3438
  %v3875 = vunpack.c.l.b16 %v3439
  %v3876 = vunpack.c.h.b16 %v3439
  %v3877 = vunpack.c.l.b16 %v3440
  %v3878 = vunpack.c.h.b16 %v3440
  %v3879 = vunpack.c.l.b16 %v3441
  %v3880 = vunpack.c.h.b16 %v3441
  %v3881 = vunpack.c.l.b16 %v3442
  %v3882 = vunpack.c.h.b16 %v3442
  %v3883 = vunpack.c.l.b16 %v3443
  %v3884 = vunpack.c.h.b16 %v3443
  %v3885 = vunpack.c.l.b16 %v3444
  %v3886 = vunpack.c.h.b16 %v3444
  %v3887 = vunpack.c.l.b16 %v3445
  %v3888 = vunpack.c.h.b16 %v3445
  %v3889 = vunpack.c.l.b16 %v3446
  %v3890 = vunpack.c.h.b16 %v3446
  %v3891 = vunpack.c.l.b16 %v3447
  %v3892 = vunpack.c.h.b16 %v3447
  %v3893 = vunpack.c.l.b16 %v3448
  %v3894 = vunpack.c.h.b16 %v3448
  %v3895 = vunpack.c.l.b16 %v3449
  %v3896 = vunpack.c.h.b16 %v3449
  %v3897 = vunpack.c.l.b16 %v3450
  %v3898 = vunpack.c.h.b16 %v3450
  %v3899 = vunpack.c.l.b16 %v3451
  %v3900 = vunpack.c.h.b16 %v3451
  %v3901 = vunpack.c.l.b16 %v3452
  %v3902 = vunpack.c.h.b16 %v3452
  %v3903 = vunpack.c.l.b16 %v3453
  %v3904 = vunpack.c.h.b16 %v3453
  %v3905 = vunpack.c.l.b16 %v3454
  %v3906 = vunpack.c.h.b16 %v3454
  %v3907 = vunpack.c.l.b16 %v3455
  %v3908 = vunpack.c.h.b16 %v3455
  %v3909 = vunpack.c.l.b16 %v3456
  %v3910 = vunpack.c.h.b16 %v3456
  %v3911 = vunpack.c.l.b16 %v3457
  %v3912 = vunpack.c.h.b16 %v3457
  %v3913 = vunpack.c.l.b16 %v3458
  %v3914 = vunpack.c.h.b16 %v3458
  %v3915 = vunpack.c.l.b16 %v3459
  %v3916 = vunpack.c.h.b16 %v3459
  %v3917 = vunpack.c.l.b16 %v3460
  %v3918 = vunpack.c.h.b16 %v3460
  %v3919 = vunpack.c.l.b16 %v3461
  %v3920 = vunpack.c.h.b16 %v3461
  %v3921 = vunpack.c.l.b16 %v3462
  %v3922 = vunpack.c.h.b16 %v3462
  %v3923 = vunpack.c.l.b16 %v3463
  %v3924 = vunpack.c.h.b16 %v3463
  %v3925 = vunpack.c.l.b16 %v3464
  %v3926 = vunpack.c.h.b16 %v3464
  %v3927 = vpack.c.b16 %v3675, %v3671
  %v3928 = vpack.c.b16 %v3676, %v3672
  %v3929 = vpack.c.b16 %v3677, %v3673
  %v3930 = vpack.c.b16 %v3678, %v3674
  %v3931 = vpack.c.b16 %v3683, %v3679
  %v3932 = vpack.c.b16 %v3684, %v3680
  %v3933 = vpack.c.b16 %v3685, %v3681
  %v3934 = vpack.c.b16 %v3686, %v3682
  %v3935 = vpack.c.b16 %v3691, %v3687
  %v3936 = vpack.c.b16 %v3692, %v3688
  %v3937 = vpack.c.b16 %v3693, %v3689
  %v3938 = vpack.c.b16 %v3694, %v3690
  %v3939 = vpack.c.b16 %v3699, %v3695
  %v3940 = vpack.c.b16 %v3700, %v3696
  %v3941 = vpack.c.b16 %v3701, %v3697
  %v3942 = vpack.c.b16 %v3702, %v3698
  %v3943 = vpack.c.b16 %v3707, %v3703
  %v3944 = vpack.c.b16 %v3708, %v3704
  %v3945 = vpack.c.b16 %v3709, %v3705
  %v3946 = vpack.c.b16 %v3710, %v3706
  %v3947 = vpack.c.b16 %v3715, %v3711
  %v3948 = vpack.c.b16 %v3716, %v3712
  %v3949 = vpack.c.b16 %v3717, %v3713
  %v3950 = vpack.c.b16 %v3718, %v3714
  %v3951 = vpack.c.b16 %v3723, %v3719
  %v3952 = vpack.c.b16 %v3724, %v3720
  %v3953 = vpack.c.b16 %v3725, %v3721
  %v3954 = vpack.c.b16 %v3726, %v3722
  %v3955 = vpack.c.b16 %v3731, %v3727
  %v3956 = vpack.c.b16 %v3732, %v3728
  %v3957 = vpack.c.b16 %v3733, %v3729
  %v3958 = vpack.c.b16 %v3734, %v3730
  %v3959 = vpack.c.b16 %v3739, %v3735
  %v3960 = vpack.c.b16 %v3740, %v3736
  %v3961 = vpack.c.b16 %v3741, %v3737
  %v3962 = vpack.c.b16 %v3742, %v3738
  %v3963 = vpack.c.b16 %v3747, %v3743
  %v3964 = vpack.c.b16 %v3748, %v3744
  %v3965 = vpack.c.b16 %v3749, %v3745
  %v3966 = vpack.c.b16 %v3750, %v3746
  %v3967 = vpack.c.b16 %v3755, %v3751
  %v3968 = vpack.c.b16 %v3756, %v3752
  %v3969 = vpack.c.b16 %v3757, %v3753
  %v3970 = vpack.c.b16 %v3758, %v3754
  %v3971 = vpack.c.b16 %v3763, %v3759
  %v3972 = vpack.c.b16 %v3764, %v3760
  %v3973 = vpack.c.b16 %v3765, %v3761
  %v3974 = vpack.c.b16 %v3766, %v3762
  %v3975 = vpack.c.b16 %v3771, %v3767
  %v3976 = vpack.c.b16 %v3772, %v3768
  %v3977 = vpack.c.b16 %v3773, %v3769
  %v3978 = vpack.c.b16 %v3774, %v3770
  %v3979 = vpack.c.b16 %v3779, %v3775
  %v3980 = vpack.c.b16 %v3780, %v3776
  %v3981 = vpack.c.b16 %v3781, %v3777
  %v3982 = vpack.c.b16 %v3782, %v3778
  %v3983 = vpack.c.b16 %v3787, %v3783
  %v3984 = vpack.c.b16 %v3788, %v3784
  %v3985 = vpack.c.b16 %v3789, %v3785
  %v3986 = vpack.c.b16 %v3790, %v3786
  %v3987 = vpack.c.b16 %v3795, %v3791
  %v3988 = vpack.c.b16 %v3796, %v3792
  %v3989 = vpack.c.b16 %v3797, %v3793
  %v3990 = vpack.c.b16 %v3798, %v3794
  %v3991 = vpack.c.b16 %v3803, %v3799
  %v3992 = vpack.c.b16 %v3804, %v3800
  %v3993 = vpack.c.b16 %v3805, %v3801
  %v3994 = vpack.c.b16 %v3806, %v3802
  %v3995 = vpack.c.b16 %v3811, %v3807
  %v3996 = vpack.c.b16 %v3812, %v3808
  %v3997 = vpack.c.b16 %v3813, %v3809
  %v3998 = vpack.c.b16 %v3814, %v3810
  %v3999 = vpack.c.b16 %v3819, %v3815
  %v4000 = vpack.c.b16 %v3820, %v3816
  %v4001 = vpack.c.b16 %v3821, %v3817
  %v4002 = vpack.c.b16 %v3822, %v3818
  %v4003 = vpack.c.b16 %v3827, %v3823
  %v4004 = vpack.c.b16 %v3828, %v3824
  %v4005 = vpack.c.b16 %v3829, %v3825
  %v4006 = vpack.c.b16 %v3830, %v3826
  %v4007 = vpack.c.b16 %v3835, %v3831
  %v4008 = vpack.c.b16 %v3836, %v3832
  %v4009 = vpack.c.b16 %v3837, %v3833
  %v4010 = vpack.c.b16 %v3838, %v3834
  %v4011 = vpack.c.b16 %v3843, %v3839
  %v4012 = vpack.c.b16 %v3844, %v3840
  %v4013 = vpack.c.b16 %v3845, %v3841
  %v4014 = vpack.c.b16 %v3846, %v3842
  %v4015 = vpack.c.b16 %v3851, %v3847
  %v4016 = vpack.c.b16 %v3852, %v3848
  %v4017 = vpack.c.b16 %v3853, %v3849
  %v4018 = vpack.c.b16 %v3854, %v3850
  %v4019 = vpack.c.b16 %v3859, %v3855
  %v4020 = vpack.c.b16 %v3860, %v3856
  %v4021 = vpack.c.b16 %v3861, %v3857
  %v4022 = vpack.c.b16 %v3862, %v3858
  %v4023 = vpack.c.b16 %v3867, %v3863
  %v4024 = vpack.c.b16 %v3868, %v3864
  %v4025 = vpack.c.b16 %v3869, %v3865
  %v4026 = vpack.c.b16 %v3870, %v3866
  %v4027 = vpack.c.b16 %v3875, %v3871
  %v4028 = vpack.c.b16 %v3876, %v3872
  %v4029 = vpack.c.b16 %v3877, %v3873
  %v4030 = vpack.c.b16 %v3878, %v3874
  %v4031 = vpack.c.b16 %v3883, %v3879
  %v4032 = vpack.c.b16 %v3884, %v3880
  %v4033 = vpack.c.b16 %v3885, %v3881
  %v4034 = vpack.c.b16 %v3886, %v3882
  %v4035 = vpack.c.b16 %v3891, %v3887
  %v4036 = vpack.c.b16 %v3892, %v3888
  %v4037 = vpack.c.b16 %v3893, %v3889
  %v4038 = vpack.c.b16 %v3894, %v3890
  %v4039 = vpack.c.b16 %v3899, %v3895
  %v4040 = vpack.c.b16 %v3900, %v3896
  %v4041 = vpack.c.b16 %v3901, %v3897
  %v4042 = vpack.c.b16 %v3902, %v3898
  %v4043 = vpack.c.b16 %v3907, %v3903
  %v4044 = vpack.c.b16 %v3908, %v3904
  %v4045 = vpack.c.b16 %v3909, %v3905
  %v4046 = vpack.c.b16 %v3910, %v3906
  %v4047 = vpack.c.b16 %v3915, %v3911
  %v4048 = vpack.c.b16 %v3916, %v3912
  %v4049 = vpack.c.b16 %v3917, %v3913
  %v4050 = vpack.c.b16 %v3918, %v3914
  %v4051 = vpack.c.b16 %v3923, %v3919
  %v4052 = vpack.c.b16 %v3924, %v3920
  %v4053 = vpack.c.b16 %v3925, %v3921
  %v4054 = vpack.c.b16 %v3926, %v3922
  %4183 = vmatprep.subr.bf16.mxu0 %v3956
  %4184 = vmatpush1.bf16.msra.mxu0 %v3955
  %4185 = vmatprep.subr.bf16.mxu0 %v3952
  %4186 = vmatpush1.bf16.msra.mxu0 %v3951
  %4187 = vmatprep.subr.bf16.mxu0 %v3948
  %4188 = vmatpush1.bf16.msra.mxu0 %v3947
  %4189 = vmatprep.subr.bf16.mxu0 %v3944
  %4190 = vmatpush1.bf16.msra.mxu0 %v3943
  %4191 = vmatprep.subr.bf16.mxu0 %v3940
  %4192 = vmatpush1.bf16.msra.mxu0 %v3939
  %4193 = vmatprep.subr.bf16.mxu0 %v3936
  %4194 = vmatpush1.bf16.msra.mxu0 %v3935
  %4195 = vmatprep.subr.bf16.mxu0 %v3932
  %4196 = vmatpush1.bf16.msra.mxu0 %v3931
  %4197 = vmatprep.subr.bf16.mxu0 %v3928
  %4198 = vmatpush1.bf16.msra.mxu0 %v3927
  %4199 = vmatprep.subr.bf16.mxu0 %v3988
  %4200 = vmatpush2.bf16.msra.mxu0 %v3987
  %4201 = vmatprep.subr.bf16.mxu0 %v3984
  %4202 = vmatpush2.bf16.msra.mxu0 %v3983
  %4203 = vmatprep.subr.bf16.mxu0 %v3980
  %4204 = vmatpush2.bf16.msra.mxu0 %v3979
  %4205 = vmatprep.subr.bf16.mxu0 %v3976
  %4206 = vmatpush2.bf16.msra.mxu0 %v3975
  %4207 = vmatprep.subr.bf16.mxu0 %v3972
  %4208 = vmatpush2.bf16.msra.mxu0 %v3971
  %4209 = vmatprep.subr.bf16.mxu0 %v3968
  %4210 = vmatpush2.bf16.msra.mxu0 %v3967
  %4211 = vmatprep.subr.bf16.mxu0 %v3964
  %4212 = vmatpush2.bf16.msra.mxu0 %v3963
  %4213 = vmatprep.subr.bf16.mxu0 %v3960
  %4214 = vmatpush2.bf16.msra.mxu0 %v3959
  %4215 = vmatprep.mubr.bf16.mxu0 %v3514
  %4216 = vmatmul.mubr.bf16.gmra.mxu0 %v3502
  %v4217 = vpop.f32.mrf.mxu0
  %v4218 = vadd.f32 0.0, %v4217
  %v4219 = vpop.f32.mrf.mxu0
  %v4220 = vadd.f32 0.0, %v4219
  %v4221 = vpop.f32.mrf.mxu0
  %v4222 = vadd.f32 0.0, %v4221
  %v4223 = vpop.f32.mrf.mxu0
  %v4224 = vadd.f32 0.0, %v4223
  %4225 = vdwg.mxu0
  %4226 = vmatprep.subr.bf16.mxu0 %v4020
  %4227 = vmatpush1.bf16.msra.mxu0 %v4019
  %4228 = vmatprep.subr.bf16.mxu0 %v4016
  %4229 = vmatpush1.bf16.msra.mxu0 %v4015
  %4230 = vmatprep.subr.bf16.mxu0 %v4012
  %4231 = vmatpush1.bf16.msra.mxu0 %v4011
  %4232 = vmatprep.subr.bf16.mxu0 %v4008
  %4233 = vmatpush1.bf16.msra.mxu0 %v4007
  %4234 = vmatprep.subr.bf16.mxu0 %v4004
  %4235 = vmatpush1.bf16.msra.mxu0 %v4003
  %4236 = vmatprep.subr.bf16.mxu0 %v4000
  %4237 = vmatpush1.bf16.msra.mxu0 %v3999
  %4238 = vmatprep.subr.bf16.mxu0 %v3996
  %4239 = vmatpush1.bf16.msra.mxu0 %v3995
  %4240 = vmatprep.subr.bf16.mxu0 %v3992
  %4241 = vmatpush1.bf16.msra.mxu0 %v3991
  %4242 = vmatprep.subr.bf16.mxu0 %v4052
  %4243 = vmatpush2.bf16.msra.mxu0 %v4051
  %4244 = vmatprep.subr.bf16.mxu0 %v4048
  %4245 = vmatpush2.bf16.msra.mxu0 %v4047
  %4246 = vmatprep.subr.bf16.mxu0 %v4044
  %4247 = vmatpush2.bf16.msra.mxu0 %v4043
  %4248 = vmatprep.subr.bf16.mxu0 %v4040
  %4249 = vmatpush2.bf16.msra.mxu0 %v4039
  %4250 = vmatprep.subr.bf16.mxu0 %v4036
  %4251 = vmatpush2.bf16.msra.mxu0 %v4035
  %4252 = vmatprep.subr.bf16.mxu0 %v4032
  %4253 = vmatpush2.bf16.msra.mxu0 %v4031
  %4254 = vmatprep.subr.bf16.mxu0 %v4028
  %4255 = vmatpush2.bf16.msra.mxu0 %v4027
  %4256 = vmatprep.subr.bf16.mxu0 %v4024
  %4257 = vmatpush2.bf16.msra.mxu0 %v4023
  %4258 = vmatprep.mubr.bf16.mxu0 %v3538
  %4259 = vmatmul.mubr.bf16.gmra.mxu0 %v3526
  %v4260 = vpop.f32.mrf.mxu0
  %v4261 = vadd.f32 %v4218, %v4260
  %v4262 = vpop.f32.mrf.mxu0
  %v4263 = vadd.f32 %v4220, %v4262
  %v4264 = vpop.f32.mrf.mxu0
  %v4265 = vadd.f32 %v4222, %v4264
  %v4266 = vpop.f32.mrf.mxu0
  %v4267 = vadd.f32 %v4224, %v4266
  %4268 = vdwg.mxu0
  %4269 = vmatprep.subr.bf16.mxu0 %v3958
  %4270 = vmatpush1.bf16.msra.mxu0 %v3957
  %4271 = vmatprep.subr.bf16.mxu0 %v3954
  %4272 = vmatpush1.bf16.msra.mxu0 %v3953
  %4273 = vmatprep.subr.bf16.mxu0 %v3950
  %4274 = vmatpush1.bf16.msra.mxu0 %v3949
  %4275 = vmatprep.subr.bf16.mxu0 %v3946
  %4276 = vmatpush1.bf16.msra.mxu0 %v3945
  %4277 = vmatprep.subr.bf16.mxu0 %v3942
  %4278 = vmatpush1.bf16.msra.mxu0 %v3941
  %4279 = vmatprep.subr.bf16.mxu0 %v3938
  %4280 = vmatpush1.bf16.msra.mxu0 %v3937
  %4281 = vmatprep.subr.bf16.mxu0 %v3934
  %4282 = vmatpush1.bf16.msra.mxu0 %v3933
  %4283 = vmatprep.subr.bf16.mxu0 %v3930
  %4284 = vmatpush1.bf16.msra.mxu0 %v3929
  %4285 = vmatprep.subr.bf16.mxu0 %v3990
  %4286 = vmatpush2.bf16.msra.mxu0 %v3989
  %4287 = vmatprep.subr.bf16.mxu0 %v3986
  %4288 = vmatpush2.bf16.msra.mxu0 %v3985
  %4289 = vmatprep.subr.bf16.mxu0 %v3982
  %4290 = vmatpush2.bf16.msra.mxu0 %v3981
  %4291 = vmatprep.subr.bf16.mxu0 %v3978
  %4292 = vmatpush2.bf16.msra.mxu0 %v3977
  %4293 = vmatprep.subr.bf16.mxu0 %v3974
  %4294 = vmatpush2.bf16.msra.mxu0 %v3973
  %4295 = vmatprep.subr.bf16.mxu0 %v3970
  %4296 = vmatpush2.bf16.msra.mxu0 %v3969
  %4297 = vmatprep.subr.bf16.mxu0 %v3966
  %4298 = vmatpush2.bf16.msra.mxu0 %v3965
  %4299 = vmatprep.subr.bf16.mxu0 %v3962
  %4300 = vmatpush2.bf16.msra.mxu0 %v3961
  %4301 = vmatprep.mubr.bf16.mxu0 %v3514
  %4302 = vmatmul.mubr.bf16.gmra.mxu0 %v3502
  %v4303 = vpop.f32.mrf.mxu0
  %v4304 = vadd.f32 0.0, %v4303
  %v4305 = vpop.f32.mrf.mxu0
  %v4306 = vadd.f32 0.0, %v4305
  %v4307 = vpop.f32.mrf.mxu0
  %v4308 = vadd.f32 0.0, %v4307
  %v4309 = vpop.f32.mrf.mxu0
  %v4310 = vadd.f32 0.0, %v4309
  %4311 = vdwg.mxu0
  %4312 = vmatprep.subr.bf16.mxu0 %v4022
  %4313 = vmatpush1.bf16.msra.mxu0 %v4021
  %4314 = vmatprep.subr.bf16.mxu0 %v4018
  %4315 = vmatpush1.bf16.msra.mxu0 %v4017
  %4316 = vmatprep.subr.bf16.mxu0 %v4014
  %4317 = vmatpush1.bf16.msra.mxu0 %v4013
  %4318 = vmatprep.subr.bf16.mxu0 %v4010
  %4319 = vmatpush1.bf16.msra.mxu0 %v4009
  %4320 = vmatprep.subr.bf16.mxu0 %v4006
  %4321 = vmatpush1.bf16.msra.mxu0 %v4005
  %4322 = vmatprep.subr.bf16.mxu0 %v4002
  %4323 = vmatpush1.bf16.msra.mxu0 %v4001
  %4324 = vmatprep.subr.bf16.mxu0 %v3998
  %4325 = vmatpush1.bf16.msra.mxu0 %v3997
  %4326 = vmatprep.subr.bf16.mxu0 %v3994
  %4327 = vmatpush1.bf16.msra.mxu0 %v3993
  %4328 = vmatprep.subr.bf16.mxu0 %v4054
  %4329 = vmatpush2.bf16.msra.mxu0 %v4053
  %4330 = vmatprep.subr.bf16.mxu0 %v4050
  %4331 = vmatpush2.bf16.msra.mxu0 %v4049
  %4332 = vmatprep.subr.bf16.mxu0 %v4046
  %4333 = vmatpush2.bf16.msra.mxu0 %v4045
  %4334 = vmatprep.subr.bf16.mxu0 %v4042
  %4335 = vmatpush2.bf16.msra.mxu0 %v4041
  %4336 = vmatprep.subr.bf16.mxu0 %v4038
  %4337 = vmatpush2.bf16.msra.mxu0 %v4037
  %4338 = vmatprep.subr.bf16.mxu0 %v4034
  %4339 = vmatpush2.bf16.msra.mxu0 %v4033
  %4340 = vmatprep.subr.bf16.mxu0 %v4030
  %4341 = vmatpush2.bf16.msra.mxu0 %v4029
  %4342 = vmatprep.subr.bf16.mxu0 %v4026
  %4343 = vmatpush2.bf16.msra.mxu0 %v4025
  %4344 = vmatprep.mubr.bf16.mxu0 %v3538
  %4345 = vmatmul.mubr.bf16.gmra.mxu0 %v3526
  %v4346 = vpop.f32.mrf.mxu0
  %v4347 = vadd.f32 %v4304, %v4346
  %v4348 = vpop.f32.mrf.mxu0
  %v4349 = vadd.f32 %v4306, %v4348
  %v4350 = vpop.f32.mrf.mxu0
  %v4351 = vadd.f32 %v4308, %v4350
  %v4352 = vpop.f32.mrf.mxu0
  %v4353 = vadd.f32 %v4310, %v4352
  %4354 = vdwg.mxu0
  %v4487 = vunpack.c.l.b16 %v3207
  %v4488 = vunpack.c.h.b16 %v3207
  %v4489 = vunpack.c.l.b16 %v3208
  %v4490 = vunpack.c.h.b16 %v3208
  %v4491 = vunpack.c.l.b16 %v3209
  %v4492 = vunpack.c.h.b16 %v3209
  %v4493 = vunpack.c.l.b16 %v3210
  %v4494 = vunpack.c.h.b16 %v3210
  %v4495 = vunpack.c.l.b16 %v3211
  %v4496 = vunpack.c.h.b16 %v3211
  %v4497 = vunpack.c.l.b16 %v3212
  %v4498 = vunpack.c.h.b16 %v3212
  %v4499 = vunpack.c.l.b16 %v3213
  %v4500 = vunpack.c.h.b16 %v3213
  %v4501 = vunpack.c.l.b16 %v3214
  %v4502 = vunpack.c.h.b16 %v3214
  %v4503 = vunpack.c.l.b16 %v3215
  %v4504 = vunpack.c.h.b16 %v3215
  %v4505 = vunpack.c.l.b16 %v3216
  %v4506 = vunpack.c.h.b16 %v3216
  %v4507 = vunpack.c.l.b16 %v3217
  %v4508 = vunpack.c.h.b16 %v3217
  %v4509 = vunpack.c.l.b16 %v3218
  %v4510 = vunpack.c.h.b16 %v3218
  %v4511 = vunpack.c.l.b16 %v3219
  %v4512 = vunpack.c.h.b16 %v3219
  %v4513 = vunpack.c.l.b16 %v3220
  %v4514 = vunpack.c.h.b16 %v3220
  %v4515 = vunpack.c.l.b16 %v3221
  %v4516 = vunpack.c.h.b16 %v3221
  %v4517 = vunpack.c.l.b16 %v3222
  %v4518 = vunpack.c.h.b16 %v3222
  %v4519 = vunpack.c.l.b16 %v3223
  %v4520 = vunpack.c.h.b16 %v3223
  %v4521 = vunpack.c.l.b16 %v3224
  %v4522 = vunpack.c.h.b16 %v3224
  %v4523 = vunpack.c.l.b16 %v3225
  %v4524 = vunpack.c.h.b16 %v3225
  %v4525 = vunpack.c.l.b16 %v3226
  %v4526 = vunpack.c.h.b16 %v3226
  %v4527 = vunpack.c.l.b16 %v3227
  %v4528 = vunpack.c.h.b16 %v3227
  %v4529 = vunpack.c.l.b16 %v3228
  %v4530 = vunpack.c.h.b16 %v3228
  %v4531 = vunpack.c.l.b16 %v3229
  %v4532 = vunpack.c.h.b16 %v3229
  %v4533 = vunpack.c.l.b16 %v3230
  %v4534 = vunpack.c.h.b16 %v3230
  %v4535 = vunpack.c.l.b16 %v3231
  %v4536 = vunpack.c.h.b16 %v3231
  %v4537 = vunpack.c.l.b16 %v3232
  %v4538 = vunpack.c.h.b16 %v3232
  %v4539 = vunpack.c.l.b16 %v3233
  %v4540 = vunpack.c.h.b16 %v3233
  %v4541 = vunpack.c.l.b16 %v3234
  %v4542 = vunpack.c.h.b16 %v3234
  %v4543 = vunpack.c.l.b16 %v3235
  %v4544 = vunpack.c.h.b16 %v3235
  %v4545 = vunpack.c.l.b16 %v3236
  %v4546 = vunpack.c.h.b16 %v3236
  %v4547 = vunpack.c.l.b16 %v3237
  %v4548 = vunpack.c.h.b16 %v3237
  %v4549 = vunpack.c.l.b16 %v3238
  %v4550 = vunpack.c.h.b16 %v3238
  %v4551 = vunpack.c.l.b16 %v3239
  %v4552 = vunpack.c.h.b16 %v3239
  %v4553 = vunpack.c.l.b16 %v3240
  %v4554 = vunpack.c.h.b16 %v3240
  %v4555 = vunpack.c.l.b16 %v3241
  %v4556 = vunpack.c.h.b16 %v3241
  %v4557 = vunpack.c.l.b16 %v3242
  %v4558 = vunpack.c.h.b16 %v3242
  %v4559 = vunpack.c.l.b16 %v3243
  %v4560 = vunpack.c.h.b16 %v3243
  %v4561 = vunpack.c.l.b16 %v3244
  %v4562 = vunpack.c.h.b16 %v3244
  %v4563 = vunpack.c.l.b16 %v3245
  %v4564 = vunpack.c.h.b16 %v3245
  %v4565 = vunpack.c.l.b16 %v3246
  %v4566 = vunpack.c.h.b16 %v3246
  %v4567 = vunpack.c.l.b16 %v3247
  %v4568 = vunpack.c.h.b16 %v3247
  %v4569 = vunpack.c.l.b16 %v3248
  %v4570 = vunpack.c.h.b16 %v3248
  %v4571 = vunpack.c.l.b16 %v3249
  %v4572 = vunpack.c.h.b16 %v3249
  %v4573 = vunpack.c.l.b16 %v3250
  %v4574 = vunpack.c.h.b16 %v3250
  %v4575 = vunpack.c.l.b16 %v3251
  %v4576 = vunpack.c.h.b16 %v3251
  %v4577 = vunpack.c.l.b16 %v3252
  %v4578 = vunpack.c.h.b16 %v3252
  %v4579 = vunpack.c.l.b16 %v3253
  %v4580 = vunpack.c.h.b16 %v3253
  %v4581 = vunpack.c.l.b16 %v3254
  %v4582 = vunpack.c.h.b16 %v3254
  %v4583 = vunpack.c.l.b16 %v3255
  %v4584 = vunpack.c.h.b16 %v3255
  %v4585 = vunpack.c.l.b16 %v3256
  %v4586 = vunpack.c.h.b16 %v3256
  %v4587 = vunpack.c.l.b16 %v3257
  %v4588 = vunpack.c.h.b16 %v3257
  %v4589 = vunpack.c.l.b16 %v3258
  %v4590 = vunpack.c.h.b16 %v3258
  %v4591 = vunpack.c.l.b16 %v3259
  %v4592 = vunpack.c.h.b16 %v3259
  %v4593 = vunpack.c.l.b16 %v3260
  %v4594 = vunpack.c.h.b16 %v3260
  %v4595 = vunpack.c.l.b16 %v3261
  %v4596 = vunpack.c.h.b16 %v3261
  %v4597 = vunpack.c.l.b16 %v3262
  %v4598 = vunpack.c.h.b16 %v3262
  %v4599 = vunpack.c.l.b16 %v3263
  %v4600 = vunpack.c.h.b16 %v3263
  %v4601 = vunpack.c.l.b16 %v3264
  %v4602 = vunpack.c.h.b16 %v3264
  %v4603 = vunpack.c.l.b16 %v3265
  %v4604 = vunpack.c.h.b16 %v3265
  %v4605 = vunpack.c.l.b16 %v3266
  %v4606 = vunpack.c.h.b16 %v3266
  %v4607 = vunpack.c.l.b16 %v3267
  %v4608 = vunpack.c.h.b16 %v3267
  %v4609 = vunpack.c.l.b16 %v3268
  %v4610 = vunpack.c.h.b16 %v3268
  %v4611 = vunpack.c.l.b16 %v3269
  %v4612 = vunpack.c.h.b16 %v3269
  %v4613 = vunpack.c.l.b16 %v3270
  %v4614 = vunpack.c.h.b16 %v3270
  %v4615 = vunpack.c.l.b16 %v3271
  %v4616 = vunpack.c.h.b16 %v3271
  %v4617 = vunpack.c.l.b16 %v3272
  %v4618 = vunpack.c.h.b16 %v3272
  %v4619 = vunpack.c.l.b16 %v3273
  %v4620 = vunpack.c.h.b16 %v3273
  %v4621 = vunpack.c.l.b16 %v3274
  %v4622 = vunpack.c.h.b16 %v3274
  %v4623 = vunpack.c.l.b16 %v3275
  %v4624 = vunpack.c.h.b16 %v3275
  %v4625 = vunpack.c.l.b16 %v3276
  %v4626 = vunpack.c.h.b16 %v3276
  %v4627 = vunpack.c.l.b16 %v3277
  %v4628 = vunpack.c.h.b16 %v3277
  %v4629 = vunpack.c.l.b16 %v3278
  %v4630 = vunpack.c.h.b16 %v3278
  %v4631 = vunpack.c.l.b16 %v3279
  %v4632 = vunpack.c.h.b16 %v3279
  %v4633 = vunpack.c.l.b16 %v3280
  %v4634 = vunpack.c.h.b16 %v3280
  %v4635 = vunpack.c.l.b16 %v3281
  %v4636 = vunpack.c.h.b16 %v3281
  %v4637 = vunpack.c.l.b16 %v3282
  %v4638 = vunpack.c.h.b16 %v3282
  %v4639 = vunpack.c.l.b16 %v3283
  %v4640 = vunpack.c.h.b16 %v3283
  %v4641 = vunpack.c.l.b16 %v3284
  %v4642 = vunpack.c.h.b16 %v3284
  %v4643 = vunpack.c.l.b16 %v3285
  %v4644 = vunpack.c.h.b16 %v3285
  %v4645 = vunpack.c.l.b16 %v3286
  %v4646 = vunpack.c.h.b16 %v3286
  %v4647 = vunpack.c.l.b16 %v3287
  %v4648 = vunpack.c.h.b16 %v3287
  %v4649 = vunpack.c.l.b16 %v3288
  %v4650 = vunpack.c.h.b16 %v3288
  %v4651 = vunpack.c.l.b16 %v3289
  %v4652 = vunpack.c.h.b16 %v3289
  %v4653 = vunpack.c.l.b16 %v3290
  %v4654 = vunpack.c.h.b16 %v3290
  %v4655 = vunpack.c.l.b16 %v3291
  %v4656 = vunpack.c.h.b16 %v3291
  %v4657 = vunpack.c.l.b16 %v3292
  %v4658 = vunpack.c.h.b16 %v3292
  %v4659 = vunpack.c.l.b16 %v3293
  %v4660 = vunpack.c.h.b16 %v3293
  %v4661 = vunpack.c.l.b16 %v3294
  %v4662 = vunpack.c.h.b16 %v3294
  %v4663 = vunpack.c.l.b16 %v3295
  %v4664 = vunpack.c.h.b16 %v3295
  %v4665 = vunpack.c.l.b16 %v3296
  %v4666 = vunpack.c.h.b16 %v3296
  %v4667 = vunpack.c.l.b16 %v3297
  %v4668 = vunpack.c.h.b16 %v3297
  %v4669 = vunpack.c.l.b16 %v3298
  %v4670 = vunpack.c.h.b16 %v3298
  %v4671 = vunpack.c.l.b16 %v3299
  %v4672 = vunpack.c.h.b16 %v3299
  %v4673 = vunpack.c.l.b16 %v3300
  %v4674 = vunpack.c.h.b16 %v3300
  %v4675 = vunpack.c.l.b16 %v3301
  %v4676 = vunpack.c.h.b16 %v3301
  %v4677 = vunpack.c.l.b16 %v3302
  %v4678 = vunpack.c.h.b16 %v3302
  %v4679 = vunpack.c.l.b16 %v3303
  %v4680 = vunpack.c.h.b16 %v3303
  %v4681 = vunpack.c.l.b16 %v3304
  %v4682 = vunpack.c.h.b16 %v3304
  %v4683 = vunpack.c.l.b16 %v3305
  %v4684 = vunpack.c.h.b16 %v3305
  %v4685 = vunpack.c.l.b16 %v3306
  %v4686 = vunpack.c.h.b16 %v3306
  %v4687 = vunpack.c.l.b16 %v3307
  %v4688 = vunpack.c.h.b16 %v3307
  %v4689 = vunpack.c.l.b16 %v3308
  %v4690 = vunpack.c.h.b16 %v3308
  %v4691 = vunpack.c.l.b16 %v3309
  %v4692 = vunpack.c.h.b16 %v3309
  %v4693 = vunpack.c.l.b16 %v3310
  %v4694 = vunpack.c.h.b16 %v3310
  %v4695 = vunpack.c.l.b16 %v3311
  %v4696 = vunpack.c.h.b16 %v3311
  %v4697 = vunpack.c.l.b16 %v3312
  %v4698 = vunpack.c.h.b16 %v3312
  %v4699 = vunpack.c.l.b16 %v3313
  %v4700 = vunpack.c.h.b16 %v3313
  %v4701 = vunpack.c.l.b16 %v3314
  %v4702 = vunpack.c.h.b16 %v3314
  %v4703 = vunpack.c.l.b16 %v3315
  %v4704 = vunpack.c.h.b16 %v3315
  %v4705 = vunpack.c.l.b16 %v3316
  %v4706 = vunpack.c.h.b16 %v3316
  %v4707 = vunpack.c.l.b16 %v3317
  %v4708 = vunpack.c.h.b16 %v3317
  %v4709 = vunpack.c.l.b16 %v3318
  %v4710 = vunpack.c.h.b16 %v3318
  %v4711 = vunpack.c.l.b16 %v3319
  %v4712 = vunpack.c.h.b16 %v3319
  %v4713 = vunpack.c.l.b16 %v3320
  %v4714 = vunpack.c.h.b16 %v3320
  %v4715 = vunpack.c.l.b16 %v3321
  %v4716 = vunpack.c.h.b16 %v3321
  %v4717 = vunpack.c.l.b16 %v3322
  %v4718 = vunpack.c.h.b16 %v3322
  %v4719 = vunpack.c.l.b16 %v3323
  %v4720 = vunpack.c.h.b16 %v3323
  %v4721 = vunpack.c.l.b16 %v3324
  %v4722 = vunpack.c.h.b16 %v3324
  %v4723 = vunpack.c.l.b16 %v3325
  %v4724 = vunpack.c.h.b16 %v3325
  %v4725 = vunpack.c.l.b16 %v3326
  %v4726 = vunpack.c.h.b16 %v3326
  %v4727 = vunpack.c.l.b16 %v3327
  %v4728 = vunpack.c.h.b16 %v3327
  %v4729 = vunpack.c.l.b16 %v3328
  %v4730 = vunpack.c.h.b16 %v3328
  %v4731 = vunpack.c.l.b16 %v3329
  %v4732 = vunpack.c.h.b16 %v3329
  %v4733 = vunpack.c.l.b16 %v3330
  %v4734 = vunpack.c.h.b16 %v3330
  %v4735 = vunpack.c.l.b16 %v3331
  %v4736 = vunpack.c.h.b16 %v3331
  %v4737 = vunpack.c.l.b16 %v3332
  %v4738 = vunpack.c.h.b16 %v3332
  %v4739 = vunpack.c.l.b16 %v3333
  %v4740 = vunpack.c.h.b16 %v3333
  %v4741 = vunpack.c.l.b16 %v3334
  %v4742 = vunpack.c.h.b16 %v3334
  %v4743 = vpack.c.b16 %v4491, %v4487
  %v4744 = vpack.c.b16 %v4492, %v4488
  %v4745 = vpack.c.b16 %v4493, %v4489
  %v4746 = vpack.c.b16 %v4494, %v4490
  %v4747 = vpack.c.b16 %v4499, %v4495
  %v4748 = vpack.c.b16 %v4500, %v4496
  %v4749 = vpack.c.b16 %v4501, %v4497
  %v4750 = vpack.c.b16 %v4502, %v4498
  %v4751 = vpack.c.b16 %v4507, %v4503
  %v4752 = vpack.c.b16 %v4508, %v4504
  %v4753 = vpack.c.b16 %v4509, %v4505
  %v4754 = vpack.c.b16 %v4510, %v4506
  %v4755 = vpack.c.b16 %v4515, %v4511
  %v4756 = vpack.c.b16 %v4516, %v4512
  %v4757 = vpack.c.b16 %v4517, %v4513
  %v4758 = vpack.c.b16 %v4518, %v4514
  %v4759 = vpack.c.b16 %v4523, %v4519
  %v4760 = vpack.c.b16 %v4524, %v4520
  %v4761 = vpack.c.b16 %v4525, %v4521
  %v4762 = vpack.c.b16 %v4526, %v4522
  %v4763 = vpack.c.b16 %v4531, %v4527
  %v4764 = vpack.c.b16 %v4532, %v4528
  %v4765 = vpack.c.b16 %v4533, %v4529
  %v4766 = vpack.c.b16 %v4534, %v4530
  %v4767 = vpack.c.b16 %v4539, %v4535
  %v4768 = vpack.c.b16 %v4540, %v4536
  %v4769 = vpack.c.b16 %v4541, %v4537
  %v4770 = vpack.c.b16 %v4542, %v4538
  %v4771 = vpack.c.b16 %v4547, %v4543
  %v4772 = vpack.c.b16 %v4548, %v4544
  %v4773 = vpack.c.b16 %v4549, %v4545
  %v4774 = vpack.c.b16 %v4550, %v4546
  %v4775 = vpack.c.b16 %v4555, %v4551
  %v4776 = vpack.c.b16 %v4556, %v4552
  %v4777 = vpack.c.b16 %v4557, %v4553
  %v4778 = vpack.c.b16 %v4558, %v4554
  %v4779 = vpack.c.b16 %v4563, %v4559
  %v4780 = vpack.c.b16 %v4564, %v4560
  %v4781 = vpack.c.b16 %v4565, %v4561
  %v4782 = vpack.c.b16 %v4566, %v4562
  %v4783 = vpack.c.b16 %v4571, %v4567
  %v4784 = vpack.c.b16 %v4572, %v4568
  %v4785 = vpack.c.b16 %v4573, %v4569
  %v4786 = vpack.c.b16 %v4574, %v4570
  %v4787 = vpack.c.b16 %v4579, %v4575
  %v4788 = vpack.c.b16 %v4580, %v4576
  %v4789 = vpack.c.b16 %v4581, %v4577
  %v4790 = vpack.c.b16 %v4582, %v4578
  %v4791 = vpack.c.b16 %v4587, %v4583
  %v4792 = vpack.c.b16 %v4588, %v4584
  %v4793 = vpack.c.b16 %v4589, %v4585
  %v4794 = vpack.c.b16 %v4590, %v4586
  %v4795 = vpack.c.b16 %v4595, %v4591
  %v4796 = vpack.c.b16 %v4596, %v4592
  %v4797 = vpack.c.b16 %v4597, %v4593
  %v4798 = vpack.c.b16 %v4598, %v4594
  %v4799 = vpack.c.b16 %v4603, %v4599
  %v4800 = vpack.c.b16 %v4604, %v4600
  %v4801 = vpack.c.b16 %v4605, %v4601
  %v4802 = vpack.c.b16 %v4606, %v4602
  %v4803 = vpack.c.b16 %v4611, %v4607
  %v4804 = vpack.c.b16 %v4612, %v4608
  %v4805 = vpack.c.b16 %v4613, %v4609
  %v4806 = vpack.c.b16 %v4614, %v4610
  %v4807 = vpack.c.b16 %v4619, %v4615
  %v4808 = vpack.c.b16 %v4620, %v4616
  %v4809 = vpack.c.b16 %v4621, %v4617
  %v4810 = vpack.c.b16 %v4622, %v4618
  %v4811 = vpack.c.b16 %v4627, %v4623
  %v4812 = vpack.c.b16 %v4628, %v4624
  %v4813 = vpack.c.b16 %v4629, %v4625
  %v4814 = vpack.c.b16 %v4630, %v4626
  %v4815 = vpack.c.b16 %v4635, %v4631
  %v4816 = vpack.c.b16 %v4636, %v4632
  %v4817 = vpack.c.b16 %v4637, %v4633
  %v4818 = vpack.c.b16 %v4638, %v4634
  %v4819 = vpack.c.b16 %v4643, %v4639
  %v4820 = vpack.c.b16 %v4644, %v4640
  %v4821 = vpack.c.b16 %v4645, %v4641
  %v4822 = vpack.c.b16 %v4646, %v4642
  %v4823 = vpack.c.b16 %v4651, %v4647
  %v4824 = vpack.c.b16 %v4652, %v4648
  %v4825 = vpack.c.b16 %v4653, %v4649
  %v4826 = vpack.c.b16 %v4654, %v4650
  %v4827 = vpack.c.b16 %v4659, %v4655
  %v4828 = vpack.c.b16 %v4660, %v4656
  %v4829 = vpack.c.b16 %v4661, %v4657
  %v4830 = vpack.c.b16 %v4662, %v4658
  %v4831 = vpack.c.b16 %v4667, %v4663
  %v4832 = vpack.c.b16 %v4668, %v4664
  %v4833 = vpack.c.b16 %v4669, %v4665
  %v4834 = vpack.c.b16 %v4670, %v4666
  %v4835 = vpack.c.b16 %v4675, %v4671
  %v4836 = vpack.c.b16 %v4676, %v4672
  %v4837 = vpack.c.b16 %v4677, %v4673
  %v4838 = vpack.c.b16 %v4678, %v4674
  %v4839 = vpack.c.b16 %v4683, %v4679
  %v4840 = vpack.c.b16 %v4684, %v4680
  %v4841 = vpack.c.b16 %v4685, %v4681
  %v4842 = vpack.c.b16 %v4686, %v4682
  %v4843 = vpack.c.b16 %v4691, %v4687
  %v4844 = vpack.c.b16 %v4692, %v4688
  %v4845 = vpack.c.b16 %v4693, %v4689
  %v4846 = vpack.c.b16 %v4694, %v4690
  %v4847 = vpack.c.b16 %v4699, %v4695
  %v4848 = vpack.c.b16 %v4700, %v4696
  %v4849 = vpack.c.b16 %v4701, %v4697
  %v4850 = vpack.c.b16 %v4702, %v4698
  %v4851 = vpack.c.b16 %v4707, %v4703
  %v4852 = vpack.c.b16 %v4708, %v4704
  %v4853 = vpack.c.b16 %v4709, %v4705
  %v4854 = vpack.c.b16 %v4710, %v4706
  %v4855 = vpack.c.b16 %v4715, %v4711
  %v4856 = vpack.c.b16 %v4716, %v4712
  %v4857 = vpack.c.b16 %v4717, %v4713
  %v4858 = vpack.c.b16 %v4718, %v4714
  %v4859 = vpack.c.b16 %v4723, %v4719
  %v4860 = vpack.c.b16 %v4724, %v4720
  %v4861 = vpack.c.b16 %v4725, %v4721
  %v4862 = vpack.c.b16 %v4726, %v4722
  %v4863 = vpack.c.b16 %v4731, %v4727
  %v4864 = vpack.c.b16 %v4732, %v4728
  %v4865 = vpack.c.b16 %v4733, %v4729
  %v4866 = vpack.c.b16 %v4734, %v4730
  %v4867 = vpack.c.b16 %v4739, %v4735
  %v4868 = vpack.c.b16 %v4740, %v4736
  %v4869 = vpack.c.b16 %v4741, %v4737
  %v4870 = vpack.c.b16 %v4742, %v4738
  %4999 = vmatprep.subr.bf16.mxu0 %v4772
  %5000 = vmatpush1.bf16.msra.mxu0 %v4771
  %5001 = vmatprep.subr.bf16.mxu0 %v4768
  %5002 = vmatpush1.bf16.msra.mxu0 %v4767
  %5003 = vmatprep.subr.bf16.mxu0 %v4764
  %5004 = vmatpush1.bf16.msra.mxu0 %v4763
  %5005 = vmatprep.subr.bf16.mxu0 %v4760
  %5006 = vmatpush1.bf16.msra.mxu0 %v4759
  %5007 = vmatprep.subr.bf16.mxu0 %v4756
  %5008 = vmatpush1.bf16.msra.mxu0 %v4755
  %5009 = vmatprep.subr.bf16.mxu0 %v4752
  %5010 = vmatpush1.bf16.msra.mxu0 %v4751
  %5011 = vmatprep.subr.bf16.mxu0 %v4748
  %5012 = vmatpush1.bf16.msra.mxu0 %v4747
  %5013 = vmatprep.subr.bf16.mxu0 %v4744
  %5014 = vmatpush1.bf16.msra.mxu0 %v4743
  %5015 = vmatprep.subr.bf16.mxu0 %v4804
  %5016 = vmatpush2.bf16.msra.mxu0 %v4803
  %5017 = vmatprep.subr.bf16.mxu0 %v4800
  %5018 = vmatpush2.bf16.msra.mxu0 %v4799
  %5019 = vmatprep.subr.bf16.mxu0 %v4796
  %5020 = vmatpush2.bf16.msra.mxu0 %v4795
  %5021 = vmatprep.subr.bf16.mxu0 %v4792
  %5022 = vmatpush2.bf16.msra.mxu0 %v4791
  %5023 = vmatprep.subr.bf16.mxu0 %v4788
  %5024 = vmatpush2.bf16.msra.mxu0 %v4787
  %5025 = vmatprep.subr.bf16.mxu0 %v4784
  %5026 = vmatpush2.bf16.msra.mxu0 %v4783
  %5027 = vmatprep.subr.bf16.mxu0 %v4780
  %5028 = vmatpush2.bf16.msra.mxu0 %v4779
  %5029 = vmatprep.subr.bf16.mxu0 %v4776
  %5030 = vmatpush2.bf16.msra.mxu0 %v4775
  %5031 = vmatprep.mubr.bf16.mxu0 %v3484
  %5032 = vmatmul.mubr.bf16.gmra.mxu0 %v3483
  %v5033 = vpop.f32.mrf.mxu0
  %v5034 = vadd.f32 %v4261, %v5033
  %v5035 = vpop.f32.mrf.mxu0
  %v5036 = vadd.f32 %v4263, %v5035
  %v5037 = vpop.f32.mrf.mxu0
  %v5038 = vadd.f32 %v4265, %v5037
  %v5039 = vpop.f32.mrf.mxu0
  %v5040 = vadd.f32 %v4267, %v5039
  %5041 = vdwg.mxu0
  %5042 = vmatprep.subr.bf16.mxu0 %v4836
  %5043 = vmatpush1.bf16.msra.mxu0 %v4835
  %5044 = vmatprep.subr.bf16.mxu0 %v4832
  %5045 = vmatpush1.bf16.msra.mxu0 %v4831
  %5046 = vmatprep.subr.bf16.mxu0 %v4828
  %5047 = vmatpush1.bf16.msra.mxu0 %v4827
  %5048 = vmatprep.subr.bf16.mxu0 %v4824
  %5049 = vmatpush1.bf16.msra.mxu0 %v4823
  %5050 = vmatprep.subr.bf16.mxu0 %v4820
  %5051 = vmatpush1.bf16.msra.mxu0 %v4819
  %5052 = vmatprep.subr.bf16.mxu0 %v4816
  %5053 = vmatpush1.bf16.msra.mxu0 %v4815
  %5054 = vmatprep.subr.bf16.mxu0 %v4812
  %5055 = vmatpush1.bf16.msra.mxu0 %v4811
  %5056 = vmatprep.subr.bf16.mxu0 %v4808
  %5057 = vmatpush1.bf16.msra.mxu0 %v4807
  %5058 = vmatprep.subr.bf16.mxu0 %v4868
  %5059 = vmatpush2.bf16.msra.mxu0 %v4867
  %5060 = vmatprep.subr.bf16.mxu0 %v4864
  %5061 = vmatpush2.bf16.msra.mxu0 %v4863
  %5062 = vmatprep.subr.bf16.mxu0 %v4860
  %5063 = vmatpush2.bf16.msra.mxu0 %v4859
  %5064 = vmatprep.subr.bf16.mxu0 %v4856
  %5065 = vmatpush2.bf16.msra.mxu0 %v4855
  %5066 = vmatprep.subr.bf16.mxu0 %v4852
  %5067 = vmatpush2.bf16.msra.mxu0 %v4851
  %5068 = vmatprep.subr.bf16.mxu0 %v4848
  %5069 = vmatpush2.bf16.msra.mxu0 %v4847
  %5070 = vmatprep.subr.bf16.mxu0 %v4844
  %5071 = vmatpush2.bf16.msra.mxu0 %v4843
  %5072 = vmatprep.subr.bf16.mxu0 %v4840
  %5073 = vmatpush2.bf16.msra.mxu0 %v4839
  %5074 = vmatprep.mubr.bf16.mxu0 %v3486
  %5075 = vmatmul.mubr.bf16.gmra.mxu0 %v3485
  %v5076 = vpop.f32.mrf.mxu0
  %v5077 = vadd.f32 %v5034, %v5076
  %v5078 = vpop.f32.mrf.mxu0
  %v5079 = vadd.f32 %v5036, %v5078
  %v5080 = vpop.f32.mrf.mxu0
  %v5081 = vadd.f32 %v5038, %v5080
  %v5082 = vpop.f32.mrf.mxu0
  %v5083 = vadd.f32 %v5040, %v5082
  %5084 = vdwg.mxu0
  %5085 = vmatprep.subr.bf16.mxu0 %v4774
  %5086 = vmatpush1.bf16.msra.mxu0 %v4773
  %5087 = vmatprep.subr.bf16.mxu0 %v4770
  %5088 = vmatpush1.bf16.msra.mxu0 %v4769
  %5089 = vmatprep.subr.bf16.mxu0 %v4766
  %5090 = vmatpush1.bf16.msra.mxu0 %v4765
  %5091 = vmatprep.subr.bf16.mxu0 %v4762
  %5092 = vmatpush1.bf16.msra.mxu0 %v4761
  %5093 = vmatprep.subr.bf16.mxu0 %v4758
  %5094 = vmatpush1.bf16.msra.mxu0 %v4757
  %5095 = vmatprep.subr.bf16.mxu0 %v4754
  %5096 = vmatpush1.bf16.msra.mxu0 %v4753
  %5097 = vmatprep.subr.bf16.mxu0 %v4750
  %5098 = vmatpush1.bf16.msra.mxu0 %v4749
  %5099 = vmatprep.subr.bf16.mxu0 %v4746
  %5100 = vmatpush1.bf16.msra.mxu0 %v4745
  %5101 = vmatprep.subr.bf16.mxu0 %v4806
  %5102 = vmatpush2.bf16.msra.mxu0 %v4805
  %5103 = vmatprep.subr.bf16.mxu0 %v4802
  %5104 = vmatpush2.bf16.msra.mxu0 %v4801
  %5105 = vmatprep.subr.bf16.mxu0 %v4798
  %5106 = vmatpush2.bf16.msra.mxu0 %v4797
  %5107 = vmatprep.subr.bf16.mxu0 %v4794
  %5108 = vmatpush2.bf16.msra.mxu0 %v4793
  %5109 = vmatprep.subr.bf16.mxu0 %v4790
  %5110 = vmatpush2.bf16.msra.mxu0 %v4789
  %5111 = vmatprep.subr.bf16.mxu0 %v4786
  %5112 = vmatpush2.bf16.msra.mxu0 %v4785
  %5113 = vmatprep.subr.bf16.mxu0 %v4782
  %5114 = vmatpush2.bf16.msra.mxu0 %v4781
  %5115 = vmatprep.subr.bf16.mxu0 %v4778
  %5116 = vmatpush2.bf16.msra.mxu0 %v4777
  %5117 = vmatprep.mubr.bf16.mxu0 %v3484
  %5118 = vmatmul.mubr.bf16.gmra.mxu0 %v3483
  %v5119 = vpop.f32.mrf.mxu0
  %v5120 = vadd.f32 %v4347, %v5119
  %v5121 = vpop.f32.mrf.mxu0
  %v5122 = vadd.f32 %v4349, %v5121
  %v5123 = vpop.f32.mrf.mxu0
  %v5124 = vadd.f32 %v4351, %v5123
  %v5125 = vpop.f32.mrf.mxu0
  %v5126 = vadd.f32 %v4353, %v5125
  %5127 = vdwg.mxu0
  %5128 = vmatprep.subr.bf16.mxu0 %v4838
  %5129 = vmatpush1.bf16.msra.mxu0 %v4837
  %5130 = vmatprep.subr.bf16.mxu0 %v4834
  %5131 = vmatpush1.bf16.msra.mxu0 %v4833
  %5132 = vmatprep.subr.bf16.mxu0 %v4830
  %5133 = vmatpush1.bf16.msra.mxu0 %v4829
  %5134 = vmatprep.subr.bf16.mxu0 %v4826
  %5135 = vmatpush1.bf16.msra.mxu0 %v4825
  %5136 = vmatprep.subr.bf16.mxu0 %v4822
  %5137 = vmatpush1.bf16.msra.mxu0 %v4821
  %5138 = vmatprep.subr.bf16.mxu0 %v4818
  %5139 = vmatpush1.bf16.msra.mxu0 %v4817
  %5140 = vmatprep.subr.bf16.mxu0 %v4814
  %5141 = vmatpush1.bf16.msra.mxu0 %v4813
  %5142 = vmatprep.subr.bf16.mxu0 %v4810
  %5143 = vmatpush1.bf16.msra.mxu0 %v4809
  %5144 = vmatprep.subr.bf16.mxu0 %v4870
  %5145 = vmatpush2.bf16.msra.mxu0 %v4869
  %5146 = vmatprep.subr.bf16.mxu0 %v4866
  %5147 = vmatpush2.bf16.msra.mxu0 %v4865
  %5148 = vmatprep.subr.bf16.mxu0 %v4862
  %5149 = vmatpush2.bf16.msra.mxu0 %v4861
  %5150 = vmatprep.subr.bf16.mxu0 %v4858
  %5151 = vmatpush2.bf16.msra.mxu0 %v4857
  %5152 = vmatprep.subr.bf16.mxu0 %v4854
  %5153 = vmatpush2.bf16.msra.mxu0 %v4853
  %5154 = vmatprep.subr.bf16.mxu0 %v4850
  %5155 = vmatpush2.bf16.msra.mxu0 %v4849
  %5156 = vmatprep.subr.bf16.mxu0 %v4846
  %5157 = vmatpush2.bf16.msra.mxu0 %v4845
  %5158 = vmatprep.subr.bf16.mxu0 %v4842
  %5159 = vmatpush2.bf16.msra.mxu0 %v4841
  %5160 = vmatprep.mubr.bf16.mxu0 %v3486
  %5161 = vmatmul.mubr.bf16.gmra.mxu0 %v3485
  %v5162 = vpop.f32.mrf.mxu0
  %v5163 = vadd.f32 %v5120, %v5162
  %v5164 = vpop.f32.mrf.mxu0
  %v5165 = vadd.f32 %v5122, %v5164
  %v5166 = vpop.f32.mrf.mxu0
  %v5167 = vadd.f32 %v5124, %v5166
  %v5168 = vpop.f32.mrf.mxu0
  %v5169 = vadd.f32 %v5126, %v5168
  %5170 = vdwg.mxu0
  %v5171 = vld [vmem:[#allocation2] sm:$0xee]
  %v5172 = vld [vmem:[#allocation2 + $0x8] sm:$0xee]
  %v5173 = vld [vmem:[%s2088] sm:$0xff]
  %v5174 = vld [vmem:[%s2088 + $0x8] sm:$0xff]
  %v5175 = vld [vmem:[%s2088 + $0x10] sm:$0xff]
  %v5176 = vld [vmem:[%s2088 + $0x18] sm:$0xff]
  %v5177 = vld [vmem:[%s2088 + $0x20] sm:$0xff]
  %v5178 = vld [vmem:[%s2088 + $0x28] sm:$0xff]
  %v5179 = vld [vmem:[%s2088 + $0x30] sm:$0xff]
  %v5180 = vld [vmem:[%s2088 + $0x38] sm:$0xff]
  %v5181 = vld [vmem:[%s2088 + $0x40] sm:$0xff]
  %v5182 = vld [vmem:[%s2088 + $0x48] sm:$0xff]
  %v5183 = vld [vmem:[%s2088 + $0x50] sm:$0xff]
  %v5184 = vld [vmem:[%s2088 + $0x58] sm:$0xff]
  %v5185 = vld [vmem:[%s2088 + $0x60] sm:$0xff]
  %v5186 = vld [vmem:[%s2088 + $0x68] sm:$0xff]
  %v5187 = vld [vmem:[%s2088 + $0x70] sm:$0xff]
  %v5188 = vld [vmem:[%s2088 + $0x78] sm:$0xff]
  %v5189 = vld [vmem:[%s2088 + $0x80] sm:$0xff]
  %v5190 = vld [vmem:[%s2088 + $0x88] sm:$0xff]
  %v5191 = vld [vmem:[%s2088 + $0x90] sm:$0xff]
  %v5192 = vld [vmem:[%s2088 + $0x98] sm:$0xff]
  %v5193 = vld [vmem:[%s2088 + $0xa0] sm:$0xff]
  %v5194 = vld [vmem:[%s2088 + $0xa8] sm:$0xff]
  %v5195 = vld [vmem:[%s2088 + $0xb0] sm:$0xff]
  %v5196 = vld [vmem:[%s2088 + $0xb8] sm:$0xff]
  %v5197 = vld [vmem:[%s2088 + $0xc0] sm:$0xff]
  %v5198 = vld [vmem:[%s2088 + $0xc8] sm:$0xff]
  %v5199 = vld [vmem:[%s2088 + $0xd0] sm:$0xff]
  %v5200 = vld [vmem:[%s2088 + $0xd8] sm:$0xff]
  %v5201 = vld [vmem:[%s2088 + $0xe0] sm:$0xff]
  %v5202 = vld [vmem:[%s2088 + $0xe8] sm:$0xff]
  %v5203 = vld [vmem:[%s2088 + $0xf0] sm:$0xff]
  %v5204 = vld [vmem:[%s2088 + $0xf8] sm:$0xff]
  %v5205 = vld [vmem:[%s2088 + $0x100] sm:$0xff]
  %v5206 = vld [vmem:[%s2088 + $0x108] sm:$0xff]
  %v5207 = vld [vmem:[%s2088 + $0x110] sm:$0xff]
  %v5208 = vld [vmem:[%s2088 + $0x118] sm:$0xff]
  %v5209 = vld [vmem:[%s2088 + $0x120] sm:$0xff]
  %v5210 = vld [vmem:[%s2088 + $0x128] sm:$0xff]
  %v5211 = vld [vmem:[%s2088 + $0x130] sm:$0xff]
  %v5212 = vld [vmem:[%s2088 + $0x138] sm:$0xff]
  %v5213 = vld [vmem:[%s2088 + $0x140] sm:$0xff]
  %v5214 = vld [vmem:[%s2088 + $0x148] sm:$0xff]
  %v5215 = vld [vmem:[%s2088 + $0x150] sm:$0xff]
  %v5216 = vld [vmem:[%s2088 + $0x158] sm:$0xff]
  %v5217 = vld [vmem:[%s2088 + $0x160] sm:$0xff]
  %v5218 = vld [vmem:[%s2088 + $0x168] sm:$0xff]
  %v5219 = vld [vmem:[%s2088 + $0x170] sm:$0xff]
  %v5220 = vld [vmem:[%s2088 + $0x178] sm:$0xff]
  %v5221 = vld [vmem:[%s2088 + $0x180] sm:$0xff]
  %v5222 = vld [vmem:[%s2088 + $0x188] sm:$0xff]
  %v5223 = vld [vmem:[%s2088 + $0x190] sm:$0xff]
  %v5224 = vld [vmem:[%s2088 + $0x198] sm:$0xff]
  %v5225 = vld [vmem:[%s2088 + $0x1a0] sm:$0xff]
  %v5226 = vld [vmem:[%s2088 + $0x1a8] sm:$0xff]
  %v5227 = vld [vmem:[%s2088 + $0x1b0] sm:$0xff]
  %v5228 = vld [vmem:[%s2088 + $0x1b8] sm:$0xff]
  %v5229 = vld [vmem:[%s2088 + $0x1c0] sm:$0xff]
  %v5230 = vld [vmem:[%s2088 + $0x1c8] sm:$0xff]
  %v5231 = vld [vmem:[%s2088 + $0x1d0] sm:$0xff]
  %v5232 = vld [vmem:[%s2088 + $0x1d8] sm:$0xff]
  %v5233 = vld [vmem:[%s2088 + $0x1e0] sm:$0xff]
  %v5234 = vld [vmem:[%s2088 + $0x1e8] sm:$0xff]
  %v5235 = vld [vmem:[%s2088 + $0x1f0] sm:$0xff]
  %v5236 = vld [vmem:[%s2088 + $0x1f8] sm:$0xff]
  %v5237 = vld [vmem:[%s2088 + $0x200] sm:$0xff]
  %v5238 = vld [vmem:[%s2088 + $0x208] sm:$0xff]
  %v5239 = vld [vmem:[%s2088 + $0x210] sm:$0xff]
  %v5240 = vld [vmem:[%s2088 + $0x218] sm:$0xff]
  %v5241 = vld [vmem:[%s2088 + $0x220] sm:$0xff]
  %v5242 = vld [vmem:[%s2088 + $0x228] sm:$0xff]
  %v5243 = vld [vmem:[%s2088 + $0x230] sm:$0xff]
  %v5244 = vld [vmem:[%s2088 + $0x238] sm:$0xff]
  %v5245 = vld [vmem:[%s2088 + $0x240] sm:$0xff]
  %v5246 = vld [vmem:[%s2088 + $0x248] sm:$0xff]
  %v5247 = vld [vmem:[%s2088 + $0x250] sm:$0xff]
  %v5248 = vld [vmem:[%s2088 + $0x258] sm:$0xff]
  %v5249 = vld [vmem:[%s2088 + $0x260] sm:$0xff]
  %v5250 = vld [vmem:[%s2088 + $0x268] sm:$0xff]
  %v5251 = vld [vmem:[%s2088 + $0x270] sm:$0xff]
  %v5252 = vld [vmem:[%s2088 + $0x278] sm:$0xff]
  %v5253 = vld [vmem:[%s2088 + $0x280] sm:$0xff]
  %v5254 = vld [vmem:[%s2088 + $0x288] sm:$0xff]
  %v5255 = vld [vmem:[%s2088 + $0x290] sm:$0xff]
  %v5256 = vld [vmem:[%s2088 + $0x298] sm:$0xff]
  %v5257 = vld [vmem:[%s2088 + $0x2a0] sm:$0xff]
  %v5258 = vld [vmem:[%s2088 + $0x2a8] sm:$0xff]
  %v5259 = vld [vmem:[%s2088 + $0x2b0] sm:$0xff]
  %v5260 = vld [vmem:[%s2088 + $0x2b8] sm:$0xff]
  %v5261 = vld [vmem:[%s2088 + $0x2c0] sm:$0xff]
  %v5262 = vld [vmem:[%s2088 + $0x2c8] sm:$0xff]
  %v5263 = vld [vmem:[%s2088 + $0x2d0] sm:$0xff]
  %v5264 = vld [vmem:[%s2088 + $0x2d8] sm:$0xff]
  %v5265 = vld [vmem:[%s2088 + $0x2e0] sm:$0xff]
  %v5266 = vld [vmem:[%s2088 + $0x2e8] sm:$0xff]
  %v5267 = vld [vmem:[%s2088 + $0x2f0] sm:$0xff]
  %v5268 = vld [vmem:[%s2088 + $0x2f8] sm:$0xff]
  %v5269 = vld [vmem:[%s2088 + $0x300] sm:$0xff]
  %v5270 = vld [vmem:[%s2088 + $0x308] sm:$0xff]
  %v5271 = vld [vmem:[%s2088 + $0x310] sm:$0xff]
  %v5272 = vld [vmem:[%s2088 + $0x318] sm:$0xff]
  %v5273 = vld [vmem:[%s2088 + $0x320] sm:$0xff]
  %v5274 = vld [vmem:[%s2088 + $0x328] sm:$0xff]
  %v5275 = vld [vmem:[%s2088 + $0x330] sm:$0xff]
  %v5276 = vld [vmem:[%s2088 + $0x338] sm:$0xff]
  %v5277 = vld [vmem:[%s2088 + $0x340] sm:$0xff]
  %v5278 = vld [vmem:[%s2088 + $0x348] sm:$0xff]
  %v5279 = vld [vmem:[%s2088 + $0x350] sm:$0xff]
  %v5280 = vld [vmem:[%s2088 + $0x358] sm:$0xff]
  %v5281 = vld [vmem:[%s2088 + $0x360] sm:$0xff]
  %v5282 = vld [vmem:[%s2088 + $0x368] sm:$0xff]
  %v5283 = vld [vmem:[%s2088 + $0x370] sm:$0xff]
  %v5284 = vld [vmem:[%s2088 + $0x378] sm:$0xff]
  %v5285 = vld [vmem:[%s2088 + $0x380] sm:$0xff]
  %v5286 = vld [vmem:[%s2088 + $0x388] sm:$0xff]
  %v5287 = vld [vmem:[%s2088 + $0x390] sm:$0xff]
  %v5288 = vld [vmem:[%s2088 + $0x398] sm:$0xff]
  %v5289 = vld [vmem:[%s2088 + $0x3a0] sm:$0xff]
  %v5290 = vld [vmem:[%s2088 + $0x3a8] sm:$0xff]
  %v5291 = vld [vmem:[%s2088 + $0x3b0] sm:$0xff]
  %v5292 = vld [vmem:[%s2088 + $0x3b8] sm:$0xff]
  %v5293 = vld [vmem:[%s2088 + $0x3c0] sm:$0xff]
  %v5294 = vld [vmem:[%s2088 + $0x3c8] sm:$0xff]
  %v5295 = vld [vmem:[%s2088 + $0x3d0] sm:$0xff]
  %v5296 = vld [vmem:[%s2088 + $0x3d8] sm:$0xff]
  %v5297 = vld [vmem:[%s2088 + $0x3e0] sm:$0xff]
  %v5298 = vld [vmem:[%s2088 + $0x3e8] sm:$0xff]
  %v5299 = vld [vmem:[%s2088 + $0x3f0] sm:$0xff]
  %v5300 = vld [vmem:[%s2088 + $0x3f8] sm:$0xff]
  %v5303 = vunpack.c.l.b16 %v5171
  %v5304 = vunpack.c.h.b16 %v5171
  %v5305 = vunpack.c.l.b16 %v5172
  %v5306 = vunpack.c.h.b16 %v5172
  %v5307 = vpack.c.b16 %v3475, %v5303
  %v5308 = vpack.c.b16 %v3476, %v5304
  %v5309 = vpack.c.b16 %v3477, %v5305
  %v5310 = vpack.c.b16 %v3478, %v5306
  %v5311 = vrot.slane %v5307, 1
  %v5312 = vrot.slane %v3487, 1
  %v5313 = vsel %vm2227, %v5311, %v5312
  %v5314 = vrot.slane %v5308, 1
  %v5315 = vrot.slane %v3488, 1
  %v5316 = vsel %vm2227, %v5314, %v5315
  %v5317 = vrot.slane %v5309, 1
  %v5318 = vrot.slane %v3489, 1
  %v5319 = vsel %vm2227, %v5317, %v5318
  %v5320 = vrot.slane %v5310, 1
  %v5321 = vrot.slane %v3490, 1
  %v5322 = vsel %vm2227, %v5320, %v5321
  %v5455 = vunpack.c.l.b16 %v5173
  %v5456 = vunpack.c.h.b16 %v5173
  %v5457 = vunpack.c.l.b16 %v5174
  %v5458 = vunpack.c.h.b16 %v5174
  %v5459 = vunpack.c.l.b16 %v5175
  %v5460 = vunpack.c.h.b16 %v5175
  %v5461 = vunpack.c.l.b16 %v5176
  %v5462 = vunpack.c.h.b16 %v5176
  %v5463 = vunpack.c.l.b16 %v5177
  %v5464 = vunpack.c.h.b16 %v5177
  %v5465 = vunpack.c.l.b16 %v5178
  %v5466 = vunpack.c.h.b16 %v5178
  %v5467 = vunpack.c.l.b16 %v5179
  %v5468 = vunpack.c.h.b16 %v5179
  %v5469 = vunpack.c.l.b16 %v5180
  %v5470 = vunpack.c.h.b16 %v5180
  %v5471 = vunpack.c.l.b16 %v5181
  %v5472 = vunpack.c.h.b16 %v5181
  %v5473 = vunpack.c.l.b16 %v5182
  %v5474 = vunpack.c.h.b16 %v5182
  %v5475 = vunpack.c.l.b16 %v5183
  %v5476 = vunpack.c.h.b16 %v5183
  %v5477 = vunpack.c.l.b16 %v5184
  %v5478 = vunpack.c.h.b16 %v5184
  %v5479 = vunpack.c.l.b16 %v5185
  %v5480 = vunpack.c.h.b16 %v5185
  %v5481 = vunpack.c.l.b16 %v5186
  %v5482 = vunpack.c.h.b16 %v5186
  %v5483 = vunpack.c.l.b16 %v5187
  %v5484 = vunpack.c.h.b16 %v5187
  %v5485 = vunpack.c.l.b16 %v5188
  %v5486 = vunpack.c.h.b16 %v5188
  %v5487 = vunpack.c.l.b16 %v5189
  %v5488 = vunpack.c.h.b16 %v5189
  %v5489 = vunpack.c.l.b16 %v5190
  %v5490 = vunpack.c.h.b16 %v5190
  %v5491 = vunpack.c.l.b16 %v5191
  %v5492 = vunpack.c.h.b16 %v5191
  %v5493 = vunpack.c.l.b16 %v5192
  %v5494 = vunpack.c.h.b16 %v5192
  %v5495 = vunpack.c.l.b16 %v5193
  %v5496 = vunpack.c.h.b16 %v5193
  %v5497 = vunpack.c.l.b16 %v5194
  %v5498 = vunpack.c.h.b16 %v5194
  %v5499 = vunpack.c.l.b16 %v5195
  %v5500 = vunpack.c.h.b16 %v5195
  %v5501 = vunpack.c.l.b16 %v5196
  %v5502 = vunpack.c.h.b16 %v5196
  %v5503 = vunpack.c.l.b16 %v5197
  %v5504 = vunpack.c.h.b16 %v5197
  %v5505 = vunpack.c.l.b16 %v5198
  %v5506 = vunpack.c.h.b16 %v5198
  %v5507 = vunpack.c.l.b16 %v5199
  %v5508 = vunpack.c.h.b16 %v5199
  %v5509 = vunpack.c.l.b16 %v5200
  %v5510 = vunpack.c.h.b16 %v5200
  %v5511 = vunpack.c.l.b16 %v5201
  %v5512 = vunpack.c.h.b16 %v5201
  %v5513 = vunpack.c.l.b16 %v5202
  %v5514 = vunpack.c.h.b16 %v5202
  %v5515 = vunpack.c.l.b16 %v5203
  %v5516 = vunpack.c.h.b16 %v5203
  %v5517 = vunpack.c.l.b16 %v5204
  %v5518 = vunpack.c.h.b16 %v5204
  %v5519 = vunpack.c.l.b16 %v5205
  %v5520 = vunpack.c.h.b16 %v5205
  %v5521 = vunpack.c.l.b16 %v5206
  %v5522 = vunpack.c.h.b16 %v5206
  %v5523 = vunpack.c.l.b16 %v5207
  %v5524 = vunpack.c.h.b16 %v5207
  %v5525 = vunpack.c.l.b16 %v5208
  %v5526 = vunpack.c.h.b16 %v5208
  %v5527 = vunpack.c.l.b16 %v5209
  %v5528 = vunpack.c.h.b16 %v5209
  %v5529 = vunpack.c.l.b16 %v5210
  %v5530 = vunpack.c.h.b16 %v5210
  %v5531 = vunpack.c.l.b16 %v5211
  %v5532 = vunpack.c.h.b16 %v5211
  %v5533 = vunpack.c.l.b16 %v5212
  %v5534 = vunpack.c.h.b16 %v5212
  %v5535 = vunpack.c.l.b16 %v5213
  %v5536 = vunpack.c.h.b16 %v5213
  %v5537 = vunpack.c.l.b16 %v5214
  %v5538 = vunpack.c.h.b16 %v5214
  %v5539 = vunpack.c.l.b16 %v5215
  %v5540 = vunpack.c.h.b16 %v5215
  %v5541 = vunpack.c.l.b16 %v5216
  %v5542 = vunpack.c.h.b16 %v5216
  %v5543 = vunpack.c.l.b16 %v5217
  %v5544 = vunpack.c.h.b16 %v5217
  %v5545 = vunpack.c.l.b16 %v5218
  %v5546 = vunpack.c.h.b16 %v5218
  %v5547 = vunpack.c.l.b16 %v5219
  %v5548 = vunpack.c.h.b16 %v5219
  %v5549 = vunpack.c.l.b16 %v5220
  %v5550 = vunpack.c.h.b16 %v5220
  %v5551 = vunpack.c.l.b16 %v5221
  %v5552 = vunpack.c.h.b16 %v5221
  %v5553 = vunpack.c.l.b16 %v5222
  %v5554 = vunpack.c.h.b16 %v5222
  %v5555 = vunpack.c.l.b16 %v5223
  %v5556 = vunpack.c.h.b16 %v5223
  %v5557 = vunpack.c.l.b16 %v5224
  %v5558 = vunpack.c.h.b16 %v5224
  %v5559 = vunpack.c.l.b16 %v5225
  %v5560 = vunpack.c.h.b16 %v5225
  %v5561 = vunpack.c.l.b16 %v5226
  %v5562 = vunpack.c.h.b16 %v5226
  %v5563 = vunpack.c.l.b16 %v5227
  %v5564 = vunpack.c.h.b16 %v5227
  %v5565 = vunpack.c.l.b16 %v5228
  %v5566 = vunpack.c.h.b16 %v5228
  %v5567 = vunpack.c.l.b16 %v5229
  %v5568 = vunpack.c.h.b16 %v5229
  %v5569 = vunpack.c.l.b16 %v5230
  %v5570 = vunpack.c.h.b16 %v5230
  %v5571 = vunpack.c.l.b16 %v5231
  %v5572 = vunpack.c.h.b16 %v5231
  %v5573 = vunpack.c.l.b16 %v5232
  %v5574 = vunpack.c.h.b16 %v5232
  %v5575 = vunpack.c.l.b16 %v5233
  %v5576 = vunpack.c.h.b16 %v5233
  %v5577 = vunpack.c.l.b16 %v5234
  %v5578 = vunpack.c.h.b16 %v5234
  %v5579 = vunpack.c.l.b16 %v5235
  %v5580 = vunpack.c.h.b16 %v5235
  %v5581 = vunpack.c.l.b16 %v5236
  %v5582 = vunpack.c.h.b16 %v5236
  %v5583 = vunpack.c.l.b16 %v5237
  %v5584 = vunpack.c.h.b16 %v5237
  %v5585 = vunpack.c.l.b16 %v5238
  %v5586 = vunpack.c.h.b16 %v5238
  %v5587 = vunpack.c.l.b16 %v5239
  %v5588 = vunpack.c.h.b16 %v5239
  %v5589 = vunpack.c.l.b16 %v5240
  %v5590 = vunpack.c.h.b16 %v5240
  %v5591 = vunpack.c.l.b16 %v5241
  %v5592 = vunpack.c.h.b16 %v5241
  %v5593 = vunpack.c.l.b16 %v5242
  %v5594 = vunpack.c.h.b16 %v5242
  %v5595 = vunpack.c.l.b16 %v5243
  %v5596 = vunpack.c.h.b16 %v5243
  %v5597 = vunpack.c.l.b16 %v5244
  %v5598 = vunpack.c.h.b16 %v5244
  %v5599 = vunpack.c.l.b16 %v5245
  %v5600 = vunpack.c.h.b16 %v5245
  %v5601 = vunpack.c.l.b16 %v5246
  %v5602 = vunpack.c.h.b16 %v5246
  %v5603 = vunpack.c.l.b16 %v5247
  %v5604 = vunpack.c.h.b16 %v5247
  %v5605 = vunpack.c.l.b16 %v5248
  %v5606 = vunpack.c.h.b16 %v5248
  %v5607 = vunpack.c.l.b16 %v5249
  %v5608 = vunpack.c.h.b16 %v5249
  %v5609 = vunpack.c.l.b16 %v5250
  %v5610 = vunpack.c.h.b16 %v5250
  %v5611 = vunpack.c.l.b16 %v5251
  %v5612 = vunpack.c.h.b16 %v5251
  %v5613 = vunpack.c.l.b16 %v5252
  %v5614 = vunpack.c.h.b16 %v5252
  %v5615 = vunpack.c.l.b16 %v5253
  %v5616 = vunpack.c.h.b16 %v5253
  %v5617 = vunpack.c.l.b16 %v5254
  %v5618 = vunpack.c.h.b16 %v5254
  %v5619 = vunpack.c.l.b16 %v5255
  %v5620 = vunpack.c.h.b16 %v5255
  %v5621 = vunpack.c.l.b16 %v5256
  %v5622 = vunpack.c.h.b16 %v5256
  %v5623 = vunpack.c.l.b16 %v5257
  %v5624 = vunpack.c.h.b16 %v5257
  %v5625 = vunpack.c.l.b16 %v5258
  %v5626 = vunpack.c.h.b16 %v5258
  %v5627 = vunpack.c.l.b16 %v5259
  %v5628 = vunpack.c.h.b16 %v5259
  %v5629 = vunpack.c.l.b16 %v5260
  %v5630 = vunpack.c.h.b16 %v5260
  %v5631 = vunpack.c.l.b16 %v5261
  %v5632 = vunpack.c.h.b16 %v5261
  %v5633 = vunpack.c.l.b16 %v5262
  %v5634 = vunpack.c.h.b16 %v5262
  %v5635 = vunpack.c.l.b16 %v5263
  %v5636 = vunpack.c.h.b16 %v5263
  %v5637 = vunpack.c.l.b16 %v5264
  %v5638 = vunpack.c.h.b16 %v5264
  %v5639 = vunpack.c.l.b16 %v5265
  %v5640 = vunpack.c.h.b16 %v5265
  %v5641 = vunpack.c.l.b16 %v5266
  %v5642 = vunpack.c.h.b16 %v5266
  %v5643 = vunpack.c.l.b16 %v5267
  %v5644 = vunpack.c.h.b16 %v5267
  %v5645 = vunpack.c.l.b16 %v5268
  %v5646 = vunpack.c.h.b16 %v5268
  %v5647 = vunpack.c.l.b16 %v5269
  %v5648 = vunpack.c.h.b16 %v5269
  %v5649 = vunpack.c.l.b16 %v5270
  %v5650 = vunpack.c.h.b16 %v5270
  %v5651 = vunpack.c.l.b16 %v5271
  %v5652 = vunpack.c.h.b16 %v5271
  %v5653 = vunpack.c.l.b16 %v5272
  %v5654 = vunpack.c.h.b16 %v5272
  %v5655 = vunpack.c.l.b16 %v5273
  %v5656 = vunpack.c.h.b16 %v5273
  %v5657 = vunpack.c.l.b16 %v5274
  %v5658 = vunpack.c.h.b16 %v5274
  %v5659 = vunpack.c.l.b16 %v5275
  %v5660 = vunpack.c.h.b16 %v5275
  %v5661 = vunpack.c.l.b16 %v5276
  %v5662 = vunpack.c.h.b16 %v5276
  %v5663 = vunpack.c.l.b16 %v5277
  %v5664 = vunpack.c.h.b16 %v5277
  %v5665 = vunpack.c.l.b16 %v5278
  %v5666 = vunpack.c.h.b16 %v5278
  %v5667 = vunpack.c.l.b16 %v5279
  %v5668 = vunpack.c.h.b16 %v5279
  %v5669 = vunpack.c.l.b16 %v5280
  %v5670 = vunpack.c.h.b16 %v5280
  %v5671 = vunpack.c.l.b16 %v5281
  %v5672 = vunpack.c.h.b16 %v5281
  %v5673 = vunpack.c.l.b16 %v5282
  %v5674 = vunpack.c.h.b16 %v5282
  %v5675 = vunpack.c.l.b16 %v5283
  %v5676 = vunpack.c.h.b16 %v5283
  %v5677 = vunpack.c.l.b16 %v5284
  %v5678 = vunpack.c.h.b16 %v5284
  %v5679 = vunpack.c.l.b16 %v5285
  %v5680 = vunpack.c.h.b16 %v5285
  %v5681 = vunpack.c.l.b16 %v5286
  %v5682 = vunpack.c.h.b16 %v5286
  %v5683 = vunpack.c.l.b16 %v5287
  %v5684 = vunpack.c.h.b16 %v5287
  %v5685 = vunpack.c.l.b16 %v5288
  %v5686 = vunpack.c.h.b16 %v5288
  %v5687 = vunpack.c.l.b16 %v5289
  %v5688 = vunpack.c.h.b16 %v5289
  %v5689 = vunpack.c.l.b16 %v5290
  %v5690 = vunpack.c.h.b16 %v5290
  %v5691 = vunpack.c.l.b16 %v5291
  %v5692 = vunpack.c.h.b16 %v5291
  %v5693 = vunpack.c.l.b16 %v5292
  %v5694 = vunpack.c.h.b16 %v5292
  %v5695 = vunpack.c.l.b16 %v5293
  %v5696 = vunpack.c.h.b16 %v5293
  %v5697 = vunpack.c.l.b16 %v5294
  %v5698 = vunpack.c.h.b16 %v5294
  %v5699 = vunpack.c.l.b16 %v5295
  %v5700 = vunpack.c.h.b16 %v5295
  %v5701 = vunpack.c.l.b16 %v5296
  %v5702 = vunpack.c.h.b16 %v5296
  %v5703 = vunpack.c.l.b16 %v5297
  %v5704 = vunpack.c.h.b16 %v5297
  %v5705 = vunpack.c.l.b16 %v5298
  %v5706 = vunpack.c.h.b16 %v5298
  %v5707 = vunpack.c.l.b16 %v5299
  %v5708 = vunpack.c.h.b16 %v5299
  %v5709 = vunpack.c.l.b16 %v5300
  %v5710 = vunpack.c.h.b16 %v5300
  %v5711 = vpack.c.b16 %v5459, %v5455
  %v5712 = vpack.c.b16 %v5460, %v5456
  %v5713 = vpack.c.b16 %v5461, %v5457
  %v5714 = vpack.c.b16 %v5462, %v5458
  %v5715 = vpack.c.b16 %v5467, %v5463
  %v5716 = vpack.c.b16 %v5468, %v5464
  %v5717 = vpack.c.b16 %v5469, %v5465
  %v5718 = vpack.c.b16 %v5470, %v5466
  %v5719 = vpack.c.b16 %v5475, %v5471
  %v5720 = vpack.c.b16 %v5476, %v5472
  %v5721 = vpack.c.b16 %v5477, %v5473
  %v5722 = vpack.c.b16 %v5478, %v5474
  %v5723 = vpack.c.b16 %v5483, %v5479
  %v5724 = vpack.c.b16 %v5484, %v5480
  %v5725 = vpack.c.b16 %v5485, %v5481
  %v5726 = vpack.c.b16 %v5486, %v5482
  %v5727 = vpack.c.b16 %v5491, %v5487
  %v5728 = vpack.c.b16 %v5492, %v5488
  %v5729 = vpack.c.b16 %v5493, %v5489
  %v5730 = vpack.c.b16 %v5494, %v5490
  %v5731 = vpack.c.b16 %v5499, %v5495
  %v5732 = vpack.c.b16 %v5500, %v5496
  %v5733 = vpack.c.b16 %v5501, %v5497
  %v5734 = vpack.c.b16 %v5502, %v5498
  %v5735 = vpack.c.b16 %v5507, %v5503
  %v5736 = vpack.c.b16 %v5508, %v5504
  %v5737 = vpack.c.b16 %v5509, %v5505
  %v5738 = vpack.c.b16 %v5510, %v5506
  %v5739 = vpack.c.b16 %v5515, %v5511
  %v5740 = vpack.c.b16 %v5516, %v5512
  %v5741 = vpack.c.b16 %v5517, %v5513
  %v5742 = vpack.c.b16 %v5518, %v5514
  %v5743 = vpack.c.b16 %v5523, %v5519
  %v5744 = vpack.c.b16 %v5524, %v5520
  %v5745 = vpack.c.b16 %v5525, %v5521
  %v5746 = vpack.c.b16 %v5526, %v5522
  %v5747 = vpack.c.b16 %v5531, %v5527
  %v5748 = vpack.c.b16 %v5532, %v5528
  %v5749 = vpack.c.b16 %v5533, %v5529
  %v5750 = vpack.c.b16 %v5534, %v5530
  %v5751 = vpack.c.b16 %v5539, %v5535
  %v5752 = vpack.c.b16 %v5540, %v5536
  %v5753 = vpack.c.b16 %v5541, %v5537
  %v5754 = vpack.c.b16 %v5542, %v5538
  %v5755 = vpack.c.b16 %v5547, %v5543
  %v5756 = vpack.c.b16 %v5548, %v5544
  %v5757 = vpack.c.b16 %v5549, %v5545
  %v5758 = vpack.c.b16 %v5550, %v5546
  %v5759 = vpack.c.b16 %v5555, %v5551
  %v5760 = vpack.c.b16 %v5556, %v5552
  %v5761 = vpack.c.b16 %v5557, %v5553
  %v5762 = vpack.c.b16 %v5558, %v5554
  %v5763 = vpack.c.b16 %v5563, %v5559
  %v5764 = vpack.c.b16 %v5564, %v5560
  %v5765 = vpack.c.b16 %v5565, %v5561
  %v5766 = vpack.c.b16 %v5566, %v5562
  %v5767 = vpack.c.b16 %v5571, %v5567
  %v5768 = vpack.c.b16 %v5572, %v5568
  %v5769 = vpack.c.b16 %v5573, %v5569
  %v5770 = vpack.c.b16 %v5574, %v5570
  %v5771 = vpack.c.b16 %v5579, %v5575
  %v5772 = vpack.c.b16 %v5580, %v5576
  %v5773 = vpack.c.b16 %v5581, %v5577
  %v5774 = vpack.c.b16 %v5582, %v5578
  %v5775 = vpack.c.b16 %v5587, %v5583
  %v5776 = vpack.c.b16 %v5588, %v5584
  %v5777 = vpack.c.b16 %v5589, %v5585
  %v5778 = vpack.c.b16 %v5590, %v5586
  %v5779 = vpack.c.b16 %v5595, %v5591
  %v5780 = vpack.c.b16 %v5596, %v5592
  %v5781 = vpack.c.b16 %v5597, %v5593
  %v5782 = vpack.c.b16 %v5598, %v5594
  %v5783 = vpack.c.b16 %v5603, %v5599
  %v5784 = vpack.c.b16 %v5604, %v5600
  %v5785 = vpack.c.b16 %v5605, %v5601
  %v5786 = vpack.c.b16 %v5606, %v5602
  %v5787 = vpack.c.b16 %v5611, %v5607
  %v5788 = vpack.c.b16 %v5612, %v5608
  %v5789 = vpack.c.b16 %v5613, %v5609
  %v5790 = vpack.c.b16 %v5614, %v5610
  %v5791 = vpack.c.b16 %v5619, %v5615
  %v5792 = vpack.c.b16 %v5620, %v5616
  %v5793 = vpack.c.b16 %v5621, %v5617
  %v5794 = vpack.c.b16 %v5622, %v5618
  %v5795 = vpack.c.b16 %v5627, %v5623
  %v5796 = vpack.c.b16 %v5628, %v5624
  %v5797 = vpack.c.b16 %v5629, %v5625
  %v5798 = vpack.c.b16 %v5630, %v5626
  %v5799 = vpack.c.b16 %v5635, %v5631
  %v5800 = vpack.c.b16 %v5636, %v5632
  %v5801 = vpack.c.b16 %v5637, %v5633
  %v5802 = vpack.c.b16 %v5638, %v5634
  %v5803 = vpack.c.b16 %v5643, %v5639
  %v5804 = vpack.c.b16 %v5644, %v5640
  %v5805 = vpack.c.b16 %v5645, %v5641
  %v5806 = vpack.c.b16 %v5646, %v5642
  %v5807 = vpack.c.b16 %v5651, %v5647
  %v5808 = vpack.c.b16 %v5652, %v5648
  %v5809 = vpack.c.b16 %v5653, %v5649
  %v5810 = vpack.c.b16 %v5654, %v5650
  %v5811 = vpack.c.b16 %v5659, %v5655
  %v5812 = vpack.c.b16 %v5660, %v5656
  %v5813 = vpack.c.b16 %v5661, %v5657
  %v5814 = vpack.c.b16 %v5662, %v5658
  %v5815 = vpack.c.b16 %v5667, %v5663
  %v5816 = vpack.c.b16 %v5668, %v5664
  %v5817 = vpack.c.b16 %v5669, %v5665
  %v5818 = vpack.c.b16 %v5670, %v5666
  %v5819 = vpack.c.b16 %v5675, %v5671
  %v5820 = vpack.c.b16 %v5676, %v5672
  %v5821 = vpack.c.b16 %v5677, %v5673
  %v5822 = vpack.c.b16 %v5678, %v5674
  %v5823 = vpack.c.b16 %v5683, %v5679
  %v5824 = vpack.c.b16 %v5684, %v5680
  %v5825 = vpack.c.b16 %v5685, %v5681
  %v5826 = vpack.c.b16 %v5686, %v5682
  %v5827 = vpack.c.b16 %v5691, %v5687
  %v5828 = vpack.c.b16 %v5692, %v5688
  %v5829 = vpack.c.b16 %v5693, %v5689
  %v5830 = vpack.c.b16 %v5694, %v5690
  %v5831 = vpack.c.b16 %v5699, %v5695
  %v5832 = vpack.c.b16 %v5700, %v5696
  %v5833 = vpack.c.b16 %v5701, %v5697
  %v5834 = vpack.c.b16 %v5702, %v5698
  %v5835 = vpack.c.b16 %v5707, %v5703
  %v5836 = vpack.c.b16 %v5708, %v5704
  %v5837 = vpack.c.b16 %v5709, %v5705
  %v5838 = vpack.c.b16 %v5710, %v5706
  %5967 = vmatprep.subr.bf16.mxu0 %v5740
  %5968 = vmatpush1.bf16.msra.mxu0 %v5739
  %5969 = vmatprep.subr.bf16.mxu0 %v5736
  %5970 = vmatpush1.bf16.msra.mxu0 %v5735
  %5971 = vmatprep.subr.bf16.mxu0 %v5732
  %5972 = vmatpush1.bf16.msra.mxu0 %v5731
  %5973 = vmatprep.subr.bf16.mxu0 %v5728
  %5974 = vmatpush1.bf16.msra.mxu0 %v5727
  %5975 = vmatprep.subr.bf16.mxu0 %v5724
  %5976 = vmatpush1.bf16.msra.mxu0 %v5723
  %5977 = vmatprep.subr.bf16.mxu0 %v5720
  %5978 = vmatpush1.bf16.msra.mxu0 %v5719
  %5979 = vmatprep.subr.bf16.mxu0 %v5716
  %5980 = vmatpush1.bf16.msra.mxu0 %v5715
  %5981 = vmatprep.subr.bf16.mxu0 %v5712
  %5982 = vmatpush1.bf16.msra.mxu0 %v5711
  %5983 = vmatprep.subr.bf16.mxu0 %v5772
  %5984 = vmatpush2.bf16.msra.mxu0 %v5771
  %5985 = vmatprep.subr.bf16.mxu0 %v5768
  %5986 = vmatpush2.bf16.msra.mxu0 %v5767
  %5987 = vmatprep.subr.bf16.mxu0 %v5764
  %5988 = vmatpush2.bf16.msra.mxu0 %v5763
  %5989 = vmatprep.subr.bf16.mxu0 %v5760
  %5990 = vmatpush2.bf16.msra.mxu0 %v5759
  %5991 = vmatprep.subr.bf16.mxu0 %v5756
  %5992 = vmatpush2.bf16.msra.mxu0 %v5755
  %5993 = vmatprep.subr.bf16.mxu0 %v5752
  %5994 = vmatpush2.bf16.msra.mxu0 %v5751
  %5995 = vmatprep.subr.bf16.mxu0 %v5748
  %5996 = vmatpush2.bf16.msra.mxu0 %v5747
  %5997 = vmatprep.subr.bf16.mxu0 %v5744
  %5998 = vmatpush2.bf16.msra.mxu0 %v5743
  %5999 = vmatprep.mubr.bf16.mxu0 %v5316
  %6000 = vmatmul.mubr.bf16.gmra.mxu0 %v5313
  %v6001 = vpop.f32.mrf.mxu0
  %v6002 = vadd.f32 0.0, %v6001
  %v6003 = vpop.f32.mrf.mxu0
  %v6004 = vadd.f32 0.0, %v6003
  %v6005 = vpop.f32.mrf.mxu0
  %v6006 = vadd.f32 0.0, %v6005
  %v6007 = vpop.f32.mrf.mxu0
  %v6008 = vadd.f32 0.0, %v6007
  %6009 = vdwg.mxu0
  %6010 = vmatprep.subr.bf16.mxu0 %v5804
  %6011 = vmatpush1.bf16.msra.mxu0 %v5803
  %6012 = vmatprep.subr.bf16.mxu0 %v5800
  %6013 = vmatpush1.bf16.msra.mxu0 %v5799
  %6014 = vmatprep.subr.bf16.mxu0 %v5796
  %6015 = vmatpush1.bf16.msra.mxu0 %v5795
  %6016 = vmatprep.subr.bf16.mxu0 %v5792
  %6017 = vmatpush1.bf16.msra.mxu0 %v5791
  %6018 = vmatprep.subr.bf16.mxu0 %v5788
  %6019 = vmatpush1.bf16.msra.mxu0 %v5787
  %6020 = vmatprep.subr.bf16.mxu0 %v5784
  %6021 = vmatpush1.bf16.msra.mxu0 %v5783
  %6022 = vmatprep.subr.bf16.mxu0 %v5780
  %6023 = vmatpush1.bf16.msra.mxu0 %v5779
  %6024 = vmatprep.subr.bf16.mxu0 %v5776
  %6025 = vmatpush1.bf16.msra.mxu0 %v5775
  %6026 = vmatprep.subr.bf16.mxu0 %v5836
  %6027 = vmatpush2.bf16.msra.mxu0 %v5835
  %6028 = vmatprep.subr.bf16.mxu0 %v5832
  %6029 = vmatpush2.bf16.msra.mxu0 %v5831
  %6030 = vmatprep.subr.bf16.mxu0 %v5828
  %6031 = vmatpush2.bf16.msra.mxu0 %v5827
  %6032 = vmatprep.subr.bf16.mxu0 %v5824
  %6033 = vmatpush2.bf16.msra.mxu0 %v5823
  %6034 = vmatprep.subr.bf16.mxu0 %v5820
  %6035 = vmatpush2.bf16.msra.mxu0 %v5819
  %6036 = vmatprep.subr.bf16.mxu0 %v5816
  %6037 = vmatpush2.bf16.msra.mxu0 %v5815
  %6038 = vmatprep.subr.bf16.mxu0 %v5812
  %6039 = vmatpush2.bf16.msra.mxu0 %v5811
  %6040 = vmatprep.subr.bf16.mxu0 %v5808
  %6041 = vmatpush2.bf16.msra.mxu0 %v5807
  %6042 = vmatprep.mubr.bf16.mxu0 %v5322
  %6043 = vmatmul.mubr.bf16.gmra.mxu0 %v5319
  %v6044 = vpop.f32.mrf.mxu0
  %v6045 = vadd.f32 %v6002, %v6044
  %v6046 = vpop.f32.mrf.mxu0
  %v6047 = vadd.f32 %v6004, %v6046
  %v6048 = vpop.f32.mrf.mxu0
  %v6049 = vadd.f32 %v6006, %v6048
  %v6050 = vpop.f32.mrf.mxu0
  %v6051 = vadd.f32 %v6008, %v6050
  %6052 = vdwg.mxu0
  %6053 = vmatprep.subr.bf16.mxu0 %v5742
  %6054 = vmatpush1.bf16.msra.mxu0 %v5741
  %6055 = vmatprep.subr.bf16.mxu0 %v5738
  %6056 = vmatpush1.bf16.msra.mxu0 %v5737
  %6057 = vmatprep.subr.bf16.mxu0 %v5734
  %6058 = vmatpush1.bf16.msra.mxu0 %v5733
  %6059 = vmatprep.subr.bf16.mxu0 %v5730
  %6060 = vmatpush1.bf16.msra.mxu0 %v5729
  %6061 = vmatprep.subr.bf16.mxu0 %v5726
  %6062 = vmatpush1.bf16.msra.mxu0 %v5725
  %6063 = vmatprep.subr.bf16.mxu0 %v5722
  %6064 = vmatpush1.bf16.msra.mxu0 %v5721
  %6065 = vmatprep.subr.bf16.mxu0 %v5718
  %6066 = vmatpush1.bf16.msra.mxu0 %v5717
  %6067 = vmatprep.subr.bf16.mxu0 %v5714
  %6068 = vmatpush1.bf16.msra.mxu0 %v5713
  %6069 = vmatprep.subr.bf16.mxu0 %v5774
  %6070 = vmatpush2.bf16.msra.mxu0 %v5773
  %6071 = vmatprep.subr.bf16.mxu0 %v5770
  %6072 = vmatpush2.bf16.msra.mxu0 %v5769
  %6073 = vmatprep.subr.bf16.mxu0 %v5766
  %6074 = vmatpush2.bf16.msra.mxu0 %v5765
  %6075 = vmatprep.subr.bf16.mxu0 %v5762
  %6076 = vmatpush2.bf16.msra.mxu0 %v5761
  %6077 = vmatprep.subr.bf16.mxu0 %v5758
  %6078 = vmatpush2.bf16.msra.mxu0 %v5757
  %6079 = vmatprep.subr.bf16.mxu0 %v5754
  %6080 = vmatpush2.bf16.msra.mxu0 %v5753
  %6081 = vmatprep.subr.bf16.mxu0 %v5750
  %6082 = vmatpush2.bf16.msra.mxu0 %v5749
  %6083 = vmatprep.subr.bf16.mxu0 %v5746
  %6084 = vmatpush2.bf16.msra.mxu0 %v5745
  %6085 = vmatprep.mubr.bf16.mxu0 %v5316
  %6086 = vmatmul.mubr.bf16.gmra.mxu0 %v5313
  %v6087 = vpop.f32.mrf.mxu0
  %v6088 = vadd.f32 0.0, %v6087
  %v6089 = vpop.f32.mrf.mxu0
  %v6090 = vadd.f32 0.0, %v6089
  %v6091 = vpop.f32.mrf.mxu0
  %v6092 = vadd.f32 0.0, %v6091
  %v6093 = vpop.f32.mrf.mxu0
  %v6094 = vadd.f32 0.0, %v6093
  %6095 = vdwg.mxu0
  %6096 = vmatprep.subr.bf16.mxu0 %v5806
  %6097 = vmatpush1.bf16.msra.mxu0 %v5805
  %6098 = vmatprep.subr.bf16.mxu0 %v5802
  %6099 = vmatpush1.bf16.msra.mxu0 %v5801
  %6100 = vmatprep.subr.bf16.mxu0 %v5798
  %6101 = vmatpush1.bf16.msra.mxu0 %v5797
  %6102 = vmatprep.subr.bf16.mxu0 %v5794
  %6103 = vmatpush1.bf16.msra.mxu0 %v5793
  %6104 = vmatprep.subr.bf16.mxu0 %v5790
  %6105 = vmatpush1.bf16.msra.mxu0 %v5789
  %6106 = vmatprep.subr.bf16.mxu0 %v5786
  %6107 = vmatpush1.bf16.msra.mxu0 %v5785
  %6108 = vmatprep.subr.bf16.mxu0 %v5782
  %6109 = vmatpush1.bf16.msra.mxu0 %v5781
  %6110 = vmatprep.subr.bf16.mxu0 %v5778
  %6111 = vmatpush1.bf16.msra.mxu0 %v5777
  %6112 = vmatprep.subr.bf16.mxu0 %v5838
  %6113 = vmatpush2.bf16.msra.mxu0 %v5837
  %6114 = vmatprep.subr.bf16.mxu0 %v5834
  %6115 = vmatpush2.bf16.msra.mxu0 %v5833
  %6116 = vmatprep.subr.bf16.mxu0 %v5830
  %6117 = vmatpush2.bf16.msra.mxu0 %v5829
  %6118 = vmatprep.subr.bf16.mxu0 %v5826
  %6119 = vmatpush2.bf16.msra.mxu0 %v5825
  %6120 = vmatprep.subr.bf16.mxu0 %v5822
  %6121 = vmatpush2.bf16.msra.mxu0 %v5821
  %6122 = vmatprep.subr.bf16.mxu0 %v5818
  %6123 = vmatpush2.bf16.msra.mxu0 %v5817
  %6124 = vmatprep.subr.bf16.mxu0 %v5814
  %6125 = vmatpush2.bf16.msra.mxu0 %v5813
  %6126 = vmatprep.subr.bf16.mxu0 %v5810
  %6127 = vmatpush2.bf16.msra.mxu0 %v5809
  %6128 = vmatprep.mubr.bf16.mxu0 %v5322
  %6129 = vmatmul.mubr.bf16.gmra.mxu0 %v5319
  %v6130 = vpop.f32.mrf.mxu0
  %v6131 = vadd.f32 %v6088, %v6130
  %v6132 = vpop.f32.mrf.mxu0
  %v6133 = vadd.f32 %v6090, %v6132
  %v6134 = vpop.f32.mrf.mxu0
  %v6135 = vadd.f32 %v6092, %v6134
  %v6136 = vpop.f32.mrf.mxu0
  %v6137 = vadd.f32 %v6094, %v6136
  %6138 = vdwg.mxu0
  %v6139 = vadd.f32 %v5077, %v6045
  %v6140 = vadd.f32 %v5079, %v6047
  %v6141 = vadd.f32 %v5163, %v6131
  %v6142 = vadd.f32 %v5165, %v6133
  %v6143 = vadd.f32 %v5081, %v6049
  %v6144 = vadd.f32 %v5083, %v6051
  %v6145 = vadd.f32 %v5167, %v6135
  %v6146 = vadd.f32 %v5169, %v6137
  %s6147 = scalar_lea.vmem [#allocation3], 64
  %6148 = vst [vmem:[%s6147] sm:$0xff] %v6139
  %6149 = vst [vmem:[%s6147 + $0x8] sm:$0xff] %v6140
  %6150 = vst [vmem:[%s6147 + $0x10] sm:$0xff] %v6141
  %6151 = vst [vmem:[%s6147 + $0x18] sm:$0xff] %v6142
  %6152 = vst [vmem:[%s6147 + $0x20] sm:$0xff] %v6143
  %6153 = vst [vmem:[%s6147 + $0x28] sm:$0xff] %v6144
  %6154 = vst [vmem:[%s6147 + $0x30] sm:$0xff] %v6145
  %6155 = vst [vmem:[%s6147 + $0x38] sm:$0xff] %v6146
  %v6156 = vadd.f32 %v6139, %v6143
  %v6157 = vrot.slane %v6156, 4
  %v6158 = vadd.f32 %v6156, %v6157
  %v6159 = vrot.slane %v6158, 2
  %v6160 = vadd.f32 %v6158, %v6159
  %v6161 = vrot.slane %v6160, 1
  %v6162 = vadd.f32 %v6160, %v6161
  %v6163 = vadd.f32 %v6140, %v6144
  %v6164 = vrot.slane %v6163, 4
  %v6165 = vadd.f32 %v6163, %v6164
  %v6166 = vrot.slane %v6165, 2
  %v6167 = vadd.f32 %v6165, %v6166
  %v6168 = vrot.slane %v6167, 1
  %v6169 = vadd.f32 %v6167, %v6168
  %v6170 = vadd.f32 %v6141, %v6145
  %v6171 = vrot.slane %v6170, 4
  %v6172 = vadd.f32 %v6170, %v6171
  %v6173 = vrot.slane %v6172, 2
  %v6174 = vadd.f32 %v6172, %v6173
  %v6175 = vrot.slane %v6174, 1
  %v6176 = vadd.f32 %v6174, %v6175
  %v6177 = vadd.f32 %v6142, %v6146
  %v6178 = vrot.slane %v6177, 4
  %v6179 = vadd.f32 %v6177, %v6178
  %v6180 = vrot.slane %v6179, 2
  %v6181 = vadd.f32 %v6179, %v6180
  %v6182 = vrot.slane %v6181, 1
  %v6183 = vadd.f32 %v6181, %v6182
  %v6184 = vadd.f32 %v3100, %v6162
  %v6185 = vadd.f32 %v3101, %v6169
  %v6186 = vadd.f32 %v3102, %v6176
  %v6187 = vadd.f32 %v3103, %v6183
  %v6188 = vmul.f32 %v6139, %v6139
  %v6189 = vmul.f32 %v6140, %v6140
  %v6190 = vmul.f32 %v6141, %v6141
  %v6191 = vmul.f32 %v6142, %v6142
  %v6192 = vmul.f32 %v6143, %v6143
  %v6193 = vmul.f32 %v6144, %v6144
  %v6194 = vmul.f32 %v6145, %v6145
  %v6195 = vmul.f32 %v6146, %v6146
  %v6196 = vadd.f32 %v6188, %v6192
  %v6197 = vrot.slane %v6196, 4
  %v6198 = vadd.f32 %v6196, %v6197
  %v6199 = vrot.slane %v6198, 2
  %v6200 = vadd.f32 %v6198, %v6199
  %v6201 = vrot.slane %v6200, 1
  %v6202 = vadd.f32 %v6200, %v6201
  %v6203 = vadd.f32 %v6189, %v6193
  %v6204 = vrot.slane %v6203, 4
  %v6205 = vadd.f32 %v6203, %v6204
  %v6206 = vrot.slane %v6205, 2
  %v6207 = vadd.f32 %v6205, %v6206
  %v6208 = vrot.slane %v6207, 1
  %v6209 = vadd.f32 %v6207, %v6208
  %v6210 = vadd.f32 %v6190, %v6194
  %v6211 = vrot.slane %v6210, 4
  %v6212 = vadd.f32 %v6210, %v6211
  %v6213 = vrot.slane %v6212, 2
  %v6214 = vadd.f32 %v6212, %v6213
  %v6215 = vrot.slane %v6214, 1
  %v6216 = vadd.f32 %v6214, %v6215
  %v6217 = vadd.f32 %v6191, %v6195
  %v6218 = vrot.slane %v6217, 4
  %v6219 = vadd.f32 %v6217, %v6218
  %v6220 = vrot.slane %v6219, 2
  %v6221 = vadd.f32 %v6219, %v6220
  %v6222 = vrot.slane %v6221, 1
  %v6223 = vadd.f32 %v6221, %v6222
  %v6224 = vadd.f32 %v3140, %v6202
  %v6225 = vadd.f32 %v3141, %v6209
  %v6226 = vadd.f32 %v3142, %v6216
  %v6227 = vadd.f32 %v3143, %v6223
  %v6228 = vld [vmem:[%s3] sm:$0xf]
  %v6229 = vld [vmem:[%s4] sm:$0xf]
  %6230 = vrot.lane.b32.xlu0 %v6184, 32
  %v6231 = vpop.permute.xlu0 %6230
  %6232 = vrot.lane.b32.xlu0 %v6185, 32
  %v6233 = vpop.permute.xlu0 %6232
  %6234 = vrot.lane.b32.xlu0 %v6186, 32
  %v6235 = vpop.permute.xlu0 %6234
  %6236 = vrot.lane.b32.xlu0 %v6187, 32
  %v6237 = vpop.permute.xlu0 %6236
  %v6238 = vlaneseq
  %v6239 = vand.u32 %v6238, 127
  %vm6240 = vcmp.lt.s32.totalorder %v6239, 32
  %v6241 = vsel %vm6240, %v6235, %v6237
  %v6242 = vsel %vm6240, %v6233, %v6235
  %v6243 = vsel %vm6240, %v6231, %v6233
  %v6244 = vsel %vm6240, %v6237, %v6231
  %v6245 = vadd.f32 %v6184, %v6244
  %v6246 = vadd.f32 %v6185, %v6243
  %v6247 = vadd.f32 %v6186, %v6242
  %v6248 = vadd.f32 %v6187, %v6241
  %6249 = vrot.lane.b32.xlu0 %v6245, 64
  %v6250 = vpop.permute.xlu0 %6249
  %6251 = vrot.lane.b32.xlu0 %v6246, 64
  %v6252 = vpop.permute.xlu0 %6251
  %6253 = vrot.lane.b32.xlu0 %v6247, 64
  %v6254 = vpop.permute.xlu0 %6253
  %6255 = vrot.lane.b32.xlu0 %v6248, 64
  %v6256 = vpop.permute.xlu0 %6255
  %vm6257 = vcmp.lt.s32.totalorder %v6239, 64
  %v6258 = vsel %vm6257, %v6254, %v6256
  %v6259 = vsel %vm6257, %v6252, %v6254
  %v6260 = vsel %vm6257, %v6250, %v6252
  %v6261 = vsel %vm6257, %v6256, %v6250
  %v6262 = vadd.f32 %v6245, %v6261
  %v6263 = vadd.f32 %v6246, %v6260
  %v6264 = vadd.f32 %v6247, %v6259
  %v6265 = vadd.f32 %v6248, %v6258
  %v6266 = vadd.f32 %v6262, %v6265
  %v6267 = vadd.f32 %v6263, %v6262
  %v6268 = vadd.f32 %v6264, %v6263
  %v6269 = vadd.f32 %v6265, %v6264
  %v6270 = vadd.f32 %v6266, %v6268
  %v6271 = vadd.f32 %v6267, %v6269
  %v6272 = vmul.f32 %v6270, 0.001953125
  %v6273 = vmul.f32 %v6271, 0.001953125
  %6274 = vrot.lane.b32.xlu0 %v6224, 32
  %v6275 = vpop.permute.xlu0 %6274
  %6276 = vrot.lane.b32.xlu0 %v6225, 32
  %v6277 = vpop.permute.xlu0 %6276
  %6278 = vrot.lane.b32.xlu0 %v6226, 32
  %v6279 = vpop.permute.xlu0 %6278
  %6280 = vrot.lane.b32.xlu0 %v6227, 32
  %v6281 = vpop.permute.xlu0 %6280
  %v6282 = vsel %vm6240, %v6279, %v6281
  %v6283 = vsel %vm6240, %v6277, %v6279
  %v6284 = vsel %vm6240, %v6275, %v6277
  %v6285 = vsel %vm6240, %v6281, %v6275
  %v6286 = vadd.f32 %v6224, %v6285
  %v6287 = vadd.f32 %v6225, %v6284
  %v6288 = vadd.f32 %v6226, %v6283
  %v6289 = vadd.f32 %v6227, %v6282
  %6290 = vrot.lane.b32.xlu0 %v6286, 64
  %v6291 = vpop.permute.xlu0 %6290
  %6292 = vrot.lane.b32.xlu0 %v6287, 64
  %v6293 = vpop.permute.xlu0 %6292
  %6294 = vrot.lane.b32.xlu0 %v6288, 64
  %v6295 = vpop.permute.xlu0 %6294
  %6296 = vrot.lane.b32.xlu0 %v6289, 64
  %v6297 = vpop.permute.xlu0 %6296
  %v6298 = vsel %vm6257, %v6295, %v6297
  %v6299 = vsel %vm6257, %v6293, %v6295
  %v6300 = vsel %vm6257, %v6291, %v6293
  %v6301 = vsel %vm6257, %v6297, %v6291
  %v6302 = vadd.f32 %v6286, %v6301
  %v6303 = vadd.f32 %v6287, %v6300
  %v6304 = vadd.f32 %v6288, %v6299
  %v6305 = vadd.f32 %v6289, %v6298
  %v6306 = vadd.f32 %v6302, %v6305
  %v6307 = vadd.f32 %v6303, %v6302
  %v6308 = vadd.f32 %v6304, %v6303
  %v6309 = vadd.f32 %v6305, %v6304
  %v6310 = vadd.f32 %v6306, %v6308
  %v6311 = vadd.f32 %v6307, %v6309
  %v6312 = vmul.f32 %v6310, 0.001953125
  %v6313 = vmul.f32 %v6311, 0.001953125
  %v6314 = vmul.f32 %v6272, %v6272
  %v6315 = vmul.f32 %v6273, %v6273
  %v6316 = vsub.f32 %v6312, %v6314
  %v6317 = vsub.f32 %v6313, %v6315
  %v6318 = vmax.f32 %v6316, 0.0
  %v6319 = vmax.f32 %v6317, 0.0
  %v6320 = vadd.f32 %v6318, 1e-05
  %v6321 = vadd.f32 %v6319, 1e-05
  %v6322 = vrsqrt.pop %v6320
  %v6323 = vrsqrt.pop %v6321
  %v6326 = vcombine.low %v6322, %v6323
  %v6328 = vunpack.c.l.s4 1966171168
  %v6329 = vunpack.c.0.s8 %v6328
  %v6330 = vlaneseq
  %v6331 = vshrl.u32 %v6330, 7
  %v6332 = vsub.s32 %v6329, %v6331
  %v6333 = vrot.slane %v6326, %v6332
  %v6334 = vcombine.low %v6333, %v6333
  %v6336 = vunpack.c.l.s4 1966171168
  %v6337 = vunpack.c.0.s8 %v6336
  %v6338 = vlaneseq
  %v6339 = vshrl.u32 %v6338, 7
  %v6340 = vsub.s32 %v6337, %v6339
  %v6341 = vrot.slane %v6334, %v6340
  %v6343 = vmul.f32 %v6228, %v6341
  %v6345 = vlaneseq
  %v6346 = vshrl.u32 %v6345, 7
  %v6347 = vsub.s32 0, %v6346
  %v6348 = vrot.slane %v6343, %v6347
  %v6349 = vlaneseq
  %v6350 = vshrl.u32 %v6349, 7
  %v6351 = vsub.s32 1, %v6350
  %v6352 = vrot.slane %v6343, %v6351
  %v6353 = vlaneseq
  %v6354 = vshrl.u32 %v6353, 7
  %v6355 = vsub.s32 2, %v6354
  %v6356 = vrot.slane %v6343, %v6355
  %v6357 = vlaneseq
  %v6358 = vshrl.u32 %v6357, 7
  %v6359 = vsub.s32 3, %v6358
  %v6360 = vrot.slane %v6343, %v6359
  %v6365 = vmul.f32 %v6272, %v6348
  %v6366 = vmul.f32 %v6273, %v6352
  %v6367 = vmul.f32 %v6272, %v6356
  %v6368 = vmul.f32 %v6273, %v6360
  %v6373 = vcombine.low %v6365, %v6366
  %v6374 = vcombine.low %v6367, %v6368
  %v6376 = vunpack.c.l.s4 1966171168
  %v6377 = vunpack.c.0.s8 %v6376
  %v6378 = vlaneseq
  %v6379 = vshrl.u32 %v6378, 7
  %v6380 = vsub.s32 %v6377, %v6379
  %v6381 = vrot.slane %v6373, %v6380
  %v6383 = vunpack.c.l.s4 1966171168
  %v6384 = vunpack.c.0.s8 %v6383
  %v6385 = vlaneseq
  %v6386 = vshrl.u32 %v6385, 7
  %v6387 = vsub.s32 %v6384, %v6386
  %v6388 = vrot.slane %v6374, %v6387
  %v6389 = vcombine.low %v6381, %v6388
  %v6391 = vunpack.c.l.s4 1966171168
  %v6392 = vunpack.c.0.s8 %v6391
  %v6393 = vlaneseq
  %v6394 = vshrl.u32 %v6393, 7
  %v6395 = vsub.s32 %v6392, %v6394
  %v6396 = vrot.slane %v6389, %v6395
  %v6398 = vsub.f32 %v6229, %v6396
  %v6399 = vld [vmem:[#allocation3] sm:$0xff]
  %v6400 = vld [vmem:[#allocation3 + $0x8] sm:$0xff]
  %v6401 = vld [vmem:[#allocation3 + $0x10] sm:$0xff]
  %v6402 = vld [vmem:[#allocation3 + $0x18] sm:$0xff]
  %v6403 = vld [vmem:[#allocation3 + $0x20] sm:$0xff]
  %v6404 = vld [vmem:[#allocation3 + $0x28] sm:$0xff]
  %v6405 = vld [vmem:[#allocation3 + $0x30] sm:$0xff]
  %v6406 = vld [vmem:[#allocation3 + $0x38] sm:$0xff]
  %v6407 = vmul.f32 %v6399, %v6348
  %v6408 = vmul.f32 %v6400, %v6352
  %v6409 = vmul.f32 %v6401, %v6356
  %v6410 = vmul.f32 %v6402, %v6360
  %v6411 = vmul.f32 %v6403, %v6348
  %v6412 = vmul.f32 %v6404, %v6352
  %v6413 = vmul.f32 %v6405, %v6356
  %v6414 = vmul.f32 %v6406, %v6360
  %v6416 = vlaneseq
  %v6417 = vshrl.u32 %v6416, 7
  %v6418 = vsub.s32 0, %v6417
  %v6419 = vrot.slane %v6398, %v6418
  %v6420 = vlaneseq
  %v6421 = vshrl.u32 %v6420, 7
  %v6422 = vsub.s32 1, %v6421
  %v6423 = vrot.slane %v6398, %v6422
  %v6424 = vlaneseq
  %v6425 = vshrl.u32 %v6424, 7
  %v6426 = vsub.s32 2, %v6425
  %v6427 = vrot.slane %v6398, %v6426
  %v6428 = vlaneseq
  %v6429 = vshrl.u32 %v6428, 7
  %v6430 = vsub.s32 3, %v6429
  %v6431 = vrot.slane %v6398, %v6430
  %v6436 = vadd.f32 %v6407, %v6419
  %v6437 = vadd.f32 %v6408, %v6423
  %v6438 = vadd.f32 %v6409, %v6427
  %v6439 = vadd.f32 %v6410, %v6431
  %v6440 = vadd.f32 %v6411, %v6419
  %v6441 = vadd.f32 %v6412, %v6423
  %v6442 = vadd.f32 %v6413, %v6427
  %v6443 = vadd.f32 %v6414, %v6431
  %v6444 = vmax.f32 %v6436, 0.0
  %v6445 = vmax.f32 %v6437, 0.0
  %v6446 = vmax.f32 %v6438, 0.0
  %v6447 = vmax.f32 %v6439, 0.0
  %v6448 = vmax.f32 %v6440, 0.0
  %v6449 = vmax.f32 %v6441, 0.0
  %v6450 = vmax.f32 %v6442, 0.0
  %v6451 = vmax.f32 %v6443, 0.0
  %v6452 = vpack.c.bf16 %v6448, %v6444
  %v6453 = vpack.c.bf16 %v6449, %v6445
  %v6454 = vpack.c.bf16 %v6450, %v6446
  %v6455 = vpack.c.bf16 %v6451, %v6447
  %v6460 = vunpack.c.l.b16 %v6452
  %v6461 = vunpack.c.l.b16 %v6453
  %v6462 = vunpack.c.l.b16 %v6454
  %v6463 = vunpack.c.l.b16 %v6455
  %v6464 = vunpack.c.h.b16 %v6452
  %v6465 = vunpack.c.h.b16 %v6453
  %v6466 = vunpack.c.h.b16 %v6454
  %v6467 = vunpack.c.h.b16 %v6455
  %v6468 = vpack.c.b16 %v6461, %v6460
  %v6469 = vpack.c.b16 %v6463, %v6462
  %v6470 = vpack.c.b16 %v6465, %v6464
  %v6471 = vpack.c.b16 %v6467, %v6466
  %v6473 = vshrl.u32 %v6468, 16
  %v6475 = vrot.slane %v6473, 7
  %v6476 = vshll.u32 %v6468, 16
  %v6478 = vor.u32 %v6475, %v6476
  %v6480 = vshrl.u32 %v6469, 16
  %v6482 = vrot.slane %v6480, 7
  %v6483 = vshll.u32 %v6469, 16
  %v6485 = vor.u32 %v6482, %v6483
  %v6486 = vrot.slane %v6475, 4
  %v6488 = vshrl.u32 %v6470, 16
  %v6490 = vrot.slane %v6488, 7
  %v6491 = vshll.u32 %v6470, 16
  %v6493 = vor.u32 %v6490, %v6491
  %v6494 = vsel %vm56, %v6486, %v6493
  %v6495 = vrot.slane %v6482, 4
  %v6497 = vshrl.u32 %v6471, 16
  %v6499 = vrot.slane %v6497, 7
  %v6500 = vshll.u32 %v6471, 16
  %v6502 = vor.u32 %v6499, %v6500
  %v6503 = vsel %vm56, %v6495, %v6502
  %v6504 = vrot.slane %v6490, 4
  %v6505 = vrot.slane %v6499, 4
  %v6512 = vld [vmem:[#allocation2] sm:$0xff]
  %v6513 = vsel %vm101, %v6478, %v6512
  %6514 = vst [vmem:[#allocation2] sm:$0xff] %v6513
  %v6515 = vld [vmem:[#allocation2 + $0x8] sm:$0xff]
  %v6516 = vsel %vm101, %v6485, %v6515
  %6517 = vst [vmem:[#allocation2 + $0x8] sm:$0xff] %v6516
  %6518 = vst [vmem:[#allocation2 + $0x10] sm:$0xff] %v6494
  %6519 = vst [vmem:[#allocation2 + $0x18] sm:$0xff] %v6503
  %v6520 = vld [vmem:[#allocation2 + $0x20] sm:$0x11]
  %v6521 = vsel %vm33, %v6504, %v6520
  %6522 = vst [vmem:[#allocation2 + $0x20] sm:$0x11] %v6521
  %v6523 = vld [vmem:[#allocation2 + $0x28] sm:$0x11]
  %v6524 = vsel %vm33, %v6505, %v6523
  %6525 = vst [vmem:[#allocation2 + $0x28] sm:$0x11] %v6524
  %v6526 = vld [vmem:[#allocation2] sm:$0xff]
  %v6527 = vld [vmem:[#allocation2 + $0x8] sm:$0xff]
  %v6528 = vld [vmem:[#allocation2 + $0x10] sm:$0xff]
  %v6529 = vld [vmem:[#allocation2 + $0x18] sm:$0xff]
  %v6530 = vld [vmem:[%s2] sm:$0xff]
  %v6531 = vld [vmem:[%s2 + $0x8] sm:$0xff]
  %v6532 = vld [vmem:[%s2 + $0x10] sm:$0xff]
  %v6533 = vld [vmem:[%s2 + $0x18] sm:$0xff]
  %v6534 = vld [vmem:[%s2 + $0x20] sm:$0xff]
  %v6535 = vld [vmem:[%s2 + $0x28] sm:$0xff]
  %v6536 = vld [vmem:[%s2 + $0x30] sm:$0xff]
  %v6537 = vld [vmem:[%s2 + $0x38] sm:$0xff]
  %v6538 = vld [vmem:[%s2 + $0x40] sm:$0xff]
  %v6539 = vld [vmem:[%s2 + $0x48] sm:$0xff]
  %v6540 = vld [vmem:[%s2 + $0x50] sm:$0xff]
  %v6541 = vld [vmem:[%s2 + $0x58] sm:$0xff]
  %v6542 = vld [vmem:[%s2 + $0x60] sm:$0xff]
  %v6543 = vld [vmem:[%s2 + $0x68] sm:$0xff]
  %v6544 = vld [vmem:[%s2 + $0x70] sm:$0xff]
  %v6545 = vld [vmem:[%s2 + $0x78] sm:$0xff]
  %v6546 = vld [vmem:[%s2 + $0x80] sm:$0xff]
  %v6547 = vld [vmem:[%s2 + $0x88] sm:$0xff]
  %v6548 = vld [vmem:[%s2 + $0x90] sm:$0xff]
  %v6549 = vld [vmem:[%s2 + $0x98] sm:$0xff]
  %v6550 = vld [vmem:[%s2 + $0xa0] sm:$0xff]
  %v6551 = vld [vmem:[%s2 + $0xa8] sm:$0xff]
  %v6552 = vld [vmem:[%s2 + $0xb0] sm:$0xff]
  %v6553 = vld [vmem:[%s2 + $0xb8] sm:$0xff]
  %v6554 = vld [vmem:[%s2 + $0xc0] sm:$0xff]
  %v6555 = vld [vmem:[%s2 + $0xc8] sm:$0xff]
  %v6556 = vld [vmem:[%s2 + $0xd0] sm:$0xff]
  %v6557 = vld [vmem:[%s2 + $0xd8] sm:$0xff]
  %v6558 = vld [vmem:[%s2 + $0xe0] sm:$0xff]
  %v6559 = vld [vmem:[%s2 + $0xe8] sm:$0xff]
  %v6560 = vld [vmem:[%s2 + $0xf0] sm:$0xff]
  %v6561 = vld [vmem:[%s2 + $0xf8] sm:$0xff]
  %v6562 = vld [vmem:[%s2 + $0x100] sm:$0xff]
  %v6563 = vld [vmem:[%s2 + $0x108] sm:$0xff]
  %v6564 = vld [vmem:[%s2 + $0x110] sm:$0xff]
  %v6565 = vld [vmem:[%s2 + $0x118] sm:$0xff]
  %v6566 = vld [vmem:[%s2 + $0x120] sm:$0xff]
  %v6567 = vld [vmem:[%s2 + $0x128] sm:$0xff]
  %v6568 = vld [vmem:[%s2 + $0x130] sm:$0xff]
  %v6569 = vld [vmem:[%s2 + $0x138] sm:$0xff]
  %v6570 = vld [vmem:[%s2 + $0x140] sm:$0xff]
  %v6571 = vld [vmem:[%s2 + $0x148] sm:$0xff]
  %v6572 = vld [vmem:[%s2 + $0x150] sm:$0xff]
  %v6573 = vld [vmem:[%s2 + $0x158] sm:$0xff]
  %v6574 = vld [vmem:[%s2 + $0x160] sm:$0xff]
  %v6575 = vld [vmem:[%s2 + $0x168] sm:$0xff]
  %v6576 = vld [vmem:[%s2 + $0x170] sm:$0xff]
  %v6577 = vld [vmem:[%s2 + $0x178] sm:$0xff]
  %v6578 = vld [vmem:[%s2 + $0x180] sm:$0xff]
  %v6579 = vld [vmem:[%s2 + $0x188] sm:$0xff]
  %v6580 = vld [vmem:[%s2 + $0x190] sm:$0xff]
  %v6581 = vld [vmem:[%s2 + $0x198] sm:$0xff]
  %v6582 = vld [vmem:[%s2 + $0x1a0] sm:$0xff]
  %v6583 = vld [vmem:[%s2 + $0x1a8] sm:$0xff]
  %v6584 = vld [vmem:[%s2 + $0x1b0] sm:$0xff]
  %v6585 = vld [vmem:[%s2 + $0x1b8] sm:$0xff]
  %v6586 = vld [vmem:[%s2 + $0x1c0] sm:$0xff]
  %v6587 = vld [vmem:[%s2 + $0x1c8] sm:$0xff]
  %v6588 = vld [vmem:[%s2 + $0x1d0] sm:$0xff]
  %v6589 = vld [vmem:[%s2 + $0x1d8] sm:$0xff]
  %v6590 = vld [vmem:[%s2 + $0x1e0] sm:$0xff]
  %v6591 = vld [vmem:[%s2 + $0x1e8] sm:$0xff]
  %v6592 = vld [vmem:[%s2 + $0x1f0] sm:$0xff]
  %v6593 = vld [vmem:[%s2 + $0x1f8] sm:$0xff]
  %v6594 = vld [vmem:[%s2 + $0x200] sm:$0xff]
  %v6595 = vld [vmem:[%s2 + $0x208] sm:$0xff]
  %v6596 = vld [vmem:[%s2 + $0x210] sm:$0xff]
  %v6597 = vld [vmem:[%s2 + $0x218] sm:$0xff]
  %v6598 = vld [vmem:[%s2 + $0x220] sm:$0xff]
  %v6599 = vld [vmem:[%s2 + $0x228] sm:$0xff]
  %v6600 = vld [vmem:[%s2 + $0x230] sm:$0xff]
  %v6601 = vld [vmem:[%s2 + $0x238] sm:$0xff]
  %v6602 = vld [vmem:[%s2 + $0x240] sm:$0xff]
  %v6603 = vld [vmem:[%s2 + $0x248] sm:$0xff]
  %v6604 = vld [vmem:[%s2 + $0x250] sm:$0xff]
  %v6605 = vld [vmem:[%s2 + $0x258] sm:$0xff]
  %v6606 = vld [vmem:[%s2 + $0x260] sm:$0xff]
  %v6607 = vld [vmem:[%s2 + $0x268] sm:$0xff]
  %v6608 = vld [vmem:[%s2 + $0x270] sm:$0xff]
  %v6609 = vld [vmem:[%s2 + $0x278] sm:$0xff]
  %v6610 = vld [vmem:[%s2 + $0x280] sm:$0xff]
  %v6611 = vld [vmem:[%s2 + $0x288] sm:$0xff]
  %v6612 = vld [vmem:[%s2 + $0x290] sm:$0xff]
  %v6613 = vld [vmem:[%s2 + $0x298] sm:$0xff]
  %v6614 = vld [vmem:[%s2 + $0x2a0] sm:$0xff]
  %v6615 = vld [vmem:[%s2 + $0x2a8] sm:$0xff]
  %v6616 = vld [vmem:[%s2 + $0x2b0] sm:$0xff]
  %v6617 = vld [vmem:[%s2 + $0x2b8] sm:$0xff]
  %v6618 = vld [vmem:[%s2 + $0x2c0] sm:$0xff]
  %v6619 = vld [vmem:[%s2 + $0x2c8] sm:$0xff]
  %v6620 = vld [vmem:[%s2 + $0x2d0] sm:$0xff]
  %v6621 = vld [vmem:[%s2 + $0x2d8] sm:$0xff]
  %v6622 = vld [vmem:[%s2 + $0x2e0] sm:$0xff]
  %v6623 = vld [vmem:[%s2 + $0x2e8] sm:$0xff]
  %v6624 = vld [vmem:[%s2 + $0x2f0] sm:$0xff]
  %v6625 = vld [vmem:[%s2 + $0x2f8] sm:$0xff]
  %v6626 = vld [vmem:[%s2 + $0x300] sm:$0xff]
  %v6627 = vld [vmem:[%s2 + $0x308] sm:$0xff]
  %v6628 = vld [vmem:[%s2 + $0x310] sm:$0xff]
  %v6629 = vld [vmem:[%s2 + $0x318] sm:$0xff]
  %v6630 = vld [vmem:[%s2 + $0x320] sm:$0xff]
  %v6631 = vld [vmem:[%s2 + $0x328] sm:$0xff]
  %v6632 = vld [vmem:[%s2 + $0x330] sm:$0xff]
  %v6633 = vld [vmem:[%s2 + $0x338] sm:$0xff]
  %v6634 = vld [vmem:[%s2 + $0x340] sm:$0xff]
  %v6635 = vld [vmem:[%s2 + $0x348] sm:$0xff]
  %v6636 = vld [vmem:[%s2 + $0x350] sm:$0xff]
  %v6637 = vld [vmem:[%s2 + $0x358] sm:$0xff]
  %v6638 = vld [vmem:[%s2 + $0x360] sm:$0xff]
  %v6639 = vld [vmem:[%s2 + $0x368] sm:$0xff]
  %v6640 = vld [vmem:[%s2 + $0x370] sm:$0xff]
  %v6641 = vld [vmem:[%s2 + $0x378] sm:$0xff]
  %v6642 = vld [vmem:[%s2 + $0x380] sm:$0xff]
  %v6643 = vld [vmem:[%s2 + $0x388] sm:$0xff]
  %v6644 = vld [vmem:[%s2 + $0x390] sm:$0xff]
  %v6645 = vld [vmem:[%s2 + $0x398] sm:$0xff]
  %v6646 = vld [vmem:[%s2 + $0x3a0] sm:$0xff]
  %v6647 = vld [vmem:[%s2 + $0x3a8] sm:$0xff]
  %v6648 = vld [vmem:[%s2 + $0x3b0] sm:$0xff]
  %v6649 = vld [vmem:[%s2 + $0x3b8] sm:$0xff]
  %v6650 = vld [vmem:[%s2 + $0x3c0] sm:$0xff]
  %v6651 = vld [vmem:[%s2 + $0x3c8] sm:$0xff]
  %v6652 = vld [vmem:[%s2 + $0x3d0] sm:$0xff]
  %v6653 = vld [vmem:[%s2 + $0x3d8] sm:$0xff]
  %v6654 = vld [vmem:[%s2 + $0x3e0] sm:$0xff]
  %v6655 = vld [vmem:[%s2 + $0x3e8] sm:$0xff]
  %v6656 = vld [vmem:[%s2 + $0x3f0] sm:$0xff]
  %v6657 = vld [vmem:[%s2 + $0x3f8] sm:$0xff]
  %v6658 = vld [vmem:[#allocation2 + $0x20] sm:$0x11]
  %v6659 = vld [vmem:[#allocation2 + $0x28] sm:$0x11]
  %s6660 = scalar_lea.vmem %s2, 1024
  %v6661 = vld [vmem:[%s6660] sm:$0xff]
  %v6662 = vld [vmem:[%s6660 + $0x8] sm:$0xff]
  %v6663 = vld [vmem:[%s6660 + $0x10] sm:$0xff]
  %v6664 = vld [vmem:[%s6660 + $0x18] sm:$0xff]
  %v6665 = vld [vmem:[%s6660 + $0x20] sm:$0xff]
  %v6666 = vld [vmem:[%s6660 + $0x28] sm:$0xff]
  %v6667 = vld [vmem:[%s6660 + $0x30] sm:$0xff]
  %v6668 = vld [vmem:[%s6660 + $0x38] sm:$0xff]
  %v6669 = vld [vmem:[%s6660 + $0x40] sm:$0xff]
  %v6670 = vld [vmem:[%s6660 + $0x48] sm:$0xff]
  %v6671 = vld [vmem:[%s6660 + $0x50] sm:$0xff]
  %v6672 = vld [vmem:[%s6660 + $0x58] sm:$0xff]
  %v6673 = vld [vmem:[%s6660 + $0x60] sm:$0xff]
  %v6674 = vld [vmem:[%s6660 + $0x68] sm:$0xff]
  %v6675 = vld [vmem:[%s6660 + $0x70] sm:$0xff]
  %v6676 = vld [vmem:[%s6660 + $0x78] sm:$0xff]
  %v6677 = vld [vmem:[%s6660 + $0x80] sm:$0xff]
  %v6678 = vld [vmem:[%s6660 + $0x88] sm:$0xff]
  %v6679 = vld [vmem:[%s6660 + $0x90] sm:$0xff]
  %v6680 = vld [vmem:[%s6660 + $0x98] sm:$0xff]
  %v6681 = vld [vmem:[%s6660 + $0xa0] sm:$0xff]
  %v6682 = vld [vmem:[%s6660 + $0xa8] sm:$0xff]
  %v6683 = vld [vmem:[%s6660 + $0xb0] sm:$0xff]
  %v6684 = vld [vmem:[%s6660 + $0xb8] sm:$0xff]
  %v6685 = vld [vmem:[%s6660 + $0xc0] sm:$0xff]
  %v6686 = vld [vmem:[%s6660 + $0xc8] sm:$0xff]
  %v6687 = vld [vmem:[%s6660 + $0xd0] sm:$0xff]
  %v6688 = vld [vmem:[%s6660 + $0xd8] sm:$0xff]
  %v6689 = vld [vmem:[%s6660 + $0xe0] sm:$0xff]
  %v6690 = vld [vmem:[%s6660 + $0xe8] sm:$0xff]
  %v6691 = vld [vmem:[%s6660 + $0xf0] sm:$0xff]
  %v6692 = vld [vmem:[%s6660 + $0xf8] sm:$0xff]
  %v6693 = vld [vmem:[%s6660 + $0x100] sm:$0xff]
  %v6694 = vld [vmem:[%s6660 + $0x108] sm:$0xff]
  %v6695 = vld [vmem:[%s6660 + $0x110] sm:$0xff]
  %v6696 = vld [vmem:[%s6660 + $0x118] sm:$0xff]
  %v6697 = vld [vmem:[%s6660 + $0x120] sm:$0xff]
  %v6698 = vld [vmem:[%s6660 + $0x128] sm:$0xff]
  %v6699 = vld [vmem:[%s6660 + $0x130] sm:$0xff]
  %v6700 = vld [vmem:[%s6660 + $0x138] sm:$0xff]
  %v6701 = vld [vmem:[%s6660 + $0x140] sm:$0xff]
  %v6702 = vld [vmem:[%s6660 + $0x148] sm:$0xff]
  %v6703 = vld [vmem:[%s6660 + $0x150] sm:$0xff]
  %v6704 = vld [vmem:[%s6660 + $0x158] sm:$0xff]
  %v6705 = vld [vmem:[%s6660 + $0x160] sm:$0xff]
  %v6706 = vld [vmem:[%s6660 + $0x168] sm:$0xff]
  %v6707 = vld [vmem:[%s6660 + $0x170] sm:$0xff]
  %v6708 = vld [vmem:[%s6660 + $0x178] sm:$0xff]
  %v6709 = vld [vmem:[%s6660 + $0x180] sm:$0xff]
  %v6710 = vld [vmem:[%s6660 + $0x188] sm:$0xff]
  %v6711 = vld [vmem:[%s6660 + $0x190] sm:$0xff]
  %v6712 = vld [vmem:[%s6660 + $0x198] sm:$0xff]
  %v6713 = vld [vmem:[%s6660 + $0x1a0] sm:$0xff]
  %v6714 = vld [vmem:[%s6660 + $0x1a8] sm:$0xff]
  %v6715 = vld [vmem:[%s6660 + $0x1b0] sm:$0xff]
  %v6716 = vld [vmem:[%s6660 + $0x1b8] sm:$0xff]
  %v6717 = vld [vmem:[%s6660 + $0x1c0] sm:$0xff]
  %v6718 = vld [vmem:[%s6660 + $0x1c8] sm:$0xff]
  %v6719 = vld [vmem:[%s6660 + $0x1d0] sm:$0xff]
  %v6720 = vld [vmem:[%s6660 + $0x1d8] sm:$0xff]
  %v6721 = vld [vmem:[%s6660 + $0x1e0] sm:$0xff]
  %v6722 = vld [vmem:[%s6660 + $0x1e8] sm:$0xff]
  %v6723 = vld [vmem:[%s6660 + $0x1f0] sm:$0xff]
  %v6724 = vld [vmem:[%s6660 + $0x1f8] sm:$0xff]
  %v6725 = vld [vmem:[%s6660 + $0x200] sm:$0xff]
  %v6726 = vld [vmem:[%s6660 + $0x208] sm:$0xff]
  %v6727 = vld [vmem:[%s6660 + $0x210] sm:$0xff]
  %v6728 = vld [vmem:[%s6660 + $0x218] sm:$0xff]
  %v6729 = vld [vmem:[%s6660 + $0x220] sm:$0xff]
  %v6730 = vld [vmem:[%s6660 + $0x228] sm:$0xff]
  %v6731 = vld [vmem:[%s6660 + $0x230] sm:$0xff]
  %v6732 = vld [vmem:[%s6660 + $0x238] sm:$0xff]
  %v6733 = vld [vmem:[%s6660 + $0x240] sm:$0xff]
  %v6734 = vld [vmem:[%s6660 + $0x248] sm:$0xff]
  %v6735 = vld [vmem:[%s6660 + $0x250] sm:$0xff]
  %v6736 = vld [vmem:[%s6660 + $0x258] sm:$0xff]
  %v6737 = vld [vmem:[%s6660 + $0x260] sm:$0xff]
  %v6738 = vld [vmem:[%s6660 + $0x268] sm:$0xff]
  %v6739 = vld [vmem:[%s6660 + $0x270] sm:$0xff]
  %v6740 = vld [vmem:[%s6660 + $0x278] sm:$0xff]
  %v6741 = vld [vmem:[%s6660 + $0x280] sm:$0xff]
  %v6742 = vld [vmem:[%s6660 + $0x288] sm:$0xff]
  %v6743 = vld [vmem:[%s6660 + $0x290] sm:$0xff]
  %v6744 = vld [vmem:[%s6660 + $0x298] sm:$0xff]
  %v6745 = vld [vmem:[%s6660 + $0x2a0] sm:$0xff]
  %v6746 = vld [vmem:[%s6660 + $0x2a8] sm:$0xff]
  %v6747 = vld [vmem:[%s6660 + $0x2b0] sm:$0xff]
  %v6748 = vld [vmem:[%s6660 + $0x2b8] sm:$0xff]
  %v6749 = vld [vmem:[%s6660 + $0x2c0] sm:$0xff]
  %v6750 = vld [vmem:[%s6660 + $0x2c8] sm:$0xff]
  %v6751 = vld [vmem:[%s6660 + $0x2d0] sm:$0xff]
  %v6752 = vld [vmem:[%s6660 + $0x2d8] sm:$0xff]
  %v6753 = vld [vmem:[%s6660 + $0x2e0] sm:$0xff]
  %v6754 = vld [vmem:[%s6660 + $0x2e8] sm:$0xff]
  %v6755 = vld [vmem:[%s6660 + $0x2f0] sm:$0xff]
  %v6756 = vld [vmem:[%s6660 + $0x2f8] sm:$0xff]
  %v6757 = vld [vmem:[%s6660 + $0x300] sm:$0xff]
  %v6758 = vld [vmem:[%s6660 + $0x308] sm:$0xff]
  %v6759 = vld [vmem:[%s6660 + $0x310] sm:$0xff]
  %v6760 = vld [vmem:[%s6660 + $0x318] sm:$0xff]
  %v6761 = vld [vmem:[%s6660 + $0x320] sm:$0xff]
  %v6762 = vld [vmem:[%s6660 + $0x328] sm:$0xff]
  %v6763 = vld [vmem:[%s6660 + $0x330] sm:$0xff]
  %v6764 = vld [vmem:[%s6660 + $0x338] sm:$0xff]
  %v6765 = vld [vmem:[%s6660 + $0x340] sm:$0xff]
  %v6766 = vld [vmem:[%s6660 + $0x348] sm:$0xff]
  %v6767 = vld [vmem:[%s6660 + $0x350] sm:$0xff]
  %v6768 = vld [vmem:[%s6660 + $0x358] sm:$0xff]
  %v6769 = vld [vmem:[%s6660 + $0x360] sm:$0xff]
  %v6770 = vld [vmem:[%s6660 + $0x368] sm:$0xff]
  %v6771 = vld [vmem:[%s6660 + $0x370] sm:$0xff]
  %v6772 = vld [vmem:[%s6660 + $0x378] sm:$0xff]
  %v6773 = vld [vmem:[%s6660 + $0x380] sm:$0xff]
  %v6774 = vld [vmem:[%s6660 + $0x388] sm:$0xff]
  %v6775 = vld [vmem:[%s6660 + $0x390] sm:$0xff]
  %v6776 = vld [vmem:[%s6660 + $0x398] sm:$0xff]
  %v6777 = vld [vmem:[%s6660 + $0x3a0] sm:$0xff]
  %v6778 = vld [vmem:[%s6660 + $0x3a8] sm:$0xff]
  %v6779 = vld [vmem:[%s6660 + $0x3b0] sm:$0xff]
  %v6780 = vld [vmem:[%s6660 + $0x3b8] sm:$0xff]
  %v6781 = vld [vmem:[%s6660 + $0x3c0] sm:$0xff]
  %v6782 = vld [vmem:[%s6660 + $0x3c8] sm:$0xff]
  %v6783 = vld [vmem:[%s6660 + $0x3d0] sm:$0xff]
  %v6784 = vld [vmem:[%s6660 + $0x3d8] sm:$0xff]
  %v6785 = vld [vmem:[%s6660 + $0x3e0] sm:$0xff]
  %v6786 = vld [vmem:[%s6660 + $0x3e8] sm:$0xff]
  %v6787 = vld [vmem:[%s6660 + $0x3f0] sm:$0xff]
  %v6788 = vld [vmem:[%s6660 + $0x3f8] sm:$0xff]
  %v6795 = vunpack.c.l.b16 %v6526
  %v6796 = vunpack.c.h.b16 %v6526
  %v6797 = vunpack.c.l.b16 %v6527
  %v6798 = vunpack.c.h.b16 %v6527
  %v6799 = vunpack.c.l.b16 %v6528
  %v6800 = vunpack.c.h.b16 %v6528
  %v6801 = vunpack.c.l.b16 %v6529
  %v6802 = vunpack.c.h.b16 %v6529
  %v6803 = vunpack.c.l.b16 %v6658
  %v6804 = vunpack.c.h.b16 %v6658
  %v6805 = vunpack.c.l.b16 %v6659
  %v6806 = vunpack.c.h.b16 %v6659
  %v6807 = vpack.c.b16 %v6799, %v6795
  %v6808 = vpack.c.b16 %v6800, %v6796
  %v6809 = vpack.c.b16 %v6801, %v6797
  %v6810 = vpack.c.b16 %v6802, %v6798
  %v6811 = vpack.c.b16 %v6803, %v6803
  %v6812 = vpack.c.b16 %v6804, %v6804
  %v6813 = vpack.c.b16 %v6805, %v6805
  %v6814 = vpack.c.b16 %v6806, %v6806
  %v6816 = vshrl.u32 %v6807, 16
  %v6818 = vshll.u32 %v6807, 16
  %v6820 = vrot.slane %v6818, 1
  %v6821 = vor.u32 %v6816, %v6820
  %v6823 = vshll.u32 %v6811, 16
  %v6825 = vrot.slane %v6823, 1
  %v6826 = vsel %vm405, %v6821, %v6825
  %v6828 = vshrl.u32 %v6808, 16
  %v6830 = vshll.u32 %v6808, 16
  %v6832 = vrot.slane %v6830, 1
  %v6833 = vor.u32 %v6828, %v6832
  %v6835 = vshll.u32 %v6812, 16
  %v6837 = vrot.slane %v6835, 1
  %v6838 = vsel %vm405, %v6833, %v6837
  %v6840 = vshrl.u32 %v6809, 16
  %v6842 = vshll.u32 %v6809, 16
  %v6844 = vrot.slane %v6842, 1
  %v6845 = vor.u32 %v6840, %v6844
  %v6847 = vshll.u32 %v6813, 16
  %v6849 = vrot.slane %v6847, 1
  %v6850 = vsel %vm405, %v6845, %v6849
  %v6852 = vshrl.u32 %v6810, 16
  %v6854 = vshll.u32 %v6810, 16
  %v6856 = vrot.slane %v6854, 1
  %v6857 = vor.u32 %v6852, %v6856
  %v6859 = vshll.u32 %v6814, 16
  %v6861 = vrot.slane %v6859, 1
  %v6862 = vsel %vm405, %v6857, %v6861
  %v6995 = vunpack.c.l.b16 %v6661
  %v6996 = vunpack.c.h.b16 %v6661
  %v6997 = vunpack.c.l.b16 %v6662
  %v6998 = vunpack.c.h.b16 %v6662
  %v6999 = vunpack.c.l.b16 %v6663
  %v7000 = vunpack.c.h.b16 %v6663
  %v7001 = vunpack.c.l.b16 %v6664
  %v7002 = vunpack.c.h.b16 %v6664
  %v7003 = vunpack.c.l.b16 %v6665
  %v7004 = vunpack.c.h.b16 %v6665
  %v7005 = vunpack.c.l.b16 %v6666
  %v7006 = vunpack.c.h.b16 %v6666
  %v7007 = vunpack.c.l.b16 %v6667
  %v7008 = vunpack.c.h.b16 %v6667
  %v7009 = vunpack.c.l.b16 %v6668
  %v7010 = vunpack.c.h.b16 %v6668
  %v7011 = vunpack.c.l.b16 %v6669
  %v7012 = vunpack.c.h.b16 %v6669
  %v7013 = vunpack.c.l.b16 %v6670
  %v7014 = vunpack.c.h.b16 %v6670
  %v7015 = vunpack.c.l.b16 %v6671
  %v7016 = vunpack.c.h.b16 %v6671
  %v7017 = vunpack.c.l.b16 %v6672
  %v7018 = vunpack.c.h.b16 %v6672
  %v7019 = vunpack.c.l.b16 %v6673
  %v7020 = vunpack.c.h.b16 %v6673
  %v7021 = vunpack.c.l.b16 %v6674
  %v7022 = vunpack.c.h.b16 %v6674
  %v7023 = vunpack.c.l.b16 %v6675
  %v7024 = vunpack.c.h.b16 %v6675
  %v7025 = vunpack.c.l.b16 %v6676
  %v7026 = vunpack.c.h.b16 %v6676
  %v7027 = vunpack.c.l.b16 %v6677
  %v7028 = vunpack.c.h.b16 %v6677
  %v7029 = vunpack.c.l.b16 %v6678
  %v7030 = vunpack.c.h.b16 %v6678
  %v7031 = vunpack.c.l.b16 %v6679
  %v7032 = vunpack.c.h.b16 %v6679
  %v7033 = vunpack.c.l.b16 %v6680
  %v7034 = vunpack.c.h.b16 %v6680
  %v7035 = vunpack.c.l.b16 %v6681
  %v7036 = vunpack.c.h.b16 %v6681
  %v7037 = vunpack.c.l.b16 %v6682
  %v7038 = vunpack.c.h.b16 %v6682
  %v7039 = vunpack.c.l.b16 %v6683
  %v7040 = vunpack.c.h.b16 %v6683
  %v7041 = vunpack.c.l.b16 %v6684
  %v7042 = vunpack.c.h.b16 %v6684
  %v7043 = vunpack.c.l.b16 %v6685
  %v7044 = vunpack.c.h.b16 %v6685
  %v7045 = vunpack.c.l.b16 %v6686
  %v7046 = vunpack.c.h.b16 %v6686
  %v7047 = vunpack.c.l.b16 %v6687
  %v7048 = vunpack.c.h.b16 %v6687
  %v7049 = vunpack.c.l.b16 %v6688
  %v7050 = vunpack.c.h.b16 %v6688
  %v7051 = vunpack.c.l.b16 %v6689
  %v7052 = vunpack.c.h.b16 %v6689
  %v7053 = vunpack.c.l.b16 %v6690
  %v7054 = vunpack.c.h.b16 %v6690
  %v7055 = vunpack.c.l.b16 %v6691
  %v7056 = vunpack.c.h.b16 %v6691
  %v7057 = vunpack.c.l.b16 %v6692
  %v7058 = vunpack.c.h.b16 %v6692
  %v7059 = vunpack.c.l.b16 %v6693
  %v7060 = vunpack.c.h.b16 %v6693
  %v7061 = vunpack.c.l.b16 %v6694
  %v7062 = vunpack.c.h.b16 %v6694
  %v7063 = vunpack.c.l.b16 %v6695
  %v7064 = vunpack.c.h.b16 %v6695
  %v7065 = vunpack.c.l.b16 %v6696
  %v7066 = vunpack.c.h.b16 %v6696
  %v7067 = vunpack.c.l.b16 %v6697
  %v7068 = vunpack.c.h.b16 %v6697
  %v7069 = vunpack.c.l.b16 %v6698
  %v7070 = vunpack.c.h.b16 %v6698
  %v7071 = vunpack.c.l.b16 %v6699
  %v7072 = vunpack.c.h.b16 %v6699
  %v7073 = vunpack.c.l.b16 %v6700
  %v7074 = vunpack.c.h.b16 %v6700
  %v7075 = vunpack.c.l.b16 %v6701
  %v7076 = vunpack.c.h.b16 %v6701
  %v7077 = vunpack.c.l.b16 %v6702
  %v7078 = vunpack.c.h.b16 %v6702
  %v7079 = vunpack.c.l.b16 %v6703
  %v7080 = vunpack.c.h.b16 %v6703
  %v7081 = vunpack.c.l.b16 %v6704
  %v7082 = vunpack.c.h.b16 %v6704
  %v7083 = vunpack.c.l.b16 %v6705
  %v7084 = vunpack.c.h.b16 %v6705
  %v7085 = vunpack.c.l.b16 %v6706
  %v7086 = vunpack.c.h.b16 %v6706
  %v7087 = vunpack.c.l.b16 %v6707
  %v7088 = vunpack.c.h.b16 %v6707
  %v7089 = vunpack.c.l.b16 %v6708
  %v7090 = vunpack.c.h.b16 %v6708
  %v7091 = vunpack.c.l.b16 %v6709
  %v7092 = vunpack.c.h.b16 %v6709
  %v7093 = vunpack.c.l.b16 %v6710
  %v7094 = vunpack.c.h.b16 %v6710
  %v7095 = vunpack.c.l.b16 %v6711
  %v7096 = vunpack.c.h.b16 %v6711
  %v7097 = vunpack.c.l.b16 %v6712
  %v7098 = vunpack.c.h.b16 %v6712
  %v7099 = vunpack.c.l.b16 %v6713
  %v7100 = vunpack.c.h.b16 %v6713
  %v7101 = vunpack.c.l.b16 %v6714
  %v7102 = vunpack.c.h.b16 %v6714
  %v7103 = vunpack.c.l.b16 %v6715
  %v7104 = vunpack.c.h.b16 %v6715
  %v7105 = vunpack.c.l.b16 %v6716
  %v7106 = vunpack.c.h.b16 %v6716
  %v7107 = vunpack.c.l.b16 %v6717
  %v7108 = vunpack.c.h.b16 %v6717
  %v7109 = vunpack.c.l.b16 %v6718
  %v7110 = vunpack.c.h.b16 %v6718
  %v7111 = vunpack.c.l.b16 %v6719
  %v7112 = vunpack.c.h.b16 %v6719
  %v7113 = vunpack.c.l.b16 %v6720
  %v7114 = vunpack.c.h.b16 %v6720
  %v7115 = vunpack.c.l.b16 %v6721
  %v7116 = vunpack.c.h.b16 %v6721
  %v7117 = vunpack.c.l.b16 %v6722
  %v7118 = vunpack.c.h.b16 %v6722
  %v7119 = vunpack.c.l.b16 %v6723
  %v7120 = vunpack.c.h.b16 %v6723
  %v7121 = vunpack.c.l.b16 %v6724
  %v7122 = vunpack.c.h.b16 %v6724
  %v7123 = vunpack.c.l.b16 %v6725
  %v7124 = vunpack.c.h.b16 %v6725
  %v7125 = vunpack.c.l.b16 %v6726
  %v7126 = vunpack.c.h.b16 %v6726
  %v7127 = vunpack.c.l.b16 %v6727
  %v7128 = vunpack.c.h.b16 %v6727
  %v7129 = vunpack.c.l.b16 %v6728
  %v7130 = vunpack.c.h.b16 %v6728
  %v7131 = vunpack.c.l.b16 %v6729
  %v7132 = vunpack.c.h.b16 %v6729
  %v7133 = vunpack.c.l.b16 %v6730
  %v7134 = vunpack.c.h.b16 %v6730
  %v7135 = vunpack.c.l.b16 %v6731
  %v7136 = vunpack.c.h.b16 %v6731
  %v7137 = vunpack.c.l.b16 %v6732
  %v7138 = vunpack.c.h.b16 %v6732
  %v7139 = vunpack.c.l.b16 %v6733
  %v7140 = vunpack.c.h.b16 %v6733
  %v7141 = vunpack.c.l.b16 %v6734
  %v7142 = vunpack.c.h.b16 %v6734
  %v7143 = vunpack.c.l.b16 %v6735
  %v7144 = vunpack.c.h.b16 %v6735
  %v7145 = vunpack.c.l.b16 %v6736
  %v7146 = vunpack.c.h.b16 %v6736
  %v7147 = vunpack.c.l.b16 %v6737
  %v7148 = vunpack.c.h.b16 %v6737
  %v7149 = vunpack.c.l.b16 %v6738
  %v7150 = vunpack.c.h.b16 %v6738
  %v7151 = vunpack.c.l.b16 %v6739
  %v7152 = vunpack.c.h.b16 %v6739
  %v7153 = vunpack.c.l.b16 %v6740
  %v7154 = vunpack.c.h.b16 %v6740
  %v7155 = vunpack.c.l.b16 %v6741
  %v7156 = vunpack.c.h.b16 %v6741
  %v7157 = vunpack.c.l.b16 %v6742
  %v7158 = vunpack.c.h.b16 %v6742
  %v7159 = vunpack.c.l.b16 %v6743
  %v7160 = vunpack.c.h.b16 %v6743
  %v7161 = vunpack.c.l.b16 %v6744
  %v7162 = vunpack.c.h.b16 %v6744
  %v7163 = vunpack.c.l.b16 %v6745
  %v7164 = vunpack.c.h.b16 %v6745
  %v7165 = vunpack.c.l.b16 %v6746
  %v7166 = vunpack.c.h.b16 %v6746
  %v7167 = vunpack.c.l.b16 %v6747
  %v7168 = vunpack.c.h.b16 %v6747
  %v7169 = vunpack.c.l.b16 %v6748
  %v7170 = vunpack.c.h.b16 %v6748
  %v7171 = vunpack.c.l.b16 %v6749
  %v7172 = vunpack.c.h.b16 %v6749
  %v7173 = vunpack.c.l.b16 %v6750
  %v7174 = vunpack.c.h.b16 %v6750
  %v7175 = vunpack.c.l.b16 %v6751
  %v7176 = vunpack.c.h.b16 %v6751
  %v7177 = vunpack.c.l.b16 %v6752
  %v7178 = vunpack.c.h.b16 %v6752
  %v7179 = vunpack.c.l.b16 %v6753
  %v7180 = vunpack.c.h.b16 %v6753
  %v7181 = vunpack.c.l.b16 %v6754
  %v7182 = vunpack.c.h.b16 %v6754
  %v7183 = vunpack.c.l.b16 %v6755
  %v7184 = vunpack.c.h.b16 %v6755
  %v7185 = vunpack.c.l.b16 %v6756
  %v7186 = vunpack.c.h.b16 %v6756
  %v7187 = vunpack.c.l.b16 %v6757
  %v7188 = vunpack.c.h.b16 %v6757
  %v7189 = vunpack.c.l.b16 %v6758
  %v7190 = vunpack.c.h.b16 %v6758
  %v7191 = vunpack.c.l.b16 %v6759
  %v7192 = vunpack.c.h.b16 %v6759
  %v7193 = vunpack.c.l.b16 %v6760
  %v7194 = vunpack.c.h.b16 %v6760
  %v7195 = vunpack.c.l.b16 %v6761
  %v7196 = vunpack.c.h.b16 %v6761
  %v7197 = vunpack.c.l.b16 %v6762
  %v7198 = vunpack.c.h.b16 %v6762
  %v7199 = vunpack.c.l.b16 %v6763
  %v7200 = vunpack.c.h.b16 %v6763
  %v7201 = vunpack.c.l.b16 %v6764
  %v7202 = vunpack.c.h.b16 %v6764
  %v7203 = vunpack.c.l.b16 %v6765
  %v7204 = vunpack.c.h.b16 %v6765
  %v7205 = vunpack.c.l.b16 %v6766
  %v7206 = vunpack.c.h.b16 %v6766
  %v7207 = vunpack.c.l.b16 %v6767
  %v7208 = vunpack.c.h.b16 %v6767
  %v7209 = vunpack.c.l.b16 %v6768
  %v7210 = vunpack.c.h.b16 %v6768
  %v7211 = vunpack.c.l.b16 %v6769
  %v7212 = vunpack.c.h.b16 %v6769
  %v7213 = vunpack.c.l.b16 %v6770
  %v7214 = vunpack.c.h.b16 %v6770
  %v7215 = vunpack.c.l.b16 %v6771
  %v7216 = vunpack.c.h.b16 %v6771
  %v7217 = vunpack.c.l.b16 %v6772
  %v7218 = vunpack.c.h.b16 %v6772
  %v7219 = vunpack.c.l.b16 %v6773
  %v7220 = vunpack.c.h.b16 %v6773
  %v7221 = vunpack.c.l.b16 %v6774
  %v7222 = vunpack.c.h.b16 %v6774
  %v7223 = vunpack.c.l.b16 %v6775
  %v7224 = vunpack.c.h.b16 %v6775
  %v7225 = vunpack.c.l.b16 %v6776
  %v7226 = vunpack.c.h.b16 %v6776
  %v7227 = vunpack.c.l.b16 %v6777
  %v7228 = vunpack.c.h.b16 %v6777
  %v7229 = vunpack.c.l.b16 %v6778
  %v7230 = vunpack.c.h.b16 %v6778
  %v7231 = vunpack.c.l.b16 %v6779
  %v7232 = vunpack.c.h.b16 %v6779
  %v7233 = vunpack.c.l.b16 %v6780
  %v7234 = vunpack.c.h.b16 %v6780
  %v7235 = vunpack.c.l.b16 %v6781
  %v7236 = vunpack.c.h.b16 %v6781
  %v7237 = vunpack.c.l.b16 %v6782
  %v7238 = vunpack.c.h.b16 %v6782
  %v7239 = vunpack.c.l.b16 %v6783
  %v7240 = vunpack.c.h.b16 %v6783
  %v7241 = vunpack.c.l.b16 %v6784
  %v7242 = vunpack.c.h.b16 %v6784
  %v7243 = vunpack.c.l.b16 %v6785
  %v7244 = vunpack.c.h.b16 %v6785
  %v7245 = vunpack.c.l.b16 %v6786
  %v7246 = vunpack.c.h.b16 %v6786
  %v7247 = vunpack.c.l.b16 %v6787
  %v7248 = vunpack.c.h.b16 %v6787
  %v7249 = vunpack.c.l.b16 %v6788
  %v7250 = vunpack.c.h.b16 %v6788
  %v7251 = vpack.c.b16 %v6999, %v6995
  %v7252 = vpack.c.b16 %v7000, %v6996
  %v7253 = vpack.c.b16 %v7001, %v6997
  %v7254 = vpack.c.b16 %v7002, %v6998
  %v7255 = vpack.c.b16 %v7007, %v7003
  %v7256 = vpack.c.b16 %v7008, %v7004
  %v7257 = vpack.c.b16 %v7009, %v7005
  %v7258 = vpack.c.b16 %v7010, %v7006
  %v7259 = vpack.c.b16 %v7015, %v7011
  %v7260 = vpack.c.b16 %v7016, %v7012
  %v7261 = vpack.c.b16 %v7017, %v7013
  %v7262 = vpack.c.b16 %v7018, %v7014
  %v7263 = vpack.c.b16 %v7023, %v7019
  %v7264 = vpack.c.b16 %v7024, %v7020
  %v7265 = vpack.c.b16 %v7025, %v7021
  %v7266 = vpack.c.b16 %v7026, %v7022
  %v7267 = vpack.c.b16 %v7031, %v7027
  %v7268 = vpack.c.b16 %v7032, %v7028
  %v7269 = vpack.c.b16 %v7033, %v7029
  %v7270 = vpack.c.b16 %v7034, %v7030
  %v7271 = vpack.c.b16 %v7039, %v7035
  %v7272 = vpack.c.b16 %v7040, %v7036
  %v7273 = vpack.c.b16 %v7041, %v7037
  %v7274 = vpack.c.b16 %v7042, %v7038
  %v7275 = vpack.c.b16 %v7047, %v7043
  %v7276 = vpack.c.b16 %v7048, %v7044
  %v7277 = vpack.c.b16 %v7049, %v7045
  %v7278 = vpack.c.b16 %v7050, %v7046
  %v7279 = vpack.c.b16 %v7055, %v7051
  %v7280 = vpack.c.b16 %v7056, %v7052
  %v7281 = vpack.c.b16 %v7057, %v7053
  %v7282 = vpack.c.b16 %v7058, %v7054
  %v7283 = vpack.c.b16 %v7063, %v7059
  %v7284 = vpack.c.b16 %v7064, %v7060
  %v7285 = vpack.c.b16 %v7065, %v7061
  %v7286 = vpack.c.b16 %v7066, %v7062
  %v7287 = vpack.c.b16 %v7071, %v7067
  %v7288 = vpack.c.b16 %v7072, %v7068
  %v7289 = vpack.c.b16 %v7073, %v7069
  %v7290 = vpack.c.b16 %v7074, %v7070
  %v7291 = vpack.c.b16 %v7079, %v7075
  %v7292 = vpack.c.b16 %v7080, %v7076
  %v7293 = vpack.c.b16 %v7081, %v7077
  %v7294 = vpack.c.b16 %v7082, %v7078
  %v7295 = vpack.c.b16 %v7087, %v7083
  %v7296 = vpack.c.b16 %v7088, %v7084
  %v7297 = vpack.c.b16 %v7089, %v7085
  %v7298 = vpack.c.b16 %v7090, %v7086
  %v7299 = vpack.c.b16 %v7095, %v7091
  %v7300 = vpack.c.b16 %v7096, %v7092
  %v7301 = vpack.c.b16 %v7097, %v7093
  %v7302 = vpack.c.b16 %v7098, %v7094
  %v7303 = vpack.c.b16 %v7103, %v7099
  %v7304 = vpack.c.b16 %v7104, %v7100
  %v7305 = vpack.c.b16 %v7105, %v7101
  %v7306 = vpack.c.b16 %v7106, %v7102
  %v7307 = vpack.c.b16 %v7111, %v7107
  %v7308 = vpack.c.b16 %v7112, %v7108
  %v7309 = vpack.c.b16 %v7113, %v7109
  %v7310 = vpack.c.b16 %v7114, %v7110
  %v7311 = vpack.c.b16 %v7119, %v7115
  %v7312 = vpack.c.b16 %v7120, %v7116
  %v7313 = vpack.c.b16 %v7121, %v7117
  %v7314 = vpack.c.b16 %v7122, %v7118
  %v7315 = vpack.c.b16 %v7127, %v7123
  %v7316 = vpack.c.b16 %v7128, %v7124
  %v7317 = vpack.c.b16 %v7129, %v7125
  %v7318 = vpack.c.b16 %v7130, %v7126
  %v7319 = vpack.c.b16 %v7135, %v7131
  %v7320 = vpack.c.b16 %v7136, %v7132
  %v7321 = vpack.c.b16 %v7137, %v7133
  %v7322 = vpack.c.b16 %v7138, %v7134
  %v7323 = vpack.c.b16 %v7143, %v7139
  %v7324 = vpack.c.b16 %v7144, %v7140
  %v7325 = vpack.c.b16 %v7145, %v7141
  %v7326 = vpack.c.b16 %v7146, %v7142
  %v7327 = vpack.c.b16 %v7151, %v7147
  %v7328 = vpack.c.b16 %v7152, %v7148
  %v7329 = vpack.c.b16 %v7153, %v7149
  %v7330 = vpack.c.b16 %v7154, %v7150
  %v7331 = vpack.c.b16 %v7159, %v7155
  %v7332 = vpack.c.b16 %v7160, %v7156
  %v7333 = vpack.c.b16 %v7161, %v7157
  %v7334 = vpack.c.b16 %v7162, %v7158
  %v7335 = vpack.c.b16 %v7167, %v7163
  %v7336 = vpack.c.b16 %v7168, %v7164
  %v7337 = vpack.c.b16 %v7169, %v7165
  %v7338 = vpack.c.b16 %v7170, %v7166
  %v7339 = vpack.c.b16 %v7175, %v7171
  %v7340 = vpack.c.b16 %v7176, %v7172
  %v7341 = vpack.c.b16 %v7177, %v7173
  %v7342 = vpack.c.b16 %v7178, %v7174
  %v7343 = vpack.c.b16 %v7183, %v7179
  %v7344 = vpack.c.b16 %v7184, %v7180
  %v7345 = vpack.c.b16 %v7185, %v7181
  %v7346 = vpack.c.b16 %v7186, %v7182
  %v7347 = vpack.c.b16 %v7191, %v7187
  %v7348 = vpack.c.b16 %v7192, %v7188
  %v7349 = vpack.c.b16 %v7193, %v7189
  %v7350 = vpack.c.b16 %v7194, %v7190
  %v7351 = vpack.c.b16 %v7199, %v7195
  %v7352 = vpack.c.b16 %v7200, %v7196
  %v7353 = vpack.c.b16 %v7201, %v7197
  %v7354 = vpack.c.b16 %v7202, %v7198
  %v7355 = vpack.c.b16 %v7207, %v7203
  %v7356 = vpack.c.b16 %v7208, %v7204
  %v7357 = vpack.c.b16 %v7209, %v7205
  %v7358 = vpack.c.b16 %v7210, %v7206
  %v7359 = vpack.c.b16 %v7215, %v7211
  %v7360 = vpack.c.b16 %v7216, %v7212
  %v7361 = vpack.c.b16 %v7217, %v7213
  %v7362 = vpack.c.b16 %v7218, %v7214
  %v7363 = vpack.c.b16 %v7223, %v7219
  %v7364 = vpack.c.b16 %v7224, %v7220
  %v7365 = vpack.c.b16 %v7225, %v7221
  %v7366 = vpack.c.b16 %v7226, %v7222
  %v7367 = vpack.c.b16 %v7231, %v7227
  %v7368 = vpack.c.b16 %v7232, %v7228
  %v7369 = vpack.c.b16 %v7233, %v7229
  %v7370 = vpack.c.b16 %v7234, %v7230
  %v7371 = vpack.c.b16 %v7239, %v7235
  %v7372 = vpack.c.b16 %v7240, %v7236
  %v7373 = vpack.c.b16 %v7241, %v7237
  %v7374 = vpack.c.b16 %v7242, %v7238
  %v7375 = vpack.c.b16 %v7247, %v7243
  %v7376 = vpack.c.b16 %v7248, %v7244
  %v7377 = vpack.c.b16 %v7249, %v7245
  %v7378 = vpack.c.b16 %v7250, %v7246
  %7507 = vmatprep.subr.bf16.mxu0 %v7280
  %7508 = vmatpush1.bf16.msra.mxu0 %v7279
  %7509 = vmatprep.subr.bf16.mxu0 %v7276
  %7510 = vmatpush1.bf16.msra.mxu0 %v7275
  %7511 = vmatprep.subr.bf16.mxu0 %v7272
  %7512 = vmatpush1.bf16.msra.mxu0 %v7271
  %7513 = vmatprep.subr.bf16.mxu0 %v7268
  %7514 = vmatpush1.bf16.msra.mxu0 %v7267
  %7515 = vmatprep.subr.bf16.mxu0 %v7264
  %7516 = vmatpush1.bf16.msra.mxu0 %v7263
  %7517 = vmatprep.subr.bf16.mxu0 %v7260
  %7518 = vmatpush1.bf16.msra.mxu0 %v7259
  %7519 = vmatprep.subr.bf16.mxu0 %v7256
  %7520 = vmatpush1.bf16.msra.mxu0 %v7255
  %7521 = vmatprep.subr.bf16.mxu0 %v7252
  %7522 = vmatpush1.bf16.msra.mxu0 %v7251
  %7523 = vmatprep.subr.bf16.mxu0 %v7312
  %7524 = vmatpush2.bf16.msra.mxu0 %v7311
  %7525 = vmatprep.subr.bf16.mxu0 %v7308
  %7526 = vmatpush2.bf16.msra.mxu0 %v7307
  %7527 = vmatprep.subr.bf16.mxu0 %v7304
  %7528 = vmatpush2.bf16.msra.mxu0 %v7303
  %7529 = vmatprep.subr.bf16.mxu0 %v7300
  %7530 = vmatpush2.bf16.msra.mxu0 %v7299
  %7531 = vmatprep.subr.bf16.mxu0 %v7296
  %7532 = vmatpush2.bf16.msra.mxu0 %v7295
  %7533 = vmatprep.subr.bf16.mxu0 %v7292
  %7534 = vmatpush2.bf16.msra.mxu0 %v7291
  %7535 = vmatprep.subr.bf16.mxu0 %v7288
  %7536 = vmatpush2.bf16.msra.mxu0 %v7287
  %7537 = vmatprep.subr.bf16.mxu0 %v7284
  %7538 = vmatpush2.bf16.msra.mxu0 %v7283
  %7539 = vmatprep.mubr.bf16.mxu0 %v6838
  %7540 = vmatmul.mubr.bf16.gmra.mxu0 %v6826
  %v7541 = vpop.f32.mrf.mxu0
  %v7542 = vadd.f32 0.0, %v7541
  %v7543 = vpop.f32.mrf.mxu0
  %v7544 = vadd.f32 0.0, %v7543
  %v7545 = vpop.f32.mrf.mxu0
  %v7546 = vadd.f32 0.0, %v7545
  %v7547 = vpop.f32.mrf.mxu0
  %v7548 = vadd.f32 0.0, %v7547
  %7549 = vdwg.mxu0
  %7550 = vmatprep.subr.bf16.mxu0 %v7344
  %7551 = vmatpush1.bf16.msra.mxu0 %v7343
  %7552 = vmatprep.subr.bf16.mxu0 %v7340
  %7553 = vmatpush1.bf16.msra.mxu0 %v7339
  %7554 = vmatprep.subr.bf16.mxu0 %v7336
  %7555 = vmatpush1.bf16.msra.mxu0 %v7335
  %7556 = vmatprep.subr.bf16.mxu0 %v7332
  %7557 = vmatpush1.bf16.msra.mxu0 %v7331
  %7558 = vmatprep.subr.bf16.mxu0 %v7328
  %7559 = vmatpush1.bf16.msra.mxu0 %v7327
  %7560 = vmatprep.subr.bf16.mxu0 %v7324
  %7561 = vmatpush1.bf16.msra.mxu0 %v7323
  %7562 = vmatprep.subr.bf16.mxu0 %v7320
  %7563 = vmatpush1.bf16.msra.mxu0 %v7319
  %7564 = vmatprep.subr.bf16.mxu0 %v7316
  %7565 = vmatpush1.bf16.msra.mxu0 %v7315
  %7566 = vmatprep.subr.bf16.mxu0 %v7376
  %7567 = vmatpush2.bf16.msra.mxu0 %v7375
  %7568 = vmatprep.subr.bf16.mxu0 %v7372
  %7569 = vmatpush2.bf16.msra.mxu0 %v7371
  %7570 = vmatprep.subr.bf16.mxu0 %v7368
  %7571 = vmatpush2.bf16.msra.mxu0 %v7367
  %7572 = vmatprep.subr.bf16.mxu0 %v7364
  %7573 = vmatpush2.bf16.msra.mxu0 %v7363
  %7574 = vmatprep.subr.bf16.mxu0 %v7360
  %7575 = vmatpush2.bf16.msra.mxu0 %v7359
  %7576 = vmatprep.subr.bf16.mxu0 %v7356
  %7577 = vmatpush2.bf16.msra.mxu0 %v7355
  %7578 = vmatprep.subr.bf16.mxu0 %v7352
  %7579 = vmatpush2.bf16.msra.mxu0 %v7351
  %7580 = vmatprep.subr.bf16.mxu0 %v7348
  %7581 = vmatpush2.bf16.msra.mxu0 %v7347
  %7582 = vmatprep.mubr.bf16.mxu0 %v6862
  %7583 = vmatmul.mubr.bf16.gmra.mxu0 %v6850
  %v7584 = vpop.f32.mrf.mxu0
  %v7585 = vadd.f32 %v7542, %v7584
  %v7586 = vpop.f32.mrf.mxu0
  %v7587 = vadd.f32 %v7544, %v7586
  %v7588 = vpop.f32.mrf.mxu0
  %v7589 = vadd.f32 %v7546, %v7588
  %v7590 = vpop.f32.mrf.mxu0
  %v7591 = vadd.f32 %v7548, %v7590
  %7592 = vdwg.mxu0
  %7593 = vmatprep.subr.bf16.mxu0 %v7282
  %7594 = vmatpush1.bf16.msra.mxu0 %v7281
  %7595 = vmatprep.subr.bf16.mxu0 %v7278
  %7596 = vmatpush1.bf16.msra.mxu0 %v7277
  %7597 = vmatprep.subr.bf16.mxu0 %v7274
  %7598 = vmatpush1.bf16.msra.mxu0 %v7273
  %7599 = vmatprep.subr.bf16.mxu0 %v7270
  %7600 = vmatpush1.bf16.msra.mxu0 %v7269
  %7601 = vmatprep.subr.bf16.mxu0 %v7266
  %7602 = vmatpush1.bf16.msra.mxu0 %v7265
  %7603 = vmatprep.subr.bf16.mxu0 %v7262
  %7604 = vmatpush1.bf16.msra.mxu0 %v7261
  %7605 = vmatprep.subr.bf16.mxu0 %v7258
  %7606 = vmatpush1.bf16.msra.mxu0 %v7257
  %7607 = vmatprep.subr.bf16.mxu0 %v7254
  %7608 = vmatpush1.bf16.msra.mxu0 %v7253
  %7609 = vmatprep.subr.bf16.mxu0 %v7314
  %7610 = vmatpush2.bf16.msra.mxu0 %v7313
  %7611 = vmatprep.subr.bf16.mxu0 %v7310
  %7612 = vmatpush2.bf16.msra.mxu0 %v7309
  %7613 = vmatprep.subr.bf16.mxu0 %v7306
  %7614 = vmatpush2.bf16.msra.mxu0 %v7305
  %7615 = vmatprep.subr.bf16.mxu0 %v7302
  %7616 = vmatpush2.bf16.msra.mxu0 %v7301
  %7617 = vmatprep.subr.bf16.mxu0 %v7298
  %7618 = vmatpush2.bf16.msra.mxu0 %v7297
  %7619 = vmatprep.subr.bf16.mxu0 %v7294
  %7620 = vmatpush2.bf16.msra.mxu0 %v7293
  %7621 = vmatprep.subr.bf16.mxu0 %v7290
  %7622 = vmatpush2.bf16.msra.mxu0 %v7289
  %7623 = vmatprep.subr.bf16.mxu0 %v7286
  %7624 = vmatpush2.bf16.msra.mxu0 %v7285
  %7625 = vmatprep.mubr.bf16.mxu0 %v6838
  %7626 = vmatmul.mubr.bf16.gmra.mxu0 %v6826
  %v7627 = vpop.f32.mrf.mxu0
  %v7628 = vadd.f32 0.0, %v7627
  %v7629 = vpop.f32.mrf.mxu0
  %v7630 = vadd.f32 0.0, %v7629
  %v7631 = vpop.f32.mrf.mxu0
  %v7632 = vadd.f32 0.0, %v7631
  %v7633 = vpop.f32.mrf.mxu0
  %v7634 = vadd.f32 0.0, %v7633
  %7635 = vdwg.mxu0
  %7636 = vmatprep.subr.bf16.mxu0 %v7346
  %7637 = vmatpush1.bf16.msra.mxu0 %v7345
  %7638 = vmatprep.subr.bf16.mxu0 %v7342
  %7639 = vmatpush1.bf16.msra.mxu0 %v7341
  %7640 = vmatprep.subr.bf16.mxu0 %v7338
  %7641 = vmatpush1.bf16.msra.mxu0 %v7337
  %7642 = vmatprep.subr.bf16.mxu0 %v7334
  %7643 = vmatpush1.bf16.msra.mxu0 %v7333
  %7644 = vmatprep.subr.bf16.mxu0 %v7330
  %7645 = vmatpush1.bf16.msra.mxu0 %v7329
  %7646 = vmatprep.subr.bf16.mxu0 %v7326
  %7647 = vmatpush1.bf16.msra.mxu0 %v7325
  %7648 = vmatprep.subr.bf16.mxu0 %v7322
  %7649 = vmatpush1.bf16.msra.mxu0 %v7321
  %7650 = vmatprep.subr.bf16.mxu0 %v7318
  %7651 = vmatpush1.bf16.msra.mxu0 %v7317
  %7652 = vmatprep.subr.bf16.mxu0 %v7378
  %7653 = vmatpush2.bf16.msra.mxu0 %v7377
  %7654 = vmatprep.subr.bf16.mxu0 %v7374
  %7655 = vmatpush2.bf16.msra.mxu0 %v7373
  %7656 = vmatprep.subr.bf16.mxu0 %v7370
  %7657 = vmatpush2.bf16.msra.mxu0 %v7369
  %7658 = vmatprep.subr.bf16.mxu0 %v7366
  %7659 = vmatpush2.bf16.msra.mxu0 %v7365
  %7660 = vmatprep.subr.bf16.mxu0 %v7362
  %7661 = vmatpush2.bf16.msra.mxu0 %v7361
  %7662 = vmatprep.subr.bf16.mxu0 %v7358
  %7663 = vmatpush2.bf16.msra.mxu0 %v7357
  %7664 = vmatprep.subr.bf16.mxu0 %v7354
  %7665 = vmatpush2.bf16.msra.mxu0 %v7353
  %7666 = vmatprep.subr.bf16.mxu0 %v7350
  %7667 = vmatpush2.bf16.msra.mxu0 %v7349
  %7668 = vmatprep.mubr.bf16.mxu0 %v6862
  %7669 = vmatmul.mubr.bf16.gmra.mxu0 %v6850
  %v7670 = vpop.f32.mrf.mxu0
  %v7671 = vadd.f32 %v7628, %v7670
  %v7672 = vpop.f32.mrf.mxu0
  %v7673 = vadd.f32 %v7630, %v7672
  %v7674 = vpop.f32.mrf.mxu0
  %v7675 = vadd.f32 %v7632, %v7674
  %v7676 = vpop.f32.mrf.mxu0
  %v7677 = vadd.f32 %v7634, %v7676
  %7678 = vdwg.mxu0
  %v7811 = vunpack.c.l.b16 %v6530
  %v7812 = vunpack.c.h.b16 %v6530
  %v7813 = vunpack.c.l.b16 %v6531
  %v7814 = vunpack.c.h.b16 %v6531
  %v7815 = vunpack.c.l.b16 %v6532
  %v7816 = vunpack.c.h.b16 %v6532
  %v7817 = vunpack.c.l.b16 %v6533
  %v7818 = vunpack.c.h.b16 %v6533
  %v7819 = vunpack.c.l.b16 %v6534
  %v7820 = vunpack.c.h.b16 %v6534
  %v7821 = vunpack.c.l.b16 %v6535
  %v7822 = vunpack.c.h.b16 %v6535
  %v7823 = vunpack.c.l.b16 %v6536
  %v7824 = vunpack.c.h.b16 %v6536
  %v7825 = vunpack.c.l.b16 %v6537
  %v7826 = vunpack.c.h.b16 %v6537
  %v7827 = vunpack.c.l.b16 %v6538
  %v7828 = vunpack.c.h.b16 %v6538
  %v7829 = vunpack.c.l.b16 %v6539
  %v7830 = vunpack.c.h.b16 %v6539
  %v7831 = vunpack.c.l.b16 %v6540
  %v7832 = vunpack.c.h.b16 %v6540
  %v7833 = vunpack.c.l.b16 %v6541
  %v7834 = vunpack.c.h.b16 %v6541
  %v7835 = vunpack.c.l.b16 %v6542
  %v7836 = vunpack.c.h.b16 %v6542
  %v7837 = vunpack.c.l.b16 %v6543
  %v7838 = vunpack.c.h.b16 %v6543
  %v7839 = vunpack.c.l.b16 %v6544
  %v7840 = vunpack.c.h.b16 %v6544
  %v7841 = vunpack.c.l.b16 %v6545
  %v7842 = vunpack.c.h.b16 %v6545
  %v7843 = vunpack.c.l.b16 %v6546
  %v7844 = vunpack.c.h.b16 %v6546
  %v7845 = vunpack.c.l.b16 %v6547
  %v7846 = vunpack.c.h.b16 %v6547
  %v7847 = vunpack.c.l.b16 %v6548
  %v7848 = vunpack.c.h.b16 %v6548
  %v7849 = vunpack.c.l.b16 %v6549
  %v7850 = vunpack.c.h.b16 %v6549
  %v7851 = vunpack.c.l.b16 %v6550
  %v7852 = vunpack.c.h.b16 %v6550
  %v7853 = vunpack.c.l.b16 %v6551
  %v7854 = vunpack.c.h.b16 %v6551
  %v7855 = vunpack.c.l.b16 %v6552
  %v7856 = vunpack.c.h.b16 %v6552
  %v7857 = vunpack.c.l.b16 %v6553
  %v7858 = vunpack.c.h.b16 %v6553
  %v7859 = vunpack.c.l.b16 %v6554
  %v7860 = vunpack.c.h.b16 %v6554
  %v7861 = vunpack.c.l.b16 %v6555
  %v7862 = vunpack.c.h.b16 %v6555
  %v7863 = vunpack.c.l.b16 %v6556
  %v7864 = vunpack.c.h.b16 %v6556
  %v7865 = vunpack.c.l.b16 %v6557
  %v7866 = vunpack.c.h.b16 %v6557
  %v7867 = vunpack.c.l.b16 %v6558
  %v7868 = vunpack.c.h.b16 %v6558
  %v7869 = vunpack.c.l.b16 %v6559
  %v7870 = vunpack.c.h.b16 %v6559
  %v7871 = vunpack.c.l.b16 %v6560
  %v7872 = vunpack.c.h.b16 %v6560
  %v7873 = vunpack.c.l.b16 %v6561
  %v7874 = vunpack.c.h.b16 %v6561
  %v7875 = vunpack.c.l.b16 %v6562
  %v7876 = vunpack.c.h.b16 %v6562
  %v7877 = vunpack.c.l.b16 %v6563
  %v7878 = vunpack.c.h.b16 %v6563
  %v7879 = vunpack.c.l.b16 %v6564
  %v7880 = vunpack.c.h.b16 %v6564
  %v7881 = vunpack.c.l.b16 %v6565
  %v7882 = vunpack.c.h.b16 %v6565
  %v7883 = vunpack.c.l.b16 %v6566
  %v7884 = vunpack.c.h.b16 %v6566
  %v7885 = vunpack.c.l.b16 %v6567
  %v7886 = vunpack.c.h.b16 %v6567
  %v7887 = vunpack.c.l.b16 %v6568
  %v7888 = vunpack.c.h.b16 %v6568
  %v7889 = vunpack.c.l.b16 %v6569
  %v7890 = vunpack.c.h.b16 %v6569
  %v7891 = vunpack.c.l.b16 %v6570
  %v7892 = vunpack.c.h.b16 %v6570
  %v7893 = vunpack.c.l.b16 %v6571
  %v7894 = vunpack.c.h.b16 %v6571
  %v7895 = vunpack.c.l.b16 %v6572
  %v7896 = vunpack.c.h.b16 %v6572
  %v7897 = vunpack.c.l.b16 %v6573
  %v7898 = vunpack.c.h.b16 %v6573
  %v7899 = vunpack.c.l.b16 %v6574
  %v7900 = vunpack.c.h.b16 %v6574
  %v7901 = vunpack.c.l.b16 %v6575
  %v7902 = vunpack.c.h.b16 %v6575
  %v7903 = vunpack.c.l.b16 %v6576
  %v7904 = vunpack.c.h.b16 %v6576
  %v7905 = vunpack.c.l.b16 %v6577
  %v7906 = vunpack.c.h.b16 %v6577
  %v7907 = vunpack.c.l.b16 %v6578
  %v7908 = vunpack.c.h.b16 %v6578
  %v7909 = vunpack.c.l.b16 %v6579
  %v7910 = vunpack.c.h.b16 %v6579
  %v7911 = vunpack.c.l.b16 %v6580
  %v7912 = vunpack.c.h.b16 %v6580
  %v7913 = vunpack.c.l.b16 %v6581
  %v7914 = vunpack.c.h.b16 %v6581
  %v7915 = vunpack.c.l.b16 %v6582
  %v7916 = vunpack.c.h.b16 %v6582
  %v7917 = vunpack.c.l.b16 %v6583
  %v7918 = vunpack.c.h.b16 %v6583
  %v7919 = vunpack.c.l.b16 %v6584
  %v7920 = vunpack.c.h.b16 %v6584
  %v7921 = vunpack.c.l.b16 %v6585
  %v7922 = vunpack.c.h.b16 %v6585
  %v7923 = vunpack.c.l.b16 %v6586
  %v7924 = vunpack.c.h.b16 %v6586
  %v7925 = vunpack.c.l.b16 %v6587
  %v7926 = vunpack.c.h.b16 %v6587
  %v7927 = vunpack.c.l.b16 %v6588
  %v7928 = vunpack.c.h.b16 %v6588
  %v7929 = vunpack.c.l.b16 %v6589
  %v7930 = vunpack.c.h.b16 %v6589
  %v7931 = vunpack.c.l.b16 %v6590
  %v7932 = vunpack.c.h.b16 %v6590
  %v7933 = vunpack.c.l.b16 %v6591
  %v7934 = vunpack.c.h.b16 %v6591
  %v7935 = vunpack.c.l.b16 %v6592
  %v7936 = vunpack.c.h.b16 %v6592
  %v7937 = vunpack.c.l.b16 %v6593
  %v7938 = vunpack.c.h.b16 %v6593
  %v7939 = vunpack.c.l.b16 %v6594
  %v7940 = vunpack.c.h.b16 %v6594
  %v7941 = vunpack.c.l.b16 %v6595
  %v7942 = vunpack.c.h.b16 %v6595
  %v7943 = vunpack.c.l.b16 %v6596
  %v7944 = vunpack.c.h.b16 %v6596
  %v7945 = vunpack.c.l.b16 %v6597
  %v7946 = vunpack.c.h.b16 %v6597
  %v7947 = vunpack.c.l.b16 %v6598
  %v7948 = vunpack.c.h.b16 %v6598
  %v7949 = vunpack.c.l.b16 %v6599
  %v7950 = vunpack.c.h.b16 %v6599
  %v7951 = vunpack.c.l.b16 %v6600
  %v7952 = vunpack.c.h.b16 %v6600
  %v7953 = vunpack.c.l.b16 %v6601
  %v7954 = vunpack.c.h.b16 %v6601
  %v7955 = vunpack.c.l.b16 %v6602
  %v7956 = vunpack.c.h.b16 %v6602
  %v7957 = vunpack.c.l.b16 %v6603
  %v7958 = vunpack.c.h.b16 %v6603
  %v7959 = vunpack.c.l.b16 %v6604
  %v7960 = vunpack.c.h.b16 %v6604
  %v7961 = vunpack.c.l.b16 %v6605
  %v7962 = vunpack.c.h.b16 %v6605
  %v7963 = vunpack.c.l.b16 %v6606
  %v7964 = vunpack.c.h.b16 %v6606
  %v7965 = vunpack.c.l.b16 %v6607
  %v7966 = vunpack.c.h.b16 %v6607
  %v7967 = vunpack.c.l.b16 %v6608
  %v7968 = vunpack.c.h.b16 %v6608
  %v7969 = vunpack.c.l.b16 %v6609
  %v7970 = vunpack.c.h.b16 %v6609
  %v7971 = vunpack.c.l.b16 %v6610
  %v7972 = vunpack.c.h.b16 %v6610
  %v7973 = vunpack.c.l.b16 %v6611
  %v7974 = vunpack.c.h.b16 %v6611
  %v7975 = vunpack.c.l.b16 %v6612
  %v7976 = vunpack.c.h.b16 %v6612
  %v7977 = vunpack.c.l.b16 %v6613
  %v7978 = vunpack.c.h.b16 %v6613
  %v7979 = vunpack.c.l.b16 %v6614
  %v7980 = vunpack.c.h.b16 %v6614
  %v7981 = vunpack.c.l.b16 %v6615
  %v7982 = vunpack.c.h.b16 %v6615
  %v7983 = vunpack.c.l.b16 %v6616
  %v7984 = vunpack.c.h.b16 %v6616
  %v7985 = vunpack.c.l.b16 %v6617
  %v7986 = vunpack.c.h.b16 %v6617
  %v7987 = vunpack.c.l.b16 %v6618
  %v7988 = vunpack.c.h.b16 %v6618
  %v7989 = vunpack.c.l.b16 %v6619
  %v7990 = vunpack.c.h.b16 %v6619
  %v7991 = vunpack.c.l.b16 %v6620
  %v7992 = vunpack.c.h.b16 %v6620
  %v7993 = vunpack.c.l.b16 %v6621
  %v7994 = vunpack.c.h.b16 %v6621
  %v7995 = vunpack.c.l.b16 %v6622
  %v7996 = vunpack.c.h.b16 %v6622
  %v7997 = vunpack.c.l.b16 %v6623
  %v7998 = vunpack.c.h.b16 %v6623
  %v7999 = vunpack.c.l.b16 %v6624
  %v8000 = vunpack.c.h.b16 %v6624
  %v8001 = vunpack.c.l.b16 %v6625
  %v8002 = vunpack.c.h.b16 %v6625
  %v8003 = vunpack.c.l.b16 %v6626
  %v8004 = vunpack.c.h.b16 %v6626
  %v8005 = vunpack.c.l.b16 %v6627
  %v8006 = vunpack.c.h.b16 %v6627
  %v8007 = vunpack.c.l.b16 %v6628
  %v8008 = vunpack.c.h.b16 %v6628
  %v8009 = vunpack.c.l.b16 %v6629
  %v8010 = vunpack.c.h.b16 %v6629
  %v8011 = vunpack.c.l.b16 %v6630
  %v8012 = vunpack.c.h.b16 %v6630
  %v8013 = vunpack.c.l.b16 %v6631
  %v8014 = vunpack.c.h.b16 %v6631
  %v8015 = vunpack.c.l.b16 %v6632
  %v8016 = vunpack.c.h.b16 %v6632
  %v8017 = vunpack.c.l.b16 %v6633
  %v8018 = vunpack.c.h.b16 %v6633
  %v8019 = vunpack.c.l.b16 %v6634
  %v8020 = vunpack.c.h.b16 %v6634
  %v8021 = vunpack.c.l.b16 %v6635
  %v8022 = vunpack.c.h.b16 %v6635
  %v8023 = vunpack.c.l.b16 %v6636
  %v8024 = vunpack.c.h.b16 %v6636
  %v8025 = vunpack.c.l.b16 %v6637
  %v8026 = vunpack.c.h.b16 %v6637
  %v8027 = vunpack.c.l.b16 %v6638
  %v8028 = vunpack.c.h.b16 %v6638
  %v8029 = vunpack.c.l.b16 %v6639
  %v8030 = vunpack.c.h.b16 %v6639
  %v8031 = vunpack.c.l.b16 %v6640
  %v8032 = vunpack.c.h.b16 %v6640
  %v8033 = vunpack.c.l.b16 %v6641
  %v8034 = vunpack.c.h.b16 %v6641
  %v8035 = vunpack.c.l.b16 %v6642
  %v8036 = vunpack.c.h.b16 %v6642
  %v8037 = vunpack.c.l.b16 %v6643
  %v8038 = vunpack.c.h.b16 %v6643
  %v8039 = vunpack.c.l.b16 %v6644
  %v8040 = vunpack.c.h.b16 %v6644
  %v8041 = vunpack.c.l.b16 %v6645
  %v8042 = vunpack.c.h.b16 %v6645
  %v8043 = vunpack.c.l.b16 %v6646
  %v8044 = vunpack.c.h.b16 %v6646
  %v8045 = vunpack.c.l.b16 %v6647
  %v8046 = vunpack.c.h.b16 %v6647
  %v8047 = vunpack.c.l.b16 %v6648
  %v8048 = vunpack.c.h.b16 %v6648
  %v8049 = vunpack.c.l.b16 %v6649
  %v8050 = vunpack.c.h.b16 %v6649
  %v8051 = vunpack.c.l.b16 %v6650
  %v8052 = vunpack.c.h.b16 %v6650
  %v8053 = vunpack.c.l.b16 %v6651
  %v8054 = vunpack.c.h.b16 %v6651
  %v8055 = vunpack.c.l.b16 %v6652
  %v8056 = vunpack.c.h.b16 %v6652
  %v8057 = vunpack.c.l.b16 %v6653
  %v8058 = vunpack.c.h.b16 %v6653
  %v8059 = vunpack.c.l.b16 %v6654
  %v8060 = vunpack.c.h.b16 %v6654
  %v8061 = vunpack.c.l.b16 %v6655
  %v8062 = vunpack.c.h.b16 %v6655
  %v8063 = vunpack.c.l.b16 %v6656
  %v8064 = vunpack.c.h.b16 %v6656
  %v8065 = vunpack.c.l.b16 %v6657
  %v8066 = vunpack.c.h.b16 %v6657
  %v8067 = vpack.c.b16 %v7815, %v7811
  %v8068 = vpack.c.b16 %v7816, %v7812
  %v8069 = vpack.c.b16 %v7817, %v7813
  %v8070 = vpack.c.b16 %v7818, %v7814
  %v8071 = vpack.c.b16 %v7823, %v7819
  %v8072 = vpack.c.b16 %v7824, %v7820
  %v8073 = vpack.c.b16 %v7825, %v7821
  %v8074 = vpack.c.b16 %v7826, %v7822
  %v8075 = vpack.c.b16 %v7831, %v7827
  %v8076 = vpack.c.b16 %v7832, %v7828
  %v8077 = vpack.c.b16 %v7833, %v7829
  %v8078 = vpack.c.b16 %v7834, %v7830
  %v8079 = vpack.c.b16 %v7839, %v7835
  %v8080 = vpack.c.b16 %v7840, %v7836
  %v8081 = vpack.c.b16 %v7841, %v7837
  %v8082 = vpack.c.b16 %v7842, %v7838
  %v8083 = vpack.c.b16 %v7847, %v7843
  %v8084 = vpack.c.b16 %v7848, %v7844
  %v8085 = vpack.c.b16 %v7849, %v7845
  %v8086 = vpack.c.b16 %v7850, %v7846
  %v8087 = vpack.c.b16 %v7855, %v7851
  %v8088 = vpack.c.b16 %v7856, %v7852
  %v8089 = vpack.c.b16 %v7857, %v7853
  %v8090 = vpack.c.b16 %v7858, %v7854
  %v8091 = vpack.c.b16 %v7863, %v7859
  %v8092 = vpack.c.b16 %v7864, %v7860
  %v8093 = vpack.c.b16 %v7865, %v7861
  %v8094 = vpack.c.b16 %v7866, %v7862
  %v8095 = vpack.c.b16 %v7871, %v7867
  %v8096 = vpack.c.b16 %v7872, %v7868
  %v8097 = vpack.c.b16 %v7873, %v7869
  %v8098 = vpack.c.b16 %v7874, %v7870
  %v8099 = vpack.c.b16 %v7879, %v7875
  %v8100 = vpack.c.b16 %v7880, %v7876
  %v8101 = vpack.c.b16 %v7881, %v7877
  %v8102 = vpack.c.b16 %v7882, %v7878
  %v8103 = vpack.c.b16 %v7887, %v7883
  %v8104 = vpack.c.b16 %v7888, %v7884
  %v8105 = vpack.c.b16 %v7889, %v7885
  %v8106 = vpack.c.b16 %v7890, %v7886
  %v8107 = vpack.c.b16 %v7895, %v7891
  %v8108 = vpack.c.b16 %v7896, %v7892
  %v8109 = vpack.c.b16 %v7897, %v7893
  %v8110 = vpack.c.b16 %v7898, %v7894
  %v8111 = vpack.c.b16 %v7903, %v7899
  %v8112 = vpack.c.b16 %v7904, %v7900
  %v8113 = vpack.c.b16 %v7905, %v7901
  %v8114 = vpack.c.b16 %v7906, %v7902
  %v8115 = vpack.c.b16 %v7911, %v7907
  %v8116 = vpack.c.b16 %v7912, %v7908
  %v8117 = vpack.c.b16 %v7913, %v7909
  %v8118 = vpack.c.b16 %v7914, %v7910
  %v8119 = vpack.c.b16 %v7919, %v7915
  %v8120 = vpack.c.b16 %v7920, %v7916
  %v8121 = vpack.c.b16 %v7921, %v7917
  %v8122 = vpack.c.b16 %v7922, %v7918
  %v8123 = vpack.c.b16 %v7927, %v7923
  %v8124 = vpack.c.b16 %v7928, %v7924
  %v8125 = vpack.c.b16 %v7929, %v7925
  %v8126 = vpack.c.b16 %v7930, %v7926
  %v8127 = vpack.c.b16 %v7935, %v7931
  %v8128 = vpack.c.b16 %v7936, %v7932
  %v8129 = vpack.c.b16 %v7937, %v7933
  %v8130 = vpack.c.b16 %v7938, %v7934
  %v8131 = vpack.c.b16 %v7943, %v7939
  %v8132 = vpack.c.b16 %v7944, %v7940
  %v8133 = vpack.c.b16 %v7945, %v7941
  %v8134 = vpack.c.b16 %v7946, %v7942
  %v8135 = vpack.c.b16 %v7951, %v7947
  %v8136 = vpack.c.b16 %v7952, %v7948
  %v8137 = vpack.c.b16 %v7953, %v7949
  %v8138 = vpack.c.b16 %v7954, %v7950
  %v8139 = vpack.c.b16 %v7959, %v7955
  %v8140 = vpack.c.b16 %v7960, %v7956
  %v8141 = vpack.c.b16 %v7961, %v7957
  %v8142 = vpack.c.b16 %v7962, %v7958
  %v8143 = vpack.c.b16 %v7967, %v7963
  %v8144 = vpack.c.b16 %v7968, %v7964
  %v8145 = vpack.c.b16 %v7969, %v7965
  %v8146 = vpack.c.b16 %v7970, %v7966
  %v8147 = vpack.c.b16 %v7975, %v7971
  %v8148 = vpack.c.b16 %v7976, %v7972
  %v8149 = vpack.c.b16 %v7977, %v7973
  %v8150 = vpack.c.b16 %v7978, %v7974
  %v8151 = vpack.c.b16 %v7983, %v7979
  %v8152 = vpack.c.b16 %v7984, %v7980
  %v8153 = vpack.c.b16 %v7985, %v7981
  %v8154 = vpack.c.b16 %v7986, %v7982
  %v8155 = vpack.c.b16 %v7991, %v7987
  %v8156 = vpack.c.b16 %v7992, %v7988
  %v8157 = vpack.c.b16 %v7993, %v7989
  %v8158 = vpack.c.b16 %v7994, %v7990
  %v8159 = vpack.c.b16 %v7999, %v7995
  %v8160 = vpack.c.b16 %v8000, %v7996
  %v8161 = vpack.c.b16 %v8001, %v7997
  %v8162 = vpack.c.b16 %v8002, %v7998
  %v8163 = vpack.c.b16 %v8007, %v8003
  %v8164 = vpack.c.b16 %v8008, %v8004
  %v8165 = vpack.c.b16 %v8009, %v8005
  %v8166 = vpack.c.b16 %v8010, %v8006
  %v8167 = vpack.c.b16 %v8015, %v8011
  %v8168 = vpack.c.b16 %v8016, %v8012
  %v8169 = vpack.c.b16 %v8017, %v8013
  %v8170 = vpack.c.b16 %v8018, %v8014
  %v8171 = vpack.c.b16 %v8023, %v8019
  %v8172 = vpack.c.b16 %v8024, %v8020
  %v8173 = vpack.c.b16 %v8025, %v8021
  %v8174 = vpack.c.b16 %v8026, %v8022
  %v8175 = vpack.c.b16 %v8031, %v8027
  %v8176 = vpack.c.b16 %v8032, %v8028
  %v8177 = vpack.c.b16 %v8033, %v8029
  %v8178 = vpack.c.b16 %v8034, %v8030
  %v8179 = vpack.c.b16 %v8039, %v8035
  %v8180 = vpack.c.b16 %v8040, %v8036
  %v8181 = vpack.c.b16 %v8041, %v8037
  %v8182 = vpack.c.b16 %v8042, %v8038
  %v8183 = vpack.c.b16 %v8047, %v8043
  %v8184 = vpack.c.b16 %v8048, %v8044
  %v8185 = vpack.c.b16 %v8049, %v8045
  %v8186 = vpack.c.b16 %v8050, %v8046
  %v8187 = vpack.c.b16 %v8055, %v8051
  %v8188 = vpack.c.b16 %v8056, %v8052
  %v8189 = vpack.c.b16 %v8057, %v8053
  %v8190 = vpack.c.b16 %v8058, %v8054
  %v8191 = vpack.c.b16 %v8063, %v8059
  %v8192 = vpack.c.b16 %v8064, %v8060
  %v8193 = vpack.c.b16 %v8065, %v8061
  %v8194 = vpack.c.b16 %v8066, %v8062
  %8323 = vmatprep.subr.bf16.mxu0 %v8096
  %8324 = vmatpush1.bf16.msra.mxu0 %v8095
  %8325 = vmatprep.subr.bf16.mxu0 %v8092
  %8326 = vmatpush1.bf16.msra.mxu0 %v8091
  %8327 = vmatprep.subr.bf16.mxu0 %v8088
  %8328 = vmatpush1.bf16.msra.mxu0 %v8087
  %8329 = vmatprep.subr.bf16.mxu0 %v8084
  %8330 = vmatpush1.bf16.msra.mxu0 %v8083
  %8331 = vmatprep.subr.bf16.mxu0 %v8080
  %8332 = vmatpush1.bf16.msra.mxu0 %v8079
  %8333 = vmatprep.subr.bf16.mxu0 %v8076
  %8334 = vmatpush1.bf16.msra.mxu0 %v8075
  %8335 = vmatprep.subr.bf16.mxu0 %v8072
  %8336 = vmatpush1.bf16.msra.mxu0 %v8071
  %8337 = vmatprep.subr.bf16.mxu0 %v8068
  %8338 = vmatpush1.bf16.msra.mxu0 %v8067
  %8339 = vmatprep.subr.bf16.mxu0 %v8128
  %8340 = vmatpush2.bf16.msra.mxu0 %v8127
  %8341 = vmatprep.subr.bf16.mxu0 %v8124
  %8342 = vmatpush2.bf16.msra.mxu0 %v8123
  %8343 = vmatprep.subr.bf16.mxu0 %v8120
  %8344 = vmatpush2.bf16.msra.mxu0 %v8119
  %8345 = vmatprep.subr.bf16.mxu0 %v8116
  %8346 = vmatpush2.bf16.msra.mxu0 %v8115
  %8347 = vmatprep.subr.bf16.mxu0 %v8112
  %8348 = vmatpush2.bf16.msra.mxu0 %v8111
  %8349 = vmatprep.subr.bf16.mxu0 %v8108
  %8350 = vmatpush2.bf16.msra.mxu0 %v8107
  %8351 = vmatprep.subr.bf16.mxu0 %v8104
  %8352 = vmatpush2.bf16.msra.mxu0 %v8103
  %8353 = vmatprep.subr.bf16.mxu0 %v8100
  %8354 = vmatpush2.bf16.msra.mxu0 %v8099
  %8355 = vmatprep.mubr.bf16.mxu0 %v6808
  %8356 = vmatmul.mubr.bf16.gmra.mxu0 %v6807
  %v8357 = vpop.f32.mrf.mxu0
  %v8358 = vadd.f32 %v7585, %v8357
  %v8359 = vpop.f32.mrf.mxu0
  %v8360 = vadd.f32 %v7587, %v8359
  %v8361 = vpop.f32.mrf.mxu0
  %v8362 = vadd.f32 %v7589, %v8361
  %v8363 = vpop.f32.mrf.mxu0
  %v8364 = vadd.f32 %v7591, %v8363
  %8365 = vdwg.mxu0
  %8366 = vmatprep.subr.bf16.mxu0 %v8160
  %8367 = vmatpush1.bf16.msra.mxu0 %v8159
  %8368 = vmatprep.subr.bf16.mxu0 %v8156
  %8369 = vmatpush1.bf16.msra.mxu0 %v8155
  %8370 = vmatprep.subr.bf16.mxu0 %v8152
  %8371 = vmatpush1.bf16.msra.mxu0 %v8151
  %8372 = vmatprep.subr.bf16.mxu0 %v8148
  %8373 = vmatpush1.bf16.msra.mxu0 %v8147
  %8374 = vmatprep.subr.bf16.mxu0 %v8144
  %8375 = vmatpush1.bf16.msra.mxu0 %v8143
  %8376 = vmatprep.subr.bf16.mxu0 %v8140
  %8377 = vmatpush1.bf16.msra.mxu0 %v8139
  %8378 = vmatprep.subr.bf16.mxu0 %v8136
  %8379 = vmatpush1.bf16.msra.mxu0 %v8135
  %8380 = vmatprep.subr.bf16.mxu0 %v8132
  %8381 = vmatpush1.bf16.msra.mxu0 %v8131
  %8382 = vmatprep.subr.bf16.mxu0 %v8192
  %8383 = vmatpush2.bf16.msra.mxu0 %v8191
  %8384 = vmatprep.subr.bf16.mxu0 %v8188
  %8385 = vmatpush2.bf16.msra.mxu0 %v8187
  %8386 = vmatprep.subr.bf16.mxu0 %v8184
  %8387 = vmatpush2.bf16.msra.mxu0 %v8183
  %8388 = vmatprep.subr.bf16.mxu0 %v8180
  %8389 = vmatpush2.bf16.msra.mxu0 %v8179
  %8390 = vmatprep.subr.bf16.mxu0 %v8176
  %8391 = vmatpush2.bf16.msra.mxu0 %v8175
  %8392 = vmatprep.subr.bf16.mxu0 %v8172
  %8393 = vmatpush2.bf16.msra.mxu0 %v8171
  %8394 = vmatprep.subr.bf16.mxu0 %v8168
  %8395 = vmatpush2.bf16.msra.mxu0 %v8167
  %8396 = vmatprep.subr.bf16.mxu0 %v8164
  %8397 = vmatpush2.bf16.msra.mxu0 %v8163
  %8398 = vmatprep.mubr.bf16.mxu0 %v6810
  %8399 = vmatmul.mubr.bf16.gmra.mxu0 %v6809
  %v8400 = vpop.f32.mrf.mxu0
  %v8401 = vadd.f32 %v8358, %v8400
  %v8402 = vpop.f32.mrf.mxu0
  %v8403 = vadd.f32 %v8360, %v8402
  %v8404 = vpop.f32.mrf.mxu0
  %v8405 = vadd.f32 %v8362, %v8404
  %v8406 = vpop.f32.mrf.mxu0
  %v8407 = vadd.f32 %v8364, %v8406
  %8408 = vdwg.mxu0
  %8409 = vmatprep.subr.bf16.mxu0 %v8098
  %8410 = vmatpush1.bf16.msra.mxu0 %v8097
  %8411 = vmatprep.subr.bf16.mxu0 %v8094
  %8412 = vmatpush1.bf16.msra.mxu0 %v8093
  %8413 = vmatprep.subr.bf16.mxu0 %v8090
  %8414 = vmatpush1.bf16.msra.mxu0 %v8089
  %8415 = vmatprep.subr.bf16.mxu0 %v8086
  %8416 = vmatpush1.bf16.msra.mxu0 %v8085
  %8417 = vmatprep.subr.bf16.mxu0 %v8082
  %8418 = vmatpush1.bf16.msra.mxu0 %v8081
  %8419 = vmatprep.subr.bf16.mxu0 %v8078
  %8420 = vmatpush1.bf16.msra.mxu0 %v8077
  %8421 = vmatprep.subr.bf16.mxu0 %v8074
  %8422 = vmatpush1.bf16.msra.mxu0 %v8073
  %8423 = vmatprep.subr.bf16.mxu0 %v8070
  %8424 = vmatpush1.bf16.msra.mxu0 %v8069
  %8425 = vmatprep.subr.bf16.mxu0 %v8130
  %8426 = vmatpush2.bf16.msra.mxu0 %v8129
  %8427 = vmatprep.subr.bf16.mxu0 %v8126
  %8428 = vmatpush2.bf16.msra.mxu0 %v8125
  %8429 = vmatprep.subr.bf16.mxu0 %v8122
  %8430 = vmatpush2.bf16.msra.mxu0 %v8121
  %8431 = vmatprep.subr.bf16.mxu0 %v8118
  %8432 = vmatpush2.bf16.msra.mxu0 %v8117
  %8433 = vmatprep.subr.bf16.mxu0 %v8114
  %8434 = vmatpush2.bf16.msra.mxu0 %v8113
  %8435 = vmatprep.subr.bf16.mxu0 %v8110
  %8436 = vmatpush2.bf16.msra.mxu0 %v8109
  %8437 = vmatprep.subr.bf16.mxu0 %v8106
  %8438 = vmatpush2.bf16.msra.mxu0 %v8105
  %8439 = vmatprep.subr.bf16.mxu0 %v8102
  %8440 = vmatpush2.bf16.msra.mxu0 %v8101
  %8441 = vmatprep.mubr.bf16.mxu0 %v6808
  %8442 = vmatmul.mubr.bf16.gmra.mxu0 %v6807
  %v8443 = vpop.f32.mrf.mxu0
  %v8444 = vadd.f32 %v7671, %v8443
  %v8445 = vpop.f32.mrf.mxu0
  %v8446 = vadd.f32 %v7673, %v8445
  %v8447 = vpop.f32.mrf.mxu0
  %v8448 = vadd.f32 %v7675, %v8447
  %v8449 = vpop.f32.mrf.mxu0
  %v8450 = vadd.f32 %v7677, %v8449
  %8451 = vdwg.mxu0
  %8452 = vmatprep.subr.bf16.mxu0 %v8162
  %8453 = vmatpush1.bf16.msra.mxu0 %v8161
  %8454 = vmatprep.subr.bf16.mxu0 %v8158
  %8455 = vmatpush1.bf16.msra.mxu0 %v8157
  %8456 = vmatprep.subr.bf16.mxu0 %v8154
  %8457 = vmatpush1.bf16.msra.mxu0 %v8153
  %8458 = vmatprep.subr.bf16.mxu0 %v8150
  %8459 = vmatpush1.bf16.msra.mxu0 %v8149
  %8460 = vmatprep.subr.bf16.mxu0 %v8146
  %8461 = vmatpush1.bf16.msra.mxu0 %v8145
  %8462 = vmatprep.subr.bf16.mxu0 %v8142
  %8463 = vmatpush1.bf16.msra.mxu0 %v8141
  %8464 = vmatprep.subr.bf16.mxu0 %v8138
  %8465 = vmatpush1.bf16.msra.mxu0 %v8137
  %8466 = vmatprep.subr.bf16.mxu0 %v8134
  %8467 = vmatpush1.bf16.msra.mxu0 %v8133
  %8468 = vmatprep.subr.bf16.mxu0 %v8194
  %8469 = vmatpush2.bf16.msra.mxu0 %v8193
  %8470 = vmatprep.subr.bf16.mxu0 %v8190
  %8471 = vmatpush2.bf16.msra.mxu0 %v8189
  %8472 = vmatprep.subr.bf16.mxu0 %v8186
  %8473 = vmatpush2.bf16.msra.mxu0 %v8185
  %8474 = vmatprep.subr.bf16.mxu0 %v8182
  %8475 = vmatpush2.bf16.msra.mxu0 %v8181
  %8476 = vmatprep.subr.bf16.mxu0 %v8178
  %8477 = vmatpush2.bf16.msra.mxu0 %v8177
  %8478 = vmatprep.subr.bf16.mxu0 %v8174
  %8479 = vmatpush2.bf16.msra.mxu0 %v8173
  %8480 = vmatprep.subr.bf16.mxu0 %v8170
  %8481 = vmatpush2.bf16.msra.mxu0 %v8169
  %8482 = vmatprep.subr.bf16.mxu0 %v8166
  %8483 = vmatpush2.bf16.msra.mxu0 %v8165
  %8484 = vmatprep.mubr.bf16.mxu0 %v6810
  %8485 = vmatmul.mubr.bf16.gmra.mxu0 %v6809
  %v8486 = vpop.f32.mrf.mxu0
  %v8487 = vadd.f32 %v8444, %v8486
  %v8488 = vpop.f32.mrf.mxu0
  %v8489 = vadd.f32 %v8446, %v8488
  %v8490 = vpop.f32.mrf.mxu0
  %v8491 = vadd.f32 %v8448, %v8490
  %v8492 = vpop.f32.mrf.mxu0
  %v8493 = vadd.f32 %v8450, %v8492
  %8494 = vdwg.mxu0
  %v8495 = vld [vmem:[#allocation2] sm:$0xee]
  %v8496 = vld [vmem:[#allocation2 + $0x8] sm:$0xee]
  %s8497 = scalar_lea.vmem %s2, 2048
  %v8498 = vld [vmem:[%s8497] sm:$0xff]
  %v8499 = vld [vmem:[%s8497 + $0x8] sm:$0xff]
  %v8500 = vld [vmem:[%s8497 + $0x10] sm:$0xff]
  %v8501 = vld [vmem:[%s8497 + $0x18] sm:$0xff]
  %v8502 = vld [vmem:[%s8497 + $0x20] sm:$0xff]
  %v8503 = vld [vmem:[%s8497 + $0x28] sm:$0xff]
  %v8504 = vld [vmem:[%s8497 + $0x30] sm:$0xff]
  %v8505 = vld [vmem:[%s8497 + $0x38] sm:$0xff]
  %v8506 = vld [vmem:[%s8497 + $0x40] sm:$0xff]
  %v8507 = vld [vmem:[%s8497 + $0x48] sm:$0xff]
  %v8508 = vld [vmem:[%s8497 + $0x50] sm:$0xff]
  %v8509 = vld [vmem:[%s8497 + $0x58] sm:$0xff]
  %v8510 = vld [vmem:[%s8497 + $0x60] sm:$0xff]
  %v8511 = vld [vmem:[%s8497 + $0x68] sm:$0xff]
  %v8512 = vld [vmem:[%s8497 + $0x70] sm:$0xff]
  %v8513 = vld [vmem:[%s8497 + $0x78] sm:$0xff]
  %v8514 = vld [vmem:[%s8497 + $0x80] sm:$0xff]
  %v8515 = vld [vmem:[%s8497 + $0x88] sm:$0xff]
  %v8516 = vld [vmem:[%s8497 + $0x90] sm:$0xff]
  %v8517 = vld [vmem:[%s8497 + $0x98] sm:$0xff]
  %v8518 = vld [vmem:[%s8497 + $0xa0] sm:$0xff]
  %v8519 = vld [vmem:[%s8497 + $0xa8] sm:$0xff]
  %v8520 = vld [vmem:[%s8497 + $0xb0] sm:$0xff]
  %v8521 = vld [vmem:[%s8497 + $0xb8] sm:$0xff]
  %v8522 = vld [vmem:[%s8497 + $0xc0] sm:$0xff]
  %v8523 = vld [vmem:[%s8497 + $0xc8] sm:$0xff]
  %v8524 = vld [vmem:[%s8497 + $0xd0] sm:$0xff]
  %v8525 = vld [vmem:[%s8497 + $0xd8] sm:$0xff]
  %v8526 = vld [vmem:[%s8497 + $0xe0] sm:$0xff]
  %v8527 = vld [vmem:[%s8497 + $0xe8] sm:$0xff]
  %v8528 = vld [vmem:[%s8497 + $0xf0] sm:$0xff]
  %v8529 = vld [vmem:[%s8497 + $0xf8] sm:$0xff]
  %v8530 = vld [vmem:[%s8497 + $0x100] sm:$0xff]
  %v8531 = vld [vmem:[%s8497 + $0x108] sm:$0xff]
  %v8532 = vld [vmem:[%s8497 + $0x110] sm:$0xff]
  %v8533 = vld [vmem:[%s8497 + $0x118] sm:$0xff]
  %v8534 = vld [vmem:[%s8497 + $0x120] sm:$0xff]
  %v8535 = vld [vmem:[%s8497 + $0x128] sm:$0xff]
  %v8536 = vld [vmem:[%s8497 + $0x130] sm:$0xff]
  %v8537 = vld [vmem:[%s8497 + $0x138] sm:$0xff]
  %v8538 = vld [vmem:[%s8497 + $0x140] sm:$0xff]
  %v8539 = vld [vmem:[%s8497 + $0x148] sm:$0xff]
  %v8540 = vld [vmem:[%s8497 + $0x150] sm:$0xff]
  %v8541 = vld [vmem:[%s8497 + $0x158] sm:$0xff]
  %v8542 = vld [vmem:[%s8497 + $0x160] sm:$0xff]
  %v8543 = vld [vmem:[%s8497 + $0x168] sm:$0xff]
  %v8544 = vld [vmem:[%s8497 + $0x170] sm:$0xff]
  %v8545 = vld [vmem:[%s8497 + $0x178] sm:$0xff]
  %v8546 = vld [vmem:[%s8497 + $0x180] sm:$0xff]
  %v8547 = vld [vmem:[%s8497 + $0x188] sm:$0xff]
  %v8548 = vld [vmem:[%s8497 + $0x190] sm:$0xff]
  %v8549 = vld [vmem:[%s8497 + $0x198] sm:$0xff]
  %v8550 = vld [vmem:[%s8497 + $0x1a0] sm:$0xff]
  %v8551 = vld [vmem:[%s8497 + $0x1a8] sm:$0xff]
  %v8552 = vld [vmem:[%s8497 + $0x1b0] sm:$0xff]
  %v8553 = vld [vmem:[%s8497 + $0x1b8] sm:$0xff]
  %v8554 = vld [vmem:[%s8497 + $0x1c0] sm:$0xff]
  %v8555 = vld [vmem:[%s8497 + $0x1c8] sm:$0xff]
  %v8556 = vld [vmem:[%s8497 + $0x1d0] sm:$0xff]
  %v8557 = vld [vmem:[%s8497 + $0x1d8] sm:$0xff]
  %v8558 = vld [vmem:[%s8497 + $0x1e0] sm:$0xff]
  %v8559 = vld [vmem:[%s8497 + $0x1e8] sm:$0xff]
  %v8560 = vld [vmem:[%s8497 + $0x1f0] sm:$0xff]
  %v8561 = vld [vmem:[%s8497 + $0x1f8] sm:$0xff]
  %v8562 = vld [vmem:[%s8497 + $0x200] sm:$0xff]
  %v8563 = vld [vmem:[%s8497 + $0x208] sm:$0xff]
  %v8564 = vld [vmem:[%s8497 + $0x210] sm:$0xff]
  %v8565 = vld [vmem:[%s8497 + $0x218] sm:$0xff]
  %v8566 = vld [vmem:[%s8497 + $0x220] sm:$0xff]
  %v8567 = vld [vmem:[%s8497 + $0x228] sm:$0xff]
  %v8568 = vld [vmem:[%s8497 + $0x230] sm:$0xff]
  %v8569 = vld [vmem:[%s8497 + $0x238] sm:$0xff]
  %v8570 = vld [vmem:[%s8497 + $0x240] sm:$0xff]
  %v8571 = vld [vmem:[%s8497 + $0x248] sm:$0xff]
  %v8572 = vld [vmem:[%s8497 + $0x250] sm:$0xff]
  %v8573 = vld [vmem:[%s8497 + $0x258] sm:$0xff]
  %v8574 = vld [vmem:[%s8497 + $0x260] sm:$0xff]
  %v8575 = vld [vmem:[%s8497 + $0x268] sm:$0xff]
  %v8576 = vld [vmem:[%s8497 + $0x270] sm:$0xff]
  %v8577 = vld [vmem:[%s8497 + $0x278] sm:$0xff]
  %v8578 = vld [vmem:[%s8497 + $0x280] sm:$0xff]
  %v8579 = vld [vmem:[%s8497 + $0x288] sm:$0xff]
  %v8580 = vld [vmem:[%s8497 + $0x290] sm:$0xff]
  %v8581 = vld [vmem:[%s8497 + $0x298] sm:$0xff]
  %v8582 = vld [vmem:[%s8497 + $0x2a0] sm:$0xff]
  %v8583 = vld [vmem:[%s8497 + $0x2a8] sm:$0xff]
  %v8584 = vld [vmem:[%s8497 + $0x2b0] sm:$0xff]
  %v8585 = vld [vmem:[%s8497 + $0x2b8] sm:$0xff]
  %v8586 = vld [vmem:[%s8497 + $0x2c0] sm:$0xff]
  %v8587 = vld [vmem:[%s8497 + $0x2c8] sm:$0xff]
  %v8588 = vld [vmem:[%s8497 + $0x2d0] sm:$0xff]
  %v8589 = vld [vmem:[%s8497 + $0x2d8] sm:$0xff]
  %v8590 = vld [vmem:[%s8497 + $0x2e0] sm:$0xff]
  %v8591 = vld [vmem:[%s8497 + $0x2e8] sm:$0xff]
  %v8592 = vld [vmem:[%s8497 + $0x2f0] sm:$0xff]
  %v8593 = vld [vmem:[%s8497 + $0x2f8] sm:$0xff]
  %v8594 = vld [vmem:[%s8497 + $0x300] sm:$0xff]
  %v8595 = vld [vmem:[%s8497 + $0x308] sm:$0xff]
  %v8596 = vld [vmem:[%s8497 + $0x310] sm:$0xff]
  %v8597 = vld [vmem:[%s8497 + $0x318] sm:$0xff]
  %v8598 = vld [vmem:[%s8497 + $0x320] sm:$0xff]
  %v8599 = vld [vmem:[%s8497 + $0x328] sm:$0xff]
  %v8600 = vld [vmem:[%s8497 + $0x330] sm:$0xff]
  %v8601 = vld [vmem:[%s8497 + $0x338] sm:$0xff]
  %v8602 = vld [vmem:[%s8497 + $0x340] sm:$0xff]
  %v8603 = vld [vmem:[%s8497 + $0x348] sm:$0xff]
  %v8604 = vld [vmem:[%s8497 + $0x350] sm:$0xff]
  %v8605 = vld [vmem:[%s8497 + $0x358] sm:$0xff]
  %v8606 = vld [vmem:[%s8497 + $0x360] sm:$0xff]
  %v8607 = vld [vmem:[%s8497 + $0x368] sm:$0xff]
  %v8608 = vld [vmem:[%s8497 + $0x370] sm:$0xff]
  %v8609 = vld [vmem:[%s8497 + $0x378] sm:$0xff]
  %v8610 = vld [vmem:[%s8497 + $0x380] sm:$0xff]
  %v8611 = vld [vmem:[%s8497 + $0x388] sm:$0xff]
  %v8612 = vld [vmem:[%s8497 + $0x390] sm:$0xff]
  %v8613 = vld [vmem:[%s8497 + $0x398] sm:$0xff]
  %v8614 = vld [vmem:[%s8497 + $0x3a0] sm:$0xff]
  %v8615 = vld [vmem:[%s8497 + $0x3a8] sm:$0xff]
  %v8616 = vld [vmem:[%s8497 + $0x3b0] sm:$0xff]
  %v8617 = vld [vmem:[%s8497 + $0x3b8] sm:$0xff]
  %v8618 = vld [vmem:[%s8497 + $0x3c0] sm:$0xff]
  %v8619 = vld [vmem:[%s8497 + $0x3c8] sm:$0xff]
  %v8620 = vld [vmem:[%s8497 + $0x3d0] sm:$0xff]
  %v8621 = vld [vmem:[%s8497 + $0x3d8] sm:$0xff]
  %v8622 = vld [vmem:[%s8497 + $0x3e0] sm:$0xff]
  %v8623 = vld [vmem:[%s8497 + $0x3e8] sm:$0xff]
  %v8624 = vld [vmem:[%s8497 + $0x3f0] sm:$0xff]
  %v8625 = vld [vmem:[%s8497 + $0x3f8] sm:$0xff]
  %v8628 = vunpack.c.l.b16 %v8495
  %v8629 = vunpack.c.h.b16 %v8495
  %v8630 = vunpack.c.l.b16 %v8496
  %v8631 = vunpack.c.h.b16 %v8496
  %v8632 = vpack.c.b16 %v6799, %v8628
  %v8633 = vpack.c.b16 %v6800, %v8629
  %v8634 = vpack.c.b16 %v6801, %v8630
  %v8635 = vpack.c.b16 %v6802, %v8631
  %v8636 = vrot.slane %v8632, 1
  %v8637 = vrot.slane %v6811, 1
  %v8638 = vsel %vm2227, %v8636, %v8637
  %v8639 = vrot.slane %v8633, 1
  %v8640 = vrot.slane %v6812, 1
  %v8641 = vsel %vm2227, %v8639, %v8640
  %v8642 = vrot.slane %v8634, 1
  %v8643 = vrot.slane %v6813, 1
  %v8644 = vsel %vm2227, %v8642, %v8643
  %v8645 = vrot.slane %v8635, 1
  %v8646 = vrot.slane %v6814, 1
  %v8647 = vsel %vm2227, %v8645, %v8646
  %v8780 = vunpack.c.l.b16 %v8498
  %v8781 = vunpack.c.h.b16 %v8498
  %v8782 = vunpack.c.l.b16 %v8499
  %v8783 = vunpack.c.h.b16 %v8499
  %v8784 = vunpack.c.l.b16 %v8500
  %v8785 = vunpack.c.h.b16 %v8500
  %v8786 = vunpack.c.l.b16 %v8501
  %v8787 = vunpack.c.h.b16 %v8501
  %v8788 = vunpack.c.l.b16 %v8502
  %v8789 = vunpack.c.h.b16 %v8502
  %v8790 = vunpack.c.l.b16 %v8503
  %v8791 = vunpack.c.h.b16 %v8503
  %v8792 = vunpack.c.l.b16 %v8504
  %v8793 = vunpack.c.h.b16 %v8504
  %v8794 = vunpack.c.l.b16 %v8505
  %v8795 = vunpack.c.h.b16 %v8505
  %v8796 = vunpack.c.l.b16 %v8506
  %v8797 = vunpack.c.h.b16 %v8506
  %v8798 = vunpack.c.l.b16 %v8507
  %v8799 = vunpack.c.h.b16 %v8507
  %v8800 = vunpack.c.l.b16 %v8508
  %v8801 = vunpack.c.h.b16 %v8508
  %v8802 = vunpack.c.l.b16 %v8509
  %v8803 = vunpack.c.h.b16 %v8509
  %v8804 = vunpack.c.l.b16 %v8510
  %v8805 = vunpack.c.h.b16 %v8510
  %v8806 = vunpack.c.l.b16 %v8511
  %v8807 = vunpack.c.h.b16 %v8511
  %v8808 = vunpack.c.l.b16 %v8512
  %v8809 = vunpack.c.h.b16 %v8512
  %v8810 = vunpack.c.l.b16 %v8513
  %v8811 = vunpack.c.h.b16 %v8513
  %v8812 = vunpack.c.l.b16 %v8514
  %v8813 = vunpack.c.h.b16 %v8514
  %v8814 = vunpack.c.l.b16 %v8515
  %v8815 = vunpack.c.h.b16 %v8515
  %v8816 = vunpack.c.l.b16 %v8516
  %v8817 = vunpack.c.h.b16 %v8516
  %v8818 = vunpack.c.l.b16 %v8517
  %v8819 = vunpack.c.h.b16 %v8517
  %v8820 = vunpack.c.l.b16 %v8518
  %v8821 = vunpack.c.h.b16 %v8518
  %v8822 = vunpack.c.l.b16 %v8519
  %v8823 = vunpack.c.h.b16 %v8519
  %v8824 = vunpack.c.l.b16 %v8520
  %v8825 = vunpack.c.h.b16 %v8520
  %v8826 = vunpack.c.l.b16 %v8521
  %v8827 = vunpack.c.h.b16 %v8521
  %v8828 = vunpack.c.l.b16 %v8522
  %v8829 = vunpack.c.h.b16 %v8522
  %v8830 = vunpack.c.l.b16 %v8523
  %v8831 = vunpack.c.h.b16 %v8523
  %v8832 = vunpack.c.l.b16 %v8524
  %v8833 = vunpack.c.h.b16 %v8524
  %v8834 = vunpack.c.l.b16 %v8525
  %v8835 = vunpack.c.h.b16 %v8525
  %v8836 = vunpack.c.l.b16 %v8526
  %v8837 = vunpack.c.h.b16 %v8526
  %v8838 = vunpack.c.l.b16 %v8527
  %v8839 = vunpack.c.h.b16 %v8527
  %v8840 = vunpack.c.l.b16 %v8528
  %v8841 = vunpack.c.h.b16 %v8528
  %v8842 = vunpack.c.l.b16 %v8529
  %v8843 = vunpack.c.h.b16 %v8529
  %v8844 = vunpack.c.l.b16 %v8530
  %v8845 = vunpack.c.h.b16 %v8530
  %v8846 = vunpack.c.l.b16 %v8531
  %v8847 = vunpack.c.h.b16 %v8531
  %v8848 = vunpack.c.l.b16 %v8532
  %v8849 = vunpack.c.h.b16 %v8532
  %v8850 = vunpack.c.l.b16 %v8533
  %v8851 = vunpack.c.h.b16 %v8533
  %v8852 = vunpack.c.l.b16 %v8534
  %v8853 = vunpack.c.h.b16 %v8534
  %v8854 = vunpack.c.l.b16 %v8535
  %v8855 = vunpack.c.h.b16 %v8535
  %v8856 = vunpack.c.l.b16 %v8536
  %v8857 = vunpack.c.h.b16 %v8536
  %v8858 = vunpack.c.l.b16 %v8537
  %v8859 = vunpack.c.h.b16 %v8537
  %v8860 = vunpack.c.l.b16 %v8538
  %v8861 = vunpack.c.h.b16 %v8538
  %v8862 = vunpack.c.l.b16 %v8539
  %v8863 = vunpack.c.h.b16 %v8539
  %v8864 = vunpack.c.l.b16 %v8540
  %v8865 = vunpack.c.h.b16 %v8540
  %v8866 = vunpack.c.l.b16 %v8541
  %v8867 = vunpack.c.h.b16 %v8541
  %v8868 = vunpack.c.l.b16 %v8542
  %v8869 = vunpack.c.h.b16 %v8542
  %v8870 = vunpack.c.l.b16 %v8543
  %v8871 = vunpack.c.h.b16 %v8543
  %v8872 = vunpack.c.l.b16 %v8544
  %v8873 = vunpack.c.h.b16 %v8544
  %v8874 = vunpack.c.l.b16 %v8545
  %v8875 = vunpack.c.h.b16 %v8545
  %v8876 = vunpack.c.l.b16 %v8546
  %v8877 = vunpack.c.h.b16 %v8546
  %v8878 = vunpack.c.l.b16 %v8547
  %v8879 = vunpack.c.h.b16 %v8547
  %v8880 = vunpack.c.l.b16 %v8548
  %v8881 = vunpack.c.h.b16 %v8548
  %v8882 = vunpack.c.l.b16 %v8549
  %v8883 = vunpack.c.h.b16 %v8549
  %v8884 = vunpack.c.l.b16 %v8550
  %v8885 = vunpack.c.h.b16 %v8550
  %v8886 = vunpack.c.l.b16 %v8551
  %v8887 = vunpack.c.h.b16 %v8551
  %v8888 = vunpack.c.l.b16 %v8552
  %v8889 = vunpack.c.h.b16 %v8552
  %v8890 = vunpack.c.l.b16 %v8553
  %v8891 = vunpack.c.h.b16 %v8553
  %v8892 = vunpack.c.l.b16 %v8554
  %v8893 = vunpack.c.h.b16 %v8554
  %v8894 = vunpack.c.l.b16 %v8555
  %v8895 = vunpack.c.h.b16 %v8555
  %v8896 = vunpack.c.l.b16 %v8556
  %v8897 = vunpack.c.h.b16 %v8556
  %v8898 = vunpack.c.l.b16 %v8557
  %v8899 = vunpack.c.h.b16 %v8557
  %v8900 = vunpack.c.l.b16 %v8558
  %v8901 = vunpack.c.h.b16 %v8558
  %v8902 = vunpack.c.l.b16 %v8559
  %v8903 = vunpack.c.h.b16 %v8559
  %v8904 = vunpack.c.l.b16 %v8560
  %v8905 = vunpack.c.h.b16 %v8560
  %v8906 = vunpack.c.l.b16 %v8561
  %v8907 = vunpack.c.h.b16 %v8561
  %v8908 = vunpack.c.l.b16 %v8562
  %v8909 = vunpack.c.h.b16 %v8562
  %v8910 = vunpack.c.l.b16 %v8563
  %v8911 = vunpack.c.h.b16 %v8563
  %v8912 = vunpack.c.l.b16 %v8564
  %v8913 = vunpack.c.h.b16 %v8564
  %v8914 = vunpack.c.l.b16 %v8565
  %v8915 = vunpack.c.h.b16 %v8565
  %v8916 = vunpack.c.l.b16 %v8566
  %v8917 = vunpack.c.h.b16 %v8566
  %v8918 = vunpack.c.l.b16 %v8567
  %v8919 = vunpack.c.h.b16 %v8567
  %v8920 = vunpack.c.l.b16 %v8568
  %v8921 = vunpack.c.h.b16 %v8568
  %v8922 = vunpack.c.l.b16 %v8569
  %v8923 = vunpack.c.h.b16 %v8569
  %v8924 = vunpack.c.l.b16 %v8570
  %v8925 = vunpack.c.h.b16 %v8570
  %v8926 = vunpack.c.l.b16 %v8571
  %v8927 = vunpack.c.h.b16 %v8571
  %v8928 = vunpack.c.l.b16 %v8572
  %v8929 = vunpack.c.h.b16 %v8572
  %v8930 = vunpack.c.l.b16 %v8573
  %v8931 = vunpack.c.h.b16 %v8573
  %v8932 = vunpack.c.l.b16 %v8574
  %v8933 = vunpack.c.h.b16 %v8574
  %v8934 = vunpack.c.l.b16 %v8575
  %v8935 = vunpack.c.h.b16 %v8575
  %v8936 = vunpack.c.l.b16 %v8576
  %v8937 = vunpack.c.h.b16 %v8576
  %v8938 = vunpack.c.l.b16 %v8577
  %v8939 = vunpack.c.h.b16 %v8577
  %v8940 = vunpack.c.l.b16 %v8578
  %v8941 = vunpack.c.h.b16 %v8578
  %v8942 = vunpack.c.l.b16 %v8579
  %v8943 = vunpack.c.h.b16 %v8579
  %v8944 = vunpack.c.l.b16 %v8580
  %v8945 = vunpack.c.h.b16 %v8580
  %v8946 = vunpack.c.l.b16 %v8581
  %v8947 = vunpack.c.h.b16 %v8581
  %v8948 = vunpack.c.l.b16 %v8582
  %v8949 = vunpack.c.h.b16 %v8582
  %v8950 = vunpack.c.l.b16 %v8583
  %v8951 = vunpack.c.h.b16 %v8583
  %v8952 = vunpack.c.l.b16 %v8584
  %v8953 = vunpack.c.h.b16 %v8584
  %v8954 = vunpack.c.l.b16 %v8585
  %v8955 = vunpack.c.h.b16 %v8585
  %v8956 = vunpack.c.l.b16 %v8586
  %v8957 = vunpack.c.h.b16 %v8586
  %v8958 = vunpack.c.l.b16 %v8587
  %v8959 = vunpack.c.h.b16 %v8587
  %v8960 = vunpack.c.l.b16 %v8588
  %v8961 = vunpack.c.h.b16 %v8588
  %v8962 = vunpack.c.l.b16 %v8589
  %v8963 = vunpack.c.h.b16 %v8589
  %v8964 = vunpack.c.l.b16 %v8590
  %v8965 = vunpack.c.h.b16 %v8590
  %v8966 = vunpack.c.l.b16 %v8591
  %v8967 = vunpack.c.h.b16 %v8591
  %v8968 = vunpack.c.l.b16 %v8592
  %v8969 = vunpack.c.h.b16 %v8592
  %v8970 = vunpack.c.l.b16 %v8593
  %v8971 = vunpack.c.h.b16 %v8593
  %v8972 = vunpack.c.l.b16 %v8594
  %v8973 = vunpack.c.h.b16 %v8594
  %v8974 = vunpack.c.l.b16 %v8595
  %v8975 = vunpack.c.h.b16 %v8595
  %v8976 = vunpack.c.l.b16 %v8596
  %v8977 = vunpack.c.h.b16 %v8596
  %v8978 = vunpack.c.l.b16 %v8597
  %v8979 = vunpack.c.h.b16 %v8597
  %v8980 = vunpack.c.l.b16 %v8598
  %v8981 = vunpack.c.h.b16 %v8598
  %v8982 = vunpack.c.l.b16 %v8599
  %v8983 = vunpack.c.h.b16 %v8599
  %v8984 = vunpack.c.l.b16 %v8600
  %v8985 = vunpack.c.h.b16 %v8600
  %v8986 = vunpack.c.l.b16 %v8601
  %v8987 = vunpack.c.h.b16 %v8601
  %v8988 = vunpack.c.l.b16 %v8602
  %v8989 = vunpack.c.h.b16 %v8602
  %v8990 = vunpack.c.l.b16 %v8603
  %v8991 = vunpack.c.h.b16 %v8603
  %v8992 = vunpack.c.l.b16 %v8604
  %v8993 = vunpack.c.h.b16 %v8604
  %v8994 = vunpack.c.l.b16 %v8605
  %v8995 = vunpack.c.h.b16 %v8605
  %v8996 = vunpack.c.l.b16 %v8606
  %v8997 = vunpack.c.h.b16 %v8606
  %v8998 = vunpack.c.l.b16 %v8607
  %v8999 = vunpack.c.h.b16 %v8607
  %v9000 = vunpack.c.l.b16 %v8608
  %v9001 = vunpack.c.h.b16 %v8608
  %v9002 = vunpack.c.l.b16 %v8609
  %v9003 = vunpack.c.h.b16 %v8609
  %v9004 = vunpack.c.l.b16 %v8610
  %v9005 = vunpack.c.h.b16 %v8610
  %v9006 = vunpack.c.l.b16 %v8611
  %v9007 = vunpack.c.h.b16 %v8611
  %v9008 = vunpack.c.l.b16 %v8612
  %v9009 = vunpack.c.h.b16 %v8612
  %v9010 = vunpack.c.l.b16 %v8613
  %v9011 = vunpack.c.h.b16 %v8613
  %v9012 = vunpack.c.l.b16 %v8614
  %v9013 = vunpack.c.h.b16 %v8614
  %v9014 = vunpack.c.l.b16 %v8615
  %v9015 = vunpack.c.h.b16 %v8615
  %v9016 = vunpack.c.l.b16 %v8616
  %v9017 = vunpack.c.h.b16 %v8616
  %v9018 = vunpack.c.l.b16 %v8617
  %v9019 = vunpack.c.h.b16 %v8617
  %v9020 = vunpack.c.l.b16 %v8618
  %v9021 = vunpack.c.h.b16 %v8618
  %v9022 = vunpack.c.l.b16 %v8619
  %v9023 = vunpack.c.h.b16 %v8619
  %v9024 = vunpack.c.l.b16 %v8620
  %v9025 = vunpack.c.h.b16 %v8620
  %v9026 = vunpack.c.l.b16 %v8621
  %v9027 = vunpack.c.h.b16 %v8621
  %v9028 = vunpack.c.l.b16 %v8622
  %v9029 = vunpack.c.h.b16 %v8622
  %v9030 = vunpack.c.l.b16 %v8623
  %v9031 = vunpack.c.h.b16 %v8623
  %v9032 = vunpack.c.l.b16 %v8624
  %v9033 = vunpack.c.h.b16 %v8624
  %v9034 = vunpack.c.l.b16 %v8625
  %v9035 = vunpack.c.h.b16 %v8625
  %v9036 = vpack.c.b16 %v8784, %v8780
  %v9037 = vpack.c.b16 %v8785, %v8781
  %v9038 = vpack.c.b16 %v8786, %v8782
  %v9039 = vpack.c.b16 %v8787, %v8783
  %v9040 = vpack.c.b16 %v8792, %v8788
  %v9041 = vpack.c.b16 %v8793, %v8789
  %v9042 = vpack.c.b16 %v8794, %v8790
  %v9043 = vpack.c.b16 %v8795, %v8791
  %v9044 = vpack.c.b16 %v8800, %v8796
  %v9045 = vpack.c.b16 %v8801, %v8797
  %v9046 = vpack.c.b16 %v8802, %v8798
  %v9047 = vpack.c.b16 %v8803, %v8799
  %v9048 = vpack.c.b16 %v8808, %v8804
  %v9049 = vpack.c.b16 %v8809, %v8805
  %v9050 = vpack.c.b16 %v8810, %v8806
  %v9051 = vpack.c.b16 %v8811, %v8807
  %v9052 = vpack.c.b16 %v8816, %v8812
  %v9053 = vpack.c.b16 %v8817, %v8813
  %v9054 = vpack.c.b16 %v8818, %v8814
  %v9055 = vpack.c.b16 %v8819, %v8815
  %v9056 = vpack.c.b16 %v8824, %v8820
  %v9057 = vpack.c.b16 %v8825, %v8821
  %v9058 = vpack.c.b16 %v8826, %v8822
  %v9059 = vpack.c.b16 %v8827, %v8823
  %v9060 = vpack.c.b16 %v8832, %v8828
  %v9061 = vpack.c.b16 %v8833, %v8829
  %v9062 = vpack.c.b16 %v8834, %v8830
  %v9063 = vpack.c.b16 %v8835, %v8831
  %v9064 = vpack.c.b16 %v8840, %v8836
  %v9065 = vpack.c.b16 %v8841, %v8837
  %v9066 = vpack.c.b16 %v8842, %v8838
  %v9067 = vpack.c.b16 %v8843, %v8839
  %v9068 = vpack.c.b16 %v8848, %v8844
  %v9069 = vpack.c.b16 %v8849, %v8845
  %v9070 = vpack.c.b16 %v8850, %v8846
  %v9071 = vpack.c.b16 %v8851, %v8847
  %v9072 = vpack.c.b16 %v8856, %v8852
  %v9073 = vpack.c.b16 %v8857, %v8853
  %v9074 = vpack.c.b16 %v8858, %v8854
  %v9075 = vpack.c.b16 %v8859, %v8855
  %v9076 = vpack.c.b16 %v8864, %v8860
  %v9077 = vpack.c.b16 %v8865, %v8861
  %v9078 = vpack.c.b16 %v8866, %v8862
  %v9079 = vpack.c.b16 %v8867, %v8863
  %v9080 = vpack.c.b16 %v8872, %v8868
  %v9081 = vpack.c.b16 %v8873, %v8869
  %v9082 = vpack.c.b16 %v8874, %v8870
  %v9083 = vpack.c.b16 %v8875, %v8871
  %v9084 = vpack.c.b16 %v8880, %v8876
  %v9085 = vpack.c.b16 %v8881, %v8877
  %v9086 = vpack.c.b16 %v8882, %v8878
  %v9087 = vpack.c.b16 %v8883, %v8879
  %v9088 = vpack.c.b16 %v8888, %v8884
  %v9089 = vpack.c.b16 %v8889, %v8885
  %v9090 = vpack.c.b16 %v8890, %v8886
  %v9091 = vpack.c.b16 %v8891, %v8887
  %v9092 = vpack.c.b16 %v8896, %v8892
  %v9093 = vpack.c.b16 %v8897, %v8893
  %v9094 = vpack.c.b16 %v8898, %v8894
  %v9095 = vpack.c.b16 %v8899, %v8895
  %v9096 = vpack.c.b16 %v8904, %v8900
  %v9097 = vpack.c.b16 %v8905, %v8901
  %v9098 = vpack.c.b16 %v8906, %v8902
  %v9099 = vpack.c.b16 %v8907, %v8903
  %v9100 = vpack.c.b16 %v8912, %v8908
  %v9101 = vpack.c.b16 %v8913, %v8909
  %v9102 = vpack.c.b16 %v8914, %v8910
  %v9103 = vpack.c.b16 %v8915, %v8911
  %v9104 = vpack.c.b16 %v8920, %v8916
  %v9105 = vpack.c.b16 %v8921, %v8917
  %v9106 = vpack.c.b16 %v8922, %v8918
  %v9107 = vpack.c.b16 %v8923, %v8919
  %v9108 = vpack.c.b16 %v8928, %v8924
  %v9109 = vpack.c.b16 %v8929, %v8925
  %v9110 = vpack.c.b16 %v8930, %v8926
  %v9111 = vpack.c.b16 %v8931, %v8927
  %v9112 = vpack.c.b16 %v8936, %v8932
  %v9113 = vpack.c.b16 %v8937, %v8933
  %v9114 = vpack.c.b16 %v8938, %v8934
  %v9115 = vpack.c.b16 %v8939, %v8935
  %v9116 = vpack.c.b16 %v8944, %v8940
  %v9117 = vpack.c.b16 %v8945, %v8941
  %v9118 = vpack.c.b16 %v8946, %v8942
  %v9119 = vpack.c.b16 %v8947, %v8943
  %v9120 = vpack.c.b16 %v8952, %v8948
  %v9121 = vpack.c.b16 %v8953, %v8949
  %v9122 = vpack.c.b16 %v8954, %v8950
  %v9123 = vpack.c.b16 %v8955, %v8951
  %v9124 = vpack.c.b16 %v8960, %v8956
  %v9125 = vpack.c.b16 %v8961, %v8957
  %v9126 = vpack.c.b16 %v8962, %v8958
  %v9127 = vpack.c.b16 %v8963, %v8959
  %v9128 = vpack.c.b16 %v8968, %v8964
  %v9129 = vpack.c.b16 %v8969, %v8965
  %v9130 = vpack.c.b16 %v8970, %v8966
  %v9131 = vpack.c.b16 %v8971, %v8967
  %v9132 = vpack.c.b16 %v8976, %v8972
  %v9133 = vpack.c.b16 %v8977, %v8973
  %v9134 = vpack.c.b16 %v8978, %v8974
  %v9135 = vpack.c.b16 %v8979, %v8975
  %v9136 = vpack.c.b16 %v8984, %v8980
  %v9137 = vpack.c.b16 %v8985, %v8981
  %v9138 = vpack.c.b16 %v8986, %v8982
  %v9139 = vpack.c.b16 %v8987, %v8983
  %v9140 = vpack.c.b16 %v8992, %v8988
  %v9141 = vpack.c.b16 %v8993, %v8989
  %v9142 = vpack.c.b16 %v8994, %v8990
  %v9143 = vpack.c.b16 %v8995, %v8991
  %v9144 = vpack.c.b16 %v9000, %v8996
  %v9145 = vpack.c.b16 %v9001, %v8997
  %v9146 = vpack.c.b16 %v9002, %v8998
  %v9147 = vpack.c.b16 %v9003, %v8999
  %v9148 = vpack.c.b16 %v9008, %v9004
  %v9149 = vpack.c.b16 %v9009, %v9005
  %v9150 = vpack.c.b16 %v9010, %v9006
  %v9151 = vpack.c.b16 %v9011, %v9007
  %v9152 = vpack.c.b16 %v9016, %v9012
  %v9153 = vpack.c.b16 %v9017, %v9013
  %v9154 = vpack.c.b16 %v9018, %v9014
  %v9155 = vpack.c.b16 %v9019, %v9015
  %v9156 = vpack.c.b16 %v9024, %v9020
  %v9157 = vpack.c.b16 %v9025, %v9021
  %v9158 = vpack.c.b16 %v9026, %v9022
  %v9159 = vpack.c.b16 %v9027, %v9023
  %v9160 = vpack.c.b16 %v9032, %v9028
  %v9161 = vpack.c.b16 %v9033, %v9029
  %v9162 = vpack.c.b16 %v9034, %v9030
  %v9163 = vpack.c.b16 %v9035, %v9031
  %9292 = vmatprep.subr.bf16.mxu0 %v9065
  %9293 = vmatpush1.bf16.msra.mxu0 %v9064
  %9294 = vmatprep.subr.bf16.mxu0 %v9061
  %9295 = vmatpush1.bf16.msra.mxu0 %v9060
  %9296 = vmatprep.subr.bf16.mxu0 %v9057
  %9297 = vmatpush1.bf16.msra.mxu0 %v9056
  %9298 = vmatprep.subr.bf16.mxu0 %v9053
  %9299 = vmatpush1.bf16.msra.mxu0 %v9052
  %9300 = vmatprep.subr.bf16.mxu0 %v9049
  %9301 = vmatpush1.bf16.msra.mxu0 %v9048
  %9302 = vmatprep.subr.bf16.mxu0 %v9045
  %9303 = vmatpush1.bf16.msra.mxu0 %v9044
  %9304 = vmatprep.subr.bf16.mxu0 %v9041
  %9305 = vmatpush1.bf16.msra.mxu0 %v9040
  %9306 = vmatprep.subr.bf16.mxu0 %v9037
  %9307 = vmatpush1.bf16.msra.mxu0 %v9036
  %9308 = vmatprep.subr.bf16.mxu0 %v9097
  %9309 = vmatpush2.bf16.msra.mxu0 %v9096
  %9310 = vmatprep.subr.bf16.mxu0 %v9093
  %9311 = vmatpush2.bf16.msra.mxu0 %v9092
  %9312 = vmatprep.subr.bf16.mxu0 %v9089
  %9313 = vmatpush2.bf16.msra.mxu0 %v9088
  %9314 = vmatprep.subr.bf16.mxu0 %v9085
  %9315 = vmatpush2.bf16.msra.mxu0 %v9084
  %9316 = vmatprep.subr.bf16.mxu0 %v9081
  %9317 = vmatpush2.bf16.msra.mxu0 %v9080
  %9318 = vmatprep.subr.bf16.mxu0 %v9077
  %9319 = vmatpush2.bf16.msra.mxu0 %v9076
  %9320 = vmatprep.subr.bf16.mxu0 %v9073
  %9321 = vmatpush2.bf16.msra.mxu0 %v9072
  %9322 = vmatprep.subr.bf16.mxu0 %v9069
  %9323 = vmatpush2.bf16.msra.mxu0 %v9068
  %9324 = vmatprep.mubr.bf16.mxu0 %v8641
  %9325 = vmatmul.mubr.bf16.gmra.mxu0 %v8638
  %v9326 = vpop.f32.mrf.mxu0
  %v9327 = vadd.f32 0.0, %v9326
  %v9328 = vpop.f32.mrf.mxu0
  %v9329 = vadd.f32 0.0, %v9328
  %v9330 = vpop.f32.mrf.mxu0
  %v9331 = vadd.f32 0.0, %v9330
  %v9332 = vpop.f32.mrf.mxu0
  %v9333 = vadd.f32 0.0, %v9332
  %9334 = vdwg.mxu0
  %9335 = vmatprep.subr.bf16.mxu0 %v9129
  %9336 = vmatpush1.bf16.msra.mxu0 %v9128
  %9337 = vmatprep.subr.bf16.mxu0 %v9125
  %9338 = vmatpush1.bf16.msra.mxu0 %v9124
  %9339 = vmatprep.subr.bf16.mxu0 %v9121
  %9340 = vmatpush1.bf16.msra.mxu0 %v9120
  %9341 = vmatprep.subr.bf16.mxu0 %v9117
  %9342 = vmatpush1.bf16.msra.mxu0 %v9116
  %9343 = vmatprep.subr.bf16.mxu0 %v9113
  %9344 = vmatpush1.bf16.msra.mxu0 %v9112
  %9345 = vmatprep.subr.bf16.mxu0 %v9109
  %9346 = vmatpush1.bf16.msra.mxu0 %v9108
  %9347 = vmatprep.subr.bf16.mxu0 %v9105
  %9348 = vmatpush1.bf16.msra.mxu0 %v9104
  %9349 = vmatprep.subr.bf16.mxu0 %v9101
  %9350 = vmatpush1.bf16.msra.mxu0 %v9100
  %9351 = vmatprep.subr.bf16.mxu0 %v9161
  %9352 = vmatpush2.bf16.msra.mxu0 %v9160
  %9353 = vmatprep.subr.bf16.mxu0 %v9157
  %9354 = vmatpush2.bf16.msra.mxu0 %v9156
  %9355 = vmatprep.subr.bf16.mxu0 %v9153
  %9356 = vmatpush2.bf16.msra.mxu0 %v9152
  %9357 = vmatprep.subr.bf16.mxu0 %v9149
  %9358 = vmatpush2.bf16.msra.mxu0 %v9148
  %9359 = vmatprep.subr.bf16.mxu0 %v9145
  %9360 = vmatpush2.bf16.msra.mxu0 %v9144
  %9361 = vmatprep.subr.bf16.mxu0 %v9141
  %9362 = vmatpush2.bf16.msra.mxu0 %v9140
  %9363 = vmatprep.subr.bf16.mxu0 %v9137
  %9364 = vmatpush2.bf16.msra.mxu0 %v9136
  %9365 = vmatprep.subr.bf16.mxu0 %v9133
  %9366 = vmatpush2.bf16.msra.mxu0 %v9132
  %9367 = vmatprep.mubr.bf16.mxu0 %v8647
  %9368 = vmatmul.mubr.bf16.gmra.mxu0 %v8644
  %v9369 = vpop.f32.mrf.mxu0
  %v9370 = vadd.f32 %v9327, %v9369
  %v9371 = vpop.f32.mrf.mxu0
  %v9372 = vadd.f32 %v9329, %v9371
  %v9373 = vpop.f32.mrf.mxu0
  %v9374 = vadd.f32 %v9331, %v9373
  %v9375 = vpop.f32.mrf.mxu0
  %v9376 = vadd.f32 %v9333, %v9375
  %9377 = vdwg.mxu0
  %9378 = vmatprep.subr.bf16.mxu0 %v9067
  %9379 = vmatpush1.bf16.msra.mxu0 %v9066
  %9380 = vmatprep.subr.bf16.mxu0 %v9063
  %9381 = vmatpush1.bf16.msra.mxu0 %v9062
  %9382 = vmatprep.subr.bf16.mxu0 %v9059
  %9383 = vmatpush1.bf16.msra.mxu0 %v9058
  %9384 = vmatprep.subr.bf16.mxu0 %v9055
  %9385 = vmatpush1.bf16.msra.mxu0 %v9054
  %9386 = vmatprep.subr.bf16.mxu0 %v9051
  %9387 = vmatpush1.bf16.msra.mxu0 %v9050
  %9388 = vmatprep.subr.bf16.mxu0 %v9047
  %9389 = vmatpush1.bf16.msra.mxu0 %v9046
  %9390 = vmatprep.subr.bf16.mxu0 %v9043
  %9391 = vmatpush1.bf16.msra.mxu0 %v9042
  %9392 = vmatprep.subr.bf16.mxu0 %v9039
  %9393 = vmatpush1.bf16.msra.mxu0 %v9038
  %9394 = vmatprep.subr.bf16.mxu0 %v9099
  %9395 = vmatpush2.bf16.msra.mxu0 %v9098
  %9396 = vmatprep.subr.bf16.mxu0 %v9095
  %9397 = vmatpush2.bf16.msra.mxu0 %v9094
  %9398 = vmatprep.subr.bf16.mxu0 %v9091
  %9399 = vmatpush2.bf16.msra.mxu0 %v9090
  %9400 = vmatprep.subr.bf16.mxu0 %v9087
  %9401 = vmatpush2.bf16.msra.mxu0 %v9086
  %9402 = vmatprep.subr.bf16.mxu0 %v9083
  %9403 = vmatpush2.bf16.msra.mxu0 %v9082
  %9404 = vmatprep.subr.bf16.mxu0 %v9079
  %9405 = vmatpush2.bf16.msra.mxu0 %v9078
  %9406 = vmatprep.subr.bf16.mxu0 %v9075
  %9407 = vmatpush2.bf16.msra.mxu0 %v9074
  %9408 = vmatprep.subr.bf16.mxu0 %v9071
  %9409 = vmatpush2.bf16.msra.mxu0 %v9070
  %9410 = vmatprep.mubr.bf16.mxu0 %v8641
  %9411 = vmatmul.mubr.bf16.gmra.mxu0 %v8638
  %v9412 = vpop.f32.mrf.mxu0
  %v9413 = vadd.f32 0.0, %v9412
  %v9414 = vpop.f32.mrf.mxu0
  %v9415 = vadd.f32 0.0, %v9414
  %v9416 = vpop.f32.mrf.mxu0
  %v9417 = vadd.f32 0.0, %v9416
  %v9418 = vpop.f32.mrf.mxu0
  %v9419 = vadd.f32 0.0, %v9418
  %9420 = vdwg.mxu0
  %9421 = vmatprep.subr.bf16.mxu0 %v9131
  %9422 = vmatpush1.bf16.msra.mxu0 %v9130
  %9423 = vmatprep.subr.bf16.mxu0 %v9127
  %9424 = vmatpush1.bf16.msra.mxu0 %v9126
  %9425 = vmatprep.subr.bf16.mxu0 %v9123
  %9426 = vmatpush1.bf16.msra.mxu0 %v9122
  %9427 = vmatprep.subr.bf16.mxu0 %v9119
  %9428 = vmatpush1.bf16.msra.mxu0 %v9118
  %9429 = vmatprep.subr.bf16.mxu0 %v9115
  %9430 = vmatpush1.bf16.msra.mxu0 %v9114
  %9431 = vmatprep.subr.bf16.mxu0 %v9111
  %9432 = vmatpush1.bf16.msra.mxu0 %v9110
  %9433 = vmatprep.subr.bf16.mxu0 %v9107
  %9434 = vmatpush1.bf16.msra.mxu0 %v9106
  %9435 = vmatprep.subr.bf16.mxu0 %v9103
  %9436 = vmatpush1.bf16.msra.mxu0 %v9102
  %9437 = vmatprep.subr.bf16.mxu0 %v9163
  %9438 = vmatpush2.bf16.msra.mxu0 %v9162
  %9439 = vmatprep.subr.bf16.mxu0 %v9159
  %9440 = vmatpush2.bf16.msra.mxu0 %v9158
  %9441 = vmatprep.subr.bf16.mxu0 %v9155
  %9442 = vmatpush2.bf16.msra.mxu0 %v9154
  %9443 = vmatprep.subr.bf16.mxu0 %v9151
  %9444 = vmatpush2.bf16.msra.mxu0 %v9150
  %9445 = vmatprep.subr.bf16.mxu0 %v9147
  %9446 = vmatpush2.bf16.msra.mxu0 %v9146
  %9447 = vmatprep.subr.bf16.mxu0 %v9143
  %9448 = vmatpush2.bf16.msra.mxu0 %v9142
  %9449 = vmatprep.subr.bf16.mxu0 %v9139
  %9450 = vmatpush2.bf16.msra.mxu0 %v9138
  %9451 = vmatprep.subr.bf16.mxu0 %v9135
  %9452 = vmatpush2.bf16.msra.mxu0 %v9134
  %9453 = vmatprep.mubr.bf16.mxu0 %v8647
  %9454 = vmatmul.mubr.bf16.gmra.mxu0 %v8644
  %v9455 = vpop.f32.mrf.mxu0
  %v9456 = vadd.f32 %v9413, %v9455
  %v9457 = vpop.f32.mrf.mxu0
  %v9458 = vadd.f32 %v9415, %v9457
  %v9459 = vpop.f32.mrf.mxu0
  %v9460 = vadd.f32 %v9417, %v9459
  %v9461 = vpop.f32.mrf.mxu0
  %v9462 = vadd.f32 %v9419, %v9461
  %9463 = vdwg.mxu0
  %v9464 = vadd.f32 %v8401, %v9370
  %v9465 = vadd.f32 %v8403, %v9372
  %v9466 = vadd.f32 %v8487, %v9456
  %v9467 = vadd.f32 %v8489, %v9458
  %v9468 = vadd.f32 %v8405, %v9374
  %v9469 = vadd.f32 %v8407, %v9376
  %v9470 = vadd.f32 %v8491, %v9460
  %v9471 = vadd.f32 %v8493, %v9462
  %9472 = vst [vmem:[#allocation3] sm:$0xff] %v9464
  %9473 = vst [vmem:[#allocation3 + $0x8] sm:$0xff] %v9465
  %9474 = vst [vmem:[#allocation3 + $0x10] sm:$0xff] %v9466
  %9475 = vst [vmem:[#allocation3 + $0x18] sm:$0xff] %v9467
  %9476 = vst [vmem:[#allocation3 + $0x20] sm:$0xff] %v9468
  %9477 = vst [vmem:[#allocation3 + $0x28] sm:$0xff] %v9469
  %9478 = vst [vmem:[#allocation3 + $0x30] sm:$0xff] %v9470
  %9479 = vst [vmem:[#allocation3 + $0x38] sm:$0xff] %v9471
  %v9480 = vadd.f32 %v9464, %v9468
  %v9481 = vrot.slane %v9480, 4
  %v9482 = vadd.f32 %v9480, %v9481
  %v9483 = vrot.slane %v9482, 2
  %v9484 = vadd.f32 %v9482, %v9483
  %v9485 = vrot.slane %v9484, 1
  %v9486 = vadd.f32 %v9484, %v9485
  %v9487 = vadd.f32 %v9465, %v9469
  %v9488 = vrot.slane %v9487, 4
  %v9489 = vadd.f32 %v9487, %v9488
  %v9490 = vrot.slane %v9489, 2
  %v9491 = vadd.f32 %v9489, %v9490
  %v9492 = vrot.slane %v9491, 1
  %v9493 = vadd.f32 %v9491, %v9492
  %v9494 = vadd.f32 %v9466, %v9470
  %v9495 = vrot.slane %v9494, 4
  %v9496 = vadd.f32 %v9494, %v9495
  %v9497 = vrot.slane %v9496, 2
  %v9498 = vadd.f32 %v9496, %v9497
  %v9499 = vrot.slane %v9498, 1
  %v9500 = vadd.f32 %v9498, %v9499
  %v9501 = vadd.f32 %v9467, %v9471
  %v9502 = vrot.slane %v9501, 4
  %v9503 = vadd.f32 %v9501, %v9502
  %v9504 = vrot.slane %v9503, 2
  %v9505 = vadd.f32 %v9503, %v9504
  %v9506 = vrot.slane %v9505, 1
  %v9507 = vadd.f32 %v9505, %v9506
  %v9508 = vadd.f32 %v9486, 0.0
  %v9509 = vadd.f32 %v9493, 0.0
  %v9510 = vadd.f32 %v9500, 0.0
  %v9511 = vadd.f32 %v9507, 0.0
  %v9512 = vmul.f32 %v9464, %v9464
  %v9513 = vmul.f32 %v9465, %v9465
  %v9514 = vmul.f32 %v9466, %v9466
  %v9515 = vmul.f32 %v9467, %v9467
  %v9516 = vmul.f32 %v9468, %v9468
  %v9517 = vmul.f32 %v9469, %v9469
  %v9518 = vmul.f32 %v9470, %v9470
  %v9519 = vmul.f32 %v9471, %v9471
  %v9520 = vadd.f32 %v9512, %v9516
  %v9521 = vrot.slane %v9520, 4
  %v9522 = vadd.f32 %v9520, %v9521
  %v9523 = vrot.slane %v9522, 2
  %v9524 = vadd.f32 %v9522, %v9523
  %v9525 = vrot.slane %v9524, 1
  %v9526 = vadd.f32 %v9524, %v9525
  %v9527 = vadd.f32 %v9513, %v9517
  %v9528 = vrot.slane %v9527, 4
  %v9529 = vadd.f32 %v9527, %v9528
  %v9530 = vrot.slane %v9529, 2
  %v9531 = vadd.f32 %v9529, %v9530
  %v9532 = vrot.slane %v9531, 1
  %v9533 = vadd.f32 %v9531, %v9532
  %v9534 = vadd.f32 %v9514, %v9518
  %v9535 = vrot.slane %v9534, 4
  %v9536 = vadd.f32 %v9534, %v9535
  %v9537 = vrot.slane %v9536, 2
  %v9538 = vadd.f32 %v9536, %v9537
  %v9539 = vrot.slane %v9538, 1
  %v9540 = vadd.f32 %v9538, %v9539
  %v9541 = vadd.f32 %v9515, %v9519
  %v9542 = vrot.slane %v9541, 4
  %v9543 = vadd.f32 %v9541, %v9542
  %v9544 = vrot.slane %v9543, 2
  %v9545 = vadd.f32 %v9543, %v9544
  %v9546 = vrot.slane %v9545, 1
  %v9547 = vadd.f32 %v9545, %v9546
  %v9548 = vadd.f32 %v9526, 0.0
  %v9549 = vadd.f32 %v9533, 0.0
  %v9550 = vadd.f32 %v9540, 0.0
  %v9551 = vadd.f32 %v9547, 0.0
  %v9552 = vld [vmem:[%s6147] sm:$0xff]
  %v9553 = vld [vmem:[%s6147 + $0x8] sm:$0xff]
  %v9554 = vld [vmem:[%s6147 + $0x10] sm:$0xff]
  %v9555 = vld [vmem:[%s6147 + $0x18] sm:$0xff]
  %v9556 = vld [vmem:[%s6147 + $0x20] sm:$0xff]
  %v9557 = vld [vmem:[%s6147 + $0x28] sm:$0xff]
  %v9558 = vld [vmem:[%s6147 + $0x30] sm:$0xff]
  %v9559 = vld [vmem:[%s6147 + $0x38] sm:$0xff]
  %v9560 = vmul.f32 %v9552, %v6348
  %v9561 = vmul.f32 %v9553, %v6352
  %v9562 = vmul.f32 %v9554, %v6356
  %v9563 = vmul.f32 %v9555, %v6360
  %v9564 = vmul.f32 %v9556, %v6348
  %v9565 = vmul.f32 %v9557, %v6352
  %v9566 = vmul.f32 %v9558, %v6356
  %v9567 = vmul.f32 %v9559, %v6360
  %v9568 = vadd.f32 %v9560, %v6419
  %v9569 = vadd.f32 %v9561, %v6423
  %v9570 = vadd.f32 %v9562, %v6427
  %v9571 = vadd.f32 %v9563, %v6431
  %v9572 = vadd.f32 %v9564, %v6419
  %v9573 = vadd.f32 %v9565, %v6423
  %v9574 = vadd.f32 %v9566, %v6427
  %v9575 = vadd.f32 %v9567, %v6431
  %v9576 = vmax.f32 %v9568, 0.0
  %v9577 = vmax.f32 %v9569, 0.0
  %v9578 = vmax.f32 %v9570, 0.0
  %v9579 = vmax.f32 %v9571, 0.0
  %v9580 = vmax.f32 %v9572, 0.0
  %v9581 = vmax.f32 %v9573, 0.0
  %v9582 = vmax.f32 %v9574, 0.0
  %v9583 = vmax.f32 %v9575, 0.0
  %v9584 = vpack.c.bf16 %v9580, %v9576
  %v9585 = vpack.c.bf16 %v9581, %v9577
  %v9586 = vpack.c.bf16 %v9582, %v9578
  %v9587 = vpack.c.bf16 %v9583, %v9579
  %v9592 = vunpack.c.l.b16 %v9584
  %v9593 = vunpack.c.l.b16 %v9585
  %v9594 = vunpack.c.l.b16 %v9586
  %v9595 = vunpack.c.l.b16 %v9587
  %v9596 = vunpack.c.h.b16 %v9584
  %v9597 = vunpack.c.h.b16 %v9585
  %v9598 = vunpack.c.h.b16 %v9586
  %v9599 = vunpack.c.h.b16 %v9587
  %v9600 = vpack.c.b16 %v9593, %v9592
  %v9601 = vpack.c.b16 %v9595, %v9594
  %v9602 = vpack.c.b16 %v9597, %v9596
  %v9603 = vpack.c.b16 %v9599, %v9598
  %v9605 = vshrl.u32 %v9600, 16
  %v9607 = vrot.slane %v9605, 7
  %v9608 = vshll.u32 %v9600, 16
  %v9610 = vor.u32 %v9607, %v9608
  %v9612 = vshrl.u32 %v9601, 16
  %v9614 = vrot.slane %v9612, 7
  %v9615 = vshll.u32 %v9601, 16
  %v9617 = vor.u32 %v9614, %v9615
  %v9618 = vrot.slane %v9607, 4
  %v9620 = vshrl.u32 %v9602, 16
  %v9622 = vrot.slane %v9620, 7
  %v9623 = vshll.u32 %v9602, 16
  %v9625 = vor.u32 %v9622, %v9623
  %v9626 = vsel %vm56, %v9618, %v9625
  %v9627 = vrot.slane %v9614, 4
  %v9629 = vshrl.u32 %v9603, 16
  %v9631 = vrot.slane %v9629, 7
  %v9632 = vshll.u32 %v9603, 16
  %v9634 = vor.u32 %v9631, %v9632
  %v9635 = vsel %vm56, %v9627, %v9634
  %v9636 = vrot.slane %v9622, 4
  %v9637 = vrot.slane %v9631, 4
  %v9644 = vld [vmem:[#allocation2] sm:$0xff]
  %v9645 = vsel %vm101, %v9610, %v9644
  %9646 = vst [vmem:[#allocation2] sm:$0xff] %v9645
  %v9647 = vld [vmem:[#allocation2 + $0x8] sm:$0xff]
  %v9648 = vsel %vm101, %v9617, %v9647
  %9649 = vst [vmem:[#allocation2 + $0x8] sm:$0xff] %v9648
  %9650 = vst [vmem:[#allocation2 + $0x10] sm:$0xff] %v9626
  %9651 = vst [vmem:[#allocation2 + $0x18] sm:$0xff] %v9635
  %v9652 = vld [vmem:[#allocation2 + $0x20] sm:$0x11]
  %v9653 = vsel %vm33, %v9636, %v9652
  %9654 = vst [vmem:[#allocation2 + $0x20] sm:$0x11] %v9653
  %v9655 = vld [vmem:[#allocation2 + $0x28] sm:$0x11]
  %v9656 = vsel %vm33, %v9637, %v9655
  %9657 = vst [vmem:[#allocation2 + $0x28] sm:$0x11] %v9656
  %v9658 = vld [vmem:[#allocation2] sm:$0xff]
  %v9659 = vld [vmem:[#allocation2 + $0x8] sm:$0xff]
  %v9660 = vld [vmem:[#allocation2 + $0x10] sm:$0xff]
  %v9661 = vld [vmem:[#allocation2 + $0x18] sm:$0xff]
  %v9662 = vld [vmem:[%s2] sm:$0xff]
  %v9663 = vld [vmem:[%s2 + $0x8] sm:$0xff]
  %v9664 = vld [vmem:[%s2 + $0x10] sm:$0xff]
  %v9665 = vld [vmem:[%s2 + $0x18] sm:$0xff]
  %v9666 = vld [vmem:[%s2 + $0x20] sm:$0xff]
  %v9667 = vld [vmem:[%s2 + $0x28] sm:$0xff]
  %v9668 = vld [vmem:[%s2 + $0x30] sm:$0xff]
  %v9669 = vld [vmem:[%s2 + $0x38] sm:$0xff]
  %v9670 = vld [vmem:[%s2 + $0x40] sm:$0xff]
  %v9671 = vld [vmem:[%s2 + $0x48] sm:$0xff]
  %v9672 = vld [vmem:[%s2 + $0x50] sm:$0xff]
  %v9673 = vld [vmem:[%s2 + $0x58] sm:$0xff]
  %v9674 = vld [vmem:[%s2 + $0x60] sm:$0xff]
  %v9675 = vld [vmem:[%s2 + $0x68] sm:$0xff]
  %v9676 = vld [vmem:[%s2 + $0x70] sm:$0xff]
  %v9677 = vld [vmem:[%s2 + $0x78] sm:$0xff]
  %v9678 = vld [vmem:[%s2 + $0x80] sm:$0xff]
  %v9679 = vld [vmem:[%s2 + $0x88] sm:$0xff]
  %v9680 = vld [vmem:[%s2 + $0x90] sm:$0xff]
  %v9681 = vld [vmem:[%s2 + $0x98] sm:$0xff]
  %v9682 = vld [vmem:[%s2 + $0xa0] sm:$0xff]
  %v9683 = vld [vmem:[%s2 + $0xa8] sm:$0xff]
  %v9684 = vld [vmem:[%s2 + $0xb0] sm:$0xff]
  %v9685 = vld [vmem:[%s2 + $0xb8] sm:$0xff]
  %v9686 = vld [vmem:[%s2 + $0xc0] sm:$0xff]
  %v9687 = vld [vmem:[%s2 + $0xc8] sm:$0xff]
  %v9688 = vld [vmem:[%s2 + $0xd0] sm:$0xff]
  %v9689 = vld [vmem:[%s2 + $0xd8] sm:$0xff]
  %v9690 = vld [vmem:[%s2 + $0xe0] sm:$0xff]
  %v9691 = vld [vmem:[%s2 + $0xe8] sm:$0xff]
  %v9692 = vld [vmem:[%s2 + $0xf0] sm:$0xff]
  %v9693 = vld [vmem:[%s2 + $0xf8] sm:$0xff]
  %v9694 = vld [vmem:[%s2 + $0x100] sm:$0xff]
  %v9695 = vld [vmem:[%s2 + $0x108] sm:$0xff]
  %v9696 = vld [vmem:[%s2 + $0x110] sm:$0xff]
  %v9697 = vld [vmem:[%s2 + $0x118] sm:$0xff]
  %v9698 = vld [vmem:[%s2 + $0x120] sm:$0xff]
  %v9699 = vld [vmem:[%s2 + $0x128] sm:$0xff]
  %v9700 = vld [vmem:[%s2 + $0x130] sm:$0xff]
  %v9701 = vld [vmem:[%s2 + $0x138] sm:$0xff]
  %v9702 = vld [vmem:[%s2 + $0x140] sm:$0xff]
  %v9703 = vld [vmem:[%s2 + $0x148] sm:$0xff]
  %v9704 = vld [vmem:[%s2 + $0x150] sm:$0xff]
  %v9705 = vld [vmem:[%s2 + $0x158] sm:$0xff]
  %v9706 = vld [vmem:[%s2 + $0x160] sm:$0xff]
  %v9707 = vld [vmem:[%s2 + $0x168] sm:$0xff]
  %v9708 = vld [vmem:[%s2 + $0x170] sm:$0xff]
  %v9709 = vld [vmem:[%s2 + $0x178] sm:$0xff]
  %v9710 = vld [vmem:[%s2 + $0x180] sm:$0xff]
  %v9711 = vld [vmem:[%s2 + $0x188] sm:$0xff]
  %v9712 = vld [vmem:[%s2 + $0x190] sm:$0xff]
  %v9713 = vld [vmem:[%s2 + $0x198] sm:$0xff]
  %v9714 = vld [vmem:[%s2 + $0x1a0] sm:$0xff]
  %v9715 = vld [vmem:[%s2 + $0x1a8] sm:$0xff]
  %v9716 = vld [vmem:[%s2 + $0x1b0] sm:$0xff]
  %v9717 = vld [vmem:[%s2 + $0x1b8] sm:$0xff]
  %v9718 = vld [vmem:[%s2 + $0x1c0] sm:$0xff]
  %v9719 = vld [vmem:[%s2 + $0x1c8] sm:$0xff]
  %v9720 = vld [vmem:[%s2 + $0x1d0] sm:$0xff]
  %v9721 = vld [vmem:[%s2 + $0x1d8] sm:$0xff]
  %v9722 = vld [vmem:[%s2 + $0x1e0] sm:$0xff]
  %v9723 = vld [vmem:[%s2 + $0x1e8] sm:$0xff]
  %v9724 = vld [vmem:[%s2 + $0x1f0] sm:$0xff]
  %v9725 = vld [vmem:[%s2 + $0x1f8] sm:$0xff]
  %v9726 = vld [vmem:[%s2 + $0x200] sm:$0xff]
  %v9727 = vld [vmem:[%s2 + $0x208] sm:$0xff]
  %v9728 = vld [vmem:[%s2 + $0x210] sm:$0xff]
  %v9729 = vld [vmem:[%s2 + $0x218] sm:$0xff]
  %v9730 = vld [vmem:[%s2 + $0x220] sm:$0xff]
  %v9731 = vld [vmem:[%s2 + $0x228] sm:$0xff]
  %v9732 = vld [vmem:[%s2 + $0x230] sm:$0xff]
  %v9733 = vld [vmem:[%s2 + $0x238] sm:$0xff]
  %v9734 = vld [vmem:[%s2 + $0x240] sm:$0xff]
  %v9735 = vld [vmem:[%s2 + $0x248] sm:$0xff]
  %v9736 = vld [vmem:[%s2 + $0x250] sm:$0xff]
  %v9737 = vld [vmem:[%s2 + $0x258] sm:$0xff]
  %v9738 = vld [vmem:[%s2 + $0x260] sm:$0xff]
  %v9739 = vld [vmem:[%s2 + $0x268] sm:$0xff]
  %v9740 = vld [vmem:[%s2 + $0x270] sm:$0xff]
  %v9741 = vld [vmem:[%s2 + $0x278] sm:$0xff]
  %v9742 = vld [vmem:[%s2 + $0x280] sm:$0xff]
  %v9743 = vld [vmem:[%s2 + $0x288] sm:$0xff]
  %v9744 = vld [vmem:[%s2 + $0x290] sm:$0xff]
  %v9745 = vld [vmem:[%s2 + $0x298] sm:$0xff]
  %v9746 = vld [vmem:[%s2 + $0x2a0] sm:$0xff]
  %v9747 = vld [vmem:[%s2 + $0x2a8] sm:$0xff]
  %v9748 = vld [vmem:[%s2 + $0x2b0] sm:$0xff]
  %v9749 = vld [vmem:[%s2 + $0x2b8] sm:$0xff]
  %v9750 = vld [vmem:[%s2 + $0x2c0] sm:$0xff]
  %v9751 = vld [vmem:[%s2 + $0x2c8] sm:$0xff]
  %v9752 = vld [vmem:[%s2 + $0x2d0] sm:$0xff]
  %v9753 = vld [vmem:[%s2 + $0x2d8] sm:$0xff]
  %v9754 = vld [vmem:[%s2 + $0x2e0] sm:$0xff]
  %v9755 = vld [vmem:[%s2 + $0x2e8] sm:$0xff]
  %v9756 = vld [vmem:[%s2 + $0x2f0] sm:$0xff]
  %v9757 = vld [vmem:[%s2 + $0x2f8] sm:$0xff]
  %v9758 = vld [vmem:[%s2 + $0x300] sm:$0xff]
  %v9759 = vld [vmem:[%s2 + $0x308] sm:$0xff]
  %v9760 = vld [vmem:[%s2 + $0x310] sm:$0xff]
  %v9761 = vld [vmem:[%s2 + $0x318] sm:$0xff]
  %v9762 = vld [vmem:[%s2 + $0x320] sm:$0xff]
  %v9763 = vld [vmem:[%s2 + $0x328] sm:$0xff]
  %v9764 = vld [vmem:[%s2 + $0x330] sm:$0xff]
  %v9765 = vld [vmem:[%s2 + $0x338] sm:$0xff]
  %v9766 = vld [vmem:[%s2 + $0x340] sm:$0xff]
  %v9767 = vld [vmem:[%s2 + $0x348] sm:$0xff]
  %v9768 = vld [vmem:[%s2 + $0x350] sm:$0xff]
  %v9769 = vld [vmem:[%s2 + $0x358] sm:$0xff]
  %v9770 = vld [vmem:[%s2 + $0x360] sm:$0xff]
  %v9771 = vld [vmem:[%s2 + $0x368] sm:$0xff]
  %v9772 = vld [vmem:[%s2 + $0x370] sm:$0xff]
  %v9773 = vld [vmem:[%s2 + $0x378] sm:$0xff]
  %v9774 = vld [vmem:[%s2 + $0x380] sm:$0xff]
  %v9775 = vld [vmem:[%s2 + $0x388] sm:$0xff]
  %v9776 = vld [vmem:[%s2 + $0x390] sm:$0xff]
  %v9777 = vld [vmem:[%s2 + $0x398] sm:$0xff]
  %v9778 = vld [vmem:[%s2 + $0x3a0] sm:$0xff]
  %v9779 = vld [vmem:[%s2 + $0x3a8] sm:$0xff]
  %v9780 = vld [vmem:[%s2 + $0x3b0] sm:$0xff]
  %v9781 = vld [vmem:[%s2 + $0x3b8] sm:$0xff]
  %v9782 = vld [vmem:[%s2 + $0x3c0] sm:$0xff]
  %v9783 = vld [vmem:[%s2 + $0x3c8] sm:$0xff]
  %v9784 = vld [vmem:[%s2 + $0x3d0] sm:$0xff]
  %v9785 = vld [vmem:[%s2 + $0x3d8] sm:$0xff]
  %v9786 = vld [vmem:[%s2 + $0x3e0] sm:$0xff]
  %v9787 = vld [vmem:[%s2 + $0x3e8] sm:$0xff]
  %v9788 = vld [vmem:[%s2 + $0x3f0] sm:$0xff]
  %v9789 = vld [vmem:[%s2 + $0x3f8] sm:$0xff]
  %v9790 = vld [vmem:[#allocation2 + $0x20] sm:$0x11]
  %v9791 = vld [vmem:[#allocation2 + $0x28] sm:$0x11]
  %v9792 = vld [vmem:[%s6660] sm:$0xff]
  %v9793 = vld [vmem:[%s6660 + $0x8] sm:$0xff]
  %v9794 = vld [vmem:[%s6660 + $0x10] sm:$0xff]
  %v9795 = vld [vmem:[%s6660 + $0x18] sm:$0xff]
  %v9796 = vld [vmem:[%s6660 + $0x20] sm:$0xff]
  %v9797 = vld [vmem:[%s6660 + $0x28] sm:$0xff]
  %v9798 = vld [vmem:[%s6660 + $0x30] sm:$0xff]
  %v9799 = vld [vmem:[%s6660 + $0x38] sm:$0xff]
  %v9800 = vld [vmem:[%s6660 + $0x40] sm:$0xff]
  %v9801 = vld [vmem:[%s6660 + $0x48] sm:$0xff]
  %v9802 = vld [vmem:[%s6660 + $0x50] sm:$0xff]
  %v9803 = vld [vmem:[%s6660 + $0x58] sm:$0xff]
  %v9804 = vld [vmem:[%s6660 + $0x60] sm:$0xff]
  %v9805 = vld [vmem:[%s6660 + $0x68] sm:$0xff]
  %v9806 = vld [vmem:[%s6660 + $0x70] sm:$0xff]
  %v9807 = vld [vmem:[%s6660 + $0x78] sm:$0xff]
  %v9808 = vld [vmem:[%s6660 + $0x80] sm:$0xff]
  %v9809 = vld [vmem:[%s6660 + $0x88] sm:$0xff]
  %v9810 = vld [vmem:[%s6660 + $0x90] sm:$0xff]
  %v9811 = vld [vmem:[%s6660 + $0x98] sm:$0xff]
  %v9812 = vld [vmem:[%s6660 + $0xa0] sm:$0xff]
  %v9813 = vld [vmem:[%s6660 + $0xa8] sm:$0xff]
  %v9814 = vld [vmem:[%s6660 + $0xb0] sm:$0xff]
  %v9815 = vld [vmem:[%s6660 + $0xb8] sm:$0xff]
  %v9816 = vld [vmem:[%s6660 + $0xc0] sm:$0xff]
  %v9817 = vld [vmem:[%s6660 + $0xc8] sm:$0xff]
  %v9818 = vld [vmem:[%s6660 + $0xd0] sm:$0xff]
  %v9819 = vld [vmem:[%s6660 + $0xd8] sm:$0xff]
  %v9820 = vld [vmem:[%s6660 + $0xe0] sm:$0xff]
  %v9821 = vld [vmem:[%s6660 + $0xe8] sm:$0xff]
  %v9822 = vld [vmem:[%s6660 + $0xf0] sm:$0xff]
  %v9823 = vld [vmem:[%s6660 + $0xf8] sm:$0xff]
  %v9824 = vld [vmem:[%s6660 + $0x100] sm:$0xff]
  %v9825 = vld [vmem:[%s6660 + $0x108] sm:$0xff]
  %v9826 = vld [vmem:[%s6660 + $0x110] sm:$0xff]
  %v9827 = vld [vmem:[%s6660 + $0x118] sm:$0xff]
  %v9828 = vld [vmem:[%s6660 + $0x120] sm:$0xff]
  %v9829 = vld [vmem:[%s6660 + $0x128] sm:$0xff]
  %v9830 = vld [vmem:[%s6660 + $0x130] sm:$0xff]
  %v9831 = vld [vmem:[%s6660 + $0x138] sm:$0xff]
  %v9832 = vld [vmem:[%s6660 + $0x140] sm:$0xff]
  %v9833 = vld [vmem:[%s6660 + $0x148] sm:$0xff]
  %v9834 = vld [vmem:[%s6660 + $0x150] sm:$0xff]
  %v9835 = vld [vmem:[%s6660 + $0x158] sm:$0xff]
  %v9836 = vld [vmem:[%s6660 + $0x160] sm:$0xff]
  %v9837 = vld [vmem:[%s6660 + $0x168] sm:$0xff]
  %v9838 = vld [vmem:[%s6660 + $0x170] sm:$0xff]
  %v9839 = vld [vmem:[%s6660 + $0x178] sm:$0xff]
  %v9840 = vld [vmem:[%s6660 + $0x180] sm:$0xff]
  %v9841 = vld [vmem:[%s6660 + $0x188] sm:$0xff]
  %v9842 = vld [vmem:[%s6660 + $0x190] sm:$0xff]
  %v9843 = vld [vmem:[%s6660 + $0x198] sm:$0xff]
  %v9844 = vld [vmem:[%s6660 + $0x1a0] sm:$0xff]
  %v9845 = vld [vmem:[%s6660 + $0x1a8] sm:$0xff]
  %v9846 = vld [vmem:[%s6660 + $0x1b0] sm:$0xff]
  %v9847 = vld [vmem:[%s6660 + $0x1b8] sm:$0xff]
  %v9848 = vld [vmem:[%s6660 + $0x1c0] sm:$0xff]
  %v9849 = vld [vmem:[%s6660 + $0x1c8] sm:$0xff]
  %v9850 = vld [vmem:[%s6660 + $0x1d0] sm:$0xff]
  %v9851 = vld [vmem:[%s6660 + $0x1d8] sm:$0xff]
  %v9852 = vld [vmem:[%s6660 + $0x1e0] sm:$0xff]
  %v9853 = vld [vmem:[%s6660 + $0x1e8] sm:$0xff]
  %v9854 = vld [vmem:[%s6660 + $0x1f0] sm:$0xff]
  %v9855 = vld [vmem:[%s6660 + $0x1f8] sm:$0xff]
  %v9856 = vld [vmem:[%s6660 + $0x200] sm:$0xff]
  %v9857 = vld [vmem:[%s6660 + $0x208] sm:$0xff]
  %v9858 = vld [vmem:[%s6660 + $0x210] sm:$0xff]
  %v9859 = vld [vmem:[%s6660 + $0x218] sm:$0xff]
  %v9860 = vld [vmem:[%s6660 + $0x220] sm:$0xff]
  %v9861 = vld [vmem:[%s6660 + $0x228] sm:$0xff]
  %v9862 = vld [vmem:[%s6660 + $0x230] sm:$0xff]
  %v9863 = vld [vmem:[%s6660 + $0x238] sm:$0xff]
  %v9864 = vld [vmem:[%s6660 + $0x240] sm:$0xff]
  %v9865 = vld [vmem:[%s6660 + $0x248] sm:$0xff]
  %v9866 = vld [vmem:[%s6660 + $0x250] sm:$0xff]
  %v9867 = vld [vmem:[%s6660 + $0x258] sm:$0xff]
  %v9868 = vld [vmem:[%s6660 + $0x260] sm:$0xff]
  %v9869 = vld [vmem:[%s6660 + $0x268] sm:$0xff]
  %v9870 = vld [vmem:[%s6660 + $0x270] sm:$0xff]
  %v9871 = vld [vmem:[%s6660 + $0x278] sm:$0xff]
  %v9872 = vld [vmem:[%s6660 + $0x280] sm:$0xff]
  %v9873 = vld [vmem:[%s6660 + $0x288] sm:$0xff]
  %v9874 = vld [vmem:[%s6660 + $0x290] sm:$0xff]
  %v9875 = vld [vmem:[%s6660 + $0x298] sm:$0xff]
  %v9876 = vld [vmem:[%s6660 + $0x2a0] sm:$0xff]
  %v9877 = vld [vmem:[%s6660 + $0x2a8] sm:$0xff]
  %v9878 = vld [vmem:[%s6660 + $0x2b0] sm:$0xff]
  %v9879 = vld [vmem:[%s6660 + $0x2b8] sm:$0xff]
  %v9880 = vld [vmem:[%s6660 + $0x2c0] sm:$0xff]
  %v9881 = vld [vmem:[%s6660 + $0x2c8] sm:$0xff]
  %v9882 = vld [vmem:[%s6660 + $0x2d0] sm:$0xff]
  %v9883 = vld [vmem:[%s6660 + $0x2d8] sm:$0xff]
  %v9884 = vld [vmem:[%s6660 + $0x2e0] sm:$0xff]
  %v9885 = vld [vmem:[%s6660 + $0x2e8] sm:$0xff]
  %v9886 = vld [vmem:[%s6660 + $0x2f0] sm:$0xff]
  %v9887 = vld [vmem:[%s6660 + $0x2f8] sm:$0xff]
  %v9888 = vld [vmem:[%s6660 + $0x300] sm:$0xff]
  %v9889 = vld [vmem:[%s6660 + $0x308] sm:$0xff]
  %v9890 = vld [vmem:[%s6660 + $0x310] sm:$0xff]
  %v9891 = vld [vmem:[%s6660 + $0x318] sm:$0xff]
  %v9892 = vld [vmem:[%s6660 + $0x320] sm:$0xff]
  %v9893 = vld [vmem:[%s6660 + $0x328] sm:$0xff]
  %v9894 = vld [vmem:[%s6660 + $0x330] sm:$0xff]
  %v9895 = vld [vmem:[%s6660 + $0x338] sm:$0xff]
  %v9896 = vld [vmem:[%s6660 + $0x340] sm:$0xff]
  %v9897 = vld [vmem:[%s6660 + $0x348] sm:$0xff]
  %v9898 = vld [vmem:[%s6660 + $0x350] sm:$0xff]
  %v9899 = vld [vmem:[%s6660 + $0x358] sm:$0xff]
  %v9900 = vld [vmem:[%s6660 + $0x360] sm:$0xff]
  %v9901 = vld [vmem:[%s6660 + $0x368] sm:$0xff]
  %v9902 = vld [vmem:[%s6660 + $0x370] sm:$0xff]
  %v9903 = vld [vmem:[%s6660 + $0x378] sm:$0xff]
  %v9904 = vld [vmem:[%s6660 + $0x380] sm:$0xff]
  %v9905 = vld [vmem:[%s6660 + $0x388] sm:$0xff]
  %v9906 = vld [vmem:[%s6660 + $0x390] sm:$0xff]
  %v9907 = vld [vmem:[%s6660 + $0x398] sm:$0xff]
  %v9908 = vld [vmem:[%s6660 + $0x3a0] sm:$0xff]
  %v9909 = vld [vmem:[%s6660 + $0x3a8] sm:$0xff]
  %v9910 = vld [vmem:[%s6660 + $0x3b0] sm:$0xff]
  %v9911 = vld [vmem:[%s6660 + $0x3b8] sm:$0xff]
  %v9912 = vld [vmem:[%s6660 + $0x3c0] sm:$0xff]
  %v9913 = vld [vmem:[%s6660 + $0x3c8] sm:$0xff]
  %v9914 = vld [vmem:[%s6660 + $0x3d0] sm:$0xff]
  %v9915 = vld [vmem:[%s6660 + $0x3d8] sm:$0xff]
  %v9916 = vld [vmem:[%s6660 + $0x3e0] sm:$0xff]
  %v9917 = vld [vmem:[%s6660 + $0x3e8] sm:$0xff]
  %v9918 = vld [vmem:[%s6660 + $0x3f0] sm:$0xff]
  %v9919 = vld [vmem:[%s6660 + $0x3f8] sm:$0xff]
  %v9926 = vunpack.c.l.b16 %v9658
  %v9927 = vunpack.c.h.b16 %v9658
  %v9928 = vunpack.c.l.b16 %v9659
  %v9929 = vunpack.c.h.b16 %v9659
  %v9930 = vunpack.c.l.b16 %v9660
  %v9931 = vunpack.c.h.b16 %v9660
  %v9932 = vunpack.c.l.b16 %v9661
  %v9933 = vunpack.c.h.b16 %v9661
  %v9934 = vunpack.c.l.b16 %v9790
  %v9935 = vunpack.c.h.b16 %v9790
  %v9936 = vunpack.c.l.b16 %v9791
  %v9937 = vunpack.c.h.b16 %v9791
  %v9938 = vpack.c.b16 %v9930, %v9926
  %v9939 = vpack.c.b16 %v9931, %v9927
  %v9940 = vpack.c.b16 %v9932, %v9928
  %v9941 = vpack.c.b16 %v9933, %v9929
  %v9942 = vpack.c.b16 %v9934, %v9934
  %v9943 = vpack.c.b16 %v9935, %v9935
  %v9944 = vpack.c.b16 %v9936, %v9936
  %v9945 = vpack.c.b16 %v9937, %v9937
  %v9947 = vshrl.u32 %v9938, 16
  %v9949 = vshll.u32 %v9938, 16
  %v9951 = vrot.slane %v9949, 1
  %v9952 = vor.u32 %v9947, %v9951
  %v9954 = vshll.u32 %v9942, 16
  %v9956 = vrot.slane %v9954, 1
  %v9957 = vsel %vm405, %v9952, %v9956
  %v9959 = vshrl.u32 %v9939, 16
  %v9961 = vshll.u32 %v9939, 16
  %v9963 = vrot.slane %v9961, 1
  %v9964 = vor.u32 %v9959, %v9963
  %v9966 = vshll.u32 %v9943, 16
  %v9968 = vrot.slane %v9966, 1
  %v9969 = vsel %vm405, %v9964, %v9968
  %v9971 = vshrl.u32 %v9940, 16
  %v9973 = vshll.u32 %v9940, 16
  %v9975 = vrot.slane %v9973, 1
  %v9976 = vor.u32 %v9971, %v9975
  %v9978 = vshll.u32 %v9944, 16
  %v9980 = vrot.slane %v9978, 1
  %v9981 = vsel %vm405, %v9976, %v9980
  %v9983 = vshrl.u32 %v9941, 16
  %v9985 = vshll.u32 %v9941, 16
  %v9987 = vrot.slane %v9985, 1
  %v9988 = vor.u32 %v9983, %v9987
  %v9990 = vshll.u32 %v9945, 16
  %v9992 = vrot.slane %v9990, 1
  %v9993 = vsel %vm405, %v9988, %v9992
  %v10126 = vunpack.c.l.b16 %v9792
  %v10127 = vunpack.c.h.b16 %v9792
  %v10128 = vunpack.c.l.b16 %v9793
  %v10129 = vunpack.c.h.b16 %v9793
  %v10130 = vunpack.c.l.b16 %v9794
  %v10131 = vunpack.c.h.b16 %v9794
  %v10132 = vunpack.c.l.b16 %v9795
  %v10133 = vunpack.c.h.b16 %v9795
  %v10134 = vunpack.c.l.b16 %v9796
  %v10135 = vunpack.c.h.b16 %v9796
  %v10136 = vunpack.c.l.b16 %v9797
  %v10137 = vunpack.c.h.b16 %v9797
  %v10138 = vunpack.c.l.b16 %v9798
  %v10139 = vunpack.c.h.b16 %v9798
  %v10140 = vunpack.c.l.b16 %v9799
  %v10141 = vunpack.c.h.b16 %v9799
  %v10142 = vunpack.c.l.b16 %v9800
  %v10143 = vunpack.c.h.b16 %v9800
  %v10144 = vunpack.c.l.b16 %v9801
  %v10145 = vunpack.c.h.b16 %v9801
  %v10146 = vunpack.c.l.b16 %v9802
  %v10147 = vunpack.c.h.b16 %v9802
  %v10148 = vunpack.c.l.b16 %v9803
  %v10149 = vunpack.c.h.b16 %v9803
  %v10150 = vunpack.c.l.b16 %v9804
  %v10151 = vunpack.c.h.b16 %v9804
  %v10152 = vunpack.c.l.b16 %v9805
  %v10153 = vunpack.c.h.b16 %v9805
  %v10154 = vunpack.c.l.b16 %v9806
  %v10155 = vunpack.c.h.b16 %v9806
  %v10156 = vunpack.c.l.b16 %v9807
  %v10157 = vunpack.c.h.b16 %v9807
  %v10158 = vunpack.c.l.b16 %v9808
  %v10159 = vunpack.c.h.b16 %v9808
  %v10160 = vunpack.c.l.b16 %v9809
  %v10161 = vunpack.c.h.b16 %v9809
  %v10162 = vunpack.c.l.b16 %v9810
  %v10163 = vunpack.c.h.b16 %v9810
  %v10164 = vunpack.c.l.b16 %v9811
  %v10165 = vunpack.c.h.b16 %v9811
  %v10166 = vunpack.c.l.b16 %v9812
  %v10167 = vunpack.c.h.b16 %v9812
  %v10168 = vunpack.c.l.b16 %v9813
  %v10169 = vunpack.c.h.b16 %v9813
  %v10170 = vunpack.c.l.b16 %v9814
  %v10171 = vunpack.c.h.b16 %v9814
  %v10172 = vunpack.c.l.b16 %v9815
  %v10173 = vunpack.c.h.b16 %v9815
  %v10174 = vunpack.c.l.b16 %v9816
  %v10175 = vunpack.c.h.b16 %v9816
  %v10176 = vunpack.c.l.b16 %v9817
  %v10177 = vunpack.c.h.b16 %v9817
  %v10178 = vunpack.c.l.b16 %v9818
  %v10179 = vunpack.c.h.b16 %v9818
  %v10180 = vunpack.c.l.b16 %v9819
  %v10181 = vunpack.c.h.b16 %v9819
  %v10182 = vunpack.c.l.b16 %v9820
  %v10183 = vunpack.c.h.b16 %v9820
  %v10184 = vunpack.c.l.b16 %v9821
  %v10185 = vunpack.c.h.b16 %v9821
  %v10186 = vunpack.c.l.b16 %v9822
  %v10187 = vunpack.c.h.b16 %v9822
  %v10188 = vunpack.c.l.b16 %v9823
  %v10189 = vunpack.c.h.b16 %v9823
  %v10190 = vunpack.c.l.b16 %v9824
  %v10191 = vunpack.c.h.b16 %v9824
  %v10192 = vunpack.c.l.b16 %v9825
  %v10193 = vunpack.c.h.b16 %v9825
  %v10194 = vunpack.c.l.b16 %v9826
  %v10195 = vunpack.c.h.b16 %v9826
  %v10196 = vunpack.c.l.b16 %v9827
  %v10197 = vunpack.c.h.b16 %v9827
  %v10198 = vunpack.c.l.b16 %v9828
  %v10199 = vunpack.c.h.b16 %v9828
  %v10200 = vunpack.c.l.b16 %v9829
  %v10201 = vunpack.c.h.b16 %v9829
  %v10202 = vunpack.c.l.b16 %v9830
  %v10203 = vunpack.c.h.b16 %v9830
  %v10204 = vunpack.c.l.b16 %v9831
  %v10205 = vunpack.c.h.b16 %v9831
  %v10206 = vunpack.c.l.b16 %v9832
  %v10207 = vunpack.c.h.b16 %v9832
  %v10208 = vunpack.c.l.b16 %v9833
  %v10209 = vunpack.c.h.b16 %v9833
  %v10210 = vunpack.c.l.b16 %v9834
  %v10211 = vunpack.c.h.b16 %v9834
  %v10212 = vunpack.c.l.b16 %v9835
  %v10213 = vunpack.c.h.b16 %v9835
  %v10214 = vunpack.c.l.b16 %v9836
  %v10215 = vunpack.c.h.b16 %v9836
  %v10216 = vunpack.c.l.b16 %v9837
  %v10217 = vunpack.c.h.b16 %v9837
  %v10218 = vunpack.c.l.b16 %v9838
  %v10219 = vunpack.c.h.b16 %v9838
  %v10220 = vunpack.c.l.b16 %v9839
  %v10221 = vunpack.c.h.b16 %v9839
  %v10222 = vunpack.c.l.b16 %v9840
  %v10223 = vunpack.c.h.b16 %v9840
  %v10224 = vunpack.c.l.b16 %v9841
  %v10225 = vunpack.c.h.b16 %v9841
  %v10226 = vunpack.c.l.b16 %v9842
  %v10227 = vunpack.c.h.b16 %v9842
  %v10228 = vunpack.c.l.b16 %v9843
  %v10229 = vunpack.c.h.b16 %v9843
  %v10230 = vunpack.c.l.b16 %v9844
  %v10231 = vunpack.c.h.b16 %v9844
  %v10232 = vunpack.c.l.b16 %v9845
  %v10233 = vunpack.c.h.b16 %v9845
  %v10234 = vunpack.c.l.b16 %v9846
  %v10235 = vunpack.c.h.b16 %v9846
  %v10236 = vunpack.c.l.b16 %v9847
  %v10237 = vunpack.c.h.b16 %v9847
  %v10238 = vunpack.c.l.b16 %v9848
  %v10239 = vunpack.c.h.b16 %v9848
  %v10240 = vunpack.c.l.b16 %v9849
  %v10241 = vunpack.c.h.b16 %v9849
  %v10242 = vunpack.c.l.b16 %v9850
  %v10243 = vunpack.c.h.b16 %v9850
  %v10244 = vunpack.c.l.b16 %v9851
  %v10245 = vunpack.c.h.b16 %v9851
  %v10246 = vunpack.c.l.b16 %v9852
  %v10247 = vunpack.c.h.b16 %v9852
  %v10248 = vunpack.c.l.b16 %v9853
  %v10249 = vunpack.c.h.b16 %v9853
  %v10250 = vunpack.c.l.b16 %v9854
  %v10251 = vunpack.c.h.b16 %v9854
  %v10252 = vunpack.c.l.b16 %v9855
  %v10253 = vunpack.c.h.b16 %v9855
  %v10254 = vunpack.c.l.b16 %v9856
  %v10255 = vunpack.c.h.b16 %v9856
  %v10256 = vunpack.c.l.b16 %v9857
  %v10257 = vunpack.c.h.b16 %v9857
  %v10258 = vunpack.c.l.b16 %v9858
  %v10259 = vunpack.c.h.b16 %v9858
  %v10260 = vunpack.c.l.b16 %v9859
  %v10261 = vunpack.c.h.b16 %v9859
  %v10262 = vunpack.c.l.b16 %v9860
  %v10263 = vunpack.c.h.b16 %v9860
  %v10264 = vunpack.c.l.b16 %v9861
  %v10265 = vunpack.c.h.b16 %v9861
  %v10266 = vunpack.c.l.b16 %v9862
  %v10267 = vunpack.c.h.b16 %v9862
  %v10268 = vunpack.c.l.b16 %v9863
  %v10269 = vunpack.c.h.b16 %v9863
  %v10270 = vunpack.c.l.b16 %v9864
  %v10271 = vunpack.c.h.b16 %v9864
  %v10272 = vunpack.c.l.b16 %v9865
  %v10273 = vunpack.c.h.b16 %v9865
  %v10274 = vunpack.c.l.b16 %v9866
  %v10275 = vunpack.c.h.b16 %v9866
  %v10276 = vunpack.c.l.b16 %v9867
  %v10277 = vunpack.c.h.b16 %v9867
  %v10278 = vunpack.c.l.b16 %v9868
  %v10279 = vunpack.c.h.b16 %v9868
  %v10280 = vunpack.c.l.b16 %v9869
  %v10281 = vunpack.c.h.b16 %v9869
  %v10282 = vunpack.c.l.b16 %v9870
  %v10283 = vunpack.c.h.b16 %v9870
  %v10284 = vunpack.c.l.b16 %v9871
  %v10285 = vunpack.c.h.b16 %v9871
  %v10286 = vunpack.c.l.b16 %v9872
  %v10287 = vunpack.c.h.b16 %v9872
  %v10288 = vunpack.c.l.b16 %v9873
  %v10289 = vunpack.c.h.b16 %v9873
  %v10290 = vunpack.c.l.b16 %v9874
  %v10291 = vunpack.c.h.b16 %v9874
  %v10292 = vunpack.c.l.b16 %v9875
  %v10293 = vunpack.c.h.b16 %v9875
  %v10294 = vunpack.c.l.b16 %v9876
  %v10295 = vunpack.c.h.b16 %v9876
  %v10296 = vunpack.c.l.b16 %v9877
  %v10297 = vunpack.c.h.b16 %v9877
  %v10298 = vunpack.c.l.b16 %v9878
  %v10299 = vunpack.c.h.b16 %v9878
  %v10300 = vunpack.c.l.b16 %v9879
  %v10301 = vunpack.c.h.b16 %v9879
  %v10302 = vunpack.c.l.b16 %v9880
  %v10303 = vunpack.c.h.b16 %v9880
  %v10304 = vunpack.c.l.b16 %v9881
  %v10305 = vunpack.c.h.b16 %v9881
  %v10306 = vunpack.c.l.b16 %v9882
  %v10307 = vunpack.c.h.b16 %v9882
  %v10308 = vunpack.c.l.b16 %v9883
  %v10309 = vunpack.c.h.b16 %v9883
  %v10310 = vunpack.c.l.b16 %v9884
  %v10311 = vunpack.c.h.b16 %v9884
  %v10312 = vunpack.c.l.b16 %v9885
  %v10313 = vunpack.c.h.b16 %v9885
  %v10314 = vunpack.c.l.b16 %v9886
  %v10315 = vunpack.c.h.b16 %v9886
  %v10316 = vunpack.c.l.b16 %v9887
  %v10317 = vunpack.c.h.b16 %v9887
  %v10318 = vunpack.c.l.b16 %v9888
  %v10319 = vunpack.c.h.b16 %v9888
  %v10320 = vunpack.c.l.b16 %v9889
  %v10321 = vunpack.c.h.b16 %v9889
  %v10322 = vunpack.c.l.b16 %v9890
  %v10323 = vunpack.c.h.b16 %v9890
  %v10324 = vunpack.c.l.b16 %v9891
  %v10325 = vunpack.c.h.b16 %v9891
  %v10326 = vunpack.c.l.b16 %v9892
  %v10327 = vunpack.c.h.b16 %v9892
  %v10328 = vunpack.c.l.b16 %v9893
  %v10329 = vunpack.c.h.b16 %v9893
  %v10330 = vunpack.c.l.b16 %v9894
  %v10331 = vunpack.c.h.b16 %v9894
  %v10332 = vunpack.c.l.b16 %v9895
  %v10333 = vunpack.c.h.b16 %v9895
  %v10334 = vunpack.c.l.b16 %v9896
  %v10335 = vunpack.c.h.b16 %v9896
  %v10336 = vunpack.c.l.b16 %v9897
  %v10337 = vunpack.c.h.b16 %v9897
  %v10338 = vunpack.c.l.b16 %v9898
  %v10339 = vunpack.c.h.b16 %v9898
  %v10340 = vunpack.c.l.b16 %v9899
  %v10341 = vunpack.c.h.b16 %v9899
  %v10342 = vunpack.c.l.b16 %v9900
  %v10343 = vunpack.c.h.b16 %v9900
  %v10344 = vunpack.c.l.b16 %v9901
  %v10345 = vunpack.c.h.b16 %v9901
  %v10346 = vunpack.c.l.b16 %v9902
  %v10347 = vunpack.c.h.b16 %v9902
  %v10348 = vunpack.c.l.b16 %v9903
  %v10349 = vunpack.c.h.b16 %v9903
  %v10350 = vunpack.c.l.b16 %v9904
  %v10351 = vunpack.c.h.b16 %v9904
  %v10352 = vunpack.c.l.b16 %v9905
  %v10353 = vunpack.c.h.b16 %v9905
  %v10354 = vunpack.c.l.b16 %v9906
  %v10355 = vunpack.c.h.b16 %v9906
  %v10356 = vunpack.c.l.b16 %v9907
  %v10357 = vunpack.c.h.b16 %v9907
  %v10358 = vunpack.c.l.b16 %v9908
  %v10359 = vunpack.c.h.b16 %v9908
  %v10360 = vunpack.c.l.b16 %v9909
  %v10361 = vunpack.c.h.b16 %v9909
  %v10362 = vunpack.c.l.b16 %v9910
  %v10363 = vunpack.c.h.b16 %v9910
  %v10364 = vunpack.c.l.b16 %v9911
  %v10365 = vunpack.c.h.b16 %v9911
  %v10366 = vunpack.c.l.b16 %v9912
  %v10367 = vunpack.c.h.b16 %v9912
  %v10368 = vunpack.c.l.b16 %v9913
  %v10369 = vunpack.c.h.b16 %v9913
  %v10370 = vunpack.c.l.b16 %v9914
  %v10371 = vunpack.c.h.b16 %v9914
  %v10372 = vunpack.c.l.b16 %v9915
  %v10373 = vunpack.c.h.b16 %v9915
  %v10374 = vunpack.c.l.b16 %v9916
  %v10375 = vunpack.c.h.b16 %v9916
  %v10376 = vunpack.c.l.b16 %v9917
  %v10377 = vunpack.c.h.b16 %v9917
  %v10378 = vunpack.c.l.b16 %v9918
  %v10379 = vunpack.c.h.b16 %v9918
  %v10380 = vunpack.c.l.b16 %v9919
  %v10381 = vunpack.c.h.b16 %v9919
  %v10382 = vpack.c.b16 %v10130, %v10126
  %v10383 = vpack.c.b16 %v10131, %v10127
  %v10384 = vpack.c.b16 %v10132, %v10128
  %v10385 = vpack.c.b16 %v10133, %v10129
  %v10386 = vpack.c.b16 %v10138, %v10134
  %v10387 = vpack.c.b16 %v10139, %v10135
  %v10388 = vpack.c.b16 %v10140, %v10136
  %v10389 = vpack.c.b16 %v10141, %v10137
  %v10390 = vpack.c.b16 %v10146, %v10142
  %v10391 = vpack.c.b16 %v10147, %v10143
  %v10392 = vpack.c.b16 %v10148, %v10144
  %v10393 = vpack.c.b16 %v10149, %v10145
  %v10394 = vpack.c.b16 %v10154, %v10150
  %v10395 = vpack.c.b16 %v10155, %v10151
  %v10396 = vpack.c.b16 %v10156, %v10152
  %v10397 = vpack.c.b16 %v10157, %v10153
  %v10398 = vpack.c.b16 %v10162, %v10158
  %v10399 = vpack.c.b16 %v10163, %v10159
  %v10400 = vpack.c.b16 %v10164, %v10160
  %v10401 = vpack.c.b16 %v10165, %v10161
  %v10402 = vpack.c.b16 %v10170, %v10166
  %v10403 = vpack.c.b16 %v10171, %v10167
  %v10404 = vpack.c.b16 %v10172, %v10168
  %v10405 = vpack.c.b16 %v10173, %v10169
  %v10406 = vpack.c.b16 %v10178, %v10174
  %v10407 = vpack.c.b16 %v10179, %v10175
  %v10408 = vpack.c.b16 %v10180, %v10176
  %v10409 = vpack.c.b16 %v10181, %v10177
  %v10410 = vpack.c.b16 %v10186, %v10182
  %v10411 = vpack.c.b16 %v10187, %v10183
  %v10412 = vpack.c.b16 %v10188, %v10184
  %v10413 = vpack.c.b16 %v10189, %v10185
  %v10414 = vpack.c.b16 %v10194, %v10190
  %v10415 = vpack.c.b16 %v10195, %v10191
  %v10416 = vpack.c.b16 %v10196, %v10192
  %v10417 = vpack.c.b16 %v10197, %v10193
  %v10418 = vpack.c.b16 %v10202, %v10198
  %v10419 = vpack.c.b16 %v10203, %v10199
  %v10420 = vpack.c.b16 %v10204, %v10200
  %v10421 = vpack.c.b16 %v10205, %v10201
  %v10422 = vpack.c.b16 %v10210, %v10206
  %v10423 = vpack.c.b16 %v10211, %v10207
  %v10424 = vpack.c.b16 %v10212, %v10208
  %v10425 = vpack.c.b16 %v10213, %v10209
  %v10426 = vpack.c.b16 %v10218, %v10214
  %v10427 = vpack.c.b16 %v10219, %v10215
  %v10428 = vpack.c.b16 %v10220, %v10216
  %v10429 = vpack.c.b16 %v10221, %v10217
  %v10430 = vpack.c.b16 %v10226, %v10222
  %v10431 = vpack.c.b16 %v10227, %v10223
  %v10432 = vpack.c.b16 %v10228, %v10224
  %v10433 = vpack.c.b16 %v10229, %v10225
  %v10434 = vpack.c.b16 %v10234, %v10230
  %v10435 = vpack.c.b16 %v10235, %v10231
  %v10436 = vpack.c.b16 %v10236, %v10232
  %v10437 = vpack.c.b16 %v10237, %v10233
  %v10438 = vpack.c.b16 %v10242, %v10238
  %v10439 = vpack.c.b16 %v10243, %v10239
  %v10440 = vpack.c.b16 %v10244, %v10240
  %v10441 = vpack.c.b16 %v10245, %v10241
  %v10442 = vpack.c.b16 %v10250, %v10246
  %v10443 = vpack.c.b16 %v10251, %v10247
  %v10444 = vpack.c.b16 %v10252, %v10248
  %v10445 = vpack.c.b16 %v10253, %v10249
  %v10446 = vpack.c.b16 %v10258, %v10254
  %v10447 = vpack.c.b16 %v10259, %v10255
  %v10448 = vpack.c.b16 %v10260, %v10256
  %v10449 = vpack.c.b16 %v10261, %v10257
  %v10450 = vpack.c.b16 %v10266, %v10262
  %v10451 = vpack.c.b16 %v10267, %v10263
  %v10452 = vpack.c.b16 %v10268, %v10264
  %v10453 = vpack.c.b16 %v10269, %v10265
  %v10454 = vpack.c.b16 %v10274, %v10270
  %v10455 = vpack.c.b16 %v10275, %v10271
  %v10456 = vpack.c.b16 %v10276, %v10272
  %v10457 = vpack.c.b16 %v10277, %v10273
  %v10458 = vpack.c.b16 %v10282, %v10278
  %v10459 = vpack.c.b16 %v10283, %v10279
  %v10460 = vpack.c.b16 %v10284, %v10280
  %v10461 = vpack.c.b16 %v10285, %v10281
  %v10462 = vpack.c.b16 %v10290, %v10286
  %v10463 = vpack.c.b16 %v10291, %v10287
  %v10464 = vpack.c.b16 %v10292, %v10288
  %v10465 = vpack.c.b16 %v10293, %v10289
  %v10466 = vpack.c.b16 %v10298, %v10294
  %v10467 = vpack.c.b16 %v10299, %v10295
  %v10468 = vpack.c.b16 %v10300, %v10296
  %v10469 = vpack.c.b16 %v10301, %v10297
  %v10470 = vpack.c.b16 %v10306, %v10302
  %v10471 = vpack.c.b16 %v10307, %v10303
  %v10472 = vpack.c.b16 %v10308, %v10304
  %v10473 = vpack.c.b16 %v10309, %v10305
  %v10474 = vpack.c.b16 %v10314, %v10310
  %v10475 = vpack.c.b16 %v10315, %v10311
  %v10476 = vpack.c.b16 %v10316, %v10312
  %v10477 = vpack.c.b16 %v10317, %v10313
  %v10478 = vpack.c.b16 %v10322, %v10318
  %v10479 = vpack.c.b16 %v10323, %v10319
  %v10480 = vpack.c.b16 %v10324, %v10320
  %v10481 = vpack.c.b16 %v10325, %v10321
  %v10482 = vpack.c.b16 %v10330, %v10326
  %v10483 = vpack.c.b16 %v10331, %v10327
  %v10484 = vpack.c.b16 %v10332, %v10328
  %v10485 = vpack.c.b16 %v10333, %v10329
  %v10486 = vpack.c.b16 %v10338, %v10334
  %v10487 = vpack.c.b16 %v10339, %v10335
  %v10488 = vpack.c.b16 %v10340, %v10336
  %v10489 = vpack.c.b16 %v10341, %v10337
  %v10490 = vpack.c.b16 %v10346, %v10342
  %v10491 = vpack.c.b16 %v10347, %v10343
  %v10492 = vpack.c.b16 %v10348, %v10344
  %v10493 = vpack.c.b16 %v10349, %v10345
  %v10494 = vpack.c.b16 %v10354, %v10350
  %v10495 = vpack.c.b16 %v10355, %v10351
  %v10496 = vpack.c.b16 %v10356, %v10352
  %v10497 = vpack.c.b16 %v10357, %v10353
  %v10498 = vpack.c.b16 %v10362, %v10358
  %v10499 = vpack.c.b16 %v10363, %v10359
  %v10500 = vpack.c.b16 %v10364, %v10360
  %v10501 = vpack.c.b16 %v10365, %v10361
  %v10502 = vpack.c.b16 %v10370, %v10366
  %v10503 = vpack.c.b16 %v10371, %v10367
  %v10504 = vpack.c.b16 %v10372, %v10368
  %v10505 = vpack.c.b16 %v10373, %v10369
  %v10506 = vpack.c.b16 %v10378, %v10374
  %v10507 = vpack.c.b16 %v10379, %v10375
  %v10508 = vpack.c.b16 %v10380, %v10376
  %v10509 = vpack.c.b16 %v10381, %v10377
  %10638 = vmatprep.subr.bf16.mxu0 %v10411
  %10639 = vmatpush1.bf16.msra.mxu0 %v10410
  %10640 = vmatprep.subr.bf16.mxu0 %v10407
  %10641 = vmatpush1.bf16.msra.mxu0 %v10406
  %10642 = vmatprep.subr.bf16.mxu0 %v10403
  %10643 = vmatpush1.bf16.msra.mxu0 %v10402
  %10644 = vmatprep.subr.bf16.mxu0 %v10399
  %10645 = vmatpush1.bf16.msra.mxu0 %v10398
  %10646 = vmatprep.subr.bf16.mxu0 %v10395
  %10647 = vmatpush1.bf16.msra.mxu0 %v10394
  %10648 = vmatprep.subr.bf16.mxu0 %v10391
  %10649 = vmatpush1.bf16.msra.mxu0 %v10390
  %10650 = vmatprep.subr.bf16.mxu0 %v10387
  %10651 = vmatpush1.bf16.msra.mxu0 %v10386
  %10652 = vmatprep.subr.bf16.mxu0 %v10383
  %10653 = vmatpush1.bf16.msra.mxu0 %v10382
  %10654 = vmatprep.subr.bf16.mxu0 %v10443
  %10655 = vmatpush2.bf16.msra.mxu0 %v10442
  %10656 = vmatprep.subr.bf16.mxu0 %v10439
  %10657 = vmatpush2.bf16.msra.mxu0 %v10438
  %10658 = vmatprep.subr.bf16.mxu0 %v10435
  %10659 = vmatpush2.bf16.msra.mxu0 %v10434
  %10660 = vmatprep.subr.bf16.mxu0 %v10431
  %10661 = vmatpush2.bf16.msra.mxu0 %v10430
  %10662 = vmatprep.subr.bf16.mxu0 %v10427
  %10663 = vmatpush2.bf16.msra.mxu0 %v10426
  %10664 = vmatprep.subr.bf16.mxu0 %v10423
  %10665 = vmatpush2.bf16.msra.mxu0 %v10422
  %10666 = vmatprep.subr.bf16.mxu0 %v10419
  %10667 = vmatpush2.bf16.msra.mxu0 %v10418
  %10668 = vmatprep.subr.bf16.mxu0 %v10415
  %10669 = vmatpush2.bf16.msra.mxu0 %v10414
  %10670 = vmatprep.mubr.bf16.mxu0 %v9969
  %10671 = vmatmul.mubr.bf16.gmra.mxu0 %v9957
  %v10672 = vpop.f32.mrf.mxu0
  %v10673 = vadd.f32 0.0, %v10672
  %v10674 = vpop.f32.mrf.mxu0
  %v10675 = vadd.f32 0.0, %v10674
  %v10676 = vpop.f32.mrf.mxu0
  %v10677 = vadd.f32 0.0, %v10676
  %v10678 = vpop.f32.mrf.mxu0
  %v10679 = vadd.f32 0.0, %v10678
  %10680 = vdwg.mxu0
  %10681 = vmatprep.subr.bf16.mxu0 %v10475
  %10682 = vmatpush1.bf16.msra.mxu0 %v10474
  %10683 = vmatprep.subr.bf16.mxu0 %v10471
  %10684 = vmatpush1.bf16.msra.mxu0 %v10470
  %10685 = vmatprep.subr.bf16.mxu0 %v10467
  %10686 = vmatpush1.bf16.msra.mxu0 %v10466
  %10687 = vmatprep.subr.bf16.mxu0 %v10463
  %10688 = vmatpush1.bf16.msra.mxu0 %v10462
  %10689 = vmatprep.subr.bf16.mxu0 %v10459
  %10690 = vmatpush1.bf16.msra.mxu0 %v10458
  %10691 = vmatprep.subr.bf16.mxu0 %v10455
  %10692 = vmatpush1.bf16.msra.mxu0 %v10454
  %10693 = vmatprep.subr.bf16.mxu0 %v10451
  %10694 = vmatpush1.bf16.msra.mxu0 %v10450
  %10695 = vmatprep.subr.bf16.mxu0 %v10447
  %10696 = vmatpush1.bf16.msra.mxu0 %v10446
  %10697 = vmatprep.subr.bf16.mxu0 %v10507
  %10698 = vmatpush2.bf16.msra.mxu0 %v10506
  %10699 = vmatprep.subr.bf16.mxu0 %v10503
  %10700 = vmatpush2.bf16.msra.mxu0 %v10502
  %10701 = vmatprep.subr.bf16.mxu0 %v10499
  %10702 = vmatpush2.bf16.msra.mxu0 %v10498
  %10703 = vmatprep.subr.bf16.mxu0 %v10495
  %10704 = vmatpush2.bf16.msra.mxu0 %v10494
  %10705 = vmatprep.subr.bf16.mxu0 %v10491
  %10706 = vmatpush2.bf16.msra.mxu0 %v10490
  %10707 = vmatprep.subr.bf16.mxu0 %v10487
  %10708 = vmatpush2.bf16.msra.mxu0 %v10486
  %10709 = vmatprep.subr.bf16.mxu0 %v10483
  %10710 = vmatpush2.bf16.msra.mxu0 %v10482
  %10711 = vmatprep.subr.bf16.mxu0 %v10479
  %10712 = vmatpush2.bf16.msra.mxu0 %v10478
  %10713 = vmatprep.mubr.bf16.mxu0 %v9993
  %10714 = vmatmul.mubr.bf16.gmra.mxu0 %v9981
  %v10715 = vpop.f32.mrf.mxu0
  %v10716 = vadd.f32 %v10673, %v10715
  %v10717 = vpop.f32.mrf.mxu0
  %v10718 = vadd.f32 %v10675, %v10717
  %v10719 = vpop.f32.mrf.mxu0
  %v10720 = vadd.f32 %v10677, %v10719
  %v10721 = vpop.f32.mrf.mxu0
  %v10722 = vadd.f32 %v10679, %v10721
  %10723 = vdwg.mxu0
  %10724 = vmatprep.subr.bf16.mxu0 %v10413
  %10725 = vmatpush1.bf16.msra.mxu0 %v10412
  %10726 = vmatprep.subr.bf16.mxu0 %v10409
  %10727 = vmatpush1.bf16.msra.mxu0 %v10408
  %10728 = vmatprep.subr.bf16.mxu0 %v10405
  %10729 = vmatpush1.bf16.msra.mxu0 %v10404
  %10730 = vmatprep.subr.bf16.mxu0 %v10401
  %10731 = vmatpush1.bf16.msra.mxu0 %v10400
  %10732 = vmatprep.subr.bf16.mxu0 %v10397
  %10733 = vmatpush1.bf16.msra.mxu0 %v10396
  %10734 = vmatprep.subr.bf16.mxu0 %v10393
  %10735 = vmatpush1.bf16.msra.mxu0 %v10392
  %10736 = vmatprep.subr.bf16.mxu0 %v10389
  %10737 = vmatpush1.bf16.msra.mxu0 %v10388
  %10738 = vmatprep.subr.bf16.mxu0 %v10385
  %10739 = vmatpush1.bf16.msra.mxu0 %v10384
  %10740 = vmatprep.subr.bf16.mxu0 %v10445
  %10741 = vmatpush2.bf16.msra.mxu0 %v10444
  %10742 = vmatprep.subr.bf16.mxu0 %v10441
  %10743 = vmatpush2.bf16.msra.mxu0 %v10440
  %10744 = vmatprep.subr.bf16.mxu0 %v10437
  %10745 = vmatpush2.bf16.msra.mxu0 %v10436
  %10746 = vmatprep.subr.bf16.mxu0 %v10433
  %10747 = vmatpush2.bf16.msra.mxu0 %v10432
  %10748 = vmatprep.subr.bf16.mxu0 %v10429
  %10749 = vmatpush2.bf16.msra.mxu0 %v10428
  %10750 = vmatprep.subr.bf16.mxu0 %v10425
  %10751 = vmatpush2.bf16.msra.mxu0 %v10424
  %10752 = vmatprep.subr.bf16.mxu0 %v10421
  %10753 = vmatpush2.bf16.msra.mxu0 %v10420
  %10754 = vmatprep.subr.bf16.mxu0 %v10417
  %10755 = vmatpush2.bf16.msra.mxu0 %v10416
  %10756 = vmatprep.mubr.bf16.mxu0 %v9969
  %10757 = vmatmul.mubr.bf16.gmra.mxu0 %v9957
  %v10758 = vpop.f32.mrf.mxu0
  %v10759 = vadd.f32 0.0, %v10758
  %v10760 = vpop.f32.mrf.mxu0
  %v10761 = vadd.f32 0.0, %v10760
  %v10762 = vpop.f32.mrf.mxu0
  %v10763 = vadd.f32 0.0, %v10762
  %v10764 = vpop.f32.mrf.mxu0
  %v10765 = vadd.f32 0.0, %v10764
  %10766 = vdwg.mxu0
  %10767 = vmatprep.subr.bf16.mxu0 %v10477
  %10768 = vmatpush1.bf16.msra.mxu0 %v10476
  %10769 = vmatprep.subr.bf16.mxu0 %v10473
  %10770 = vmatpush1.bf16.msra.mxu0 %v10472
  %10771 = vmatprep.subr.bf16.mxu0 %v10469
  %10772 = vmatpush1.bf16.msra.mxu0 %v10468
  %10773 = vmatprep.subr.bf16.mxu0 %v10465
  %10774 = vmatpush1.bf16.msra.mxu0 %v10464
  %10775 = vmatprep.subr.bf16.mxu0 %v10461
  %10776 = vmatpush1.bf16.msra.mxu0 %v10460
  %10777 = vmatprep.subr.bf16.mxu0 %v10457
  %10778 = vmatpush1.bf16.msra.mxu0 %v10456
  %10779 = vmatprep.subr.bf16.mxu0 %v10453
  %10780 = vmatpush1.bf16.msra.mxu0 %v10452
  %10781 = vmatprep.subr.bf16.mxu0 %v10449
  %10782 = vmatpush1.bf16.msra.mxu0 %v10448
  %10783 = vmatprep.subr.bf16.mxu0 %v10509
  %10784 = vmatpush2.bf16.msra.mxu0 %v10508
  %10785 = vmatprep.subr.bf16.mxu0 %v10505
  %10786 = vmatpush2.bf16.msra.mxu0 %v10504
  %10787 = vmatprep.subr.bf16.mxu0 %v10501
  %10788 = vmatpush2.bf16.msra.mxu0 %v10500
  %10789 = vmatprep.subr.bf16.mxu0 %v10497
  %10790 = vmatpush2.bf16.msra.mxu0 %v10496
  %10791 = vmatprep.subr.bf16.mxu0 %v10493
  %10792 = vmatpush2.bf16.msra.mxu0 %v10492
  %10793 = vmatprep.subr.bf16.mxu0 %v10489
  %10794 = vmatpush2.bf16.msra.mxu0 %v10488
  %10795 = vmatprep.subr.bf16.mxu0 %v10485
  %10796 = vmatpush2.bf16.msra.mxu0 %v10484
  %10797 = vmatprep.subr.bf16.mxu0 %v10481
  %10798 = vmatpush2.bf16.msra.mxu0 %v10480
  %10799 = vmatprep.mubr.bf16.mxu0 %v9993
  %10800 = vmatmul.mubr.bf16.gmra.mxu0 %v9981
  %v10801 = vpop.f32.mrf.mxu0
  %v10802 = vadd.f32 %v10759, %v10801
  %v10803 = vpop.f32.mrf.mxu0
  %v10804 = vadd.f32 %v10761, %v10803
  %v10805 = vpop.f32.mrf.mxu0
  %v10806 = vadd.f32 %v10763, %v10805
  %v10807 = vpop.f32.mrf.mxu0
  %v10808 = vadd.f32 %v10765, %v10807
  %10809 = vdwg.mxu0
  %v10942 = vunpack.c.l.b16 %v9662
  %v10943 = vunpack.c.h.b16 %v9662
  %v10944 = vunpack.c.l.b16 %v9663
  %v10945 = vunpack.c.h.b16 %v9663
  %v10946 = vunpack.c.l.b16 %v9664
  %v10947 = vunpack.c.h.b16 %v9664
  %v10948 = vunpack.c.l.b16 %v9665
  %v10949 = vunpack.c.h.b16 %v9665
  %v10950 = vunpack.c.l.b16 %v9666
  %v10951 = vunpack.c.h.b16 %v9666
  %v10952 = vunpack.c.l.b16 %v9667
  %v10953 = vunpack.c.h.b16 %v9667
  %v10954 = vunpack.c.l.b16 %v9668
  %v10955 = vunpack.c.h.b16 %v9668
  %v10956 = vunpack.c.l.b16 %v9669
  %v10957 = vunpack.c.h.b16 %v9669
  %v10958 = vunpack.c.l.b16 %v9670
  %v10959 = vunpack.c.h.b16 %v9670
  %v10960 = vunpack.c.l.b16 %v9671
  %v10961 = vunpack.c.h.b16 %v9671
  %v10962 = vunpack.c.l.b16 %v9672
  %v10963 = vunpack.c.h.b16 %v9672
  %v10964 = vunpack.c.l.b16 %v9673
  %v10965 = vunpack.c.h.b16 %v9673
  %v10966 = vunpack.c.l.b16 %v9674
  %v10967 = vunpack.c.h.b16 %v9674
  %v10968 = vunpack.c.l.b16 %v9675
  %v10969 = vunpack.c.h.b16 %v9675
  %v10970 = vunpack.c.l.b16 %v9676
  %v10971 = vunpack.c.h.b16 %v9676
  %v10972 = vunpack.c.l.b16 %v9677
  %v10973 = vunpack.c.h.b16 %v9677
  %v10974 = vunpack.c.l.b16 %v9678
  %v10975 = vunpack.c.h.b16 %v9678
  %v10976 = vunpack.c.l.b16 %v9679
  %v10977 = vunpack.c.h.b16 %v9679
  %v10978 = vunpack.c.l.b16 %v9680
  %v10979 = vunpack.c.h.b16 %v9680
  %v10980 = vunpack.c.l.b16 %v9681
  %v10981 = vunpack.c.h.b16 %v9681
  %v10982 = vunpack.c.l.b16 %v9682
  %v10983 = vunpack.c.h.b16 %v9682
  %v10984 = vunpack.c.l.b16 %v9683
  %v10985 = vunpack.c.h.b16 %v9683
  %v10986 = vunpack.c.l.b16 %v9684
  %v10987 = vunpack.c.h.b16 %v9684
  %v10988 = vunpack.c.l.b16 %v9685
  %v10989 = vunpack.c.h.b16 %v9685
  %v10990 = vunpack.c.l.b16 %v9686
  %v10991 = vunpack.c.h.b16 %v9686
  %v10992 = vunpack.c.l.b16 %v9687
  %v10993 = vunpack.c.h.b16 %v9687
  %v10994 = vunpack.c.l.b16 %v9688
  %v10995 = vunpack.c.h.b16 %v9688
  %v10996 = vunpack.c.l.b16 %v9689
  %v10997 = vunpack.c.h.b16 %v9689
  %v10998 = vunpack.c.l.b16 %v9690
  %v10999 = vunpack.c.h.b16 %v9690
  %v11000 = vunpack.c.l.b16 %v9691
  %v11001 = vunpack.c.h.b16 %v9691
  %v11002 = vunpack.c.l.b16 %v9692
  %v11003 = vunpack.c.h.b16 %v9692
  %v11004 = vunpack.c.l.b16 %v9693
  %v11005 = vunpack.c.h.b16 %v9693
  %v11006 = vunpack.c.l.b16 %v9694
  %v11007 = vunpack.c.h.b16 %v9694
  %v11008 = vunpack.c.l.b16 %v9695
  %v11009 = vunpack.c.h.b16 %v9695
  %v11010 = vunpack.c.l.b16 %v9696
  %v11011 = vunpack.c.h.b16 %v9696
  %v11012 = vunpack.c.l.b16 %v9697
  %v11013 = vunpack.c.h.b16 %v9697
  %v11014 = vunpack.c.l.b16 %v9698
  %v11015 = vunpack.c.h.b16 %v9698
  %v11016 = vunpack.c.l.b16 %v9699
  %v11017 = vunpack.c.h.b16 %v9699
  %v11018 = vunpack.c.l.b16 %v9700
  %v11019 = vunpack.c.h.b16 %v9700
  %v11020 = vunpack.c.l.b16 %v9701
  %v11021 = vunpack.c.h.b16 %v9701
  %v11022 = vunpack.c.l.b16 %v9702
  %v11023 = vunpack.c.h.b16 %v9702
  %v11024 = vunpack.c.l.b16 %v9703
  %v11025 = vunpack.c.h.b16 %v9703
  %v11026 = vunpack.c.l.b16 %v9704
  %v11027 = vunpack.c.h.b16 %v9704
  %v11028 = vunpack.c.l.b16 %v9705
  %v11029 = vunpack.c.h.b16 %v9705
  %v11030 = vunpack.c.l.b16 %v9706
  %v11031 = vunpack.c.h.b16 %v9706
  %v11032 = vunpack.c.l.b16 %v9707
  %v11033 = vunpack.c.h.b16 %v9707
  %v11034 = vunpack.c.l.b16 %v9708
  %v11035 = vunpack.c.h.b16 %v9708
  %v11036 = vunpack.c.l.b16 %v9709
  %v11037 = vunpack.c.h.b16 %v9709
  %v11038 = vunpack.c.l.b16 %v9710
  %v11039 = vunpack.c.h.b16 %v9710
  %v11040 = vunpack.c.l.b16 %v9711
  %v11041 = vunpack.c.h.b16 %v9711
  %v11042 = vunpack.c.l.b16 %v9712
  %v11043 = vunpack.c.h.b16 %v9712
  %v11044 = vunpack.c.l.b16 %v9713
  %v11045 = vunpack.c.h.b16 %v9713
  %v11046 = vunpack.c.l.b16 %v9714
  %v11047 = vunpack.c.h.b16 %v9714
  %v11048 = vunpack.c.l.b16 %v9715
  %v11049 = vunpack.c.h.b16 %v9715
  %v11050 = vunpack.c.l.b16 %v9716
  %v11051 = vunpack.c.h.b16 %v9716
  %v11052 = vunpack.c.l.b16 %v9717
  %v11053 = vunpack.c.h.b16 %v9717
  %v11054 = vunpack.c.l.b16 %v9718
  %v11055 = vunpack.c.h.b16 %v9718
  %v11056 = vunpack.c.l.b16 %v9719
  %v11057 = vunpack.c.h.b16 %v9719
  %v11058 = vunpack.c.l.b16 %v9720
  %v11059 = vunpack.c.h.b16 %v9720
  %v11060 = vunpack.c.l.b16 %v9721
  %v11061 = vunpack.c.h.b16 %v9721
  %v11062 = vunpack.c.l.b16 %v9722
  %v11063 = vunpack.c.h.b16 %v9722
  %v11064 = vunpack.c.l.b16 %v9723
  %v11065 = vunpack.c.h.b16 %v9723
  %v11066 = vunpack.c.l.b16 %v9724
  %v11067 = vunpack.c.h.b16 %v9724
  %v11068 = vunpack.c.l.b16 %v9725
  %v11069 = vunpack.c.h.b16 %v9725
  %v11070 = vunpack.c.l.b16 %v9726
  %v11071 = vunpack.c.h.b16 %v9726
  %v11072 = vunpack.c.l.b16 %v9727
  %v11073 = vunpack.c.h.b16 %v9727
  %v11074 = vunpack.c.l.b16 %v9728
  %v11075 = vunpack.c.h.b16 %v9728
  %v11076 = vunpack.c.l.b16 %v9729
  %v11077 = vunpack.c.h.b16 %v9729
  %v11078 = vunpack.c.l.b16 %v9730
  %v11079 = vunpack.c.h.b16 %v9730
  %v11080 = vunpack.c.l.b16 %v9731
  %v11081 = vunpack.c.h.b16 %v9731
  %v11082 = vunpack.c.l.b16 %v9732
  %v11083 = vunpack.c.h.b16 %v9732
  %v11084 = vunpack.c.l.b16 %v9733
  %v11085 = vunpack.c.h.b16 %v9733
  %v11086 = vunpack.c.l.b16 %v9734
  %v11087 = vunpack.c.h.b16 %v9734
  %v11088 = vunpack.c.l.b16 %v9735
  %v11089 = vunpack.c.h.b16 %v9735
  %v11090 = vunpack.c.l.b16 %v9736
  %v11091 = vunpack.c.h.b16 %v9736
  %v11092 = vunpack.c.l.b16 %v9737
  %v11093 = vunpack.c.h.b16 %v9737
  %v11094 = vunpack.c.l.b16 %v9738
  %v11095 = vunpack.c.h.b16 %v9738
  %v11096 = vunpack.c.l.b16 %v9739
  %v11097 = vunpack.c.h.b16 %v9739
  %v11098 = vunpack.c.l.b16 %v9740
  %v11099 = vunpack.c.h.b16 %v9740
  %v11100 = vunpack.c.l.b16 %v9741
  %v11101 = vunpack.c.h.b16 %v9741
  %v11102 = vunpack.c.l.b16 %v9742
  %v11103 = vunpack.c.h.b16 %v9742
  %v11104 = vunpack.c.l.b16 %v9743
  %v11105 = vunpack.c.h.b16 %v9743
  %v11106 = vunpack.c.l.b16 %v9744
  %v11107 = vunpack.c.h.b16 %v9744
  %v11108 = vunpack.c.l.b16 %v9745
  %v11109 = vunpack.c.h.b16 %v9745
  %v11110 = vunpack.c.l.b16 %v9746
  %v11111 = vunpack.c.h.b16 %v9746
  %v11112 = vunpack.c.l.b16 %v9747
  %v11113 = vunpack.c.h.b16 %v9747
  %v11114 = vunpack.c.l.b16 %v9748
  %v11115 = vunpack.c.h.b16 %v9748
  %v11116 = vunpack.c.l.b16 %v9749
  %v11117 = vunpack.c.h.b16 %v9749
  %v11118 = vunpack.c.l.b16 %v9750
  %v11119 = vunpack.c.h.b16 %v9750
  %v11120 = vunpack.c.l.b16 %v9751
  %v11121 = vunpack.c.h.b16 %v9751
  %v11122 = vunpack.c.l.b16 %v9752
  %v11123 = vunpack.c.h.b16 %v9752
  %v11124 = vunpack.c.l.b16 %v9753
  %v11125 = vunpack.c.h.b16 %v9753
  %v11126 = vunpack.c.l.b16 %v9754
  %v11127 = vunpack.c.h.b16 %v9754
  %v11128 = vunpack.c.l.b16 %v9755
  %v11129 = vunpack.c.h.b16 %v9755
  %v11130 = vunpack.c.l.b16 %v9756
  %v11131 = vunpack.c.h.b16 %v9756
  %v11132 = vunpack.c.l.b16 %v9757
  %v11133 = vunpack.c.h.b16 %v9757
  %v11134 = vunpack.c.l.b16 %v9758
  %v11135 = vunpack.c.h.b16 %v9758
  %v11136 = vunpack.c.l.b16 %v9759
  %v11137 = vunpack.c.h.b16 %v9759
  %v11138 = vunpack.c.l.b16 %v9760
  %v11139 = vunpack.c.h.b16 %v9760
  %v11140 = vunpack.c.l.b16 %v9761
  %v11141 = vunpack.c.h.b16 %v9761
  %v11142 = vunpack.c.l.b16 %v9762
  %v11143 = vunpack.c.h.b16 %v9762
  %v11144 = vunpack.c.l.b16 %v9763
  %v11145 = vunpack.c.h.b16 %v9763
  %v11146 = vunpack.c.l.b16 %v9764
  %v11147 = vunpack.c.h.b16 %v9764
  %v11148 = vunpack.c.l.b16 %v9765
  %v11149 = vunpack.c.h.b16 %v9765
  %v11150 = vunpack.c.l.b16 %v9766
  %v11151 = vunpack.c.h.b16 %v9766
  %v11152 = vunpack.c.l.b16 %v9767
  %v11153 = vunpack.c.h.b16 %v9767
  %v11154 = vunpack.c.l.b16 %v9768
  %v11155 = vunpack.c.h.b16 %v9768
  %v11156 = vunpack.c.l.b16 %v9769
  %v11157 = vunpack.c.h.b16 %v9769
  %v11158 = vunpack.c.l.b16 %v9770
  %v11159 = vunpack.c.h.b16 %v9770
  %v11160 = vunpack.c.l.b16 %v9771
  %v11161 = vunpack.c.h.b16 %v9771
  %v11162 = vunpack.c.l.b16 %v9772
  %v11163 = vunpack.c.h.b16 %v9772
  %v11164 = vunpack.c.l.b16 %v9773
  %v11165 = vunpack.c.h.b16 %v9773
  %v11166 = vunpack.c.l.b16 %v9774
  %v11167 = vunpack.c.h.b16 %v9774
  %v11168 = vunpack.c.l.b16 %v9775
  %v11169 = vunpack.c.h.b16 %v9775
  %v11170 = vunpack.c.l.b16 %v9776
  %v11171 = vunpack.c.h.b16 %v9776
  %v11172 = vunpack.c.l.b16 %v9777
  %v11173 = vunpack.c.h.b16 %v9777
  %v11174 = vunpack.c.l.b16 %v9778
  %v11175 = vunpack.c.h.b16 %v9778
  %v11176 = vunpack.c.l.b16 %v9779
  %v11177 = vunpack.c.h.b16 %v9779
  %v11178 = vunpack.c.l.b16 %v9780
  %v11179 = vunpack.c.h.b16 %v9780
  %v11180 = vunpack.c.l.b16 %v9781
  %v11181 = vunpack.c.h.b16 %v9781
  %v11182 = vunpack.c.l.b16 %v9782
  %v11183 = vunpack.c.h.b16 %v9782
  %v11184 = vunpack.c.l.b16 %v9783
  %v11185 = vunpack.c.h.b16 %v9783
  %v11186 = vunpack.c.l.b16 %v9784
  %v11187 = vunpack.c.h.b16 %v9784
  %v11188 = vunpack.c.l.b16 %v9785
  %v11189 = vunpack.c.h.b16 %v9785
  %v11190 = vunpack.c.l.b16 %v9786
  %v11191 = vunpack.c.h.b16 %v9786
  %v11192 = vunpack.c.l.b16 %v9787
  %v11193 = vunpack.c.h.b16 %v9787
  %v11194 = vunpack.c.l.b16 %v9788
  %v11195 = vunpack.c.h.b16 %v9788
  %v11196 = vunpack.c.l.b16 %v9789
  %v11197 = vunpack.c.h.b16 %v9789
  %v11198 = vpack.c.b16 %v10946, %v10942
  %v11199 = vpack.c.b16 %v10947, %v10943
  %v11200 = vpack.c.b16 %v10948, %v10944
  %v11201 = vpack.c.b16 %v10949, %v10945
  %v11202 = vpack.c.b16 %v10954, %v10950
  %v11203 = vpack.c.b16 %v10955, %v10951
  %v11204 = vpack.c.b16 %v10956, %v10952
  %v11205 = vpack.c.b16 %v10957, %v10953
  %v11206 = vpack.c.b16 %v10962, %v10958
  %v11207 = vpack.c.b16 %v10963, %v10959
  %v11208 = vpack.c.b16 %v10964, %v10960
  %v11209 = vpack.c.b16 %v10965, %v10961
  %v11210 = vpack.c.b16 %v10970, %v10966
  %v11211 = vpack.c.b16 %v10971, %v10967
  %v11212 = vpack.c.b16 %v10972, %v10968
  %v11213 = vpack.c.b16 %v10973, %v10969
  %v11214 = vpack.c.b16 %v10978, %v10974
  %v11215 = vpack.c.b16 %v10979, %v10975
  %v11216 = vpack.c.b16 %v10980, %v10976
  %v11217 = vpack.c.b16 %v10981, %v10977
  %v11218 = vpack.c.b16 %v10986, %v10982
  %v11219 = vpack.c.b16 %v10987, %v10983
  %v11220 = vpack.c.b16 %v10988, %v10984
  %v11221 = vpack.c.b16 %v10989, %v10985
  %v11222 = vpack.c.b16 %v10994, %v10990
  %v11223 = vpack.c.b16 %v10995, %v10991
  %v11224 = vpack.c.b16 %v10996, %v10992
  %v11225 = vpack.c.b16 %v10997, %v10993
  %v11226 = vpack.c.b16 %v11002, %v10998
  %v11227 = vpack.c.b16 %v11003, %v10999
  %v11228 = vpack.c.b16 %v11004, %v11000
  %v11229 = vpack.c.b16 %v11005, %v11001
  %v11230 = vpack.c.b16 %v11010, %v11006
  %v11231 = vpack.c.b16 %v11011, %v11007
  %v11232 = vpack.c.b16 %v11012, %v11008
  %v11233 = vpack.c.b16 %v11013, %v11009
  %v11234 = vpack.c.b16 %v11018, %v11014
  %v11235 = vpack.c.b16 %v11019, %v11015
  %v11236 = vpack.c.b16 %v11020, %v11016
  %v11237 = vpack.c.b16 %v11021, %v11017
  %v11238 = vpack.c.b16 %v11026, %v11022
  %v11239 = vpack.c.b16 %v11027, %v11023
  %v11240 = vpack.c.b16 %v11028, %v11024
  %v11241 = vpack.c.b16 %v11029, %v11025
  %v11242 = vpack.c.b16 %v11034, %v11030
  %v11243 = vpack.c.b16 %v11035, %v11031
  %v11244 = vpack.c.b16 %v11036, %v11032
  %v11245 = vpack.c.b16 %v11037, %v11033
  %v11246 = vpack.c.b16 %v11042, %v11038
  %v11247 = vpack.c.b16 %v11043, %v11039
  %v11248 = vpack.c.b16 %v11044, %v11040
  %v11249 = vpack.c.b16 %v11045, %v11041
  %v11250 = vpack.c.b16 %v11050, %v11046
  %v11251 = vpack.c.b16 %v11051, %v11047
  %v11252 = vpack.c.b16 %v11052, %v11048
  %v11253 = vpack.c.b16 %v11053, %v11049
  %v11254 = vpack.c.b16 %v11058, %v11054
  %v11255 = vpack.c.b16 %v11059, %v11055
  %v11256 = vpack.c.b16 %v11060, %v11056
  %v11257 = vpack.c.b16 %v11061, %v11057
  %v11258 = vpack.c.b16 %v11066, %v11062
  %v11259 = vpack.c.b16 %v11067, %v11063
  %v11260 = vpack.c.b16 %v11068, %v11064
  %v11261 = vpack.c.b16 %v11069, %v11065
  %v11262 = vpack.c.b16 %v11074, %v11070
  %v11263 = vpack.c.b16 %v11075, %v11071
  %v11264 = vpack.c.b16 %v11076, %v11072
  %v11265 = vpack.c.b16 %v11077, %v11073
  %v11266 = vpack.c.b16 %v11082, %v11078
  %v11267 = vpack.c.b16 %v11083, %v11079
  %v11268 = vpack.c.b16 %v11084, %v11080
  %v11269 = vpack.c.b16 %v11085, %v11081
  %v11270 = vpack.c.b16 %v11090, %v11086
  %v11271 = vpack.c.b16 %v11091, %v11087
  %v11272 = vpack.c.b16 %v11092, %v11088
  %v11273 = vpack.c.b16 %v11093, %v11089
  %v11274 = vpack.c.b16 %v11098, %v11094
  %v11275 = vpack.c.b16 %v11099, %v11095
  %v11276 = vpack.c.b16 %v11100, %v11096
  %v11277 = vpack.c.b16 %v11101, %v11097
  %v11278 = vpack.c.b16 %v11106, %v11102
  %v11279 = vpack.c.b16 %v11107, %v11103
  %v11280 = vpack.c.b16 %v11108, %v11104
  %v11281 = vpack.c.b16 %v11109, %v11105
  %v11282 = vpack.c.b16 %v11114, %v11110
  %v11283 = vpack.c.b16 %v11115, %v11111
  %v11284 = vpack.c.b16 %v11116, %v11112
  %v11285 = vpack.c.b16 %v11117, %v11113
  %v11286 = vpack.c.b16 %v11122, %v11118
  %v11287 = vpack.c.b16 %v11123, %v11119
  %v11288 = vpack.c.b16 %v11124, %v11120
  %v11289 = vpack.c.b16 %v11125, %v11121
  %v11290 = vpack.c.b16 %v11130, %v11126
  %v11291 = vpack.c.b16 %v11131, %v11127
  %v11292 = vpack.c.b16 %v11132, %v11128
  %v11293 = vpack.c.b16 %v11133, %v11129
  %v11294 = vpack.c.b16 %v11138, %v11134
  %v11295 = vpack.c.b16 %v11139, %v11135
  %v11296 = vpack.c.b16 %v11140, %v11136
  %v11297 = vpack.c.b16 %v11141, %v11137
  %v11298 = vpack.c.b16 %v11146, %v11142
  %v11299 = vpack.c.b16 %v11147, %v11143
  %v11300 = vpack.c.b16 %v11148, %v11144
  %v11301 = vpack.c.b16 %v11149, %v11145
  %v11302 = vpack.c.b16 %v11154, %v11150
  %v11303 = vpack.c.b16 %v11155, %v11151
  %v11304 = vpack.c.b16 %v11156, %v11152
  %v11305 = vpack.c.b16 %v11157, %v11153
  %v11306 = vpack.c.b16 %v11162, %v11158
  %v11307 = vpack.c.b16 %v11163, %v11159
  %v11308 = vpack.c.b16 %v11164, %v11160
  %v11309 = vpack.c.b16 %v11165, %v11161
  %v11310 = vpack.c.b16 %v11170, %v11166
  %v11311 = vpack.c.b16 %v11171, %v11167
  %v11312 = vpack.c.b16 %v11172, %v11168
  %v11313 = vpack.c.b16 %v11173, %v11169
  %v11314 = vpack.c.b16 %v11178, %v11174
  %v11315 = vpack.c.b16 %v11179, %v11175
  %v11316 = vpack.c.b16 %v11180, %v11176
  %v11317 = vpack.c.b16 %v11181, %v11177
  %v11318 = vpack.c.b16 %v11186, %v11182
  %v11319 = vpack.c.b16 %v11187, %v11183
  %v11320 = vpack.c.b16 %v11188, %v11184
  %v11321 = vpack.c.b16 %v11189, %v11185
  %v11322 = vpack.c.b16 %v11194, %v11190
  %v11323 = vpack.c.b16 %v11195, %v11191
  %v11324 = vpack.c.b16 %v11196, %v11192
  %v11325 = vpack.c.b16 %v11197, %v11193
  %11454 = vmatprep.subr.bf16.mxu0 %v11227
  %11455 = vmatpush1.bf16.msra.mxu0 %v11226
  %11456 = vmatprep.subr.bf16.mxu0 %v11223
  %11457 = vmatpush1.bf16.msra.mxu0 %v11222
  %11458 = vmatprep.subr.bf16.mxu0 %v11219
  %11459 = vmatpush1.bf16.msra.mxu0 %v11218
  %11460 = vmatprep.subr.bf16.mxu0 %v11215
  %11461 = vmatpush1.bf16.msra.mxu0 %v11214
  %11462 = vmatprep.subr.bf16.mxu0 %v11211
  %11463 = vmatpush1.bf16.msra.mxu0 %v11210
  %11464 = vmatprep.subr.bf16.mxu0 %v11207
  %11465 = vmatpush1.bf16.msra.mxu0 %v11206
  %11466 = vmatprep.subr.bf16.mxu0 %v11203
  %11467 = vmatpush1.bf16.msra.mxu0 %v11202
  %11468 = vmatprep.subr.bf16.mxu0 %v11199
  %11469 = vmatpush1.bf16.msra.mxu0 %v11198
  %11470 = vmatprep.subr.bf16.mxu0 %v11259
  %11471 = vmatpush2.bf16.msra.mxu0 %v11258
  %11472 = vmatprep.subr.bf16.mxu0 %v11255
  %11473 = vmatpush2.bf16.msra.mxu0 %v11254
  %11474 = vmatprep.subr.bf16.mxu0 %v11251
  %11475 = vmatpush2.bf16.msra.mxu0 %v11250
  %11476 = vmatprep.subr.bf16.mxu0 %v11247
  %11477 = vmatpush2.bf16.msra.mxu0 %v11246
  %11478 = vmatprep.subr.bf16.mxu0 %v11243
  %11479 = vmatpush2.bf16.msra.mxu0 %v11242
  %11480 = vmatprep.subr.bf16.mxu0 %v11239
  %11481 = vmatpush2.bf16.msra.mxu0 %v11238
  %11482 = vmatprep.subr.bf16.mxu0 %v11235
  %11483 = vmatpush2.bf16.msra.mxu0 %v11234
  %11484 = vmatprep.subr.bf16.mxu0 %v11231
  %11485 = vmatpush2.bf16.msra.mxu0 %v11230
  %11486 = vmatprep.mubr.bf16.mxu0 %v9939
  %11487 = vmatmul.mubr.bf16.gmra.mxu0 %v9938
  %v11488 = vpop.f32.mrf.mxu0
  %v11489 = vadd.f32 %v10716, %v11488
  %v11490 = vpop.f32.mrf.mxu0
  %v11491 = vadd.f32 %v10718, %v11490
  %v11492 = vpop.f32.mrf.mxu0
  %v11493 = vadd.f32 %v10720, %v11492
  %v11494 = vpop.f32.mrf.mxu0
  %v11495 = vadd.f32 %v10722, %v11494
  %11496 = vdwg.mxu0
  %11497 = vmatprep.subr.bf16.mxu0 %v11291
  %11498 = vmatpush1.bf16.msra.mxu0 %v11290
  %11499 = vmatprep.subr.bf16.mxu0 %v11287
  %11500 = vmatpush1.bf16.msra.mxu0 %v11286
  %11501 = vmatprep.subr.bf16.mxu0 %v11283
  %11502 = vmatpush1.bf16.msra.mxu0 %v11282
  %11503 = vmatprep.subr.bf16.mxu0 %v11279
  %11504 = vmatpush1.bf16.msra.mxu0 %v11278
  %11505 = vmatprep.subr.bf16.mxu0 %v11275
  %11506 = vmatpush1.bf16.msra.mxu0 %v11274
  %11507 = vmatprep.subr.bf16.mxu0 %v11271
  %11508 = vmatpush1.bf16.msra.mxu0 %v11270
  %11509 = vmatprep.subr.bf16.mxu0 %v11267
  %11510 = vmatpush1.bf16.msra.mxu0 %v11266
  %11511 = vmatprep.subr.bf16.mxu0 %v11263
  %11512 = vmatpush1.bf16.msra.mxu0 %v11262
  %11513 = vmatprep.subr.bf16.mxu0 %v11323
  %11514 = vmatpush2.bf16.msra.mxu0 %v11322
  %11515 = vmatprep.subr.bf16.mxu0 %v11319
  %11516 = vmatpush2.bf16.msra.mxu0 %v11318
  %11517 = vmatprep.subr.bf16.mxu0 %v11315
  %11518 = vmatpush2.bf16.msra.mxu0 %v11314
  %11519 = vmatprep.subr.bf16.mxu0 %v11311
  %11520 = vmatpush2.bf16.msra.mxu0 %v11310
  %11521 = vmatprep.subr.bf16.mxu0 %v11307
  %11522 = vmatpush2.bf16.msra.mxu0 %v11306
  %11523 = vmatprep.subr.bf16.mxu0 %v11303
  %11524 = vmatpush2.bf16.msra.mxu0 %v11302
  %11525 = vmatprep.subr.bf16.mxu0 %v11299
  %11526 = vmatpush2.bf16.msra.mxu0 %v11298
  %11527 = vmatprep.subr.bf16.mxu0 %v11295
  %11528 = vmatpush2.bf16.msra.mxu0 %v11294
  %11529 = vmatprep.mubr.bf16.mxu0 %v9941
  %11530 = vmatmul.mubr.bf16.gmra.mxu0 %v9940
  %v11531 = vpop.f32.mrf.mxu0
  %v11532 = vadd.f32 %v11489, %v11531
  %v11533 = vpop.f32.mrf.mxu0
  %v11534 = vadd.f32 %v11491, %v11533
  %v11535 = vpop.f32.mrf.mxu0
  %v11536 = vadd.f32 %v11493, %v11535
  %v11537 = vpop.f32.mrf.mxu0
  %v11538 = vadd.f32 %v11495, %v11537
  %11539 = vdwg.mxu0
  %11540 = vmatprep.subr.bf16.mxu0 %v11229
  %11541 = vmatpush1.bf16.msra.mxu0 %v11228
  %11542 = vmatprep.subr.bf16.mxu0 %v11225
  %11543 = vmatpush1.bf16.msra.mxu0 %v11224
  %11544 = vmatprep.subr.bf16.mxu0 %v11221
  %11545 = vmatpush1.bf16.msra.mxu0 %v11220
  %11546 = vmatprep.subr.bf16.mxu0 %v11217
  %11547 = vmatpush1.bf16.msra.mxu0 %v11216
  %11548 = vmatprep.subr.bf16.mxu0 %v11213
  %11549 = vmatpush1.bf16.msra.mxu0 %v11212
  %11550 = vmatprep.subr.bf16.mxu0 %v11209
  %11551 = vmatpush1.bf16.msra.mxu0 %v11208
  %11552 = vmatprep.subr.bf16.mxu0 %v11205
  %11553 = vmatpush1.bf16.msra.mxu0 %v11204
  %11554 = vmatprep.subr.bf16.mxu0 %v11201
  %11555 = vmatpush1.bf16.msra.mxu0 %v11200
  %11556 = vmatprep.subr.bf16.mxu0 %v11261
  %11557 = vmatpush2.bf16.msra.mxu0 %v11260
  %11558 = vmatprep.subr.bf16.mxu0 %v11257
  %11559 = vmatpush2.bf16.msra.mxu0 %v11256
  %11560 = vmatprep.subr.bf16.mxu0 %v11253
  %11561 = vmatpush2.bf16.msra.mxu0 %v11252
  %11562 = vmatprep.subr.bf16.mxu0 %v11249
  %11563 = vmatpush2.bf16.msra.mxu0 %v11248
  %11564 = vmatprep.subr.bf16.mxu0 %v11245
  %11565 = vmatpush2.bf16.msra.mxu0 %v11244
  %11566 = vmatprep.subr.bf16.mxu0 %v11241
  %11567 = vmatpush2.bf16.msra.mxu0 %v11240
  %11568 = vmatprep.subr.bf16.mxu0 %v11237
  %11569 = vmatpush2.bf16.msra.mxu0 %v11236
  %11570 = vmatprep.subr.bf16.mxu0 %v11233
  %11571 = vmatpush2.bf16.msra.mxu0 %v11232
  %11572 = vmatprep.mubr.bf16.mxu0 %v9939
  %11573 = vmatmul.mubr.bf16.gmra.mxu0 %v9938
  %v11574 = vpop.f32.mrf.mxu0
  %v11575 = vadd.f32 %v10802, %v11574
  %v11576 = vpop.f32.mrf.mxu0
  %v11577 = vadd.f32 %v10804, %v11576
  %v11578 = vpop.f32.mrf.mxu0
  %v11579 = vadd.f32 %v10806, %v11578
  %v11580 = vpop.f32.mrf.mxu0
  %v11581 = vadd.f32 %v10808, %v11580
  %11582 = vdwg.mxu0
  %11583 = vmatprep.subr.bf16.mxu0 %v11293
  %11584 = vmatpush1.bf16.msra.mxu0 %v11292
  %11585 = vmatprep.subr.bf16.mxu0 %v11289
  %11586 = vmatpush1.bf16.msra.mxu0 %v11288
  %11587 = vmatprep.subr.bf16.mxu0 %v11285
  %11588 = vmatpush1.bf16.msra.mxu0 %v11284
  %11589 = vmatprep.subr.bf16.mxu0 %v11281
  %11590 = vmatpush1.bf16.msra.mxu0 %v11280
  %11591 = vmatprep.subr.bf16.mxu0 %v11277
  %11592 = vmatpush1.bf16.msra.mxu0 %v11276
  %11593 = vmatprep.subr.bf16.mxu0 %v11273
  %11594 = vmatpush1.bf16.msra.mxu0 %v11272
  %11595 = vmatprep.subr.bf16.mxu0 %v11269
  %11596 = vmatpush1.bf16.msra.mxu0 %v11268
  %11597 = vmatprep.subr.bf16.mxu0 %v11265
  %11598 = vmatpush1.bf16.msra.mxu0 %v11264
  %11599 = vmatprep.subr.bf16.mxu0 %v11325
  %11600 = vmatpush2.bf16.msra.mxu0 %v11324
  %11601 = vmatprep.subr.bf16.mxu0 %v11321
  %11602 = vmatpush2.bf16.msra.mxu0 %v11320
  %11603 = vmatprep.subr.bf16.mxu0 %v11317
  %11604 = vmatpush2.bf16.msra.mxu0 %v11316
  %11605 = vmatprep.subr.bf16.mxu0 %v11313
  %11606 = vmatpush2.bf16.msra.mxu0 %v11312
  %11607 = vmatprep.subr.bf16.mxu0 %v11309
  %11608 = vmatpush2.bf16.msra.mxu0 %v11308
  %11609 = vmatprep.subr.bf16.mxu0 %v11305
  %11610 = vmatpush2.bf16.msra.mxu0 %v11304
  %11611 = vmatprep.subr.bf16.mxu0 %v11301
  %11612 = vmatpush2.bf16.msra.mxu0 %v11300
  %11613 = vmatprep.subr.bf16.mxu0 %v11297
  %11614 = vmatpush2.bf16.msra.mxu0 %v11296
  %11615 = vmatprep.mubr.bf16.mxu0 %v9941
  %11616 = vmatmul.mubr.bf16.gmra.mxu0 %v9940
  %v11617 = vpop.f32.mrf.mxu0
  %v11618 = vadd.f32 %v11575, %v11617
  %v11619 = vpop.f32.mrf.mxu0
  %v11620 = vadd.f32 %v11577, %v11619
  %v11621 = vpop.f32.mrf.mxu0
  %v11622 = vadd.f32 %v11579, %v11621
  %v11623 = vpop.f32.mrf.mxu0
  %v11624 = vadd.f32 %v11581, %v11623
  %11625 = vdwg.mxu0
  %v11626 = vld [vmem:[#allocation2] sm:$0xee]
  %v11627 = vld [vmem:[#allocation2 + $0x8] sm:$0xee]
  %v11628 = vld [vmem:[%s8497] sm:$0xff]
  %v11629 = vld [vmem:[%s8497 + $0x8] sm:$0xff]
  %v11630 = vld [vmem:[%s8497 + $0x10] sm:$0xff]
  %v11631 = vld [vmem:[%s8497 + $0x18] sm:$0xff]
  %v11632 = vld [vmem:[%s8497 + $0x20] sm:$0xff]
  %v11633 = vld [vmem:[%s8497 + $0x28] sm:$0xff]
  %v11634 = vld [vmem:[%s8497 + $0x30] sm:$0xff]
  %v11635 = vld [vmem:[%s8497 + $0x38] sm:$0xff]
  %v11636 = vld [vmem:[%s8497 + $0x40] sm:$0xff]
  %v11637 = vld [vmem:[%s8497 + $0x48] sm:$0xff]
  %v11638 = vld [vmem:[%s8497 + $0x50] sm:$0xff]
  %v11639 = vld [vmem:[%s8497 + $0x58] sm:$0xff]
  %v11640 = vld [vmem:[%s8497 + $0x60] sm:$0xff]
  %v11641 = vld [vmem:[%s8497 + $0x68] sm:$0xff]
  %v11642 = vld [vmem:[%s8497 + $0x70] sm:$0xff]
  %v11643 = vld [vmem:[%s8497 + $0x78] sm:$0xff]
  %v11644 = vld [vmem:[%s8497 + $0x80] sm:$0xff]
  %v11645 = vld [vmem:[%s8497 + $0x88] sm:$0xff]
  %v11646 = vld [vmem:[%s8497 + $0x90] sm:$0xff]
  %v11647 = vld [vmem:[%s8497 + $0x98] sm:$0xff]
  %v11648 = vld [vmem:[%s8497 + $0xa0] sm:$0xff]
  %v11649 = vld [vmem:[%s8497 + $0xa8] sm:$0xff]
  %v11650 = vld [vmem:[%s8497 + $0xb0] sm:$0xff]
  %v11651 = vld [vmem:[%s8497 + $0xb8] sm:$0xff]
  %v11652 = vld [vmem:[%s8497 + $0xc0] sm:$0xff]
  %v11653 = vld [vmem:[%s8497 + $0xc8] sm:$0xff]
  %v11654 = vld [vmem:[%s8497 + $0xd0] sm:$0xff]
  %v11655 = vld [vmem:[%s8497 + $0xd8] sm:$0xff]
  %v11656 = vld [vmem:[%s8497 + $0xe0] sm:$0xff]
  %v11657 = vld [vmem:[%s8497 + $0xe8] sm:$0xff]
  %v11658 = vld [vmem:[%s8497 + $0xf0] sm:$0xff]
  %v11659 = vld [vmem:[%s8497 + $0xf8] sm:$0xff]
  %v11660 = vld [vmem:[%s8497 + $0x100] sm:$0xff]
  %v11661 = vld [vmem:[%s8497 + $0x108] sm:$0xff]
  %v11662 = vld [vmem:[%s8497 + $0x110] sm:$0xff]
  %v11663 = vld [vmem:[%s8497 + $0x118] sm:$0xff]
  %v11664 = vld [vmem:[%s8497 + $0x120] sm:$0xff]
  %v11665 = vld [vmem:[%s8497 + $0x128] sm:$0xff]
  %v11666 = vld [vmem:[%s8497 + $0x130] sm:$0xff]
  %v11667 = vld [vmem:[%s8497 + $0x138] sm:$0xff]
  %v11668 = vld [vmem:[%s8497 + $0x140] sm:$0xff]
  %v11669 = vld [vmem:[%s8497 + $0x148] sm:$0xff]
  %v11670 = vld [vmem:[%s8497 + $0x150] sm:$0xff]
  %v11671 = vld [vmem:[%s8497 + $0x158] sm:$0xff]
  %v11672 = vld [vmem:[%s8497 + $0x160] sm:$0xff]
  %v11673 = vld [vmem:[%s8497 + $0x168] sm:$0xff]
  %v11674 = vld [vmem:[%s8497 + $0x170] sm:$0xff]
  %v11675 = vld [vmem:[%s8497 + $0x178] sm:$0xff]
  %v11676 = vld [vmem:[%s8497 + $0x180] sm:$0xff]
  %v11677 = vld [vmem:[%s8497 + $0x188] sm:$0xff]
  %v11678 = vld [vmem:[%s8497 + $0x190] sm:$0xff]
  %v11679 = vld [vmem:[%s8497 + $0x198] sm:$0xff]
  %v11680 = vld [vmem:[%s8497 + $0x1a0] sm:$0xff]
  %v11681 = vld [vmem:[%s8497 + $0x1a8] sm:$0xff]
  %v11682 = vld [vmem:[%s8497 + $0x1b0] sm:$0xff]
  %v11683 = vld [vmem:[%s8497 + $0x1b8] sm:$0xff]
  %v11684 = vld [vmem:[%s8497 + $0x1c0] sm:$0xff]
  %v11685 = vld [vmem:[%s8497 + $0x1c8] sm:$0xff]
  %v11686 = vld [vmem:[%s8497 + $0x1d0] sm:$0xff]
  %v11687 = vld [vmem:[%s8497 + $0x1d8] sm:$0xff]
  %v11688 = vld [vmem:[%s8497 + $0x1e0] sm:$0xff]
  %v11689 = vld [vmem:[%s8497 + $0x1e8] sm:$0xff]
  %v11690 = vld [vmem:[%s8497 + $0x1f0] sm:$0xff]
  %v11691 = vld [vmem:[%s8497 + $0x1f8] sm:$0xff]
  %v11692 = vld [vmem:[%s8497 + $0x200] sm:$0xff]
  %v11693 = vld [vmem:[%s8497 + $0x208] sm:$0xff]
  %v11694 = vld [vmem:[%s8497 + $0x210] sm:$0xff]
  %v11695 = vld [vmem:[%s8497 + $0x218] sm:$0xff]
  %v11696 = vld [vmem:[%s8497 + $0x220] sm:$0xff]
  %v11697 = vld [vmem:[%s8497 + $0x228] sm:$0xff]
  %v11698 = vld [vmem:[%s8497 + $0x230] sm:$0xff]
  %v11699 = vld [vmem:[%s8497 + $0x238] sm:$0xff]
  %v11700 = vld [vmem:[%s8497 + $0x240] sm:$0xff]
  %v11701 = vld [vmem:[%s8497 + $0x248] sm:$0xff]
  %v11702 = vld [vmem:[%s8497 + $0x250] sm:$0xff]
  %v11703 = vld [vmem:[%s8497 + $0x258] sm:$0xff]
  %v11704 = vld [vmem:[%s8497 + $0x260] sm:$0xff]
  %v11705 = vld [vmem:[%s8497 + $0x268] sm:$0xff]
  %v11706 = vld [vmem:[%s8497 + $0x270] sm:$0xff]
  %v11707 = vld [vmem:[%s8497 + $0x278] sm:$0xff]
  %v11708 = vld [vmem:[%s8497 + $0x280] sm:$0xff]
  %v11709 = vld [vmem:[%s8497 + $0x288] sm:$0xff]
  %v11710 = vld [vmem:[%s8497 + $0x290] sm:$0xff]
  %v11711 = vld [vmem:[%s8497 + $0x298] sm:$0xff]
  %v11712 = vld [vmem:[%s8497 + $0x2a0] sm:$0xff]
  %v11713 = vld [vmem:[%s8497 + $0x2a8] sm:$0xff]
  %v11714 = vld [vmem:[%s8497 + $0x2b0] sm:$0xff]
  %v11715 = vld [vmem:[%s8497 + $0x2b8] sm:$0xff]
  %v11716 = vld [vmem:[%s8497 + $0x2c0] sm:$0xff]
  %v11717 = vld [vmem:[%s8497 + $0x2c8] sm:$0xff]
  %v11718 = vld [vmem:[%s8497 + $0x2d0] sm:$0xff]
  %v11719 = vld [vmem:[%s8497 + $0x2d8] sm:$0xff]
  %v11720 = vld [vmem:[%s8497 + $0x2e0] sm:$0xff]
  %v11721 = vld [vmem:[%s8497 + $0x2e8] sm:$0xff]
  %v11722 = vld [vmem:[%s8497 + $0x2f0] sm:$0xff]
  %v11723 = vld [vmem:[%s8497 + $0x2f8] sm:$0xff]
  %v11724 = vld [vmem:[%s8497 + $0x300] sm:$0xff]
  %v11725 = vld [vmem:[%s8497 + $0x308] sm:$0xff]
  %v11726 = vld [vmem:[%s8497 + $0x310] sm:$0xff]
  %v11727 = vld [vmem:[%s8497 + $0x318] sm:$0xff]
  %v11728 = vld [vmem:[%s8497 + $0x320] sm:$0xff]
  %v11729 = vld [vmem:[%s8497 + $0x328] sm:$0xff]
  %v11730 = vld [vmem:[%s8497 + $0x330] sm:$0xff]
  %v11731 = vld [vmem:[%s8497 + $0x338] sm:$0xff]
  %v11732 = vld [vmem:[%s8497 + $0x340] sm:$0xff]
  %v11733 = vld [vmem:[%s8497 + $0x348] sm:$0xff]
  %v11734 = vld [vmem:[%s8497 + $0x350] sm:$0xff]
  %v11735 = vld [vmem:[%s8497 + $0x358] sm:$0xff]
  %v11736 = vld [vmem:[%s8497 + $0x360] sm:$0xff]
  %v11737 = vld [vmem:[%s8497 + $0x368] sm:$0xff]
  %v11738 = vld [vmem:[%s8497 + $0x370] sm:$0xff]
  %v11739 = vld [vmem:[%s8497 + $0x378] sm:$0xff]
  %v11740 = vld [vmem:[%s8497 + $0x380] sm:$0xff]
  %v11741 = vld [vmem:[%s8497 + $0x388] sm:$0xff]
  %v11742 = vld [vmem:[%s8497 + $0x390] sm:$0xff]
  %v11743 = vld [vmem:[%s8497 + $0x398] sm:$0xff]
  %v11744 = vld [vmem:[%s8497 + $0x3a0] sm:$0xff]
  %v11745 = vld [vmem:[%s8497 + $0x3a8] sm:$0xff]
  %v11746 = vld [vmem:[%s8497 + $0x3b0] sm:$0xff]
  %v11747 = vld [vmem:[%s8497 + $0x3b8] sm:$0xff]
  %v11748 = vld [vmem:[%s8497 + $0x3c0] sm:$0xff]
  %v11749 = vld [vmem:[%s8497 + $0x3c8] sm:$0xff]
  %v11750 = vld [vmem:[%s8497 + $0x3d0] sm:$0xff]
  %v11751 = vld [vmem:[%s8497 + $0x3d8] sm:$0xff]
  %v11752 = vld [vmem:[%s8497 + $0x3e0] sm:$0xff]
  %v11753 = vld [vmem:[%s8497 + $0x3e8] sm:$0xff]
  %v11754 = vld [vmem:[%s8497 + $0x3f0] sm:$0xff]
  %v11755 = vld [vmem:[%s8497 + $0x3f8] sm:$0xff]
  %v11758 = vunpack.c.l.b16 %v11626
  %v11759 = vunpack.c.h.b16 %v11626
  %v11760 = vunpack.c.l.b16 %v11627
  %v11761 = vunpack.c.h.b16 %v11627
  %v11762 = vpack.c.b16 %v9930, %v11758
  %v11763 = vpack.c.b16 %v9931, %v11759
  %v11764 = vpack.c.b16 %v9932, %v11760
  %v11765 = vpack.c.b16 %v9933, %v11761
  %v11766 = vrot.slane %v11762, 1
  %v11767 = vrot.slane %v9942, 1
  %v11768 = vsel %vm2227, %v11766, %v11767
  %v11769 = vrot.slane %v11763, 1
  %v11770 = vrot.slane %v9943, 1
  %v11771 = vsel %vm2227, %v11769, %v11770
  %v11772 = vrot.slane %v11764, 1
  %v11773 = vrot.slane %v9944, 1
  %v11774 = vsel %vm2227, %v11772, %v11773
  %v11775 = vrot.slane %v11765, 1
  %v11776 = vrot.slane %v9945, 1
  %v11777 = vsel %vm2227, %v11775, %v11776
  %v11910 = vunpack.c.l.b16 %v11628
  %v11911 = vunpack.c.h.b16 %v11628
  %v11912 = vunpack.c.l.b16 %v11629
  %v11913 = vunpack.c.h.b16 %v11629
  %v11914 = vunpack.c.l.b16 %v11630
  %v11915 = vunpack.c.h.b16 %v11630
  %v11916 = vunpack.c.l.b16 %v11631
  %v11917 = vunpack.c.h.b16 %v11631
  %v11918 = vunpack.c.l.b16 %v11632
  %v11919 = vunpack.c.h.b16 %v11632
  %v11920 = vunpack.c.l.b16 %v11633
  %v11921 = vunpack.c.h.b16 %v11633
  %v11922 = vunpack.c.l.b16 %v11634
  %v11923 = vunpack.c.h.b16 %v11634
  %v11924 = vunpack.c.l.b16 %v11635
  %v11925 = vunpack.c.h.b16 %v11635
  %v11926 = vunpack.c.l.b16 %v11636
  %v11927 = vunpack.c.h.b16 %v11636
  %v11928 = vunpack.c.l.b16 %v11637
  %v11929 = vunpack.c.h.b16 %v11637
  %v11930 = vunpack.c.l.b16 %v11638
  %v11931 = vunpack.c.h.b16 %v11638
  %v11932 = vunpack.c.l.b16 %v11639
  %v11933 = vunpack.c.h.b16 %v11639
  %v11934 = vunpack.c.l.b16 %v11640
  %v11935 = vunpack.c.h.b16 %v11640
  %v11936 = vunpack.c.l.b16 %v11641
  %v11937 = vunpack.c.h.b16 %v11641
  %v11938 = vunpack.c.l.b16 %v11642
  %v11939 = vunpack.c.h.b16 %v11642
  %v11940 = vunpack.c.l.b16 %v11643
  %v11941 = vunpack.c.h.b16 %v11643
  %v11942 = vunpack.c.l.b16 %v11644
  %v11943 = vunpack.c.h.b16 %v11644
  %v11944 = vunpack.c.l.b16 %v11645
  %v11945 = vunpack.c.h.b16 %v11645
  %v11946 = vunpack.c.l.b16 %v11646
  %v11947 = vunpack.c.h.b16 %v11646
  %v11948 = vunpack.c.l.b16 %v11647
  %v11949 = vunpack.c.h.b16 %v11647
  %v11950 = vunpack.c.l.b16 %v11648
  %v11951 = vunpack.c.h.b16 %v11648
  %v11952 = vunpack.c.l.b16 %v11649
  %v11953 = vunpack.c.h.b16 %v11649
  %v11954 = vunpack.c.l.b16 %v11650
  %v11955 = vunpack.c.h.b16 %v11650
  %v11956 = vunpack.c.l.b16 %v11651
  %v11957 = vunpack.c.h.b16 %v11651
  %v11958 = vunpack.c.l.b16 %v11652
  %v11959 = vunpack.c.h.b16 %v11652
  %v11960 = vunpack.c.l.b16 %v11653
  %v11961 = vunpack.c.h.b16 %v11653
  %v11962 = vunpack.c.l.b16 %v11654
  %v11963 = vunpack.c.h.b16 %v11654
  %v11964 = vunpack.c.l.b16 %v11655
  %v11965 = vunpack.c.h.b16 %v11655
  %v11966 = vunpack.c.l.b16 %v11656
  %v11967 = vunpack.c.h.b16 %v11656
  %v11968 = vunpack.c.l.b16 %v11657
  %v11969 = vunpack.c.h.b16 %v11657
  %v11970 = vunpack.c.l.b16 %v11658
  %v11971 = vunpack.c.h.b16 %v11658
  %v11972 = vunpack.c.l.b16 %v11659
  %v11973 = vunpack.c.h.b16 %v11659
  %v11974 = vunpack.c.l.b16 %v11660
  %v11975 = vunpack.c.h.b16 %v11660
  %v11976 = vunpack.c.l.b16 %v11661
  %v11977 = vunpack.c.h.b16 %v11661
  %v11978 = vunpack.c.l.b16 %v11662
  %v11979 = vunpack.c.h.b16 %v11662
  %v11980 = vunpack.c.l.b16 %v11663
  %v11981 = vunpack.c.h.b16 %v11663
  %v11982 = vunpack.c.l.b16 %v11664
  %v11983 = vunpack.c.h.b16 %v11664
  %v11984 = vunpack.c.l.b16 %v11665
  %v11985 = vunpack.c.h.b16 %v11665
  %v11986 = vunpack.c.l.b16 %v11666
  %v11987 = vunpack.c.h.b16 %v11666
  %v11988 = vunpack.c.l.b16 %v11667
  %v11989 = vunpack.c.h.b16 %v11667
  %v11990 = vunpack.c.l.b16 %v11668
  %v11991 = vunpack.c.h.b16 %v11668
  %v11992 = vunpack.c.l.b16 %v11669
  %v11993 = vunpack.c.h.b16 %v11669
  %v11994 = vunpack.c.l.b16 %v11670
  %v11995 = vunpack.c.h.b16 %v11670
  %v11996 = vunpack.c.l.b16 %v11671
  %v11997 = vunpack.c.h.b16 %v11671
  %v11998 = vunpack.c.l.b16 %v11672
  %v11999 = vunpack.c.h.b16 %v11672
  %v12000 = vunpack.c.l.b16 %v11673
  %v12001 = vunpack.c.h.b16 %v11673
  %v12002 = vunpack.c.l.b16 %v11674
  %v12003 = vunpack.c.h.b16 %v11674
  %v12004 = vunpack.c.l.b16 %v11675
  %v12005 = vunpack.c.h.b16 %v11675
  %v12006 = vunpack.c.l.b16 %v11676
  %v12007 = vunpack.c.h.b16 %v11676
  %v12008 = vunpack.c.l.b16 %v11677
  %v12009 = vunpack.c.h.b16 %v11677
  %v12010 = vunpack.c.l.b16 %v11678
  %v12011 = vunpack.c.h.b16 %v11678
  %v12012 = vunpack.c.l.b16 %v11679
  %v12013 = vunpack.c.h.b16 %v11679
  %v12014 = vunpack.c.l.b16 %v11680
  %v12015 = vunpack.c.h.b16 %v11680
  %v12016 = vunpack.c.l.b16 %v11681
  %v12017 = vunpack.c.h.b16 %v11681
  %v12018 = vunpack.c.l.b16 %v11682
  %v12019 = vunpack.c.h.b16 %v11682
  %v12020 = vunpack.c.l.b16 %v11683
  %v12021 = vunpack.c.h.b16 %v11683
  %v12022 = vunpack.c.l.b16 %v11684
  %v12023 = vunpack.c.h.b16 %v11684
  %v12024 = vunpack.c.l.b16 %v11685
  %v12025 = vunpack.c.h.b16 %v11685
  %v12026 = vunpack.c.l.b16 %v11686
  %v12027 = vunpack.c.h.b16 %v11686
  %v12028 = vunpack.c.l.b16 %v11687
  %v12029 = vunpack.c.h.b16 %v11687
  %v12030 = vunpack.c.l.b16 %v11688
  %v12031 = vunpack.c.h.b16 %v11688
  %v12032 = vunpack.c.l.b16 %v11689
  %v12033 = vunpack.c.h.b16 %v11689
  %v12034 = vunpack.c.l.b16 %v11690
  %v12035 = vunpack.c.h.b16 %v11690
  %v12036 = vunpack.c.l.b16 %v11691
  %v12037 = vunpack.c.h.b16 %v11691
  %v12038 = vunpack.c.l.b16 %v11692
  %v12039 = vunpack.c.h.b16 %v11692
  %v12040 = vunpack.c.l.b16 %v11693
  %v12041 = vunpack.c.h.b16 %v11693
  %v12042 = vunpack.c.l.b16 %v11694
  %v12043 = vunpack.c.h.b16 %v11694
  %v12044 = vunpack.c.l.b16 %v11695
  %v12045 = vunpack.c.h.b16 %v11695
  %v12046 = vunpack.c.l.b16 %v11696
  %v12047 = vunpack.c.h.b16 %v11696
  %v12048 = vunpack.c.l.b16 %v11697
  %v12049 = vunpack.c.h.b16 %v11697
  %v12050 = vunpack.c.l.b16 %v11698
  %v12051 = vunpack.c.h.b16 %v11698
  %v12052 = vunpack.c.l.b16 %v11699
  %v12053 = vunpack.c.h.b16 %v11699
  %v12054 = vunpack.c.l.b16 %v11700
  %v12055 = vunpack.c.h.b16 %v11700
  %v12056 = vunpack.c.l.b16 %v11701
  %v12057 = vunpack.c.h.b16 %v11701
  %v12058 = vunpack.c.l.b16 %v11702
  %v12059 = vunpack.c.h.b16 %v11702
  %v12060 = vunpack.c.l.b16 %v11703
  %v12061 = vunpack.c.h.b16 %v11703
  %v12062 = vunpack.c.l.b16 %v11704
  %v12063 = vunpack.c.h.b16 %v11704
  %v12064 = vunpack.c.l.b16 %v11705
  %v12065 = vunpack.c.h.b16 %v11705
  %v12066 = vunpack.c.l.b16 %v11706
  %v12067 = vunpack.c.h.b16 %v11706
  %v12068 = vunpack.c.l.b16 %v11707
  %v12069 = vunpack.c.h.b16 %v11707
  %v12070 = vunpack.c.l.b16 %v11708
  %v12071 = vunpack.c.h.b16 %v11708
  %v12072 = vunpack.c.l.b16 %v11709
  %v12073 = vunpack.c.h.b16 %v11709
  %v12074 = vunpack.c.l.b16 %v11710
  %v12075 = vunpack.c.h.b16 %v11710
  %v12076 = vunpack.c.l.b16 %v11711
  %v12077 = vunpack.c.h.b16 %v11711
  %v12078 = vunpack.c.l.b16 %v11712
  %v12079 = vunpack.c.h.b16 %v11712
  %v12080 = vunpack.c.l.b16 %v11713
  %v12081 = vunpack.c.h.b16 %v11713
  %v12082 = vunpack.c.l.b16 %v11714
  %v12083 = vunpack.c.h.b16 %v11714
  %v12084 = vunpack.c.l.b16 %v11715
  %v12085 = vunpack.c.h.b16 %v11715
  %v12086 = vunpack.c.l.b16 %v11716
  %v12087 = vunpack.c.h.b16 %v11716
  %v12088 = vunpack.c.l.b16 %v11717
  %v12089 = vunpack.c.h.b16 %v11717
  %v12090 = vunpack.c.l.b16 %v11718
  %v12091 = vunpack.c.h.b16 %v11718
  %v12092 = vunpack.c.l.b16 %v11719
  %v12093 = vunpack.c.h.b16 %v11719
  %v12094 = vunpack.c.l.b16 %v11720
  %v12095 = vunpack.c.h.b16 %v11720
  %v12096 = vunpack.c.l.b16 %v11721
  %v12097 = vunpack.c.h.b16 %v11721
  %v12098 = vunpack.c.l.b16 %v11722
  %v12099 = vunpack.c.h.b16 %v11722
  %v12100 = vunpack.c.l.b16 %v11723
  %v12101 = vunpack.c.h.b16 %v11723
  %v12102 = vunpack.c.l.b16 %v11724
  %v12103 = vunpack.c.h.b16 %v11724
  %v12104 = vunpack.c.l.b16 %v11725
  %v12105 = vunpack.c.h.b16 %v11725
  %v12106 = vunpack.c.l.b16 %v11726
  %v12107 = vunpack.c.h.b16 %v11726
  %v12108 = vunpack.c.l.b16 %v11727
  %v12109 = vunpack.c.h.b16 %v11727
  %v12110 = vunpack.c.l.b16 %v11728
  %v12111 = vunpack.c.h.b16 %v11728
  %v12112 = vunpack.c.l.b16 %v11729
  %v12113 = vunpack.c.h.b16 %v11729
  %v12114 = vunpack.c.l.b16 %v11730
  %v12115 = vunpack.c.h.b16 %v11730
  %v12116 = vunpack.c.l.b16 %v11731
  %v12117 = vunpack.c.h.b16 %v11731
  %v12118 = vunpack.c.l.b16 %v11732
  %v12119 = vunpack.c.h.b16 %v11732
  %v12120 = vunpack.c.l.b16 %v11733
  %v12121 = vunpack.c.h.b16 %v11733
  %v12122 = vunpack.c.l.b16 %v11734
  %v12123 = vunpack.c.h.b16 %v11734
  %v12124 = vunpack.c.l.b16 %v11735
  %v12125 = vunpack.c.h.b16 %v11735
  %v12126 = vunpack.c.l.b16 %v11736
  %v12127 = vunpack.c.h.b16 %v11736
  %v12128 = vunpack.c.l.b16 %v11737
  %v12129 = vunpack.c.h.b16 %v11737
  %v12130 = vunpack.c.l.b16 %v11738
  %v12131 = vunpack.c.h.b16 %v11738
  %v12132 = vunpack.c.l.b16 %v11739
  %v12133 = vunpack.c.h.b16 %v11739
  %v12134 = vunpack.c.l.b16 %v11740
  %v12135 = vunpack.c.h.b16 %v11740
  %v12136 = vunpack.c.l.b16 %v11741
  %v12137 = vunpack.c.h.b16 %v11741
  %v12138 = vunpack.c.l.b16 %v11742
  %v12139 = vunpack.c.h.b16 %v11742
  %v12140 = vunpack.c.l.b16 %v11743
  %v12141 = vunpack.c.h.b16 %v11743
  %v12142 = vunpack.c.l.b16 %v11744
  %v12143 = vunpack.c.h.b16 %v11744
  %v12144 = vunpack.c.l.b16 %v11745
  %v12145 = vunpack.c.h.b16 %v11745
  %v12146 = vunpack.c.l.b16 %v11746
  %v12147 = vunpack.c.h.b16 %v11746
  %v12148 = vunpack.c.l.b16 %v11747
  %v12149 = vunpack.c.h.b16 %v11747
  %v12150 = vunpack.c.l.b16 %v11748
  %v12151 = vunpack.c.h.b16 %v11748
  %v12152 = vunpack.c.l.b16 %v11749
  %v12153 = vunpack.c.h.b16 %v11749
  %v12154 = vunpack.c.l.b16 %v11750
  %v12155 = vunpack.c.h.b16 %v11750
  %v12156 = vunpack.c.l.b16 %v11751
  %v12157 = vunpack.c.h.b16 %v11751
  %v12158 = vunpack.c.l.b16 %v11752
  %v12159 = vunpack.c.h.b16 %v11752
  %v12160 = vunpack.c.l.b16 %v11753
  %v12161 = vunpack.c.h.b16 %v11753
  %v12162 = vunpack.c.l.b16 %v11754
  %v12163 = vunpack.c.h.b16 %v11754
  %v12164 = vunpack.c.l.b16 %v11755
  %v12165 = vunpack.c.h.b16 %v11755
  %v12166 = vpack.c.b16 %v11914, %v11910
  %v12167 = vpack.c.b16 %v11915, %v11911
  %v12168 = vpack.c.b16 %v11916, %v11912
  %v12169 = vpack.c.b16 %v11917, %v11913
  %v12170 = vpack.c.b16 %v11922, %v11918
  %v12171 = vpack.c.b16 %v11923, %v11919
  %v12172 = vpack.c.b16 %v11924, %v11920
  %v12173 = vpack.c.b16 %v11925, %v11921
  %v12174 = vpack.c.b16 %v11930, %v11926
  %v12175 = vpack.c.b16 %v11931, %v11927
  %v12176 = vpack.c.b16 %v11932, %v11928
  %v12177 = vpack.c.b16 %v11933, %v11929
  %v12178 = vpack.c.b16 %v11938, %v11934
  %v12179 = vpack.c.b16 %v11939, %v11935
  %v12180 = vpack.c.b16 %v11940, %v11936
  %v12181 = vpack.c.b16 %v11941, %v11937
  %v12182 = vpack.c.b16 %v11946, %v11942
  %v12183 = vpack.c.b16 %v11947, %v11943
  %v12184 = vpack.c.b16 %v11948, %v11944
  %v12185 = vpack.c.b16 %v11949, %v11945
  %v12186 = vpack.c.b16 %v11954, %v11950
  %v12187 = vpack.c.b16 %v11955, %v11951
  %v12188 = vpack.c.b16 %v11956, %v11952
  %v12189 = vpack.c.b16 %v11957, %v11953
  %v12190 = vpack.c.b16 %v11962, %v11958
  %v12191 = vpack.c.b16 %v11963, %v11959
  %v12192 = vpack.c.b16 %v11964, %v11960
  %v12193 = vpack.c.b16 %v11965, %v11961
  %v12194 = vpack.c.b16 %v11970, %v11966
  %v12195 = vpack.c.b16 %v11971, %v11967
  %v12196 = vpack.c.b16 %v11972, %v11968
  %v12197 = vpack.c.b16 %v11973, %v11969
  %v12198 = vpack.c.b16 %v11978, %v11974
  %v12199 = vpack.c.b16 %v11979, %v11975
  %v12200 = vpack.c.b16 %v11980, %v11976
  %v12201 = vpack.c.b16 %v11981, %v11977
  %v12202 = vpack.c.b16 %v11986, %v11982
  %v12203 = vpack.c.b16 %v11987, %v11983
  %v12204 = vpack.c.b16 %v11988, %v11984
  %v12205 = vpack.c.b16 %v11989, %v11985
  %v12206 = vpack.c.b16 %v11994, %v11990
  %v12207 = vpack.c.b16 %v11995, %v11991
  %v12208 = vpack.c.b16 %v11996, %v11992
  %v12209 = vpack.c.b16 %v11997, %v11993
  %v12210 = vpack.c.b16 %v12002, %v11998
  %v12211 = vpack.c.b16 %v12003, %v11999
  %v12212 = vpack.c.b16 %v12004, %v12000
  %v12213 = vpack.c.b16 %v12005, %v12001
  %v12214 = vpack.c.b16 %v12010, %v12006
  %v12215 = vpack.c.b16 %v12011, %v12007
  %v12216 = vpack.c.b16 %v12012, %v12008
  %v12217 = vpack.c.b16 %v12013, %v12009
  %v12218 = vpack.c.b16 %v12018, %v12014
  %v12219 = vpack.c.b16 %v12019, %v12015
  %v12220 = vpack.c.b16 %v12020, %v12016
  %v12221 = vpack.c.b16 %v12021, %v12017
  %v12222 = vpack.c.b16 %v12026, %v12022
  %v12223 = vpack.c.b16 %v12027, %v12023
  %v12224 = vpack.c.b16 %v12028, %v12024
  %v12225 = vpack.c.b16 %v12029, %v12025
  %v12226 = vpack.c.b16 %v12034, %v12030
  %v12227 = vpack.c.b16 %v12035, %v12031
  %v12228 = vpack.c.b16 %v12036, %v12032
  %v12229 = vpack.c.b16 %v12037, %v12033
  %v12230 = vpack.c.b16 %v12042, %v12038
  %v12231 = vpack.c.b16 %v12043, %v12039
  %v12232 = vpack.c.b16 %v12044, %v12040
  %v12233 = vpack.c.b16 %v12045, %v12041
  %v12234 = vpack.c.b16 %v12050, %v12046
  %v12235 = vpack.c.b16 %v12051, %v12047
  %v12236 = vpack.c.b16 %v12052, %v12048
  %v12237 = vpack.c.b16 %v12053, %v12049
  %v12238 = vpack.c.b16 %v12058, %v12054
  %v12239 = vpack.c.b16 %v12059, %v12055
  %v12240 = vpack.c.b16 %v12060, %v12056
  %v12241 = vpack.c.b16 %v12061, %v12057
  %v12242 = vpack.c.b16 %v12066, %v12062
  %v12243 = vpack.c.b16 %v12067, %v12063
  %v12244 = vpack.c.b16 %v12068, %v12064
  %v12245 = vpack.c.b16 %v12069, %v12065
  %v12246 = vpack.c.b16 %v12074, %v12070
  %v12247 = vpack.c.b16 %v12075, %v12071
  %v12248 = vpack.c.b16 %v12076, %v12072
  %v12249 = vpack.c.b16 %v12077, %v12073
  %v12250 = vpack.c.b16 %v12082, %v12078
  %v12251 = vpack.c.b16 %v12083, %v12079
  %v12252 = vpack.c.b16 %v12084, %v12080
  %v12253 = vpack.c.b16 %v12085, %v12081
  %v12254 = vpack.c.b16 %v12090, %v12086
  %v12255 = vpack.c.b16 %v12091, %v12087
  %v12256 = vpack.c.b16 %v12092, %v12088
  %v12257 = vpack.c.b16 %v12093, %v12089
  %v12258 = vpack.c.b16 %v12098, %v12094
  %v12259 = vpack.c.b16 %v12099, %v12095
  %v12260 = vpack.c.b16 %v12100, %v12096
  %v12261 = vpack.c.b16 %v12101, %v12097
  %v12262 = vpack.c.b16 %v12106, %v12102
  %v12263 = vpack.c.b16 %v12107, %v12103
  %v12264 = vpack.c.b16 %v12108, %v12104
  %v12265 = vpack.c.b16 %v12109, %v12105
  %v12266 = vpack.c.b16 %v12114, %v12110
  %v12267 = vpack.c.b16 %v12115, %v12111
  %v12268 = vpack.c.b16 %v12116, %v12112
  %v12269 = vpack.c.b16 %v12117, %v12113
  %v12270 = vpack.c.b16 %v12122, %v12118
  %v12271 = vpack.c.b16 %v12123, %v12119
  %v12272 = vpack.c.b16 %v12124, %v12120
  %v12273 = vpack.c.b16 %v12125, %v12121
  %v12274 = vpack.c.b16 %v12130, %v12126
  %v12275 = vpack.c.b16 %v12131, %v12127
  %v12276 = vpack.c.b16 %v12132, %v12128
  %v12277 = vpack.c.b16 %v12133, %v12129
  %v12278 = vpack.c.b16 %v12138, %v12134
  %v12279 = vpack.c.b16 %v12139, %v12135
  %v12280 = vpack.c.b16 %v12140, %v12136
  %v12281 = vpack.c.b16 %v12141, %v12137
  %v12282 = vpack.c.b16 %v12146, %v12142
  %v12283 = vpack.c.b16 %v12147, %v12143
  %v12284 = vpack.c.b16 %v12148, %v12144
  %v12285 = vpack.c.b16 %v12149, %v12145
  %v12286 = vpack.c.b16 %v12154, %v12150
  %v12287 = vpack.c.b16 %v12155, %v12151
  %v12288 = vpack.c.b16 %v12156, %v12152
  %v12289 = vpack.c.b16 %v12157, %v12153
  %v12290 = vpack.c.b16 %v12162, %v12158
  %v12291 = vpack.c.b16 %v12163, %v12159
  %v12292 = vpack.c.b16 %v12164, %v12160
  %v12293 = vpack.c.b16 %v12165, %v12161
  %12422 = vmatprep.subr.bf16.mxu0 %v12195
  %12423 = vmatpush1.bf16.msra.mxu0 %v12194
  %12424 = vmatprep.subr.bf16.mxu0 %v12191
  %12425 = vmatpush1.bf16.msra.mxu0 %v12190
  %12426 = vmatprep.subr.bf16.mxu0 %v12187
  %12427 = vmatpush1.bf16.msra.mxu0 %v12186
  %12428 = vmatprep.subr.bf16.mxu0 %v12183
  %12429 = vmatpush1.bf16.msra.mxu0 %v12182
  %12430 = vmatprep.subr.bf16.mxu0 %v12179
  %12431 = vmatpush1.bf16.msra.mxu0 %v12178
  %12432 = vmatprep.subr.bf16.mxu0 %v12175
  %12433 = vmatpush1.bf16.msra.mxu0 %v12174
  %12434 = vmatprep.subr.bf16.mxu0 %v12171
  %12435 = vmatpush1.bf16.msra.mxu0 %v12170
  %12436 = vmatprep.subr.bf16.mxu0 %v12167
  %12437 = vmatpush1.bf16.msra.mxu0 %v12166
  %12438 = vmatprep.subr.bf16.mxu0 %v12227
  %12439 = vmatpush2.bf16.msra.mxu0 %v12226
  %12440 = vmatprep.subr.bf16.mxu0 %v12223
  %12441 = vmatpush2.bf16.msra.mxu0 %v12222
  %12442 = vmatprep.subr.bf16.mxu0 %v12219
  %12443 = vmatpush2.bf16.msra.mxu0 %v12218
  %12444 = vmatprep.subr.bf16.mxu0 %v12215
  %12445 = vmatpush2.bf16.msra.mxu0 %v12214
  %12446 = vmatprep.subr.bf16.mxu0 %v12211
  %12447 = vmatpush2.bf16.msra.mxu0 %v12210
  %12448 = vmatprep.subr.bf16.mxu0 %v12207
  %12449 = vmatpush2.bf16.msra.mxu0 %v12206
  %12450 = vmatprep.subr.bf16.mxu0 %v12203
  %12451 = vmatpush2.bf16.msra.mxu0 %v12202
  %12452 = vmatprep.subr.bf16.mxu0 %v12199
  %12453 = vmatpush2.bf16.msra.mxu0 %v12198
  %12454 = vmatprep.mubr.bf16.mxu0 %v11771
  %12455 = vmatmul.mubr.bf16.gmra.mxu0 %v11768
  %v12456 = vpop.f32.mrf.mxu0
  %v12457 = vadd.f32 0.0, %v12456
  %v12458 = vpop.f32.mrf.mxu0
  %v12459 = vadd.f32 0.0, %v12458
  %v12460 = vpop.f32.mrf.mxu0
  %v12461 = vadd.f32 0.0, %v12460
  %v12462 = vpop.f32.mrf.mxu0
  %v12463 = vadd.f32 0.0, %v12462
  %12464 = vdwg.mxu0
  %12465 = vmatprep.subr.bf16.mxu0 %v12259
  %12466 = vmatpush1.bf16.msra.mxu0 %v12258
  %12467 = vmatprep.subr.bf16.mxu0 %v12255
  %12468 = vmatpush1.bf16.msra.mxu0 %v12254
  %12469 = vmatprep.subr.bf16.mxu0 %v12251
  %12470 = vmatpush1.bf16.msra.mxu0 %v12250
  %12471 = vmatprep.subr.bf16.mxu0 %v12247
  %12472 = vmatpush1.bf16.msra.mxu0 %v12246
  %12473 = vmatprep.subr.bf16.mxu0 %v12243
  %12474 = vmatpush1.bf16.msra.mxu0 %v12242
  %12475 = vmatprep.subr.bf16.mxu0 %v12239
  %12476 = vmatpush1.bf16.msra.mxu0 %v12238
  %12477 = vmatprep.subr.bf16.mxu0 %v12235
  %12478 = vmatpush1.bf16.msra.mxu0 %v12234
  %12479 = vmatprep.subr.bf16.mxu0 %v12231
  %12480 = vmatpush1.bf16.msra.mxu0 %v12230
  %12481 = vmatprep.subr.bf16.mxu0 %v12291
  %12482 = vmatpush2.bf16.msra.mxu0 %v12290
  %12483 = vmatprep.subr.bf16.mxu0 %v12287
  %12484 = vmatpush2.bf16.msra.mxu0 %v12286
  %12485 = vmatprep.subr.bf16.mxu0 %v12283
  %12486 = vmatpush2.bf16.msra.mxu0 %v12282
  %12487 = vmatprep.subr.bf16.mxu0 %v12279
  %12488 = vmatpush2.bf16.msra.mxu0 %v12278
  %12489 = vmatprep.subr.bf16.mxu0 %v12275
  %12490 = vmatpush2.bf16.msra.mxu0 %v12274
  %12491 = vmatprep.subr.bf16.mxu0 %v12271
  %12492 = vmatpush2.bf16.msra.mxu0 %v12270
  %12493 = vmatprep.subr.bf16.mxu0 %v12267
  %12494 = vmatpush2.bf16.msra.mxu0 %v12266
  %12495 = vmatprep.subr.bf16.mxu0 %v12263
  %12496 = vmatpush2.bf16.msra.mxu0 %v12262
  %12497 = vmatprep.mubr.bf16.mxu0 %v11777
  %12498 = vmatmul.mubr.bf16.gmra.mxu0 %v11774
  %v12499 = vpop.f32.mrf.mxu0
  %v12500 = vadd.f32 %v12457, %v12499
  %v12501 = vpop.f32.mrf.mxu0
  %v12502 = vadd.f32 %v12459, %v12501
  %v12503 = vpop.f32.mrf.mxu0
  %v12504 = vadd.f32 %v12461, %v12503
  %v12505 = vpop.f32.mrf.mxu0
  %v12506 = vadd.f32 %v12463, %v12505
  %12507 = vdwg.mxu0
  %12508 = vmatprep.subr.bf16.mxu0 %v12197
  %12509 = vmatpush1.bf16.msra.mxu0 %v12196
  %12510 = vmatprep.subr.bf16.mxu0 %v12193
  %12511 = vmatpush1.bf16.msra.mxu0 %v12192
  %12512 = vmatprep.subr.bf16.mxu0 %v12189
  %12513 = vmatpush1.bf16.msra.mxu0 %v12188
  %12514 = vmatprep.subr.bf16.mxu0 %v12185
  %12515 = vmatpush1.bf16.msra.mxu0 %v12184
  %12516 = vmatprep.subr.bf16.mxu0 %v12181
  %12517 = vmatpush1.bf16.msra.mxu0 %v12180
  %12518 = vmatprep.subr.bf16.mxu0 %v12177
  %12519 = vmatpush1.bf16.msra.mxu0 %v12176
  %12520 = vmatprep.subr.bf16.mxu0 %v12173
  %12521 = vmatpush1.bf16.msra.mxu0 %v12172
  %12522 = vmatprep.subr.bf16.mxu0 %v12169
  %12523 = vmatpush1.bf16.msra.mxu0 %v12168
  %12524 = vmatprep.subr.bf16.mxu0 %v12229
  %12525 = vmatpush2.bf16.msra.mxu0 %v12228
  %12526 = vmatprep.subr.bf16.mxu0 %v12225
  %12527 = vmatpush2.bf16.msra.mxu0 %v12224
  %12528 = vmatprep.subr.bf16.mxu0 %v12221
  %12529 = vmatpush2.bf16.msra.mxu0 %v12220
  %12530 = vmatprep.subr.bf16.mxu0 %v12217
  %12531 = vmatpush2.bf16.msra.mxu0 %v12216
  %12532 = vmatprep.subr.bf16.mxu0 %v12213
  %12533 = vmatpush2.bf16.msra.mxu0 %v12212
  %12534 = vmatprep.subr.bf16.mxu0 %v12209
  %12535 = vmatpush2.bf16.msra.mxu0 %v12208
  %12536 = vmatprep.subr.bf16.mxu0 %v12205
  %12537 = vmatpush2.bf16.msra.mxu0 %v12204
  %12538 = vmatprep.subr.bf16.mxu0 %v12201
  %12539 = vmatpush2.bf16.msra.mxu0 %v12200
  %12540 = vmatprep.mubr.bf16.mxu0 %v11771
  %12541 = vmatmul.mubr.bf16.gmra.mxu0 %v11768
  %v12542 = vpop.f32.mrf.mxu0
  %v12543 = vadd.f32 0.0, %v12542
  %v12544 = vpop.f32.mrf.mxu0
  %v12545 = vadd.f32 0.0, %v12544
  %v12546 = vpop.f32.mrf.mxu0
  %v12547 = vadd.f32 0.0, %v12546
  %v12548 = vpop.f32.mrf.mxu0
  %v12549 = vadd.f32 0.0, %v12548
  %12550 = vdwg.mxu0
  %12551 = vmatprep.subr.bf16.mxu0 %v12261
  %12552 = vmatpush1.bf16.msra.mxu0 %v12260
  %12553 = vmatprep.subr.bf16.mxu0 %v12257
  %12554 = vmatpush1.bf16.msra.mxu0 %v12256
  %12555 = vmatprep.subr.bf16.mxu0 %v12253
  %12556 = vmatpush1.bf16.msra.mxu0 %v12252
  %12557 = vmatprep.subr.bf16.mxu0 %v12249
  %12558 = vmatpush1.bf16.msra.mxu0 %v12248
  %12559 = vmatprep.subr.bf16.mxu0 %v12245
  %12560 = vmatpush1.bf16.msra.mxu0 %v12244
  %12561 = vmatprep.subr.bf16.mxu0 %v12241
  %12562 = vmatpush1.bf16.msra.mxu0 %v12240
  %12563 = vmatprep.subr.bf16.mxu0 %v12237
  %12564 = vmatpush1.bf16.msra.mxu0 %v12236
  %12565 = vmatprep.subr.bf16.mxu0 %v12233
  %12566 = vmatpush1.bf16.msra.mxu0 %v12232
  %12567 = vmatprep.subr.bf16.mxu0 %v12293
  %12568 = vmatpush2.bf16.msra.mxu0 %v12292
  %12569 = vmatprep.subr.bf16.mxu0 %v12289
  %12570 = vmatpush2.bf16.msra.mxu0 %v12288
  %12571 = vmatprep.subr.bf16.mxu0 %v12285
  %12572 = vmatpush2.bf16.msra.mxu0 %v12284
  %12573 = vmatprep.subr.bf16.mxu0 %v12281
  %12574 = vmatpush2.bf16.msra.mxu0 %v12280
  %12575 = vmatprep.subr.bf16.mxu0 %v12277
  %12576 = vmatpush2.bf16.msra.mxu0 %v12276
  %12577 = vmatprep.subr.bf16.mxu0 %v12273
  %12578 = vmatpush2.bf16.msra.mxu0 %v12272
  %12579 = vmatprep.subr.bf16.mxu0 %v12269
  %12580 = vmatpush2.bf16.msra.mxu0 %v12268
  %12581 = vmatprep.subr.bf16.mxu0 %v12265
  %12582 = vmatpush2.bf16.msra.mxu0 %v12264
  %12583 = vmatprep.mubr.bf16.mxu0 %v11777
  %12584 = vmatmul.mubr.bf16.gmra.mxu0 %v11774
  %v12585 = vpop.f32.mrf.mxu0
  %v12586 = vadd.f32 %v12543, %v12585
  %v12587 = vpop.f32.mrf.mxu0
  %v12588 = vadd.f32 %v12545, %v12587
  %v12589 = vpop.f32.mrf.mxu0
  %v12590 = vadd.f32 %v12547, %v12589
  %v12591 = vpop.f32.mrf.mxu0
  %v12592 = vadd.f32 %v12549, %v12591
  %12593 = vdwg.mxu0
  %v12594 = vadd.f32 %v11532, %v12500
  %v12595 = vadd.f32 %v11534, %v12502
  %v12596 = vadd.f32 %v11618, %v12586
  %v12597 = vadd.f32 %v11620, %v12588
  %v12598 = vadd.f32 %v11536, %v12504
  %v12599 = vadd.f32 %v11538, %v12506
  %v12600 = vadd.f32 %v11622, %v12590
  %v12601 = vadd.f32 %v11624, %v12592
  %12602 = vst [vmem:[%s6147] sm:$0xff] %v12594
  %12603 = vst [vmem:[%s6147 + $0x8] sm:$0xff] %v12595
  %12604 = vst [vmem:[%s6147 + $0x10] sm:$0xff] %v12596
  %12605 = vst [vmem:[%s6147 + $0x18] sm:$0xff] %v12597
  %12606 = vst [vmem:[%s6147 + $0x20] sm:$0xff] %v12598
  %12607 = vst [vmem:[%s6147 + $0x28] sm:$0xff] %v12599
  %12608 = vst [vmem:[%s6147 + $0x30] sm:$0xff] %v12600
  %12609 = vst [vmem:[%s6147 + $0x38] sm:$0xff] %v12601
  %v12610 = vadd.f32 %v12594, %v12598
  %v12611 = vrot.slane %v12610, 4
  %v12612 = vadd.f32 %v12610, %v12611
  %v12613 = vrot.slane %v12612, 2
  %v12614 = vadd.f32 %v12612, %v12613
  %v12615 = vrot.slane %v12614, 1
  %v12616 = vadd.f32 %v12614, %v12615
  %v12617 = vadd.f32 %v12595, %v12599
  %v12618 = vrot.slane %v12617, 4
  %v12619 = vadd.f32 %v12617, %v12618
  %v12620 = vrot.slane %v12619, 2
  %v12621 = vadd.f32 %v12619, %v12620
  %v12622 = vrot.slane %v12621, 1
  %v12623 = vadd.f32 %v12621, %v12622
  %v12624 = vadd.f32 %v12596, %v12600
  %v12625 = vrot.slane %v12624, 4
  %v12626 = vadd.f32 %v12624, %v12625
  %v12627 = vrot.slane %v12626, 2
  %v12628 = vadd.f32 %v12626, %v12627
  %v12629 = vrot.slane %v12628, 1
  %v12630 = vadd.f32 %v12628, %v12629
  %v12631 = vadd.f32 %v12597, %v12601
  %v12632 = vrot.slane %v12631, 4
  %v12633 = vadd.f32 %v12631, %v12632
  %v12634 = vrot.slane %v12633, 2
  %v12635 = vadd.f32 %v12633, %v12634
  %v12636 = vrot.slane %v12635, 1
  %v12637 = vadd.f32 %v12635, %v12636
  %v12638 = vadd.f32 %v9508, %v12616
  %v12639 = vadd.f32 %v9509, %v12623
  %v12640 = vadd.f32 %v9510, %v12630
  %v12641 = vadd.f32 %v9511, %v12637
  %v12642 = vmul.f32 %v12594, %v12594
  %v12643 = vmul.f32 %v12595, %v12595
  %v12644 = vmul.f32 %v12596, %v12596
  %v12645 = vmul.f32 %v12597, %v12597
  %v12646 = vmul.f32 %v12598, %v12598
  %v12647 = vmul.f32 %v12599, %v12599
  %v12648 = vmul.f32 %v12600, %v12600
  %v12649 = vmul.f32 %v12601, %v12601
  %v12650 = vadd.f32 %v12642, %v12646
  %v12651 = vrot.slane %v12650, 4
  %v12652 = vadd.f32 %v12650, %v12651
  %v12653 = vrot.slane %v12652, 2
  %v12654 = vadd.f32 %v12652, %v12653
  %v12655 = vrot.slane %v12654, 1
  %v12656 = vadd.f32 %v12654, %v12655
  %v12657 = vadd.f32 %v12643, %v12647
  %v12658 = vrot.slane %v12657, 4
  %v12659 = vadd.f32 %v12657, %v12658
  %v12660 = vrot.slane %v12659, 2
  %v12661 = vadd.f32 %v12659, %v12660
  %v12662 = vrot.slane %v12661, 1
  %v12663 = vadd.f32 %v12661, %v12662
  %v12664 = vadd.f32 %v12644, %v12648
  %v12665 = vrot.slane %v12664, 4
  %v12666 = vadd.f32 %v12664, %v12665
  %v12667 = vrot.slane %v12666, 2
  %v12668 = vadd.f32 %v12666, %v12667
  %v12669 = vrot.slane %v12668, 1
  %v12670 = vadd.f32 %v12668, %v12669
  %v12671 = vadd.f32 %v12645, %v12649
  %v12672 = vrot.slane %v12671, 4
  %v12673 = vadd.f32 %v12671, %v12672
  %v12674 = vrot.slane %v12673, 2
  %v12675 = vadd.f32 %v12673, %v12674
  %v12676 = vrot.slane %v12675, 1
  %v12677 = vadd.f32 %v12675, %v12676
  %v12678 = vadd.f32 %v9548, %v12656
  %v12679 = vadd.f32 %v9549, %v12663
  %v12680 = vadd.f32 %v9550, %v12670
  %v12681 = vadd.f32 %v9551, %v12677
  %v12682 = vld [vmem:[%s5] sm:$0xf]
  %v12683 = vld [vmem:[%s6] sm:$0xf]
  %12684 = vrot.lane.b32.xlu0 %v12638, 32
  %v12685 = vpop.permute.xlu0 %12684
  %12686 = vrot.lane.b32.xlu0 %v12639, 32
  %v12687 = vpop.permute.xlu0 %12686
  %12688 = vrot.lane.b32.xlu0 %v12640, 32
  %v12689 = vpop.permute.xlu0 %12688
  %12690 = vrot.lane.b32.xlu0 %v12641, 32
  %v12691 = vpop.permute.xlu0 %12690
  %v12692 = vsel %vm6240, %v12689, %v12691
  %v12693 = vsel %vm6240, %v12687, %v12689
  %v12694 = vsel %vm6240, %v12685, %v12687
  %v12695 = vsel %vm6240, %v12691, %v12685
  %v12696 = vadd.f32 %v12638, %v12695
  %v12697 = vadd.f32 %v12639, %v12694
  %v12698 = vadd.f32 %v12640, %v12693
  %v12699 = vadd.f32 %v12641, %v12692
  %12700 = vrot.lane.b32.xlu0 %v12696, 64
  %v12701 = vpop.permute.xlu0 %12700
  %12702 = vrot.lane.b32.xlu0 %v12697, 64
  %v12703 = vpop.permute.xlu0 %12702
  %12704 = vrot.lane.b32.xlu0 %v12698, 64
  %v12705 = vpop.permute.xlu0 %12704
  %12706 = vrot.lane.b32.xlu0 %v12699, 64
  %v12707 = vpop.permute.xlu0 %12706
  %v12708 = vsel %vm6257, %v12705, %v12707
  %v12709 = vsel %vm6257, %v12703, %v12705
  %v12710 = vsel %vm6257, %v12701, %v12703
  %v12711 = vsel %vm6257, %v12707, %v12701
  %v12712 = vadd.f32 %v12696, %v12711
  %v12713 = vadd.f32 %v12697, %v12710
  %v12714 = vadd.f32 %v12698, %v12709
  %v12715 = vadd.f32 %v12699, %v12708
  %v12716 = vadd.f32 %v12712, %v12715
  %v12717 = vadd.f32 %v12713, %v12712
  %v12718 = vadd.f32 %v12714, %v12713
  %v12719 = vadd.f32 %v12715, %v12714
  %v12720 = vadd.f32 %v12716, %v12718
  %v12721 = vadd.f32 %v12717, %v12719
  %v12722 = vmul.f32 %v12720, 0.001953125
  %v12723 = vmul.f32 %v12721, 0.001953125
  %12724 = vrot.lane.b32.xlu0 %v12678, 32
  %v12725 = vpop.permute.xlu0 %12724
  %12726 = vrot.lane.b32.xlu0 %v12679, 32
  %v12727 = vpop.permute.xlu0 %12726
  %12728 = vrot.lane.b32.xlu0 %v12680, 32
  %v12729 = vpop.permute.xlu0 %12728
  %12730 = vrot.lane.b32.xlu0 %v12681, 32
  %v12731 = vpop.permute.xlu0 %12730
  %v12732 = vsel %vm6240, %v12729, %v12731
  %v12733 = vsel %vm6240, %v12727, %v12729
  %v12734 = vsel %vm6240, %v12725, %v12727
  %v12735 = vsel %vm6240, %v12731, %v12725
  %v12736 = vadd.f32 %v12678, %v12735
  %v12737 = vadd.f32 %v12679, %v12734
  %v12738 = vadd.f32 %v12680, %v12733
  %v12739 = vadd.f32 %v12681, %v12732
  %12740 = vrot.lane.b32.xlu0 %v12736, 64
  %v12741 = vpop.permute.xlu0 %12740
  %12742 = vrot.lane.b32.xlu0 %v12737, 64
  %v12743 = vpop.permute.xlu0 %12742
  %12744 = vrot.lane.b32.xlu0 %v12738, 64
  %v12745 = vpop.permute.xlu0 %12744
  %12746 = vrot.lane.b32.xlu0 %v12739, 64
  %v12747 = vpop.permute.xlu0 %12746
  %v12748 = vsel %vm6257, %v12745, %v12747
  %v12749 = vsel %vm6257, %v12743, %v12745
  %v12750 = vsel %vm6257, %v12741, %v12743
  %v12751 = vsel %vm6257, %v12747, %v12741
  %v12752 = vadd.f32 %v12736, %v12751
  %v12753 = vadd.f32 %v12737, %v12750
  %v12754 = vadd.f32 %v12738, %v12749
  %v12755 = vadd.f32 %v12739, %v12748
  %v12756 = vadd.f32 %v12752, %v12755
  %v12757 = vadd.f32 %v12753, %v12752
  %v12758 = vadd.f32 %v12754, %v12753
  %v12759 = vadd.f32 %v12755, %v12754
  %v12760 = vadd.f32 %v12756, %v12758
  %v12761 = vadd.f32 %v12757, %v12759
  %v12762 = vmul.f32 %v12760, 0.001953125
  %v12763 = vmul.f32 %v12761, 0.001953125
  %v12764 = vmul.f32 %v12722, %v12722
  %v12765 = vmul.f32 %v12723, %v12723
  %v12766 = vsub.f32 %v12762, %v12764
  %v12767 = vsub.f32 %v12763, %v12765
  %v12768 = vmax.f32 %v12766, 0.0
  %v12769 = vmax.f32 %v12767, 0.0
  %v12770 = vadd.f32 %v12768, 1e-05
  %v12771 = vadd.f32 %v12769, 1e-05
  %v12772 = vrsqrt.pop %v12770
  %v12773 = vrsqrt.pop %v12771
  %v12776 = vcombine.low %v12772, %v12773
  %v12778 = vunpack.c.l.s4 1966171168
  %v12779 = vunpack.c.0.s8 %v12778
  %v12780 = vlaneseq
  %v12781 = vshrl.u32 %v12780, 7
  %v12782 = vsub.s32 %v12779, %v12781
  %v12783 = vrot.slane %v12776, %v12782
  %v12784 = vcombine.low %v12783, %v12783
  %v12786 = vunpack.c.l.s4 1966171168
  %v12787 = vunpack.c.0.s8 %v12786
  %v12788 = vlaneseq
  %v12789 = vshrl.u32 %v12788, 7
  %v12790 = vsub.s32 %v12787, %v12789
  %v12791 = vrot.slane %v12784, %v12790
  %v12793 = vmul.f32 %v12682, %v12791
  %v12795 = vlaneseq
  %v12796 = vshrl.u32 %v12795, 7
  %v12797 = vsub.s32 0, %v12796
  %v12798 = vrot.slane %v12793, %v12797
  %v12799 = vlaneseq
  %v12800 = vshrl.u32 %v12799, 7
  %v12801 = vsub.s32 1, %v12800
  %v12802 = vrot.slane %v12793, %v12801
  %v12803 = vlaneseq
  %v12804 = vshrl.u32 %v12803, 7
  %v12805 = vsub.s32 2, %v12804
  %v12806 = vrot.slane %v12793, %v12805
  %v12807 = vlaneseq
  %v12808 = vshrl.u32 %v12807, 7
  %v12809 = vsub.s32 3, %v12808
  %v12810 = vrot.slane %v12793, %v12809
  %v12815 = vmul.f32 %v12722, %v12798
  %v12816 = vmul.f32 %v12723, %v12802
  %v12817 = vmul.f32 %v12722, %v12806
  %v12818 = vmul.f32 %v12723, %v12810
  %v12823 = vcombine.low %v12815, %v12816
  %v12824 = vcombine.low %v12817, %v12818
  %v12826 = vunpack.c.l.s4 1966171168
  %v12827 = vunpack.c.0.s8 %v12826
  %v12828 = vlaneseq
  %v12829 = vshrl.u32 %v12828, 7
  %v12830 = vsub.s32 %v12827, %v12829
  %v12831 = vrot.slane %v12823, %v12830
  %v12833 = vunpack.c.l.s4 1966171168
  %v12834 = vunpack.c.0.s8 %v12833
  %v12835 = vlaneseq
  %v12836 = vshrl.u32 %v12835, 7
  %v12837 = vsub.s32 %v12834, %v12836
  %v12838 = vrot.slane %v12824, %v12837
  %v12839 = vcombine.low %v12831, %v12838
  %v12841 = vunpack.c.l.s4 1966171168
  %v12842 = vunpack.c.0.s8 %v12841
  %v12843 = vlaneseq
  %v12844 = vshrl.u32 %v12843, 7
  %v12845 = vsub.s32 %v12842, %v12844
  %v12846 = vrot.slane %v12839, %v12845
  %v12848 = vsub.f32 %v12683, %v12846
  %v12849 = vld [vmem:[%s0] sm:$0xff]
  %v12850 = vld [vmem:[%s0 + $0x8] sm:$0xff]
  %v12851 = vld [vmem:[%s0 + $0x10] sm:$0xff]
  %v12852 = vld [vmem:[%s0 + $0x18] sm:$0xff]
  %v12853 = vunpack.c.l.bf16 %v12849
  %v12854 = vunpack.c.h.bf16 %v12849
  %v12855 = vunpack.c.l.bf16 %v12850
  %v12856 = vunpack.c.h.bf16 %v12850
  %v12857 = vunpack.c.l.bf16 %v12851
  %v12858 = vunpack.c.h.bf16 %v12851
  %v12859 = vunpack.c.l.bf16 %v12852
  %v12860 = vunpack.c.h.bf16 %v12852
  %v12861 = vld [vmem:[#allocation3] sm:$0xff]
  %v12862 = vld [vmem:[#allocation3 + $0x8] sm:$0xff]
  %v12863 = vld [vmem:[#allocation3 + $0x10] sm:$0xff]
  %v12864 = vld [vmem:[#allocation3 + $0x18] sm:$0xff]
  %v12865 = vld [vmem:[#allocation3 + $0x20] sm:$0xff]
  %v12866 = vld [vmem:[#allocation3 + $0x28] sm:$0xff]
  %v12867 = vld [vmem:[#allocation3 + $0x30] sm:$0xff]
  %v12868 = vld [vmem:[#allocation3 + $0x38] sm:$0xff]
  %v12869 = vmul.f32 %v12861, %v12798
  %v12870 = vmul.f32 %v12862, %v12802
  %v12871 = vmul.f32 %v12863, %v12806
  %v12872 = vmul.f32 %v12864, %v12810
  %v12873 = vmul.f32 %v12865, %v12798
  %v12874 = vmul.f32 %v12866, %v12802
  %v12875 = vmul.f32 %v12867, %v12806
  %v12876 = vmul.f32 %v12868, %v12810
  %v12878 = vlaneseq
  %v12879 = vshrl.u32 %v12878, 7
  %v12880 = vsub.s32 0, %v12879
  %v12881 = vrot.slane %v12848, %v12880
  %v12882 = vlaneseq
  %v12883 = vshrl.u32 %v12882, 7
  %v12884 = vsub.s32 1, %v12883
  %v12885 = vrot.slane %v12848, %v12884
  %v12886 = vlaneseq
  %v12887 = vshrl.u32 %v12886, 7
  %v12888 = vsub.s32 2, %v12887
  %v12889 = vrot.slane %v12848, %v12888
  %v12890 = vlaneseq
  %v12891 = vshrl.u32 %v12890, 7
  %v12892 = vsub.s32 3, %v12891
  %v12893 = vrot.slane %v12848, %v12892
  %v12898 = vadd.f32 %v12869, %v12881
  %v12899 = vadd.f32 %v12870, %v12885
  %v12900 = vadd.f32 %v12871, %v12889
  %v12901 = vadd.f32 %v12872, %v12893
  %v12902 = vadd.f32 %v12873, %v12881
  %v12903 = vadd.f32 %v12874, %v12885
  %v12904 = vadd.f32 %v12875, %v12889
  %v12905 = vadd.f32 %v12876, %v12893
  %v12906 = vadd.f32 %v12898, %v12853
  %v12907 = vadd.f32 %v12899, %v12854
  %v12908 = vadd.f32 %v12900, %v12855
  %v12909 = vadd.f32 %v12901, %v12856
  %v12910 = vadd.f32 %v12902, %v12857
  %v12911 = vadd.f32 %v12903, %v12858
  %v12912 = vadd.f32 %v12904, %v12859
  %v12913 = vadd.f32 %v12905, %v12860
  %v12914 = vmax.f32 %v12906, 0.0
  %v12915 = vmax.f32 %v12907, 0.0
  %v12916 = vmax.f32 %v12908, 0.0
  %v12917 = vmax.f32 %v12909, 0.0
  %v12918 = vmax.f32 %v12910, 0.0
  %v12919 = vmax.f32 %v12911, 0.0
  %v12920 = vmax.f32 %v12912, 0.0
  %v12921 = vmax.f32 %v12913, 0.0
  %12922 = vst [vmem:[%s7] sm:$0xff] %v12914
  %12923 = vst [vmem:[%s7 + $0x8] sm:$0xff] %v12915
  %12924 = vst [vmem:[%s7 + $0x10] sm:$0xff] %v12916
  %12925 = vst [vmem:[%s7 + $0x18] sm:$0xff] %v12917
  %12926 = vst [vmem:[%s7 + $0x20] sm:$0xff] %v12918
  %12927 = vst [vmem:[%s7 + $0x28] sm:$0xff] %v12919
  %12928 = vst [vmem:[%s7 + $0x30] sm:$0xff] %v12920
  %12929 = vst [vmem:[%s7 + $0x38] sm:$0xff] %v12921
  %v12930 = vld [vmem:[%s3144] sm:$0xff]
  %v12931 = vld [vmem:[%s3144 + $0x8] sm:$0xff]
  %v12932 = vld [vmem:[%s3144 + $0x10] sm:$0xff]
  %v12933 = vld [vmem:[%s3144 + $0x18] sm:$0xff]
  %v12934 = vunpack.c.l.bf16 %v12930
  %v12935 = vunpack.c.h.bf16 %v12930
  %v12936 = vunpack.c.l.bf16 %v12931
  %v12937 = vunpack.c.h.bf16 %v12931
  %v12938 = vunpack.c.l.bf16 %v12932
  %v12939 = vunpack.c.h.bf16 %v12932
  %v12940 = vunpack.c.l.bf16 %v12933
  %v12941 = vunpack.c.h.bf16 %v12933
  %v12942 = vld [vmem:[%s6147] sm:$0xff]
  %v12943 = vld [vmem:[%s6147 + $0x8] sm:$0xff]
  %v12944 = vld [vmem:[%s6147 + $0x10] sm:$0xff]
  %v12945 = vld [vmem:[%s6147 + $0x18] sm:$0xff]
  %v12946 = vld [vmem:[%s6147 + $0x20] sm:$0xff]
  %v12947 = vld [vmem:[%s6147 + $0x28] sm:$0xff]
  %v12948 = vld [vmem:[%s6147 + $0x30] sm:$0xff]
  %v12949 = vld [vmem:[%s6147 + $0x38] sm:$0xff]
  %v12950 = vmul.f32 %v12942, %v12798
  %v12951 = vmul.f32 %v12943, %v12802
  %v12952 = vmul.f32 %v12944, %v12806
  %v12953 = vmul.f32 %v12945, %v12810
  %v12954 = vmul.f32 %v12946, %v12798
  %v12955 = vmul.f32 %v12947, %v12802
  %v12956 = vmul.f32 %v12948, %v12806
  %v12957 = vmul.f32 %v12949, %v12810
  %v12958 = vadd.f32 %v12950, %v12881
  %v12959 = vadd.f32 %v12951, %v12885
  %v12960 = vadd.f32 %v12952, %v12889
  %v12961 = vadd.f32 %v12953, %v12893
  %v12962 = vadd.f32 %v12954, %v12881
  %v12963 = vadd.f32 %v12955, %v12885
  %v12964 = vadd.f32 %v12956, %v12889
  %v12965 = vadd.f32 %v12957, %v12893
  %v12966 = vadd.f32 %v12958, %v12934
  %v12967 = vadd.f32 %v12959, %v12935
  %v12968 = vadd.f32 %v12960, %v12936
  %v12969 = vadd.f32 %v12961, %v12937
  %v12970 = vadd.f32 %v12962, %v12938
  %v12971 = vadd.f32 %v12963, %v12939
  %v12972 = vadd.f32 %v12964, %v12940
  %v12973 = vadd.f32 %v12965, %v12941
  %v12974 = vmax.f32 %v12966, 0.0
  %v12975 = vmax.f32 %v12967, 0.0
  %v12976 = vmax.f32 %v12968, 0.0
  %v12977 = vmax.f32 %v12969, 0.0
  %v12978 = vmax.f32 %v12970, 0.0
  %v12979 = vmax.f32 %v12971, 0.0
  %v12980 = vmax.f32 %v12972, 0.0
  %v12981 = vmax.f32 %v12973, 0.0
  %s12982 = scalar_lea.vmem %s7, 64
  %12983 = vst [vmem:[%s12982] sm:$0xff] %v12974
  %12984 = vst [vmem:[%s12982 + $0x8] sm:$0xff] %v12975
  %12985 = vst [vmem:[%s12982 + $0x10] sm:$0xff] %v12976
  %12986 = vst [vmem:[%s12982 + $0x18] sm:$0xff] %v12977
  %12987 = vst [vmem:[%s12982 + $0x20] sm:$0xff] %v12978
  %12988 = vst [vmem:[%s12982 + $0x28] sm:$0xff] %v12979
  %12989 = vst [vmem:[%s12982 + $0x30] sm:$0xff] %v12980
  %12990 = vst [vmem:[%s12982 + $0x38] sm:$0xff] %v12981
  // Predicated region
  $region30: #{basic_block_forward.1} parent=0 // pred_check
    _
  $region31: #{basic_block_forward.1} parent=0 // pred_check_branch
    %12992 = sbr.rel (0) target = $region33
  $region32: #{basic_block_forward.1} parent=0 // pred_region
    _
  $region33: #{basic_block_forward.1} parent=0 // pred_fallthru
    _
  // Predicated region
  $region34: #{basic_block_forward.1} parent=0 // pred_check
    _
  $region35: #{basic_block_forward.1} parent=0 // pred_check_branch
    %12994 = sbr.rel (0) target = $region37
  $region36: #{basic_block_forward.1} parent=0 // pred_region
    _
  $region37: #{basic_block_forward.1} parent=0 // pred_fallthru
    _

</llo_original>
